<compile_context>
chip_gen: v6e
topology: v6e:2x2x1
jax: 0.10.0
libtpu: 0.0.40
codegen_flags: <defaults>
</compile_context>

<pallas_src>
import numpy as np
import jax
import jax.numpy as jnp
from jax.experimental import pallas as pl
from jax.experimental.pallas import tpu as pltpu


# ----------------------------------------------------------------------------
# Fused forward kernel (whole network, one batch element per grid step)
# ----------------------------------------------------------------------------
def _fcn_kernel(x_ref,
                w1_ref, b1_ref, w2_ref, b2_ref, w3_ref, b3_ref, w4_ref, b4_ref,
                s5_ref, h5_ref, wb5_ref,
                s4_ref, h4_ref, wb4_ref,
                s3_ref, h3_ref, wb3_ref,
                s2_ref, h2_ref, wb2_ref,
                s1_ref, h1_ref, wb1_ref,
                m3_ref, m2_ref, m1_ref,
                o_ref, pad_ref):
    f32 = jnp.float32

    def conv_valid_relu(xv, w_ref, b_ref):
        """Valid Conv1d (K shifted matmuls) + bias + ReLU.  xv: (Lin, Ci)."""
        K, _, Co = w_ref.shape
        Lc = xv.shape[0] - K + 1
        acc = jnp.zeros((Lc, Co), f32)
        for k in range(K):
            acc = acc + jnp.dot(xv[k:k + Lc, :], w_ref[k],
                                preferred_element_type=f32)
        return jnp.maximum(acc + b_ref[...], 0.0)

    def max_pool(v, pool_k):
        """MaxPool1d(pool_k, stride=pool_k) along the sublane (length) axis,
        kept in vregs: window-max of shifted slices + a 0/1 selection matmul."""
        Lc = v.shape[0]
        Lp = Lc // pool_k
        Lw = Lc - pool_k + 1                       # window-max valid length
        m = v[0:Lw, :]
        for j in range(1, pool_k):
            m = jnp.maximum(m, v[j:j + Lw, :])
        row = jax.lax.broadcasted_iota(jnp.int32, (Lp, Lw), 0)
        col = jax.lax.broadcasted_iota(jnp.int32, (Lp, Lw), 1)
        sel = (col == pool_k * row).astype(f32)    # picks every pool_k-th row
        return jnp.dot(sel, m, preferred_element_type=f32)

    def bn_relu_conv_same(y, s_ref, h_ref, w_ref):
        """BN(eval, folded scale/shift) + ReLU + 'same'-padded Conv1d (bias=False)."""
        Lout, Ci = y.shape
        K, _, Co = w_ref.shape
        pad = K // 2
        act = jnp.maximum(y * s_ref[...] + h_ref[...], 0.0)
        # shared zero-pad scratch: only the pad rows need zeroing, act covers the rest
        pad_ref[0:pad, 0:Ci] = jnp.zeros((pad, Ci), f32)
        pad_ref[pad + Lout:pad + Lout + pad, 0:Ci] = jnp.zeros((pad, Ci), f32)
        pad_ref[pad:pad + Lout, 0:Ci] = act
        acc = jnp.zeros((Lout, Co), f32)
        for k in range(K):
            acc = acc + jnp.dot(pad_ref[k:k + Lout, 0:Ci], w_ref[k],
                                preferred_element_type=f32)
        return acc

    xv = x_ref[0]                                           # (L, 4)

    # ---------------- encoder (conv -> ReLU -> pool; dropout == identity) ------
    c1 = conv_valid_relu(xv, w1_ref, b1_ref)                # (L-12, 128)
    skip2 = max_pool(c1, 4)                                 # (L1, 128)
    c2 = conv_valid_relu(skip2, w2_ref, b2_ref)             # (L1-4, 64)
    skip3 = max_pool(c2, 4)                                 # (L2, 64)
    c3 = conv_valid_relu(skip3, w3_ref, b3_ref)             # (L2-2, 32)
    skip4 = max_pool(c3, 2)                                 # (L3, 32)
    skip5 = conv_valid_relu(skip4, w4_ref, b4_ref)          # (L3, 32)

    # ---------------- decoder ---------------------------------------------------
    # AdaptiveAvgPool1d(1) + linear upsample of a length-1 signal == mean broadcast
    up6 = jnp.mean(skip5, axis=0, keepdims=True)            # (1, 32)
    y5 = skip5 + up6
    o5 = bn_relu_conv_same(y5, s5_ref, h5_ref, wb5_ref)     # (L3, 32)

    y4 = o5 + skip4                                         # upsample L3->L3 == identity
    o4 = bn_relu_conv_same(y4, s4_ref, h4_ref, wb4_ref)     # (L3, 64)

    y3 = jnp.dot(m3_ref[...], o4, preferred_element_type=f32) + skip3
    o3 = bn_relu_conv_same(y3, s3_ref, h3_ref, wb3_ref)     # (L2, 128)

    y2 = jnp.dot(m2_ref[...], o3, preferred_element_type=f32) + skip2
    o2 = bn_relu_conv_same(y2, s2_ref, h2_ref, wb2_ref)     # (L1, 4)

    y1 = jnp.dot(m1_ref[...], o2, preferred_element_type=f32) + xv
    o1 = bn_relu_conv_same(y1, s1_ref, h1_ref, wb1_ref)     # (L, 1)

    o_ref[0] = jax.nn.sigmoid(o1)


# ----------------------------------------------------------------------------
# pallas_call wrapper
# ----------------------------------------------------------------------------
def _interp_matrix(Lin, Lout):
    """PyTorch F.interpolate(mode='linear', align_corners=False) as (Lout, Lin)."""
    i = np.arange(Lout)
    src = np.maximum((i + 0.5) * (Lin / Lout) - 0.5, 0.0)
    i0 = np.floor(src).astype(np.int64)
    i1 = np.minimum(i0 + 1, Lin - 1)
    w1 = (src - i0).astype(np.float32)
    w0 = (1.0 - w1).astype(np.float32)
    M = np.zeros((Lout, Lin), np.float32)
    M[i, i0] += w0
    M[i, i1] += w1
    return jnp.asarray(M)


def _const_spec(shape):
    nd = len(shape)
    return pl.BlockSpec(tuple(shape), lambda b, _nd=nd: (0,) * _nd)


def fcn_forward(data_ncw, p):
    """data_ncw: (B, 4, L) PyTorch-layout input -> (B, L) sigmoid output."""
    B, Cin, L = data_ncw.shape
    assert Cin == 4
    x = jnp.transpose(data_ncw, (0, 2, 1))          # (B, L, 4) NWC kernel layout

    L1 = (L - 13 + 1) // 4
    L2 = (L1 - 5 + 1) // 4
    L3 = (L2 - 3 + 1) // 2
    M3 = _interp_matrix(L3, L2)                     # (L2, L3)
    M2 = _interp_matrix(L2, L1)                     # (L1, L2)
    M1 = _interp_matrix(L1, L)                      # (L,  L1)

    args = [x,
            p['conv1']['w'], p['conv1']['b'],
            p['conv2']['w'], p['conv2']['b'],
            p['conv3']['w'], p['conv3']['b'],
            p['conv4']['w'], p['conv4']['b'],
            p['blend5']['sc'], p['blend5']['sh'], p['blend5']['w'],
            p['blend4']['sc'], p['blend4']['sh'], p['blend4']['w'],
            p['blend3']['sc'], p['blend3']['sh'], p['blend3']['w'],
            p['blend2']['sc'], p['blend2']['sh'], p['blend2']['w'],
            p['blend1']['sc'], p['blend1']['sh'], p['blend1']['w'],
            M3, M2, M1]

    in_specs = [pl.BlockSpec((1, L, Cin), lambda b: (b, 0, 0))]
    in_specs += [_const_spec(a.shape) for a in args[1:]]

    out = pl.pallas_call(
        _fcn_kernel,
        out_shape=jax.ShapeDtypeStruct((B, L, 1), jnp.float32),
        grid_spec=pltpu.PrefetchScalarGridSpec(
            num_scalar_prefetch=0,
            grid=(B,),
            in_specs=in_specs,
            out_specs=pl.BlockSpec((1, L, 1), lambda b: (b, 0, 0)),
            scratch_shapes=[pltpu.VMEM((L + 2, 128), jnp.float32)]),
        compiler_params=pltpu.CompilerParams(
            dimension_semantics=("parallel",)),
    )(*args)
    return out.reshape(B, L)


# ----------------------------------------------------------------------------
# Parameters (deterministic xavier-uniform, like PyTorch _init_weights)
# ----------------------------------------------------------------------------
def _xavier(key, K, Ci, Co):
    fan_in, fan_out = Ci * K, Co * K
    bound = float(np.sqrt(6.0 / (fan_in + fan_out)))
    return jax.random.uniform(key, (K, Ci, Co), jnp.float32, -bound, bound)


def init_params(key):
    ks = jax.random.split(key, 9)
    eps = 1e-5
    bn_scale = lambda c: jnp.full((1, c), 1.0 / np.sqrt(1.0 + eps), jnp.float32)
    bn_shift = lambda c: jnp.zeros((1, c), jnp.float32)
    p = {}
    # encoder convs (bias=True, initialized to 0)
    p['conv1'] = dict(w=_xavier(ks[0], 13, 4, 128), b=jnp.zeros((1, 128), jnp.float32))
    p['conv2'] = dict(w=_xavier(ks[1], 5, 128, 64), b=jnp.zeros((1, 64), jnp.float32))
    p['conv3'] = dict(w=_xavier(ks[2], 3, 64, 32),  b=jnp.zeros((1, 32), jnp.float32))
    p['conv4'] = dict(w=_xavier(ks[3], 1, 32, 32),  b=jnp.zeros((1, 32), jnp.float32))
    # blend blocks: BatchNorm1d folded to scale/shift + Conv1d(bias=False)
    p['blend5'] = dict(sc=bn_scale(32),  sh=bn_shift(32),  w=_xavier(ks[4], 3, 32, 32))
    p['blend4'] = dict(sc=bn_scale(32),  sh=bn_shift(32),  w=_xavier(ks[5], 3, 32, 64))
    p['blend3'] = dict(sc=bn_scale(64),  sh=bn_shift(64),  w=_xavier(ks[6], 3, 64, 128))
    p['blend2'] = dict(sc=bn_scale(128), sh=bn_shift(128), w=_xavier(ks[7], 3, 128, 4))
    p['blend1'] = dict(sc=bn_scale(4),   sh=bn_shift(4),   w=_xavier(ks[8], 3, 4, 1))
    return p


# ----------------------------------------------------------------------------
# Pure-JAX reference (independent formulation) for correctness checking
# ----------------------------------------------------------------------------
def reference_forward(data_ncw, p):
    hp = jax.lax.Precision.HIGHEST
    x = jnp.transpose(data_ncw, (0, 2, 1))                  # (B, L, 4)

    def conv_valid(z, w, b=None):
        K = w.shape[0]
        Lc = z.shape[1] - K + 1
        acc = jnp.zeros((z.shape[0], Lc, w.shape[2]), jnp.float32)
        for k in range(K):
            acc = acc + jnp.einsum('blc,co->blo', z[:, k:k + Lc, :], w[k],
                                   precision=hp)
        return acc if b is None else acc + b

    def maxpool(z, k):
        B, Lc, C = z.shape
        Lp = Lc // k
        return jnp.max(z[:, :Lp * k, :].reshape(B, Lp, k, C), axis=2)

    def bn_relu_conv(y, sc, sh, w):
        act = jnp.maximum(y * sc + sh, 0.0)
        pad = w.shape[0] // 2
        actp = jnp.pad(act, ((0, 0), (pad, pad), (0, 0)))
        return conv_valid(actp, w)

    def upsample(z, Lout):
        M = _interp_matrix(z.shape[1], Lout)
        return jnp.einsum('lm,bmc->blc', M, z, precision=hp)

    skip1 = x
    out = maxpool(jnp.maximum(conv_valid(x, p['conv1']['w'], p['conv1']['b']), 0.0), 4)
    skip2 = out
    out = maxpool(jnp.maximum(conv_valid(out, p['conv2']['w'], p['conv2']['b']), 0.0), 4)
    skip3 = out
    out = maxpool(jnp.maximum(conv_valid(out, p['conv3']['w'], p['conv3']['b']), 0.0), 2)
    skip4 = out
    out = jnp.maximum(conv_valid(out, p['conv4']['w'], p['conv4']['b']), 0.0)
    skip5 = out
    up6 = jnp.mean(out, axis=1, keepdims=True)
    up5 = bn_relu_conv(upsample(up6, skip5.shape[1]) + skip5,
                       p['blend5']['sc'], p['blend5']['sh'], p['blend5']['w'])
    up4 = bn_relu_conv(upsample(up5, skip4.shape[1]) + skip4,
                       p['blend4']['sc'], p['blend4']['sh'], p['blend4']['w'])
    up3 = bn_relu_conv(upsample(up4, skip3.shape[1]) + skip3,
                       p['blend3']['sc'], p['blend3']['sh'], p['blend3']['w'])
    up2 = bn_relu_conv(upsample(up3, skip2.shape[1]) + skip2,
                       p['blend2']['sc'], p['blend2']['sh'], p['blend2']['w'])
    up1 = bn_relu_conv(upsample(up2, skip1.shape[1]) + skip1,
                       p['blend1']['sc'], p['blend1']['sh'], p['blend1']['w'])
    return jax.nn.sigmoid(up1)[..., 0]


# ----------------------------------------------------------------------------
if __name__ == "__main__":
    key = jax.random.PRNGKey(0)
    pkey, xkey = jax.random.split(key)
    params = init_params(pkey)

    B, C, L = 2, 4, 200
    data_ncw = jax.random.normal(xkey, (B, C, L), jnp.float32)   # PyTorch NCW input

    fwd = jax.jit(fcn_forward)
    out = jax.block_until_ready(fwd(data_ncw, params))

    assert out.shape == (B, L), out.shape
    assert bool(jnp.all(jnp.isfinite(out)))
    assert bool(jnp.all((out >= 0.0) & (out <= 1.0)))            # sigmoid output

    ref = reference_forward(data_ncw, params)
    assert bool(jnp.allclose(out, ref, atol=1e-3, rtol=1e-3)), \
        float(jnp.max(jnp.abs(out - ref)))

    print("KERNEL_OK")
</pallas_src>

<mosaic_0001>
module attributes {stable_mosaic.version = 11 : i64} {
  func.func @_fcn_kernel(%arg0: i32, %arg1: memref<1x200x4xf32, #tpu.memory_space<vmem>>, %arg2: memref<13x4x128xf32, #tpu.memory_space<vmem>>, %arg3: memref<1x128xf32, #tpu.memory_space<vmem>>, %arg4: memref<5x128x64xf32, #tpu.memory_space<vmem>>, %arg5: memref<1x64xf32, #tpu.memory_space<vmem>>, %arg6: memref<3x64x32xf32, #tpu.memory_space<vmem>>, %arg7: memref<1x32xf32, #tpu.memory_space<vmem>>, %arg8: memref<1x32x32xf32, #tpu.memory_space<vmem>>, %arg9: memref<1x32xf32, #tpu.memory_space<vmem>>, %arg10: memref<1x32xf32, #tpu.memory_space<vmem>>, %arg11: memref<1x32xf32, #tpu.memory_space<vmem>>, %arg12: memref<3x32x32xf32, #tpu.memory_space<vmem>>, %arg13: memref<1x32xf32, #tpu.memory_space<vmem>>, %arg14: memref<1x32xf32, #tpu.memory_space<vmem>>, %arg15: memref<3x32x64xf32, #tpu.memory_space<vmem>>, %arg16: memref<1x64xf32, #tpu.memory_space<vmem>>, %arg17: memref<1x64xf32, #tpu.memory_space<vmem>>, %arg18: memref<3x64x128xf32, #tpu.memory_space<vmem>>, %arg19: memref<1x128xf32, #tpu.memory_space<vmem>>, %arg20: memref<1x128xf32, #tpu.memory_space<vmem>>, %arg21: memref<3x128x4xf32, #tpu.memory_space<vmem>>, %arg22: memref<1x4xf32, #tpu.memory_space<vmem>>, %arg23: memref<1x4xf32, #tpu.memory_space<vmem>>, %arg24: memref<3x4x1xf32, #tpu.memory_space<vmem>>, %arg25: memref<10x4xf32, #tpu.memory_space<vmem>>, %arg26: memref<47x10xf32, #tpu.memory_space<vmem>>, %arg27: memref<200x47xf32, #tpu.memory_space<vmem>>, %arg28: memref<1x200x1xf32, #tpu.memory_space<vmem>>, %arg29: memref<202x128xf32, #tpu.memory_space<vmem>>) attributes {dimension_semantics = [#tpu.dimension_semantics<parallel>], iteration_bounds = array<i64: 2>, scalar_prefetch = 0 : i64, scratch_operands = 1 : i64, tpu.core_type = #tpu.core_type<tc>, window_params = [{transform_indices = @transform_0, window_bounds = array<i64: 1, 200, 4>}, {pipeline_mode = #tpu.pipeline_mode<synchronous>, transform_indices = @transform_1, window_bounds = array<i64: 13, 4, 128>}, {pipeline_mode = #tpu.pipeline_mode<synchronous>, transform_indices = @transform_2, window_bounds = array<i64: 1, 128>}, {pipeline_mode = #tpu.pipeline_mode<synchronous>, transform_indices = @transform_3, window_bounds = array<i64: 5, 128, 64>}, {pipeline_mode = #tpu.pipeline_mode<synchronous>, transform_indices = @transform_4, window_bounds = array<i64: 1, 64>}, {pipeline_mode = #tpu.pipeline_mode<synchronous>, transform_indices = @transform_5, window_bounds = array<i64: 3, 64, 32>}, {pipeline_mode = #tpu.pipeline_mode<synchronous>, transform_indices = @transform_6, window_bounds = array<i64: 1, 32>}, {pipeline_mode = #tpu.pipeline_mode<synchronous>, transform_indices = @transform_7, window_bounds = array<i64: 1, 32, 32>}, {pipeline_mode = #tpu.pipeline_mode<synchronous>, transform_indices = @transform_8, window_bounds = array<i64: 1, 32>}, {pipeline_mode = #tpu.pipeline_mode<synchronous>, transform_indices = @transform_9, window_bounds = array<i64: 1, 32>}, {pipeline_mode = #tpu.pipeline_mode<synchronous>, transform_indices = @transform_10, window_bounds = array<i64: 1, 32>}, {pipeline_mode = #tpu.pipeline_mode<synchronous>, transform_indices = @transform_11, window_bounds = array<i64: 3, 32, 32>}, {pipeline_mode = #tpu.pipeline_mode<synchronous>, transform_indices = @transform_12, window_bounds = array<i64: 1, 32>}, {pipeline_mode = #tpu.pipeline_mode<synchronous>, transform_indices = @transform_13, window_bounds = array<i64: 1, 32>}, {pipeline_mode = #tpu.pipeline_mode<synchronous>, transform_indices = @transform_14, window_bounds = array<i64: 3, 32, 64>}, {pipeline_mode = #tpu.pipeline_mode<synchronous>, transform_indices = @transform_15, window_bounds = array<i64: 1, 64>}, {pipeline_mode = #tpu.pipeline_mode<synchronous>, transform_indices = @transform_16, window_bounds = array<i64: 1, 64>}, {pipeline_mode = #tpu.pipeline_mode<synchronous>, transform_indices = @transform_17, window_bounds = array<i64: 3, 64, 128>}, {pipeline_mode = #tpu.pipeline_mode<synchronous>, transform_indices = @transform_18, window_bounds = array<i64: 1, 128>}, {pipeline_mode = #tpu.pipeline_mode<synchronous>, transform_indices = @transform_19, window_bounds = array<i64: 1, 128>}, {pipeline_mode = #tpu.pipeline_mode<synchronous>, transform_indices = @transform_20, window_bounds = array<i64: 3, 128, 4>}, {pipeline_mode = #tpu.pipeline_mode<synchronous>, transform_indices = @transform_21, window_bounds = array<i64: 1, 4>}, {pipeline_mode = #tpu.pipeline_mode<synchronous>, transform_indices = @transform_22, window_bounds = array<i64: 1, 4>}, {pipeline_mode = #tpu.pipeline_mode<synchronous>, transform_indices = @transform_23, window_bounds = array<i64: 3, 4, 1>}, {pipeline_mode = #tpu.pipeline_mode<synchronous>, transform_indices = @transform_24, window_bounds = array<i64: 10, 4>}, {pipeline_mode = #tpu.pipeline_mode<synchronous>, transform_indices = @transform_25, window_bounds = array<i64: 47, 10>}, {pipeline_mode = #tpu.pipeline_mode<synchronous>, transform_indices = @transform_26, window_bounds = array<i64: 200, 47>}, {transform_indices = @transform_27, window_bounds = array<i64: 1, 200, 1>}]} {
    %c0 = arith.constant 0 : index
    %c0_0 = arith.constant 0 : index
    %c0_1 = arith.constant 0 : index
    %0 = vector.load %arg1[%c0, %c0_0, %c0_1] : memref<1x200x4xf32, #tpu.memory_space<vmem>>, vector<1x200x4xf32>
    %1 = vector.shape_cast %0 : vector<1x200x4xf32> to vector<200x4xf32>
    %cst = arith.constant 0.000000e+00 : f32
    %2 = vector.broadcast %cst : f32 to vector<188x128xf32>
    %3 = vector.extract_strided_slice %1 {offsets = [0, 0], sizes = [188, 4], strides = [1, 1]} : vector<200x4xf32> to vector<188x4xf32>
    %c0_2 = arith.constant 0 : index
    %c0_3 = arith.constant 0 : index
    %c0_4 = arith.constant 0 : index
    %4 = vector.load %arg2[%c0_2, %c0_3, %c0_4] : memref<13x4x128xf32, #tpu.memory_space<vmem>>, vector<1x4x128xf32>
    %5 = vector.shape_cast %4 : vector<1x4x128xf32> to vector<4x128xf32>
    %cst_5 = arith.constant dense<0.000000e+00> : vector<188x128xf32>
    %6 = tpu.matmul %3, %5, %cst_5 {dimension_numbers = #tpu.dot_dimension_numbers<[1], [0], [0], [1], [0, 0, 1, 1], [], []>} : vector<188x4xf32>, vector<4x128xf32>, vector<188x128xf32> -> vector<188x128xf32>
    %7 = arith.addf %2, %6 : vector<188x128xf32>
    %8 = vector.extract_strided_slice %1 {offsets = [1, 0], sizes = [188, 4], strides = [1, 1]} : vector<200x4xf32> to vector<188x4xf32>
    %c1 = arith.constant 1 : index
    %c0_6 = arith.constant 0 : index
    %c0_7 = arith.constant 0 : index
    %9 = vector.load %arg2[%c1, %c0_6, %c0_7] : memref<13x4x128xf32, #tpu.memory_space<vmem>>, vector<1x4x128xf32>
    %10 = vector.shape_cast %9 : vector<1x4x128xf32> to vector<4x128xf32>
    %cst_8 = arith.constant dense<0.000000e+00> : vector<188x128xf32>
    %11 = tpu.matmul %8, %10, %cst_8 {dimension_numbers = #tpu.dot_dimension_numbers<[1], [0], [0], [1], [0, 0, 1, 1], [], []>} : vector<188x4xf32>, vector<4x128xf32>, vector<188x128xf32> -> vector<188x128xf32>
    %12 = arith.addf %7, %11 : vector<188x128xf32>
    %13 = vector.extract_strided_slice %1 {offsets = [2, 0], sizes = [188, 4], strides = [1, 1]} : vector<200x4xf32> to vector<188x4xf32>
    %c2 = arith.constant 2 : index
    %c0_9 = arith.constant 0 : index
    %c0_10 = arith.constant 0 : index
    %14 = vector.load %arg2[%c2, %c0_9, %c0_10] : memref<13x4x128xf32, #tpu.memory_space<vmem>>, vector<1x4x128xf32>
    %15 = vector.shape_cast %14 : vector<1x4x128xf32> to vector<4x128xf32>
    %cst_11 = arith.constant dense<0.000000e+00> : vector<188x128xf32>
    %16 = tpu.matmul %13, %15, %cst_11 {dimension_numbers = #tpu.dot_dimension_numbers<[1], [0], [0], [1], [0, 0, 1, 1], [], []>} : vector<188x4xf32>, vector<4x128xf32>, vector<188x128xf32> -> vector<188x128xf32>
    %17 = arith.addf %12, %16 : vector<188x128xf32>
    %18 = vector.extract_strided_slice %1 {offsets = [3, 0], sizes = [188, 4], strides = [1, 1]} : vector<200x4xf32> to vector<188x4xf32>
    %c3 = arith.constant 3 : index
    %c0_12 = arith.constant 0 : index
    %c0_13 = arith.constant 0 : index
    %19 = vector.load %arg2[%c3, %c0_12, %c0_13] : memref<13x4x128xf32, #tpu.memory_space<vmem>>, vector<1x4x128xf32>
    %20 = vector.shape_cast %19 : vector<1x4x128xf32> to vector<4x128xf32>
    %cst_14 = arith.constant dense<0.000000e+00> : vector<188x128xf32>
    %21 = tpu.matmul %18, %20, %cst_14 {dimension_numbers = #tpu.dot_dimension_numbers<[1], [0], [0], [1], [0, 0, 1, 1], [], []>} : vector<188x4xf32>, vector<4x128xf32>, vector<188x128xf32> -> vector<188x128xf32>
    %22 = arith.addf %17, %21 : vector<188x128xf32>
    %23 = vector.extract_strided_slice %1 {offsets = [4, 0], sizes = [188, 4], strides = [1, 1]} : vector<200x4xf32> to vector<188x4xf32>
    %c4 = arith.constant 4 : index
    %c0_15 = arith.constant 0 : index
    %c0_16 = arith.constant 0 : index
    %24 = vector.load %arg2[%c4, %c0_15, %c0_16] : memref<13x4x128xf32, #tpu.memory_space<vmem>>, vector<1x4x128xf32>
    %25 = vector.shape_cast %24 : vector<1x4x128xf32> to vector<4x128xf32>
    %cst_17 = arith.constant dense<0.000000e+00> : vector<188x128xf32>
    %26 = tpu.matmul %23, %25, %cst_17 {dimension_numbers = #tpu.dot_dimension_numbers<[1], [0], [0], [1], [0, 0, 1, 1], [], []>} : vector<188x4xf32>, vector<4x128xf32>, vector<188x128xf32> -> vector<188x128xf32>
    %27 = arith.addf %22, %26 : vector<188x128xf32>
    %28 = vector.extract_strided_slice %1 {offsets = [5, 0], sizes = [188, 4], strides = [1, 1]} : vector<200x4xf32> to vector<188x4xf32>
    %c5 = arith.constant 5 : index
    %c0_18 = arith.constant 0 : index
    %c0_19 = arith.constant 0 : index
    %29 = vector.load %arg2[%c5, %c0_18, %c0_19] : memref<13x4x128xf32, #tpu.memory_space<vmem>>, vector<1x4x128xf32>
    %30 = vector.shape_cast %29 : vector<1x4x128xf32> to vector<4x128xf32>
    %cst_20 = arith.constant dense<0.000000e+00> : vector<188x128xf32>
    %31 = tpu.matmul %28, %30, %cst_20 {dimension_numbers = #tpu.dot_dimension_numbers<[1], [0], [0], [1], [0, 0, 1, 1], [], []>} : vector<188x4xf32>, vector<4x128xf32>, vector<188x128xf32> -> vector<188x128xf32>
    %32 = arith.addf %27, %31 : vector<188x128xf32>
    %33 = vector.extract_strided_slice %1 {offsets = [6, 0], sizes = [188, 4], strides = [1, 1]} : vector<200x4xf32> to vector<188x4xf32>
    %c6 = arith.constant 6 : index
    %c0_21 = arith.constant 0 : index
    %c0_22 = arith.constant 0 : index
    %34 = vector.load %arg2[%c6, %c0_21, %c0_22] : memref<13x4x128xf32, #tpu.memory_space<vmem>>, vector<1x4x128xf32>
    %35 = vector.shape_cast %34 : vector<1x4x128xf32> to vector<4x128xf32>
    %cst_23 = arith.constant dense<0.000000e+00> : vector<188x128xf32>
    %36 = tpu.matmul %33, %35, %cst_23 {dimension_numbers = #tpu.dot_dimension_numbers<[1], [0], [0], [1], [0, 0, 1, 1], [], []>} : vector<188x4xf32>, vector<4x128xf32>, vector<188x128xf32> -> vector<188x128xf32>
    %37 = arith.addf %32, %36 : vector<188x128xf32>
    %38 = vector.extract_strided_slice %1 {offsets = [7, 0], sizes = [188, 4], strides = [1, 1]} : vector<200x4xf32> to vector<188x4xf32>
    %c7 = arith.constant 7 : index
    %c0_24 = arith.constant 0 : index
    %c0_25 = arith.constant 0 : index
    %39 = vector.load %arg2[%c7, %c0_24, %c0_25] : memref<13x4x128xf32, #tpu.memory_space<vmem>>, vector<1x4x128xf32>
    %40 = vector.shape_cast %39 : vector<1x4x128xf32> to vector<4x128xf32>
    %cst_26 = arith.constant dense<0.000000e+00> : vector<188x128xf32>
    %41 = tpu.matmul %38, %40, %cst_26 {dimension_numbers = #tpu.dot_dimension_numbers<[1], [0], [0], [1], [0, 0, 1, 1], [], []>} : vector<188x4xf32>, vector<4x128xf32>, vector<188x128xf32> -> vector<188x128xf32>
    %42 = arith.addf %37, %41 : vector<188x128xf32>
    %43 = vector.extract_strided_slice %1 {offsets = [8, 0], sizes = [188, 4], strides = [1, 1]} : vector<200x4xf32> to vector<188x4xf32>
    %c8 = arith.constant 8 : index
    %c0_27 = arith.constant 0 : index
    %c0_28 = arith.constant 0 : index
    %44 = vector.load %arg2[%c8, %c0_27, %c0_28] : memref<13x4x128xf32, #tpu.memory_space<vmem>>, vector<1x4x128xf32>
    %45 = vector.shape_cast %44 : vector<1x4x128xf32> to vector<4x128xf32>
    %cst_29 = arith.constant dense<0.000000e+00> : vector<188x128xf32>
    %46 = tpu.matmul %43, %45, %cst_29 {dimension_numbers = #tpu.dot_dimension_numbers<[1], [0], [0], [1], [0, 0, 1, 1], [], []>} : vector<188x4xf32>, vector<4x128xf32>, vector<188x128xf32> -> vector<188x128xf32>
    %47 = arith.addf %42, %46 : vector<188x128xf32>
    %48 = vector.extract_strided_slice %1 {offsets = [9, 0], sizes = [188, 4], strides = [1, 1]} : vector<200x4xf32> to vector<188x4xf32>
    %c9 = arith.constant 9 : index
    %c0_30 = arith.constant 0 : index
    %c0_31 = arith.constant 0 : index
    %49 = vector.load %arg2[%c9, %c0_30, %c0_31] : memref<13x4x128xf32, #tpu.memory_space<vmem>>, vector<1x4x128xf32>
    %50 = vector.shape_cast %49 : vector<1x4x128xf32> to vector<4x128xf32>
    %cst_32 = arith.constant dense<0.000000e+00> : vector<188x128xf32>
    %51 = tpu.matmul %48, %50, %cst_32 {dimension_numbers = #tpu.dot_dimension_numbers<[1], [0], [0], [1], [0, 0, 1, 1], [], []>} : vector<188x4xf32>, vector<4x128xf32>, vector<188x128xf32> -> vector<188x128xf32>
    %52 = arith.addf %47, %51 : vector<188x128xf32>
    %53 = vector.extract_strided_slice %1 {offsets = [10, 0], sizes = [188, 4], strides = [1, 1]} : vector<200x4xf32> to vector<188x4xf32>
    %c10 = arith.constant 10 : index
    %c0_33 = arith.constant 0 : index
    %c0_34 = arith.constant 0 : index
    %54 = vector.load %arg2[%c10, %c0_33, %c0_34] : memref<13x4x128xf32, #tpu.memory_space<vmem>>, vector<1x4x128xf32>
    %55 = vector.shape_cast %54 : vector<1x4x128xf32> to vector<4x128xf32>
    %cst_35 = arith.constant dense<0.000000e+00> : vector<188x128xf32>
    %56 = tpu.matmul %53, %55, %cst_35 {dimension_numbers = #tpu.dot_dimension_numbers<[1], [0], [0], [1], [0, 0, 1, 1], [], []>} : vector<188x4xf32>, vector<4x128xf32>, vector<188x128xf32> -> vector<188x128xf32>
    %57 = arith.addf %52, %56 : vector<188x128xf32>
    %58 = vector.extract_strided_slice %1 {offsets = [11, 0], sizes = [188, 4], strides = [1, 1]} : vector<200x4xf32> to vector<188x4xf32>
    %c11 = arith.constant 11 : index
    %c0_36 = arith.constant 0 : index
    %c0_37 = arith.constant 0 : index
    %59 = vector.load %arg2[%c11, %c0_36, %c0_37] : memref<13x4x128xf32, #tpu.memory_space<vmem>>, vector<1x4x128xf32>
    %60 = vector.shape_cast %59 : vector<1x4x128xf32> to vector<4x128xf32>
    %cst_38 = arith.constant dense<0.000000e+00> : vector<188x128xf32>
    %61 = tpu.matmul %58, %60, %cst_38 {dimension_numbers = #tpu.dot_dimension_numbers<[1], [0], [0], [1], [0, 0, 1, 1], [], []>} : vector<188x4xf32>, vector<4x128xf32>, vector<188x128xf32> -> vector<188x128xf32>
    %62 = arith.addf %57, %61 : vector<188x128xf32>
    %63 = vector.extract_strided_slice %1 {offsets = [12, 0], sizes = [188, 4], strides = [1, 1]} : vector<200x4xf32> to vector<188x4xf32>
    %c12 = arith.constant 12 : index
    %c0_39 = arith.constant 0 : index
    %c0_40 = arith.constant 0 : index
    %64 = vector.load %arg2[%c12, %c0_39, %c0_40] : memref<13x4x128xf32, #tpu.memory_space<vmem>>, vector<1x4x128xf32>
    %65 = vector.shape_cast %64 : vector<1x4x128xf32> to vector<4x128xf32>
    %cst_41 = arith.constant dense<0.000000e+00> : vector<188x128xf32>
    %66 = tpu.matmul %63, %65, %cst_41 {dimension_numbers = #tpu.dot_dimension_numbers<[1], [0], [0], [1], [0, 0, 1, 1], [], []>} : vector<188x4xf32>, vector<4x128xf32>, vector<188x128xf32> -> vector<188x128xf32>
    %67 = arith.addf %62, %66 : vector<188x128xf32>
    %c0_42 = arith.constant 0 : index
    %c0_43 = arith.constant 0 : index
    %68 = vector.load %arg3[%c0_42, %c0_43] : memref<1x128xf32, #tpu.memory_space<vmem>>, vector<1x128xf32>
    %69 = vector.broadcast %68 : vector<1x128xf32> to vector<188x128xf32>
    %70 = arith.addf %67, %69 : vector<188x128xf32>
    %cst_44 = arith.constant 0.000000e+00 : f32
    %71 = vector.broadcast %cst_44 : f32 to vector<188x128xf32>
    %72 = arith.maximumf %70, %71 : vector<188x128xf32>
    %73 = vector.extract_strided_slice %72 {offsets = [0, 0], sizes = [185, 128], strides = [1, 1]} : vector<188x128xf32> to vector<185x128xf32>
    %74 = vector.extract_strided_slice %72 {offsets = [1, 0], sizes = [185, 128], strides = [1, 1]} : vector<188x128xf32> to vector<185x128xf32>
    %75 = arith.maximumf %73, %74 : vector<185x128xf32>
    %76 = vector.extract_strided_slice %72 {offsets = [2, 0], sizes = [185, 128], strides = [1, 1]} : vector<188x128xf32> to vector<185x128xf32>
    %77 = arith.maximumf %75, %76 : vector<185x128xf32>
    %78 = vector.extract_strided_slice %72 {offsets = [3, 0], sizes = [185, 128], strides = [1, 1]} : vector<188x128xf32> to vector<185x128xf32>
    %79 = arith.maximumf %77, %78 : vector<185x128xf32>
    %80 = tpu.iota {dimensions = array<i32: 0>} : vector<47x185xi32>
    %81 = tpu.iota {dimensions = array<i32: 1>} : vector<47x185xi32>
    %c4_i32 = arith.constant 4 : i32
    %82 = vector.broadcast %c4_i32 : i32 to vector<47x185xi32>
    %83 = arith.muli %82, %80 : vector<47x185xi32>
    %84 = arith.cmpi eq, %81, %83 : vector<47x185xi32>
    %85 = arith.extui %84 : vector<47x185xi1> to vector<47x185xi32>
    %86 = arith.sitofp %85 : vector<47x185xi32> to vector<47x185xf32>
    %cst_45 = arith.constant dense<0.000000e+00> : vector<47x128xf32>
    %87 = tpu.matmul %86, %79, %cst_45 {dimension_numbers = #tpu.dot_dimension_numbers<[1], [0], [0], [1], [0, 0, 1, 1], [], []>} : vector<47x185xf32>, vector<185x128xf32>, vector<47x128xf32> -> vector<47x128xf32>
    %cst_46 = arith.constant 0.000000e+00 : f32
    %88 = vector.broadcast %cst_46 : f32 to vector<43x64xf32>
    %89 = vector.extract_strided_slice %87 {offsets = [0, 0], sizes = [43, 128], strides = [1, 1]} : vector<47x128xf32> to vector<43x128xf32>
    %c0_47 = arith.constant 0 : index
    %c0_48 = arith.constant 0 : index
    %c0_49 = arith.constant 0 : index
    %90 = vector.load %arg4[%c0_47, %c0_48, %c0_49] : memref<5x128x64xf32, #tpu.memory_space<vmem>>, vector<1x128x64xf32>
    %91 = vector.shape_cast %90 : vector<1x128x64xf32> to vector<128x64xf32>
    %cst_50 = arith.constant dense<0.000000e+00> : vector<43x64xf32>
    %92 = tpu.matmul %89, %91, %cst_50 {dimension_numbers = #tpu.dot_dimension_numbers<[1], [0], [0], [1], [0, 0, 1, 1], [], []>} : vector<43x128xf32>, vector<128x64xf32>, vector<43x64xf32> -> vector<43x64xf32>
    %93 = arith.addf %88, %92 : vector<43x64xf32>
    %94 = vector.extract_strided_slice %87 {offsets = [1, 0], sizes = [43, 128], strides = [1, 1]} : vector<47x128xf32> to vector<43x128xf32>
    %c1_51 = arith.constant 1 : index
    %c0_52 = arith.constant 0 : index
    %c0_53 = arith.constant 0 : index
    %95 = vector.load %arg4[%c1_51, %c0_52, %c0_53] : memref<5x128x64xf32, #tpu.memory_space<vmem>>, vector<1x128x64xf32>
    %96 = vector.shape_cast %95 : vector<1x128x64xf32> to vector<128x64xf32>
    %cst_54 = arith.constant dense<0.000000e+00> : vector<43x64xf32>
    %97 = tpu.matmul %94, %96, %cst_54 {dimension_numbers = #tpu.dot_dimension_numbers<[1], [0], [0], [1], [0, 0, 1, 1], [], []>} : vector<43x128xf32>, vector<128x64xf32>, vector<43x64xf32> -> vector<43x64xf32>
    %98 = arith.addf %93, %97 : vector<43x64xf32>
    %99 = vector.extract_strided_slice %87 {offsets = [2, 0], sizes = [43, 128], strides = [1, 1]} : vector<47x128xf32> to vector<43x128xf32>
    %c2_55 = arith.constant 2 : index
    %c0_56 = arith.constant 0 : index
    %c0_57 = arith.constant 0 : index
    %100 = vector.load %arg4[%c2_55, %c0_56, %c0_57] : memref<5x128x64xf32, #tpu.memory_space<vmem>>, vector<1x128x64xf32>
    %101 = vector.shape_cast %100 : vector<1x128x64xf32> to vector<128x64xf32>
    %cst_58 = arith.constant dense<0.000000e+00> : vector<43x64xf32>
    %102 = tpu.matmul %99, %101, %cst_58 {dimension_numbers = #tpu.dot_dimension_numbers<[1], [0], [0], [1], [0, 0, 1, 1], [], []>} : vector<43x128xf32>, vector<128x64xf32>, vector<43x64xf32> -> vector<43x64xf32>
    %103 = arith.addf %98, %102 : vector<43x64xf32>
    %104 = vector.extract_strided_slice %87 {offsets = [3, 0], sizes = [43, 128], strides = [1, 1]} : vector<47x128xf32> to vector<43x128xf32>
    %c3_59 = arith.constant 3 : index
    %c0_60 = arith.constant 0 : index
    %c0_61 = arith.constant 0 : index
    %105 = vector.load %arg4[%c3_59, %c0_60, %c0_61] : memref<5x128x64xf32, #tpu.memory_space<vmem>>, vector<1x128x64xf32>
    %106 = vector.shape_cast %105 : vector<1x128x64xf32> to vector<128x64xf32>
    %cst_62 = arith.constant dense<0.000000e+00> : vector<43x64xf32>
    %107 = tpu.matmul %104, %106, %cst_62 {dimension_numbers = #tpu.dot_dimension_numbers<[1], [0], [0], [1], [0, 0, 1, 1], [], []>} : vector<43x128xf32>, vector<128x64xf32>, vector<43x64xf32> -> vector<43x64xf32>
    %108 = arith.addf %103, %107 : vector<43x64xf32>
    %109 = vector.extract_strided_slice %87 {offsets = [4, 0], sizes = [43, 128], strides = [1, 1]} : vector<47x128xf32> to vector<43x128xf32>
    %c4_63 = arith.constant 4 : index
    %c0_64 = arith.constant 0 : index
    %c0_65 = arith.constant 0 : index
    %110 = vector.load %arg4[%c4_63, %c0_64, %c0_65] : memref<5x128x64xf32, #tpu.memory_space<vmem>>, vector<1x128x64xf32>
    %111 = vector.shape_cast %110 : vector<1x128x64xf32> to vector<128x64xf32>
    %cst_66 = arith.constant dense<0.000000e+00> : vector<43x64xf32>
    %112 = tpu.matmul %109, %111, %cst_66 {dimension_numbers = #tpu.dot_dimension_numbers<[1], [0], [0], [1], [0, 0, 1, 1], [], []>} : vector<43x128xf32>, vector<128x64xf32>, vector<43x64xf32> -> vector<43x64xf32>
    %113 = arith.addf %108, %112 : vector<43x64xf32>
    %c0_67 = arith.constant 0 : index
    %c0_68 = arith.constant 0 : index
    %114 = vector.load %arg5[%c0_67, %c0_68] : memref<1x64xf32, #tpu.memory_space<vmem>>, vector<1x64xf32>
    %115 = vector.broadcast %114 : vector<1x64xf32> to vector<43x64xf32>
    %116 = arith.addf %113, %115 : vector<43x64xf32>
    %cst_69 = arith.constant 0.000000e+00 : f32
    %117 = vector.broadcast %cst_69 : f32 to vector<43x64xf32>
    %118 = arith.maximumf %116, %117 : vector<43x64xf32>
    %119 = vector.extract_strided_slice %118 {offsets = [0, 0], sizes = [40, 64], strides = [1, 1]} : vector<43x64xf32> to vector<40x64xf32>
    %120 = vector.extract_strided_slice %118 {offsets = [1, 0], sizes = [40, 64], strides = [1, 1]} : vector<43x64xf32> to vector<40x64xf32>
    %121 = arith.maximumf %119, %120 : vector<40x64xf32>
    %122 = vector.extract_strided_slice %118 {offsets = [2, 0], sizes = [40, 64], strides = [1, 1]} : vector<43x64xf32> to vector<40x64xf32>
    %123 = arith.maximumf %121, %122 : vector<40x64xf32>
    %124 = vector.extract_strided_slice %118 {offsets = [3, 0], sizes = [40, 64], strides = [1, 1]} : vector<43x64xf32> to vector<40x64xf32>
    %125 = arith.maximumf %123, %124 : vector<40x64xf32>
    %126 = tpu.iota {dimensions = array<i32: 0>} : vector<10x40xi32>
    %127 = tpu.iota {dimensions = array<i32: 1>} : vector<10x40xi32>
    %c4_i32_70 = arith.constant 4 : i32
    %128 = vector.broadcast %c4_i32_70 : i32 to vector<10x40xi32>
    %129 = arith.muli %128, %126 : vector<10x40xi32>
    %130 = arith.cmpi eq, %127, %129 : vector<10x40xi32>
    %131 = arith.extui %130 : vector<10x40xi1> to vector<10x40xi32>
    %132 = arith.sitofp %131 : vector<10x40xi32> to vector<10x40xf32>
    %cst_71 = arith.constant dense<0.000000e+00> : vector<10x64xf32>
    %133 = tpu.matmul %132, %125, %cst_71 {dimension_numbers = #tpu.dot_dimension_numbers<[1], [0], [0], [1], [0, 0, 1, 1], [], []>} : vector<10x40xf32>, vector<40x64xf32>, vector<10x64xf32> -> vector<10x64xf32>
    %cst_72 = arith.constant 0.000000e+00 : f32
    %134 = vector.broadcast %cst_72 : f32 to vector<8x32xf32>
    %135 = vector.extract_strided_slice %133 {offsets = [0, 0], sizes = [8, 64], strides = [1, 1]} : vector<10x64xf32> to vector<8x64xf32>
    %c0_73 = arith.constant 0 : index
    %c0_74 = arith.constant 0 : index
    %c0_75 = arith.constant 0 : index
    %136 = vector.load %arg6[%c0_73, %c0_74, %c0_75] : memref<3x64x32xf32, #tpu.memory_space<vmem>>, vector<1x64x32xf32>
    %137 = vector.shape_cast %136 : vector<1x64x32xf32> to vector<64x32xf32>
    %cst_76 = arith.constant dense<0.000000e+00> : vector<8x32xf32>
    %138 = tpu.matmul %135, %137, %cst_76 {dimension_numbers = #tpu.dot_dimension_numbers<[1], [0], [0], [1], [0, 0, 1, 1], [], []>} : vector<8x64xf32>, vector<64x32xf32>, vector<8x32xf32> -> vector<8x32xf32>
    %139 = arith.addf %134, %138 : vector<8x32xf32>
    %140 = vector.extract_strided_slice %133 {offsets = [1, 0], sizes = [8, 64], strides = [1, 1]} : vector<10x64xf32> to vector<8x64xf32>
    %c1_77 = arith.constant 1 : index
    %c0_78 = arith.constant 0 : index
    %c0_79 = arith.constant 0 : index
    %141 = vector.load %arg6[%c1_77, %c0_78, %c0_79] : memref<3x64x32xf32, #tpu.memory_space<vmem>>, vector<1x64x32xf32>
    %142 = vector.shape_cast %141 : vector<1x64x32xf32> to vector<64x32xf32>
    %cst_80 = arith.constant dense<0.000000e+00> : vector<8x32xf32>
    %143 = tpu.matmul %140, %142, %cst_80 {dimension_numbers = #tpu.dot_dimension_numbers<[1], [0], [0], [1], [0, 0, 1, 1], [], []>} : vector<8x64xf32>, vector<64x32xf32>, vector<8x32xf32> -> vector<8x32xf32>
    %144 = arith.addf %139, %143 : vector<8x32xf32>
    %145 = vector.extract_strided_slice %133 {offsets = [2, 0], sizes = [8, 64], strides = [1, 1]} : vector<10x64xf32> to vector<8x64xf32>
    %c2_81 = arith.constant 2 : index
    %c0_82 = arith.constant 0 : index
    %c0_83 = arith.constant 0 : index
    %146 = vector.load %arg6[%c2_81, %c0_82, %c0_83] : memref<3x64x32xf32, #tpu.memory_space<vmem>>, vector<1x64x32xf32>
    %147 = vector.shape_cast %146 : vector<1x64x32xf32> to vector<64x32xf32>
    %cst_84 = arith.constant dense<0.000000e+00> : vector<8x32xf32>
    %148 = tpu.matmul %145, %147, %cst_84 {dimension_numbers = #tpu.dot_dimension_numbers<[1], [0], [0], [1], [0, 0, 1, 1], [], []>} : vector<8x64xf32>, vector<64x32xf32>, vector<8x32xf32> -> vector<8x32xf32>
    %149 = arith.addf %144, %148 : vector<8x32xf32>
    %c0_85 = arith.constant 0 : index
    %c0_86 = arith.constant 0 : index
    %150 = vector.load %arg7[%c0_85, %c0_86] : memref<1x32xf32, #tpu.memory_space<vmem>>, vector<1x32xf32>
    %151 = vector.broadcast %150 : vector<1x32xf32> to vector<8x32xf32>
    %152 = arith.addf %149, %151 : vector<8x32xf32>
    %cst_87 = arith.constant 0.000000e+00 : f32
    %153 = vector.broadcast %cst_87 : f32 to vector<8x32xf32>
    %154 = arith.maximumf %152, %153 : vector<8x32xf32>
    %155 = vector.extract_strided_slice %154 {offsets = [0, 0], sizes = [7, 32], strides = [1, 1]} : vector<8x32xf32> to vector<7x32xf32>
    %156 = vector.extract_strided_slice %154 {offsets = [1, 0], sizes = [7, 32], strides = [1, 1]} : vector<8x32xf32> to vector<7x32xf32>
    %157 = arith.maximumf %155, %156 : vector<7x32xf32>
    %158 = tpu.iota {dimensions = array<i32: 0>} : vector<4x7xi32>
    %159 = tpu.iota {dimensions = array<i32: 1>} : vector<4x7xi32>
    %c2_i32 = arith.constant 2 : i32
    %160 = vector.broadcast %c2_i32 : i32 to vector<4x7xi32>
    %161 = arith.muli %160, %158 : vector<4x7xi32>
    %162 = arith.cmpi eq, %159, %161 : vector<4x7xi32>
    %163 = arith.extui %162 : vector<4x7xi1> to vector<4x7xi32>
    %164 = arith.sitofp %163 : vector<4x7xi32> to vector<4x7xf32>
    %cst_88 = arith.constant dense<0.000000e+00> : vector<4x32xf32>
    %165 = tpu.matmul %164, %157, %cst_88 {dimension_numbers = #tpu.dot_dimension_numbers<[1], [0], [0], [1], [0, 0, 1, 1], [], []>} : vector<4x7xf32>, vector<7x32xf32>, vector<4x32xf32> -> vector<4x32xf32>
    %cst_89 = arith.constant 0.000000e+00 : f32
    %166 = vector.broadcast %cst_89 : f32 to vector<4x32xf32>
    %c0_90 = arith.constant 0 : index
    %c0_91 = arith.constant 0 : index
    %c0_92 = arith.constant 0 : index
    %167 = vector.load %arg8[%c0_90, %c0_91, %c0_92] : memref<1x32x32xf32, #tpu.memory_space<vmem>>, vector<1x32x32xf32>
    %168 = vector.shape_cast %167 : vector<1x32x32xf32> to vector<32x32xf32>
    %cst_93 = arith.constant dense<0.000000e+00> : vector<4x32xf32>
    %169 = tpu.matmul %165, %168, %cst_93 {dimension_numbers = #tpu.dot_dimension_numbers<[1], [0], [0], [1], [0, 0, 1, 1], [], []>} : vector<4x32xf32>, vector<32x32xf32>, vector<4x32xf32> -> vector<4x32xf32>
    %170 = arith.addf %166, %169 : vector<4x32xf32>
    %c0_94 = arith.constant 0 : index
    %c0_95 = arith.constant 0 : index
    %171 = vector.load %arg9[%c0_94, %c0_95] : memref<1x32xf32, #tpu.memory_space<vmem>>, vector<1x32xf32>
    %172 = vector.broadcast %171 : vector<1x32xf32> to vector<4x32xf32>
    %173 = arith.addf %170, %172 : vector<4x32xf32>
    %cst_96 = arith.constant 0.000000e+00 : f32
    %174 = vector.broadcast %cst_96 : f32 to vector<4x32xf32>
    %175 = arith.maximumf %173, %174 : vector<4x32xf32>
    %cst_97 = arith.constant dense<0.000000e+00> : vector<32xf32>
    %176 = vector.multi_reduction <add>, %175, %cst_97 [0] : vector<4x32xf32> to vector<32xf32>
    %177 = vector.shape_cast %176 : vector<32xf32> to vector<1x32xf32>
    %cst_98 = arith.constant 4.000000e+00 : f32
    %178 = vector.broadcast %cst_98 : f32 to vector<1x32xf32>
    %179 = arith.divf %177, %178 : vector<1x32xf32>
    %180 = vector.broadcast %179 : vector<1x32xf32> to vector<4x32xf32>
    %181 = arith.addf %175, %180 : vector<4x32xf32>
    %c0_99 = arith.constant 0 : index
    %c0_100 = arith.constant 0 : index
    %182 = vector.load %arg10[%c0_99, %c0_100] : memref<1x32xf32, #tpu.memory_space<vmem>>, vector<1x32xf32>
    %183 = vector.broadcast %182 : vector<1x32xf32> to vector<4x32xf32>
    %184 = arith.mulf %181, %183 : vector<4x32xf32>
    %c0_101 = arith.constant 0 : index
    %c0_102 = arith.constant 0 : index
    %185 = vector.load %arg11[%c0_101, %c0_102] : memref<1x32xf32, #tpu.memory_space<vmem>>, vector<1x32xf32>
    %186 = vector.broadcast %185 : vector<1x32xf32> to vector<4x32xf32>
    %187 = arith.addf %184, %186 : vector<4x32xf32>
    %cst_103 = arith.constant 0.000000e+00 : f32
    %188 = vector.broadcast %cst_103 : f32 to vector<4x32xf32>
    %189 = arith.maximumf %187, %188 : vector<4x32xf32>
    %cst_104 = arith.constant 0.000000e+00 : f32
    %190 = vector.broadcast %cst_104 : f32 to vector<1x32xf32>
    %c0_105 = arith.constant 0 : index
    %c0_106 = arith.constant 0 : index
    %191 = vector.load %arg29[%c0_105, %c0_106] : memref<202x128xf32, #tpu.memory_space<vmem>>, vector<1x32xf32>
    tpu.vector_store %arg29[%c0_105, %c0_106], %190 {strides = array<i32>} : memref<202x128xf32, #tpu.memory_space<vmem>>, vector<1x32xf32>,
    %cst_107 = arith.constant 0.000000e+00 : f32
    %192 = vector.broadcast %cst_107 : f32 to vector<1x32xf32>
    %c5_108 = arith.constant 5 : index
    %c0_109 = arith.constant 0 : index
    %193 = vector.load %arg29[%c5_108, %c0_109] : memref<202x128xf32, #tpu.memory_space<vmem>>, vector<1x32xf32>
    tpu.vector_store %arg29[%c5_108, %c0_109], %192 {strides = array<i32>} : memref<202x128xf32, #tpu.memory_space<vmem>>, vector<1x32xf32>,
    %c1_110 = arith.constant 1 : index
    %c0_111 = arith.constant 0 : index
    %194 = vector.load %arg29[%c1_110, %c0_111] : memref<202x128xf32, #tpu.memory_space<vmem>>, vector<4x32xf32>
    tpu.vector_store %arg29[%c1_110, %c0_111], %189 {strides = array<i32>} : memref<202x128xf32, #tpu.memory_space<vmem>>, vector<4x32xf32>,
    %cst_112 = arith.constant 0.000000e+00 : f32
    %195 = vector.broadcast %cst_112 : f32 to vector<4x32xf32>
    %c0_113 = arith.constant 0 : index
    %c0_114 = arith.constant 0 : index
    %196 = vector.load %arg29[%c0_113, %c0_114] : memref<202x128xf32, #tpu.memory_space<vmem>>, vector<4x32xf32>
    %c0_115 = arith.constant 0 : index
    %c0_116 = arith.constant 0 : index
    %c0_117 = arith.constant 0 : index
    %197 = vector.load %arg12[%c0_115, %c0_116, %c0_117] : memref<3x32x32xf32, #tpu.memory_space<vmem>>, vector<1x32x32xf32>
    %198 = vector.shape_cast %197 : vector<1x32x32xf32> to vector<32x32xf32>
    %cst_118 = arith.constant dense<0.000000e+00> : vector<4x32xf32>
    %199 = tpu.matmul %196, %198, %cst_118 {dimension_numbers = #tpu.dot_dimension_numbers<[1], [0], [0], [1], [0, 0, 1, 1], [], []>} : vector<4x32xf32>, vector<32x32xf32>, vector<4x32xf32> -> vector<4x32xf32>
    %200 = arith.addf %195, %199 : vector<4x32xf32>
    %c1_119 = arith.constant 1 : index
    %c0_120 = arith.constant 0 : index
    %201 = vector.load %arg29[%c1_119, %c0_120] : memref<202x128xf32, #tpu.memory_space<vmem>>, vector<4x32xf32>
    %c1_121 = arith.constant 1 : index
    %c0_122 = arith.constant 0 : index
    %c0_123 = arith.constant 0 : index
    %202 = vector.load %arg12[%c1_121, %c0_122, %c0_123] : memref<3x32x32xf32, #tpu.memory_space<vmem>>, vector<1x32x32xf32>
    %203 = vector.shape_cast %202 : vector<1x32x32xf32> to vector<32x32xf32>
    %cst_124 = arith.constant dense<0.000000e+00> : vector<4x32xf32>
    %204 = tpu.matmul %201, %203, %cst_124 {dimension_numbers = #tpu.dot_dimension_numbers<[1], [0], [0], [1], [0, 0, 1, 1], [], []>} : vector<4x32xf32>, vector<32x32xf32>, vector<4x32xf32> -> vector<4x32xf32>
    %205 = arith.addf %200, %204 : vector<4x32xf32>
    %c2_125 = arith.constant 2 : index
    %c0_126 = arith.constant 0 : index
    %206 = vector.load %arg29[%c2_125, %c0_126] : memref<202x128xf32, #tpu.memory_space<vmem>>, vector<4x32xf32>
    %c2_127 = arith.constant 2 : index
    %c0_128 = arith.constant 0 : index
    %c0_129 = arith.constant 0 : index
    %207 = vector.load %arg12[%c2_127, %c0_128, %c0_129] : memref<3x32x32xf32, #tpu.memory_space<vmem>>, vector<1x32x32xf32>
    %208 = vector.shape_cast %207 : vector<1x32x32xf32> to vector<32x32xf32>
    %cst_130 = arith.constant dense<0.000000e+00> : vector<4x32xf32>
    %209 = tpu.matmul %206, %208, %cst_130 {dimension_numbers = #tpu.dot_dimension_numbers<[1], [0], [0], [1], [0, 0, 1, 1], [], []>} : vector<4x32xf32>, vector<32x32xf32>, vector<4x32xf32> -> vector<4x32xf32>
    %210 = arith.addf %205, %209 : vector<4x32xf32>
    %211 = arith.addf %210, %165 : vector<4x32xf32>
    %c0_131 = arith.constant 0 : index
    %c0_132 = arith.constant 0 : index
    %212 = vector.load %arg13[%c0_131, %c0_132] : memref<1x32xf32, #tpu.memory_space<vmem>>, vector<1x32xf32>
    %213 = vector.broadcast %212 : vector<1x32xf32> to vector<4x32xf32>
    %214 = arith.mulf %211, %213 : vector<4x32xf32>
    %c0_133 = arith.constant 0 : index
    %c0_134 = arith.constant 0 : index
    %215 = vector.load %arg14[%c0_133, %c0_134] : memref<1x32xf32, #tpu.memory_space<vmem>>, vector<1x32xf32>
    %216 = vector.broadcast %215 : vector<1x32xf32> to vector<4x32xf32>
    %217 = arith.addf %214, %216 : vector<4x32xf32>
    %cst_135 = arith.constant 0.000000e+00 : f32
    %218 = vector.broadcast %cst_135 : f32 to vector<4x32xf32>
    %219 = arith.maximumf %217, %218 : vector<4x32xf32>
    %cst_136 = arith.constant 0.000000e+00 : f32
    %220 = vector.broadcast %cst_136 : f32 to vector<1x32xf32>
    %c0_137 = arith.constant 0 : index
    %c0_138 = arith.constant 0 : index
    %221 = vector.load %arg29[%c0_137, %c0_138] : memref<202x128xf32, #tpu.memory_space<vmem>>, vector<1x32xf32>
    tpu.vector_store %arg29[%c0_137, %c0_138], %220 {strides = array<i32>} : memref<202x128xf32, #tpu.memory_space<vmem>>, vector<1x32xf32>,
    %cst_139 = arith.constant 0.000000e+00 : f32
    %222 = vector.broadcast %cst_139 : f32 to vector<1x32xf32>
    %c5_140 = arith.constant 5 : index
    %c0_141 = arith.constant 0 : index
    %223 = vector.load %arg29[%c5_140, %c0_141] : memref<202x128xf32, #tpu.memory_space<vmem>>, vector<1x32xf32>
    tpu.vector_store %arg29[%c5_140, %c0_141], %222 {strides = array<i32>} : memref<202x128xf32, #tpu.memory_space<vmem>>, vector<1x32xf32>,
    %c1_142 = arith.constant 1 : index
    %c0_143 = arith.constant 0 : index
    %224 = vector.load %arg29[%c1_142, %c0_143] : memref<202x128xf32, #tpu.memory_space<vmem>>, vector<4x32xf32>
    tpu.vector_store %arg29[%c1_142, %c0_143], %219 {strides = array<i32>} : memref<202x128xf32, #tpu.memory_space<vmem>>, vector<4x32xf32>,
    %cst_144 = arith.constant 0.000000e+00 : f32
    %225 = vector.broadcast %cst_144 : f32 to vector<4x64xf32>
    %c0_145 = arith.constant 0 : index
    %c0_146 = arith.constant 0 : index
    %226 = vector.load %arg29[%c0_145, %c0_146] : memref<202x128xf32, #tpu.memory_space<vmem>>, vector<4x32xf32>
    %c0_147 = arith.constant 0 : index
    %c0_148 = arith.constant 0 : index
    %c0_149 = arith.constant 0 : index
    %227 = vector.load %arg15[%c0_147, %c0_148, %c0_149] : memref<3x32x64xf32, #tpu.memory_space<vmem>>, vector<1x32x64xf32>
    %228 = vector.shape_cast %227 : vector<1x32x64xf32> to vector<32x64xf32>
    %cst_150 = arith.constant dense<0.000000e+00> : vector<4x64xf32>
    %229 = tpu.matmul %226, %228, %cst_150 {dimension_numbers = #tpu.dot_dimension_numbers<[1], [0], [0], [1], [0, 0, 1, 1], [], []>} : vector<4x32xf32>, vector<32x64xf32>, vector<4x64xf32> -> vector<4x64xf32>
    %230 = arith.addf %225, %229 : vector<4x64xf32>
    %c1_151 = arith.constant 1 : index
    %c0_152 = arith.constant 0 : index
    %231 = vector.load %arg29[%c1_151, %c0_152] : memref<202x128xf32, #tpu.memory_space<vmem>>, vector<4x32xf32>
    %c1_153 = arith.constant 1 : index
    %c0_154 = arith.constant 0 : index
    %c0_155 = arith.constant 0 : index
    %232 = vector.load %arg15[%c1_153, %c0_154, %c0_155] : memref<3x32x64xf32, #tpu.memory_space<vmem>>, vector<1x32x64xf32>
    %233 = vector.shape_cast %232 : vector<1x32x64xf32> to vector<32x64xf32>
    %cst_156 = arith.constant dense<0.000000e+00> : vector<4x64xf32>
    %234 = tpu.matmul %231, %233, %cst_156 {dimension_numbers = #tpu.dot_dimension_numbers<[1], [0], [0], [1], [0, 0, 1, 1], [], []>} : vector<4x32xf32>, vector<32x64xf32>, vector<4x64xf32> -> vector<4x64xf32>
    %235 = arith.addf %230, %234 : vector<4x64xf32>
    %c2_157 = arith.constant 2 : index
    %c0_158 = arith.constant 0 : index
    %236 = vector.load %arg29[%c2_157, %c0_158] : memref<202x128xf32, #tpu.memory_space<vmem>>, vector<4x32xf32>
    %c2_159 = arith.constant 2 : index
    %c0_160 = arith.constant 0 : index
    %c0_161 = arith.constant 0 : index
    %237 = vector.load %arg15[%c2_159, %c0_160, %c0_161] : memref<3x32x64xf32, #tpu.memory_space<vmem>>, vector<1x32x64xf32>
    %238 = vector.shape_cast %237 : vector<1x32x64xf32> to vector<32x64xf32>
    %cst_162 = arith.constant dense<0.000000e+00> : vector<4x64xf32>
    %239 = tpu.matmul %236, %238, %cst_162 {dimension_numbers = #tpu.dot_dimension_numbers<[1], [0], [0], [1], [0, 0, 1, 1], [], []>} : vector<4x32xf32>, vector<32x64xf32>, vector<4x64xf32> -> vector<4x64xf32>
    %240 = arith.addf %235, %239 : vector<4x64xf32>
    %c0_163 = arith.constant 0 : index
    %c0_164 = arith.constant 0 : index
    %241 = vector.load %arg25[%c0_163, %c0_164] : memref<10x4xf32, #tpu.memory_space<vmem>>, vector<10x4xf32>
    %cst_165 = arith.constant dense<0.000000e+00> : vector<10x64xf32>
    %242 = tpu.matmul %241, %240, %cst_165 {dimension_numbers = #tpu.dot_dimension_numbers<[1], [0], [0], [1], [0, 0, 1, 1], [], []>} : vector<10x4xf32>, vector<4x64xf32>, vector<10x64xf32> -> vector<10x64xf32>
    %243 = arith.addf %242, %133 : vector<10x64xf32>
    %c0_166 = arith.constant 0 : index
    %c0_167 = arith.constant 0 : index
    %244 = vector.load %arg16[%c0_166, %c0_167] : memref<1x64xf32, #tpu.memory_space<vmem>>, vector<1x64xf32>
    %245 = vector.broadcast %244 : vector<1x64xf32> to vector<10x64xf32>
    %246 = arith.mulf %243, %245 : vector<10x64xf32>
    %c0_168 = arith.constant 0 : index
    %c0_169 = arith.constant 0 : index
    %247 = vector.load %arg17[%c0_168, %c0_169] : memref<1x64xf32, #tpu.memory_space<vmem>>, vector<1x64xf32>
    %248 = vector.broadcast %247 : vector<1x64xf32> to vector<10x64xf32>
    %249 = arith.addf %246, %248 : vector<10x64xf32>
    %cst_170 = arith.constant 0.000000e+00 : f32
    %250 = vector.broadcast %cst_170 : f32 to vector<10x64xf32>
    %251 = arith.maximumf %249, %250 : vector<10x64xf32>
    %cst_171 = arith.constant 0.000000e+00 : f32
    %252 = vector.broadcast %cst_171 : f32 to vector<1x64xf32>
    %c0_172 = arith.constant 0 : index
    %c0_173 = arith.constant 0 : index
    %253 = vector.load %arg29[%c0_172, %c0_173] : memref<202x128xf32, #tpu.memory_space<vmem>>, vector<1x64xf32>
    tpu.vector_store %arg29[%c0_172, %c0_173], %252 {strides = array<i32>} : memref<202x128xf32, #tpu.memory_space<vmem>>, vector<1x64xf32>,
    %cst_174 = arith.constant 0.000000e+00 : f32
    %254 = vector.broadcast %cst_174 : f32 to vector<1x64xf32>
    %c11_175 = arith.constant 11 : index
    %c0_176 = arith.constant 0 : index
    %255 = vector.load %arg29[%c11_175, %c0_176] : memref<202x128xf32, #tpu.memory_space<vmem>>, vector<1x64xf32>
    tpu.vector_store %arg29[%c11_175, %c0_176], %254 {strides = array<i32>} : memref<202x128xf32, #tpu.memory_space<vmem>>, vector<1x64xf32>,
    %c1_177 = arith.constant 1 : index
    %c0_178 = arith.constant 0 : index
    %256 = vector.load %arg29[%c1_177, %c0_178] : memref<202x128xf32, #tpu.memory_space<vmem>>, vector<10x64xf32>
    tpu.vector_store %arg29[%c1_177, %c0_178], %251 {strides = array<i32>} : memref<202x128xf32, #tpu.memory_space<vmem>>, vector<10x64xf32>,
    %cst_179 = arith.constant 0.000000e+00 : f32
    %257 = vector.broadcast %cst_179 : f32 to vector<10x128xf32>
    %c0_180 = arith.constant 0 : index
    %c0_181 = arith.constant 0 : index
    %258 = vector.load %arg29[%c0_180, %c0_181] : memref<202x128xf32, #tpu.memory_space<vmem>>, vector<10x64xf32>
    %c0_182 = arith.constant 0 : index
    %c0_183 = arith.constant 0 : index
    %c0_184 = arith.constant 0 : index
    %259 = vector.load %arg18[%c0_182, %c0_183, %c0_184] : memref<3x64x128xf32, #tpu.memory_space<vmem>>, vector<1x64x128xf32>
    %260 = vector.shape_cast %259 : vector<1x64x128xf32> to vector<64x128xf32>
    %cst_185 = arith.constant dense<0.000000e+00> : vector<10x128xf32>
    %261 = tpu.matmul %258, %260, %cst_185 {dimension_numbers = #tpu.dot_dimension_numbers<[1], [0], [0], [1], [0, 0, 1, 1], [], []>} : vector<10x64xf32>, vector<64x128xf32>, vector<10x128xf32> -> vector<10x128xf32>
    %262 = arith.addf %257, %261 : vector<10x128xf32>
    %c1_186 = arith.constant 1 : index
    %c0_187 = arith.constant 0 : index
    %263 = vector.load %arg29[%c1_186, %c0_187] : memref<202x128xf32, #tpu.memory_space<vmem>>, vector<10x64xf32>
    %c1_188 = arith.constant 1 : index
    %c0_189 = arith.constant 0 : index
    %c0_190 = arith.constant 0 : index
    %264 = vector.load %arg18[%c1_188, %c0_189, %c0_190] : memref<3x64x128xf32, #tpu.memory_space<vmem>>, vector<1x64x128xf32>
    %265 = vector.shape_cast %264 : vector<1x64x128xf32> to vector<64x128xf32>
    %cst_191 = arith.constant dense<0.000000e+00> : vector<10x128xf32>
    %266 = tpu.matmul %263, %265, %cst_191 {dimension_numbers = #tpu.dot_dimension_numbers<[1], [0], [0], [1], [0, 0, 1, 1], [], []>} : vector<10x64xf32>, vector<64x128xf32>, vector<10x128xf32> -> vector<10x128xf32>
    %267 = arith.addf %262, %266 : vector<10x128xf32>
    %c2_192 = arith.constant 2 : index
    %c0_193 = arith.constant 0 : index
    %268 = vector.load %arg29[%c2_192, %c0_193] : memref<202x128xf32, #tpu.memory_space<vmem>>, vector<10x64xf32>
    %c2_194 = arith.constant 2 : index
    %c0_195 = arith.constant 0 : index
    %c0_196 = arith.constant 0 : index
    %269 = vector.load %arg18[%c2_194, %c0_195, %c0_196] : memref<3x64x128xf32, #tpu.memory_space<vmem>>, vector<1x64x128xf32>
    %270 = vector.shape_cast %269 : vector<1x64x128xf32> to vector<64x128xf32>
    %cst_197 = arith.constant dense<0.000000e+00> : vector<10x128xf32>
    %271 = tpu.matmul %268, %270, %cst_197 {dimension_numbers = #tpu.dot_dimension_numbers<[1], [0], [0], [1], [0, 0, 1, 1], [], []>} : vector<10x64xf32>, vector<64x128xf32>, vector<10x128xf32> -> vector<10x128xf32>
    %272 = arith.addf %267, %271 : vector<10x128xf32>
    %c0_198 = arith.constant 0 : index
    %c0_199 = arith.constant 0 : index
    %273 = vector.load %arg26[%c0_198, %c0_199] : memref<47x10xf32, #tpu.memory_space<vmem>>, vector<47x10xf32>
    %cst_200 = arith.constant dense<0.000000e+00> : vector<47x128xf32>
    %274 = tpu.matmul %273, %272, %cst_200 {dimension_numbers = #tpu.dot_dimension_numbers<[1], [0], [0], [1], [0, 0, 1, 1], [], []>} : vector<47x10xf32>, vector<10x128xf32>, vector<47x128xf32> -> vector<47x128xf32>
    %275 = arith.addf %274, %87 : vector<47x128xf32>
    %c0_201 = arith.constant 0 : index
    %c0_202 = arith.constant 0 : index
    %276 = vector.load %arg19[%c0_201, %c0_202] : memref<1x128xf32, #tpu.memory_space<vmem>>, vector<1x128xf32>
    %277 = vector.broadcast %276 : vector<1x128xf32> to vector<47x128xf32>
    %278 = arith.mulf %275, %277 : vector<47x128xf32>
    %c0_203 = arith.constant 0 : index
    %c0_204 = arith.constant 0 : index
    %279 = vector.load %arg20[%c0_203, %c0_204] : memref<1x128xf32, #tpu.memory_space<vmem>>, vector<1x128xf32>
    %280 = vector.broadcast %279 : vector<1x128xf32> to vector<47x128xf32>
    %281 = arith.addf %278, %280 : vector<47x128xf32>
    %cst_205 = arith.constant 0.000000e+00 : f32
    %282 = vector.broadcast %cst_205 : f32 to vector<47x128xf32>
    %283 = arith.maximumf %281, %282 : vector<47x128xf32>
    %cst_206 = arith.constant 0.000000e+00 : f32
    %284 = vector.broadcast %cst_206 : f32 to vector<1x128xf32>
    %c0_207 = arith.constant 0 : index
    %c0_208 = arith.constant 0 : index
    %285 = vector.load %arg29[%c0_207, %c0_208] : memref<202x128xf32, #tpu.memory_space<vmem>>, vector<1x128xf32>
    tpu.vector_store %arg29[%c0_207, %c0_208], %284 {strides = array<i32>} : memref<202x128xf32, #tpu.memory_space<vmem>>, vector<1x128xf32>,
    %cst_209 = arith.constant 0.000000e+00 : f32
    %286 = vector.broadcast %cst_209 : f32 to vector<1x128xf32>
    %c48 = arith.constant 48 : index
    %c0_210 = arith.constant 0 : index
    %287 = vector.load %arg29[%c48, %c0_210] : memref<202x128xf32, #tpu.memory_space<vmem>>, vector<1x128xf32>
    tpu.vector_store %arg29[%c48, %c0_210], %286 {strides = array<i32>} : memref<202x128xf32, #tpu.memory_space<vmem>>, vector<1x128xf32>,
    %c1_211 = arith.constant 1 : index
    %c0_212 = arith.constant 0 : index
    %288 = vector.load %arg29[%c1_211, %c0_212] : memref<202x128xf32, #tpu.memory_space<vmem>>, vector<47x128xf32>
    tpu.vector_store %arg29[%c1_211, %c0_212], %283 {strides = array<i32>} : memref<202x128xf32, #tpu.memory_space<vmem>>, vector<47x128xf32>,
    %cst_213 = arith.constant 0.000000e+00 : f32
    %289 = vector.broadcast %cst_213 : f32 to vector<47x4xf32>
    %c0_214 = arith.constant 0 : index
    %c0_215 = arith.constant 0 : index
    %290 = vector.load %arg29[%c0_214, %c0_215] : memref<202x128xf32, #tpu.memory_space<vmem>>, vector<47x128xf32>
    %c0_216 = arith.constant 0 : index
    %c0_217 = arith.constant 0 : index
    %c0_218 = arith.constant 0 : index
    %291 = vector.load %arg21[%c0_216, %c0_217, %c0_218] : memref<3x128x4xf32, #tpu.memory_space<vmem>>, vector<1x128x4xf32>
    %292 = vector.shape_cast %291 : vector<1x128x4xf32> to vector<128x4xf32>
    %cst_219 = arith.constant dense<0.000000e+00> : vector<47x4xf32>
    %293 = tpu.matmul %290, %292, %cst_219 {dimension_numbers = #tpu.dot_dimension_numbers<[1], [0], [0], [1], [0, 0, 1, 1], [], []>} : vector<47x128xf32>, vector<128x4xf32>, vector<47x4xf32> -> vector<47x4xf32>
    %294 = arith.addf %289, %293 : vector<47x4xf32>
    %c1_220 = arith.constant 1 : index
    %c0_221 = arith.constant 0 : index
    %295 = vector.load %arg29[%c1_220, %c0_221] : memref<202x128xf32, #tpu.memory_space<vmem>>, vector<47x128xf32>
    %c1_222 = arith.constant 1 : index
    %c0_223 = arith.constant 0 : index
    %c0_224 = arith.constant 0 : index
    %296 = vector.load %arg21[%c1_222, %c0_223, %c0_224] : memref<3x128x4xf32, #tpu.memory_space<vmem>>, vector<1x128x4xf32>
    %297 = vector.shape_cast %296 : vector<1x128x4xf32> to vector<128x4xf32>
    %cst_225 = arith.constant dense<0.000000e+00> : vector<47x4xf32>
    %298 = tpu.matmul %295, %297, %cst_225 {dimension_numbers = #tpu.dot_dimension_numbers<[1], [0], [0], [1], [0, 0, 1, 1], [], []>} : vector<47x128xf32>, vector<128x4xf32>, vector<47x4xf32> -> vector<47x4xf32>
    %299 = arith.addf %294, %298 : vector<47x4xf32>
    %c2_226 = arith.constant 2 : index
    %c0_227 = arith.constant 0 : index
    %300 = vector.load %arg29[%c2_226, %c0_227] : memref<202x128xf32, #tpu.memory_space<vmem>>, vector<47x128xf32>
    %c2_228 = arith.constant 2 : index
    %c0_229 = arith.constant 0 : index
    %c0_230 = arith.constant 0 : index
    %301 = vector.load %arg21[%c2_228, %c0_229, %c0_230] : memref<3x128x4xf32, #tpu.memory_space<vmem>>, vector<1x128x4xf32>
    %302 = vector.shape_cast %301 : vector<1x128x4xf32> to vector<128x4xf32>
    %cst_231 = arith.constant dense<0.000000e+00> : vector<47x4xf32>
    %303 = tpu.matmul %300, %302, %cst_231 {dimension_numbers = #tpu.dot_dimension_numbers<[1], [0], [0], [1], [0, 0, 1, 1], [], []>} : vector<47x128xf32>, vector<128x4xf32>, vector<47x4xf32> -> vector<47x4xf32>
    %304 = arith.addf %299, %303 : vector<47x4xf32>
    %c0_232 = arith.constant 0 : index
    %c0_233 = arith.constant 0 : index
    %305 = vector.load %arg27[%c0_232, %c0_233] : memref<200x47xf32, #tpu.memory_space<vmem>>, vector<200x47xf32>
    %cst_234 = arith.constant dense<0.000000e+00> : vector<200x4xf32>
    %306 = tpu.matmul %305, %304, %cst_234 {dimension_numbers = #tpu.dot_dimension_numbers<[1], [0], [0], [1], [0, 0, 1, 1], [], []>} : vector<200x47xf32>, vector<47x4xf32>, vector<200x4xf32> -> vector<200x4xf32>
    %307 = arith.addf %306, %1 : vector<200x4xf32>
    %c0_235 = arith.constant 0 : index
    %c0_236 = arith.constant 0 : index
    %308 = vector.load %arg22[%c0_235, %c0_236] : memref<1x4xf32, #tpu.memory_space<vmem>>, vector<1x4xf32>
    %309 = vector.broadcast %308 : vector<1x4xf32> to vector<200x4xf32>
    %310 = arith.mulf %307, %309 : vector<200x4xf32>
    %c0_237 = arith.constant 0 : index
    %c0_238 = arith.constant 0 : index
    %311 = vector.load %arg23[%c0_237, %c0_238] : memref<1x4xf32, #tpu.memory_space<vmem>>, vector<1x4xf32>
    %312 = vector.broadcast %311 : vector<1x4xf32> to vector<200x4xf32>
    %313 = arith.addf %310, %312 : vector<200x4xf32>
    %cst_239 = arith.constant 0.000000e+00 : f32
    %314 = vector.broadcast %cst_239 : f32 to vector<200x4xf32>
    %315 = arith.maximumf %313, %314 : vector<200x4xf32>
    %cst_240 = arith.constant 0.000000e+00 : f32
    %316 = vector.broadcast %cst_240 : f32 to vector<1x4xf32>
    %c0_241 = arith.constant 0 : index
    %c0_242 = arith.constant 0 : index
    %317 = vector.load %arg29[%c0_241, %c0_242] : memref<202x128xf32, #tpu.memory_space<vmem>>, vector<1x4xf32>
    tpu.vector_store %arg29[%c0_241, %c0_242], %316 {strides = array<i32>} : memref<202x128xf32, #tpu.memory_space<vmem>>, vector<1x4xf32>,
    %cst_243 = arith.constant 0.000000e+00 : f32
    %318 = vector.broadcast %cst_243 : f32 to vector<1x4xf32>
    %c201 = arith.constant 201 : index
    %c0_244 = arith.constant 0 : index
    %319 = vector.load %arg29[%c201, %c0_244] : memref<202x128xf32, #tpu.memory_space<vmem>>, vector<1x4xf32>
    tpu.vector_store %arg29[%c201, %c0_244], %318 {strides = array<i32>} : memref<202x128xf32, #tpu.memory_space<vmem>>, vector<1x4xf32>,
    %c1_245 = arith.constant 1 : index
    %c0_246 = arith.constant 0 : index
    %320 = vector.load %arg29[%c1_245, %c0_246] : memref<202x128xf32, #tpu.memory_space<vmem>>, vector<200x4xf32>
    tpu.vector_store %arg29[%c1_245, %c0_246], %315 {strides = array<i32>} : memref<202x128xf32, #tpu.memory_space<vmem>>, vector<200x4xf32>,
    %cst_247 = arith.constant 0.000000e+00 : f32
    %321 = vector.broadcast %cst_247 : f32 to vector<200x1xf32>
    %c0_248 = arith.constant 0 : index
    %c0_249 = arith.constant 0 : index
    %322 = vector.load %arg29[%c0_248, %c0_249] : memref<202x128xf32, #tpu.memory_space<vmem>>, vector<200x4xf32>
    %c0_250 = arith.constant 0 : index
    %c0_251 = arith.constant 0 : index
    %c0_252 = arith.constant 0 : index
    %323 = vector.load %arg24[%c0_250, %c0_251, %c0_252] : memref<3x4x1xf32, #tpu.memory_space<vmem>>, vector<1x4x1xf32>
    %324 = vector.shape_cast %323 : vector<1x4x1xf32> to vector<4x1xf32>
    %cst_253 = arith.constant dense<0.000000e+00> : vector<200x1xf32>
    %325 = tpu.matmul %322, %324, %cst_253 {dimension_numbers = #tpu.dot_dimension_numbers<[1], [0], [0], [1], [0, 0, 1, 1], [], []>} : vector<200x4xf32>, vector<4x1xf32>, vector<200x1xf32> -> vector<200x1xf32>
    %326 = arith.addf %321, %325 : vector<200x1xf32>
    %c1_254 = arith.constant 1 : index
    %c0_255 = arith.constant 0 : index
    %327 = vector.load %arg29[%c1_254, %c0_255] : memref<202x128xf32, #tpu.memory_space<vmem>>, vector<200x4xf32>
    %c1_256 = arith.constant 1 : index
    %c0_257 = arith.constant 0 : index
    %c0_258 = arith.constant 0 : index
    %328 = vector.load %arg24[%c1_256, %c0_257, %c0_258] : memref<3x4x1xf32, #tpu.memory_space<vmem>>, vector<1x4x1xf32>
    %329 = vector.shape_cast %328 : vector<1x4x1xf32> to vector<4x1xf32>
    %cst_259 = arith.constant dense<0.000000e+00> : vector<200x1xf32>
    %330 = tpu.matmul %327, %329, %cst_259 {dimension_numbers = #tpu.dot_dimension_numbers<[1], [0], [0], [1], [0, 0, 1, 1], [], []>} : vector<200x4xf32>, vector<4x1xf32>, vector<200x1xf32> -> vector<200x1xf32>
    %331 = arith.addf %326, %330 : vector<200x1xf32>
    %c2_260 = arith.constant 2 : index
    %c0_261 = arith.constant 0 : index
    %332 = vector.load %arg29[%c2_260, %c0_261] : memref<202x128xf32, #tpu.memory_space<vmem>>, vector<200x4xf32>
    %c2_262 = arith.constant 2 : index
    %c0_263 = arith.constant 0 : index
    %c0_264 = arith.constant 0 : index
    %333 = vector.load %arg24[%c2_262, %c0_263, %c0_264] : memref<3x4x1xf32, #tpu.memory_space<vmem>>, vector<1x4x1xf32>
    %334 = vector.shape_cast %333 : vector<1x4x1xf32> to vector<4x1xf32>
    %cst_265 = arith.constant dense<0.000000e+00> : vector<200x1xf32>
    %335 = tpu.matmul %332, %334, %cst_265 {dimension_numbers = #tpu.dot_dimension_numbers<[1], [0], [0], [1], [0, 0, 1, 1], [], []>} : vector<200x4xf32>, vector<4x1xf32>, vector<200x1xf32> -> vector<200x1xf32>
    %336 = arith.addf %331, %335 : vector<200x1xf32>
    %337 = arith.negf %336 : vector<200x1xf32>
    %338 = math.exp %337 : vector<200x1xf32>
    %cst_266 = arith.constant 1.000000e+00 : f32
    %339 = vector.broadcast %cst_266 : f32 to vector<200x1xf32>
    %340 = arith.addf %339, %338 : vector<200x1xf32>
    %341 = arith.divf %339, %340 : vector<200x1xf32>
    %c0_267 = arith.constant 0 : index
    %c0_268 = arith.constant 0 : index
    %c0_269 = arith.constant 0 : index
    %342 = vector.load %arg28[%c0_267, %c0_268, %c0_269] : memref<1x200x1xf32, #tpu.memory_space<vmem>>, vector<1x200x1xf32>
    %343 = vector.shape_cast %342 : vector<1x200x1xf32> to vector<200x1xf32>
    %344 = vector.shape_cast %341 : vector<200x1xf32> to vector<1x200x1xf32>
    tpu.vector_store %arg28[%c0_267, %c0_268, %c0_269], %344 {strides = array<i32>} : memref<1x200x1xf32, #tpu.memory_space<vmem>>, vector<1x200x1xf32>,
    return
  }
  func.func @transform_0(%arg0: i32) -> (i32, i32, i32) {
    %c0_i32 = arith.constant 0 : i32
    %c0_i32_0 = arith.constant 0 : i32
    %c0_i32_1 = arith.constant 0 : i32
    return %arg0, %c0_i32, %c0_i32_0 : i32, i32, i32
  }
  func.func @transform_1(%arg0: i32) -> (i32, i32, i32) {
    %c0_i32 = arith.constant 0 : i32
    %c0_i32_0 = arith.constant 0 : i32
    %c0_i32_1 = arith.constant 0 : i32
    %c0_i32_2 = arith.constant 0 : i32
    return %c0_i32, %c0_i32_0, %c0_i32_1 : i32, i32, i32
  }
  func.func @transform_2(%arg0: i32) -> (i32, i32) {
    %c0_i32 = arith.constant 0 : i32
    %c0_i32_0 = arith.constant 0 : i32
    %c0_i32_1 = arith.constant 0 : i32
    return %c0_i32, %c0_i32_0 : i32, i32
  }
  func.func @transform_3(%arg0: i32) -> (i32, i32, i32) {
    %c0_i32 = arith.constant 0 : i32
    %c0_i32_0 = arith.constant 0 : i32
    %c0_i32_1 = arith.constant 0 : i32
    %c0_i32_2 = arith.constant 0 : i32
    return %c0_i32, %c0_i32_0, %c0_i32_1 : i32, i32, i32
  }
  func.func @transform_4(%arg0: i32) -> (i32, i32) {
    %c0_i32 = arith.constant 0 : i32
    %c0_i32_0 = arith.constant 0 : i32
    %c0_i32_1 = arith.constant 0 : i32
    return %c0_i32, %c0_i32_0 : i32, i32
  }
  func.func @transform_5(%arg0: i32) -> (i32, i32, i32) {
    %c0_i32 = arith.constant 0 : i32
    %c0_i32_0 = arith.constant 0 : i32
    %c0_i32_1 = arith.constant 0 : i32
    %c0_i32_2 = arith.constant 0 : i32
    return %c0_i32, %c0_i32_0, %c0_i32_1 : i32, i32, i32
  }
  func.func @transform_6(%arg0: i32) -> (i32, i32) {
    %c0_i32 = arith.constant 0 : i32
    %c0_i32_0 = arith.constant 0 : i32
    %c0_i32_1 = arith.constant 0 : i32
    return %c0_i32, %c0_i32_0 : i32, i32
  }
  func.func @transform_7(%arg0: i32) -> (i32, i32, i32) {
    %c0_i32 = arith.constant 0 : i32
    %c0_i32_0 = arith.constant 0 : i32
    %c0_i32_1 = arith.constant 0 : i32
    %c0_i32_2 = arith.constant 0 : i32
    return %c0_i32, %c0_i32_0, %c0_i32_1 : i32, i32, i32
  }
  func.func @transform_8(%arg0: i32) -> (i32, i32) {
    %c0_i32 = arith.constant 0 : i32
    %c0_i32_0 = arith.constant 0 : i32
    %c0_i32_1 = arith.constant 0 : i32
    return %c0_i32, %c0_i32_0 : i32, i32
  }
  func.func @transform_9(%arg0: i32) -> (i32, i32) {
    %c0_i32 = arith.constant 0 : i32
    %c0_i32_0 = arith.constant 0 : i32
    %c0_i32_1 = arith.constant 0 : i32
    return %c0_i32, %c0_i32_0 : i32, i32
  }
  func.func @transform_10(%arg0: i32) -> (i32, i32) {
    %c0_i32 = arith.constant 0 : i32
    %c0_i32_0 = arith.constant 0 : i32
    %c0_i32_1 = arith.constant 0 : i32
    return %c0_i32, %c0_i32_0 : i32, i32
  }
  func.func @transform_11(%arg0: i32) -> (i32, i32, i32) {
    %c0_i32 = arith.constant 0 : i32
    %c0_i32_0 = arith.constant 0 : i32
    %c0_i32_1 = arith.constant 0 : i32
    %c0_i32_2 = arith.constant 0 : i32
    return %c0_i32, %c0_i32_0, %c0_i32_1 : i32, i32, i32
  }
  func.func @transform_12(%arg0: i32) -> (i32, i32) {
    %c0_i32 = arith.constant 0 : i32
    %c0_i32_0 = arith.constant 0 : i32
    %c0_i32_1 = arith.constant 0 : i32
    return %c0_i32, %c0_i32_0 : i32, i32
  }
  func.func @transform_13(%arg0: i32) -> (i32, i32) {
    %c0_i32 = arith.constant 0 : i32
    %c0_i32_0 = arith.constant 0 : i32
    %c0_i32_1 = arith.constant 0 : i32
    return %c0_i32, %c0_i32_0 : i32, i32
  }
  func.func @transform_14(%arg0: i32) -> (i32, i32, i32) {
    %c0_i32 = arith.constant 0 : i32
    %c0_i32_0 = arith.constant 0 : i32
    %c0_i32_1 = arith.constant 0 : i32
    %c0_i32_2 = arith.constant 0 : i32
    return %c0_i32, %c0_i32_0, %c0_i32_1 : i32, i32, i32
  }
  func.func @transform_15(%arg0: i32) -> (i32, i32) {
    %c0_i32 = arith.constant 0 : i32
    %c0_i32_0 = arith.constant 0 : i32
    %c0_i32_1 = arith.constant 0 : i32
    return %c0_i32, %c0_i32_0 : i32, i32
  }
  func.func @transform_16(%arg0: i32) -> (i32, i32) {
    %c0_i32 = arith.constant 0 : i32
    %c0_i32_0 = arith.constant 0 : i32
    %c0_i32_1 = arith.constant 0 : i32
    return %c0_i32, %c0_i32_0 : i32, i32
  }
  func.func @transform_17(%arg0: i32) -> (i32, i32, i32) {
    %c0_i32 = arith.constant 0 : i32
    %c0_i32_0 = arith.constant 0 : i32
    %c0_i32_1 = arith.constant 0 : i32
    %c0_i32_2 = arith.constant 0 : i32
    return %c0_i32, %c0_i32_0, %c0_i32_1 : i32, i32, i32
  }
  func.func @transform_18(%arg0: i32) -> (i32, i32) {
    %c0_i32 = arith.constant 0 : i32
    %c0_i32_0 = arith.constant 0 : i32
    %c0_i32_1 = arith.constant 0 : i32
    return %c0_i32, %c0_i32_0 : i32, i32
  }
  func.func @transform_19(%arg0: i32) -> (i32, i32) {
    %c0_i32 = arith.constant 0 : i32
    %c0_i32_0 = arith.constant 0 : i32
    %c0_i32_1 = arith.constant 0 : i32
    return %c0_i32, %c0_i32_0 : i32, i32
  }
  func.func @transform_20(%arg0: i32) -> (i32, i32, i32) {
    %c0_i32 = arith.constant 0 : i32
    %c0_i32_0 = arith.constant 0 : i32
    %c0_i32_1 = arith.constant 0 : i32
    %c0_i32_2 = arith.constant 0 : i32
    return %c0_i32, %c0_i32_0, %c0_i32_1 : i32, i32, i32
  }
  func.func @transform_21(%arg0: i32) -> (i32, i32) {
    %c0_i32 = arith.constant 0 : i32
    %c0_i32_0 = arith.constant 0 : i32
    %c0_i32_1 = arith.constant 0 : i32
    return %c0_i32, %c0_i32_0 : i32, i32
  }
  func.func @transform_22(%arg0: i32) -> (i32, i32) {
    %c0_i32 = arith.constant 0 : i32
    %c0_i32_0 = arith.constant 0 : i32
    %c0_i32_1 = arith.constant 0 : i32
    return %c0_i32, %c0_i32_0 : i32, i32
  }
  func.func @transform_23(%arg0: i32) -> (i32, i32, i32) {
    %c0_i32 = arith.constant 0 : i32
    %c0_i32_0 = arith.constant 0 : i32
    %c0_i32_1 = arith.constant 0 : i32
    %c0_i32_2 = arith.constant 0 : i32
    return %c0_i32, %c0_i32_0, %c0_i32_1 : i32, i32, i32
  }
  func.func @transform_24(%arg0: i32) -> (i32, i32) {
    %c0_i32 = arith.constant 0 : i32
    %c0_i32_0 = arith.constant 0 : i32
    %c0_i32_1 = arith.constant 0 : i32
    return %c0_i32, %c0_i32_0 : i32, i32
  }
  func.func @transform_25(%arg0: i32) -> (i32, i32) {
    %c0_i32 = arith.constant 0 : i32
    %c0_i32_0 = arith.constant 0 : i32
    %c0_i32_1 = arith.constant 0 : i32
    return %c0_i32, %c0_i32_0 : i32, i32
  }
  func.func @transform_26(%arg0: i32) -> (i32, i32) {
    %c0_i32 = arith.constant 0 : i32
    %c0_i32_0 = arith.constant 0 : i32
    %c0_i32_1 = arith.constant 0 : i32
    return %c0_i32, %c0_i32_0 : i32, i32
  }
  func.func @transform_27(%arg0: i32) -> (i32, i32, i32) {
    %c0_i32 = arith.constant 0 : i32
    %c0_i32_0 = arith.constant 0 : i32
    %c0_i32_1 = arith.constant 0 : i32
    return %arg0, %c0_i32, %c0_i32_0 : i32, i32, i32
  }
}

</mosaic_0001>

<llo_original>
// kernel: fcn_forward.1
$region0: #{fcn_forward.1}
  #allocation0 [shape = 'u32[]', space=smem, size = 0x4, offset = 0x4, fixed_abs, tag = 'smem constant byte address 0x4 - core index']
  #allocation1 [shape = 'u32[144,128]{1,0:T(1,128)}', space=vmem, size = 0x12000, scoped, tag = 'internal scratch']
  #allocation2 [shape = 'f32[202,128]{1,0:T(8,128)}', space=vmem, size = 0x1a000, scoped, tag = 'scratch operand']
  %s0 = inlined_call_operand.vmem [shape: f32[2,200,4], index: 0, kind: input, shape index: {}]
  %s1 = inlined_call_operand.vmem [shape: f32[13,4,128], index: 1, kind: input, shape index: {}]
  %s2 = inlined_call_operand.vmem [shape: f32[1,128], index: 2, kind: input, shape index: {}]
  %s3 = inlined_call_operand.vmem [shape: f32[5,128,64], index: 3, kind: input, shape index: {}]
  %s4 = inlined_call_operand.vmem [shape: f32[1,64], index: 4, kind: input, shape index: {}]
  %s5 = inlined_call_operand.vmem [shape: f32[3,64,32], index: 5, kind: input, shape index: {}]
  %s6 = inlined_call_operand.vmem [shape: f32[1,32], index: 6, kind: input, shape index: {}]
  %s7 = inlined_call_operand.vmem [shape: f32[1,32,32], index: 7, kind: input, shape index: {}]
  %s8 = inlined_call_operand.vmem [shape: f32[1,32], index: 8, kind: input, shape index: {}]
  %s9 = inlined_call_operand.vmem [shape: f32[1,32], index: 9, kind: input, shape index: {}]
  %s10 = inlined_call_operand.vmem [shape: f32[1,32], index: 10, kind: input, shape index: {}]
  %s11 = inlined_call_operand.vmem [shape: f32[3,32,32], index: 11, kind: input, shape index: {}]
  %s12 = inlined_call_operand.vmem [shape: f32[1,32], index: 12, kind: input, shape index: {}]
  %s13 = inlined_call_operand.vmem [shape: f32[1,32], index: 13, kind: input, shape index: {}]
  %s14 = inlined_call_operand.vmem [shape: f32[3,32,64], index: 14, kind: input, shape index: {}]
  %s15 = inlined_call_operand.vmem [shape: f32[1,64], index: 15, kind: input, shape index: {}]
  %s16 = inlined_call_operand.vmem [shape: f32[1,64], index: 16, kind: input, shape index: {}]
  %s17 = inlined_call_operand.vmem [shape: f32[3,64,128], index: 17, kind: input, shape index: {}]
  %s18 = inlined_call_operand.vmem [shape: f32[1,128], index: 18, kind: input, shape index: {}]
  %s19 = inlined_call_operand.vmem [shape: f32[1,128], index: 19, kind: input, shape index: {}]
  %s20 = inlined_call_operand.vmem [shape: f32[3,128,4], index: 20, kind: input, shape index: {}]
  %s21 = inlined_call_operand.vmem [shape: f32[1,4], index: 21, kind: input, shape index: {}]
  %s22 = inlined_call_operand.vmem [shape: f32[1,4], index: 22, kind: input, shape index: {}]
  %s23 = inlined_call_operand.vmem [shape: f32[3,4,1], index: 23, kind: input, shape index: {}]
  %s24 = inlined_call_operand.vmem [shape: f32[10,4], index: 24, kind: input, shape index: {}]
  %s25 = inlined_call_operand.vmem [shape: f32[47,10], index: 25, kind: input, shape index: {}]
  %s26 = inlined_call_operand.vmem [shape: f32[200,47], index: 26, kind: input, shape index: {}]
  %s27 = inlined_call_operand.vmem [shape: f32[2,200,1], index: 27, kind: output, shape index: {}]
  %s28 = sld [smem:[#allocation0]]
  $region141: #{fcn_forward.1} parent=0
    _
  %s30 = ssub.s32 1, %s28
  %s31 = scalar_select 0, %s30, %s28
  loop: start=0, step=1, limit=4
  $region2: #{fcn_forward.1} parent=0 // loop_pre_header
    _
  $region3: #{fcn_forward.1} parent=0 // loop_header
    %s33 = sphi 0, %s37
    %p34 = scmp.ge.s32.totalorder %s33, 4
    %s43 = sphi 0, %s45
    %s46 = sphi 0, %s43
    %s47 = sphi 0, %s46
    %s63 = sphi 0, %s47
    %s67 = sphi 0, %s67
    %s69 = sphi 0, %s67
    %s70 = sphi 0, %s69
    %s84 = sphi 0, %s70
    %s88 = sphi 0, %s88
    %s90 = sphi 0, %s88
    %s91 = sphi 0, %s90
    %s105 = sphi 0, %s91
    %s109 = sphi 0, %s109
    %s111 = sphi 0, %s109
    %s112 = sphi 0, %s111
    %s126 = sphi 0, %s112
    %s130 = sphi 0, %s130
    %s132 = sphi 0, %s130
    %s133 = sphi 0, %s132
    %s147 = sphi 0, %s133
    %s151 = sphi 0, %s151
    %s153 = sphi 0, %s151
    %s154 = sphi 0, %s153
    %s168 = sphi 0, %s154
    %s172 = sphi 0, %s172
    %s174 = sphi 0, %s172
    %s175 = sphi 0, %s174
    %s189 = sphi 0, %s175
    %s193 = sphi 0, %s193
    %s195 = sphi 0, %s193
    %s196 = sphi 0, %s195
    %s210 = sphi 0, %s196
    %s214 = sphi 0, %s214
    %s216 = sphi 0, %s214
    %s217 = sphi 0, %s216
    %s231 = sphi 0, %s217
    %s235 = sphi 0, %s235
    %s237 = sphi 0, %s235
    %s238 = sphi 0, %s237
    %s252 = sphi 0, %s238
    %s256 = sphi 0, %s256
    %s258 = sphi 0, %s256
    %s259 = sphi 0, %s258
    %s273 = sphi 0, %s259
    %s277 = sphi 0, %s277
    %s279 = sphi 0, %s277
    %s280 = sphi 0, %s279
    %s294 = sphi 0, %s280
    %s298 = sphi 0, %s298
    %s300 = sphi 0, %s298
    %s301 = sphi 0, %s300
    %s315 = sphi 0, %s301
    %s319 = sphi 0, %s319
    %s321 = sphi 0, %s319
    %s322 = sphi 0, %s321
    %s336 = sphi 0, %s322
    %s340 = sphi 0, %s340
    %s342 = sphi 0, %s340
    %s343 = sphi 0, %s342
    %s357 = sphi 0, %s343
    %s361 = sphi 0, %s361
    %s363 = sphi 0, %s361
    %s364 = sphi 0, %s363
    %s378 = sphi 0, %s364
    %s382 = sphi 0, %s382
    %s384 = sphi 0, %s382
    %s385 = sphi 0, %s384
    %s399 = sphi 0, %s385
    %s403 = sphi 0, %s403
    %s405 = sphi 0, %s403
    %s406 = sphi 0, %s405
    %s420 = sphi 0, %s406
    %s424 = sphi 0, %s424
    %s426 = sphi 0, %s424
    %s427 = sphi 0, %s426
    %s441 = sphi 0, %s427
    %s445 = sphi 0, %s445
    %s447 = sphi 0, %s445
    %s448 = sphi 0, %s447
    %s462 = sphi 0, %s448
    %s466 = sphi 0, %s466
    %s468 = sphi 0, %s466
    %s469 = sphi 0, %s468
    %s483 = sphi 0, %s469
    %s487 = sphi 0, %s487
    %s489 = sphi 0, %s487
    %s490 = sphi 0, %s489
    %s504 = sphi 0, %s490
    %s508 = sphi 0, %s508
    %s510 = sphi 0, %s508
    %s511 = sphi 0, %s510
    %s525 = sphi 0, %s511
    %s529 = sphi 0, %s529
    %s531 = sphi 0, %s529
    %s532 = sphi 0, %s531
    %s546 = sphi 0, %s532
    %s550 = sphi 0, %s550
    %s552 = sphi 0, %s550
    %s553 = sphi 0, %s552
    %s567 = sphi 0, %s553
    %s571 = sphi 0, %s571
    %s573 = sphi 0, %s571
    %s574 = sphi 0, %s573
    %s588 = sphi 0, %s574
    %s592 = sphi 0, %s592
    %s594 = sphi 0, %s592
    %s595 = sphi 0, %s594
    %s609 = sphi 0, %s595
    %s615 = sphi 0, %s617
    %s618 = sphi 0, %s615
    %s619 = sphi 0, %s618
    %s635 = sphi 0, %s619
  $region4: #{fcn_forward.1} parent=0 // loop_header_branch
    %36 = sbr.rel (%p34) target = $region8
  $region5: #{fcn_forward.1} parent=0 // loop_body
    %s38 = ssub.s32 %s33, 1
    %s39 = ssub.s32 %s33, 2
    %s40 = sadd.s32 %s33, 1
    %s41 = ssub.s32 %s33, %s40
    %p42 = scmp.eq.s32.totalorder %s41, 0
    %s44 = sadd.s32 %s43, 1
    %s45 = scalar_select %p42, %s43, %s44
    %p48 = pneg %p42
    %p49 = scmp.eq.s32.totalorder %s33, 1
    %p50 = por %p48, %p49
    %p51 = scmp.ne.s32.totalorder %s43, %s46
    %p52 = scmp.eq.s32.totalorder %s33, 0
    %p53 = por %p51, %p52
    %p54 = scmp.ne.s32.totalorder %s43, %s46
    %p55 = scmp.eq.s32.totalorder %s38, 1
    %p56 = por %p54, %p55
    %p57 = scmp.ne.s32.totalorder %s46, %s47
    %p58 = scmp.eq.s32.totalorder %s38, 0
    %p59 = por %p57, %p58
    %p60 = scmp.ne.s32.totalorder %s46, %s47
    %p61 = scmp.eq.s32.totalorder %s39, 1
    %p62 = por %p60, %p61
    %p64 = scmp.ne.s32.totalorder %s47, %s63
    %p65 = scmp.eq.s32.totalorder %s39, 0
    %p66 = por %p64, %p65
    %s68 = sadd.s32 %s67, 1
    %p71 = scmp.eq.s32.totalorder %s33, 1
    %p72 = scmp.ne.s32.totalorder %s67, %s69
    %p73 = scmp.eq.s32.totalorder %s33, 0
    %p74 = por %p72, %p73
    %p75 = scmp.ne.s32.totalorder %s67, %s69
    %p76 = scmp.eq.s32.totalorder %s38, 1
    %p77 = por %p75, %p76
    %p78 = scmp.ne.s32.totalorder %s69, %s70
    %p79 = scmp.eq.s32.totalorder %s38, 0
    %p80 = por %p78, %p79
    %p81 = scmp.ne.s32.totalorder %s69, %s70
    %p82 = scmp.eq.s32.totalorder %s39, 1
    %p83 = por %p81, %p82
    %p85 = scmp.ne.s32.totalorder %s70, %s84
    %p86 = scmp.eq.s32.totalorder %s39, 0
    %p87 = por %p85, %p86
    %s89 = sadd.s32 %s88, 1
    %p92 = scmp.eq.s32.totalorder %s33, 1
    %p93 = scmp.ne.s32.totalorder %s88, %s90
    %p94 = scmp.eq.s32.totalorder %s33, 0
    %p95 = por %p93, %p94
    %p96 = scmp.ne.s32.totalorder %s88, %s90
    %p97 = scmp.eq.s32.totalorder %s38, 1
    %p98 = por %p96, %p97
    %p99 = scmp.ne.s32.totalorder %s90, %s91
    %p100 = scmp.eq.s32.totalorder %s38, 0
    %p101 = por %p99, %p100
    %p102 = scmp.ne.s32.totalorder %s90, %s91
    %p103 = scmp.eq.s32.totalorder %s39, 1
    %p104 = por %p102, %p103
    %p106 = scmp.ne.s32.totalorder %s91, %s105
    %p107 = scmp.eq.s32.totalorder %s39, 0
    %p108 = por %p106, %p107
    %s110 = sadd.s32 %s109, 1
    %p113 = scmp.eq.s32.totalorder %s33, 1
    %p114 = scmp.ne.s32.totalorder %s109, %s111
    %p115 = scmp.eq.s32.totalorder %s33, 0
    %p116 = por %p114, %p115
    %p117 = scmp.ne.s32.totalorder %s109, %s111
    %p118 = scmp.eq.s32.totalorder %s38, 1
    %p119 = por %p117, %p118
    %p120 = scmp.ne.s32.totalorder %s111, %s112
    %p121 = scmp.eq.s32.totalorder %s38, 0
    %p122 = por %p120, %p121
    %p123 = scmp.ne.s32.totalorder %s111, %s112
    %p124 = scmp.eq.s32.totalorder %s39, 1
    %p125 = por %p123, %p124
    %p127 = scmp.ne.s32.totalorder %s112, %s126
    %p128 = scmp.eq.s32.totalorder %s39, 0
    %p129 = por %p127, %p128
    %s131 = sadd.s32 %s130, 1
    %p134 = scmp.eq.s32.totalorder %s33, 1
    %p135 = scmp.ne.s32.totalorder %s130, %s132
    %p136 = scmp.eq.s32.totalorder %s33, 0
    %p137 = por %p135, %p136
    %p138 = scmp.ne.s32.totalorder %s130, %s132
    %p139 = scmp.eq.s32.totalorder %s38, 1
    %p140 = por %p138, %p139
    %p141 = scmp.ne.s32.totalorder %s132, %s133
    %p142 = scmp.eq.s32.totalorder %s38, 0
    %p143 = por %p141, %p142
    %p144 = scmp.ne.s32.totalorder %s132, %s133
    %p145 = scmp.eq.s32.totalorder %s39, 1
    %p146 = por %p144, %p145
    %p148 = scmp.ne.s32.totalorder %s133, %s147
    %p149 = scmp.eq.s32.totalorder %s39, 0
    %p150 = por %p148, %p149
    %s152 = sadd.s32 %s151, 1
    %p155 = scmp.eq.s32.totalorder %s33, 1
    %p156 = scmp.ne.s32.totalorder %s151, %s153
    %p157 = scmp.eq.s32.totalorder %s33, 0
    %p158 = por %p156, %p157
    %p159 = scmp.ne.s32.totalorder %s151, %s153
    %p160 = scmp.eq.s32.totalorder %s38, 1
    %p161 = por %p159, %p160
    %p162 = scmp.ne.s32.totalorder %s153, %s154
    %p163 = scmp.eq.s32.totalorder %s38, 0
    %p164 = por %p162, %p163
    %p165 = scmp.ne.s32.totalorder %s153, %s154
    %p166 = scmp.eq.s32.totalorder %s39, 1
    %p167 = por %p165, %p166
    %p169 = scmp.ne.s32.totalorder %s154, %s168
    %p170 = scmp.eq.s32.totalorder %s39, 0
    %p171 = por %p169, %p170
    %s173 = sadd.s32 %s172, 1
    %p176 = scmp.eq.s32.totalorder %s33, 1
    %p177 = scmp.ne.s32.totalorder %s172, %s174
    %p178 = scmp.eq.s32.totalorder %s33, 0
    %p179 = por %p177, %p178
    %p180 = scmp.ne.s32.totalorder %s172, %s174
    %p181 = scmp.eq.s32.totalorder %s38, 1
    %p182 = por %p180, %p181
    %p183 = scmp.ne.s32.totalorder %s174, %s175
    %p184 = scmp.eq.s32.totalorder %s38, 0
    %p185 = por %p183, %p184
    %p186 = scmp.ne.s32.totalorder %s174, %s175
    %p187 = scmp.eq.s32.totalorder %s39, 1
    %p188 = por %p186, %p187
    %p190 = scmp.ne.s32.totalorder %s175, %s189
    %p191 = scmp.eq.s32.totalorder %s39, 0
    %p192 = por %p190, %p191
    %s194 = sadd.s32 %s193, 1
    %p197 = scmp.eq.s32.totalorder %s33, 1
    %p198 = scmp.ne.s32.totalorder %s193, %s195
    %p199 = scmp.eq.s32.totalorder %s33, 0
    %p200 = por %p198, %p199
    %p201 = scmp.ne.s32.totalorder %s193, %s195
    %p202 = scmp.eq.s32.totalorder %s38, 1
    %p203 = por %p201, %p202
    %p204 = scmp.ne.s32.totalorder %s195, %s196
    %p205 = scmp.eq.s32.totalorder %s38, 0
    %p206 = por %p204, %p205
    %p207 = scmp.ne.s32.totalorder %s195, %s196
    %p208 = scmp.eq.s32.totalorder %s39, 1
    %p209 = por %p207, %p208
    %p211 = scmp.ne.s32.totalorder %s196, %s210
    %p212 = scmp.eq.s32.totalorder %s39, 0
    %p213 = por %p211, %p212
    %s215 = sadd.s32 %s214, 1
    %p218 = scmp.eq.s32.totalorder %s33, 1
    %p219 = scmp.ne.s32.totalorder %s214, %s216
    %p220 = scmp.eq.s32.totalorder %s33, 0
    %p221 = por %p219, %p220
    %p222 = scmp.ne.s32.totalorder %s214, %s216
    %p223 = scmp.eq.s32.totalorder %s38, 1
    %p224 = por %p222, %p223
    %p225 = scmp.ne.s32.totalorder %s216, %s217
    %p226 = scmp.eq.s32.totalorder %s38, 0
    %p227 = por %p225, %p226
    %p228 = scmp.ne.s32.totalorder %s216, %s217
    %p229 = scmp.eq.s32.totalorder %s39, 1
    %p230 = por %p228, %p229
    %p232 = scmp.ne.s32.totalorder %s217, %s231
    %p233 = scmp.eq.s32.totalorder %s39, 0
    %p234 = por %p232, %p233
    %s236 = sadd.s32 %s235, 1
    %p239 = scmp.eq.s32.totalorder %s33, 1
    %p240 = scmp.ne.s32.totalorder %s235, %s237
    %p241 = scmp.eq.s32.totalorder %s33, 0
    %p242 = por %p240, %p241
    %p243 = scmp.ne.s32.totalorder %s235, %s237
    %p244 = scmp.eq.s32.totalorder %s38, 1
    %p245 = por %p243, %p244
    %p246 = scmp.ne.s32.totalorder %s237, %s238
    %p247 = scmp.eq.s32.totalorder %s38, 0
    %p248 = por %p246, %p247
    %p249 = scmp.ne.s32.totalorder %s237, %s238
    %p250 = scmp.eq.s32.totalorder %s39, 1
    %p251 = por %p249, %p250
    %p253 = scmp.ne.s32.totalorder %s238, %s252
    %p254 = scmp.eq.s32.totalorder %s39, 0
    %p255 = por %p253, %p254
    %s257 = sadd.s32 %s256, 1
    %p260 = scmp.eq.s32.totalorder %s33, 1
    %p261 = scmp.ne.s32.totalorder %s256, %s258
    %p262 = scmp.eq.s32.totalorder %s33, 0
    %p263 = por %p261, %p262
    %p264 = scmp.ne.s32.totalorder %s256, %s258
    %p265 = scmp.eq.s32.totalorder %s38, 1
    %p266 = por %p264, %p265
    %p267 = scmp.ne.s32.totalorder %s258, %s259
    %p268 = scmp.eq.s32.totalorder %s38, 0
    %p269 = por %p267, %p268
    %p270 = scmp.ne.s32.totalorder %s258, %s259
    %p271 = scmp.eq.s32.totalorder %s39, 1
    %p272 = por %p270, %p271
    %p274 = scmp.ne.s32.totalorder %s259, %s273
    %p275 = scmp.eq.s32.totalorder %s39, 0
    %p276 = por %p274, %p275
    %s278 = sadd.s32 %s277, 1
    %p281 = scmp.eq.s32.totalorder %s33, 1
    %p282 = scmp.ne.s32.totalorder %s277, %s279
    %p283 = scmp.eq.s32.totalorder %s33, 0
    %p284 = por %p282, %p283
    %p285 = scmp.ne.s32.totalorder %s277, %s279
    %p286 = scmp.eq.s32.totalorder %s38, 1
    %p287 = por %p285, %p286
    %p288 = scmp.ne.s32.totalorder %s279, %s280
    %p289 = scmp.eq.s32.totalorder %s38, 0
    %p290 = por %p288, %p289
    %p291 = scmp.ne.s32.totalorder %s279, %s280
    %p292 = scmp.eq.s32.totalorder %s39, 1
    %p293 = por %p291, %p292
    %p295 = scmp.ne.s32.totalorder %s280, %s294
    %p296 = scmp.eq.s32.totalorder %s39, 0
    %p297 = por %p295, %p296
    %s299 = sadd.s32 %s298, 1
    %p302 = scmp.eq.s32.totalorder %s33, 1
    %p303 = scmp.ne.s32.totalorder %s298, %s300
    %p304 = scmp.eq.s32.totalorder %s33, 0
    %p305 = por %p303, %p304
    %p306 = scmp.ne.s32.totalorder %s298, %s300
    %p307 = scmp.eq.s32.totalorder %s38, 1
    %p308 = por %p306, %p307
    %p309 = scmp.ne.s32.totalorder %s300, %s301
    %p310 = scmp.eq.s32.totalorder %s38, 0
    %p311 = por %p309, %p310
    %p312 = scmp.ne.s32.totalorder %s300, %s301
    %p313 = scmp.eq.s32.totalorder %s39, 1
    %p314 = por %p312, %p313
    %p316 = scmp.ne.s32.totalorder %s301, %s315
    %p317 = scmp.eq.s32.totalorder %s39, 0
    %p318 = por %p316, %p317
    %s320 = sadd.s32 %s319, 1
    %p323 = scmp.eq.s32.totalorder %s33, 1
    %p324 = scmp.ne.s32.totalorder %s319, %s321
    %p325 = scmp.eq.s32.totalorder %s33, 0
    %p326 = por %p324, %p325
    %p327 = scmp.ne.s32.totalorder %s319, %s321
    %p328 = scmp.eq.s32.totalorder %s38, 1
    %p329 = por %p327, %p328
    %p330 = scmp.ne.s32.totalorder %s321, %s322
    %p331 = scmp.eq.s32.totalorder %s38, 0
    %p332 = por %p330, %p331
    %p333 = scmp.ne.s32.totalorder %s321, %s322
    %p334 = scmp.eq.s32.totalorder %s39, 1
    %p335 = por %p333, %p334
    %p337 = scmp.ne.s32.totalorder %s322, %s336
    %p338 = scmp.eq.s32.totalorder %s39, 0
    %p339 = por %p337, %p338
    %s341 = sadd.s32 %s340, 1
    %p344 = scmp.eq.s32.totalorder %s33, 1
    %p345 = scmp.ne.s32.totalorder %s340, %s342
    %p346 = scmp.eq.s32.totalorder %s33, 0
    %p347 = por %p345, %p346
    %p348 = scmp.ne.s32.totalorder %s340, %s342
    %p349 = scmp.eq.s32.totalorder %s38, 1
    %p350 = por %p348, %p349
    %p351 = scmp.ne.s32.totalorder %s342, %s343
    %p352 = scmp.eq.s32.totalorder %s38, 0
    %p353 = por %p351, %p352
    %p354 = scmp.ne.s32.totalorder %s342, %s343
    %p355 = scmp.eq.s32.totalorder %s39, 1
    %p356 = por %p354, %p355
    %p358 = scmp.ne.s32.totalorder %s343, %s357
    %p359 = scmp.eq.s32.totalorder %s39, 0
    %p360 = por %p358, %p359
    %s362 = sadd.s32 %s361, 1
    %p365 = scmp.eq.s32.totalorder %s33, 1
    %p366 = scmp.ne.s32.totalorder %s361, %s363
    %p367 = scmp.eq.s32.totalorder %s33, 0
    %p368 = por %p366, %p367
    %p369 = scmp.ne.s32.totalorder %s361, %s363
    %p370 = scmp.eq.s32.totalorder %s38, 1
    %p371 = por %p369, %p370
    %p372 = scmp.ne.s32.totalorder %s363, %s364
    %p373 = scmp.eq.s32.totalorder %s38, 0
    %p374 = por %p372, %p373
    %p375 = scmp.ne.s32.totalorder %s363, %s364
    %p376 = scmp.eq.s32.totalorder %s39, 1
    %p377 = por %p375, %p376
    %p379 = scmp.ne.s32.totalorder %s364, %s378
    %p380 = scmp.eq.s32.totalorder %s39, 0
    %p381 = por %p379, %p380
    %s383 = sadd.s32 %s382, 1
    %p386 = scmp.eq.s32.totalorder %s33, 1
    %p387 = scmp.ne.s32.totalorder %s382, %s384
    %p388 = scmp.eq.s32.totalorder %s33, 0
    %p389 = por %p387, %p388
    %p390 = scmp.ne.s32.totalorder %s382, %s384
    %p391 = scmp.eq.s32.totalorder %s38, 1
    %p392 = por %p390, %p391
    %p393 = scmp.ne.s32.totalorder %s384, %s385
    %p394 = scmp.eq.s32.totalorder %s38, 0
    %p395 = por %p393, %p394
    %p396 = scmp.ne.s32.totalorder %s384, %s385
    %p397 = scmp.eq.s32.totalorder %s39, 1
    %p398 = por %p396, %p397
    %p400 = scmp.ne.s32.totalorder %s385, %s399
    %p401 = scmp.eq.s32.totalorder %s39, 0
    %p402 = por %p400, %p401
    %s404 = sadd.s32 %s403, 1
    %p407 = scmp.eq.s32.totalorder %s33, 1
    %p408 = scmp.ne.s32.totalorder %s403, %s405
    %p409 = scmp.eq.s32.totalorder %s33, 0
    %p410 = por %p408, %p409
    %p411 = scmp.ne.s32.totalorder %s403, %s405
    %p412 = scmp.eq.s32.totalorder %s38, 1
    %p413 = por %p411, %p412
    %p414 = scmp.ne.s32.totalorder %s405, %s406
    %p415 = scmp.eq.s32.totalorder %s38, 0
    %p416 = por %p414, %p415
    %p417 = scmp.ne.s32.totalorder %s405, %s406
    %p418 = scmp.eq.s32.totalorder %s39, 1
    %p419 = por %p417, %p418
    %p421 = scmp.ne.s32.totalorder %s406, %s420
    %p422 = scmp.eq.s32.totalorder %s39, 0
    %p423 = por %p421, %p422
    %s425 = sadd.s32 %s424, 1
    %p428 = scmp.eq.s32.totalorder %s33, 1
    %p429 = scmp.ne.s32.totalorder %s424, %s426
    %p430 = scmp.eq.s32.totalorder %s33, 0
    %p431 = por %p429, %p430
    %p432 = scmp.ne.s32.totalorder %s424, %s426
    %p433 = scmp.eq.s32.totalorder %s38, 1
    %p434 = por %p432, %p433
    %p435 = scmp.ne.s32.totalorder %s426, %s427
    %p436 = scmp.eq.s32.totalorder %s38, 0
    %p437 = por %p435, %p436
    %p438 = scmp.ne.s32.totalorder %s426, %s427
    %p439 = scmp.eq.s32.totalorder %s39, 1
    %p440 = por %p438, %p439
    %p442 = scmp.ne.s32.totalorder %s427, %s441
    %p443 = scmp.eq.s32.totalorder %s39, 0
    %p444 = por %p442, %p443
    %s446 = sadd.s32 %s445, 1
    %p449 = scmp.eq.s32.totalorder %s33, 1
    %p450 = scmp.ne.s32.totalorder %s445, %s447
    %p451 = scmp.eq.s32.totalorder %s33, 0
    %p452 = por %p450, %p451
    %p453 = scmp.ne.s32.totalorder %s445, %s447
    %p454 = scmp.eq.s32.totalorder %s38, 1
    %p455 = por %p453, %p454
    %p456 = scmp.ne.s32.totalorder %s447, %s448
    %p457 = scmp.eq.s32.totalorder %s38, 0
    %p458 = por %p456, %p457
    %p459 = scmp.ne.s32.totalorder %s447, %s448
    %p460 = scmp.eq.s32.totalorder %s39, 1
    %p461 = por %p459, %p460
    %p463 = scmp.ne.s32.totalorder %s448, %s462
    %p464 = scmp.eq.s32.totalorder %s39, 0
    %p465 = por %p463, %p464
    %s467 = sadd.s32 %s466, 1
    %p470 = scmp.eq.s32.totalorder %s33, 1
    %p471 = scmp.ne.s32.totalorder %s466, %s468
    %p472 = scmp.eq.s32.totalorder %s33, 0
    %p473 = por %p471, %p472
    %p474 = scmp.ne.s32.totalorder %s466, %s468
    %p475 = scmp.eq.s32.totalorder %s38, 1
    %p476 = por %p474, %p475
    %p477 = scmp.ne.s32.totalorder %s468, %s469
    %p478 = scmp.eq.s32.totalorder %s38, 0
    %p479 = por %p477, %p478
    %p480 = scmp.ne.s32.totalorder %s468, %s469
    %p481 = scmp.eq.s32.totalorder %s39, 1
    %p482 = por %p480, %p481
    %p484 = scmp.ne.s32.totalorder %s469, %s483
    %p485 = scmp.eq.s32.totalorder %s39, 0
    %p486 = por %p484, %p485
    %s488 = sadd.s32 %s487, 1
    %p491 = scmp.eq.s32.totalorder %s33, 1
    %p492 = scmp.ne.s32.totalorder %s487, %s489
    %p493 = scmp.eq.s32.totalorder %s33, 0
    %p494 = por %p492, %p493
    %p495 = scmp.ne.s32.totalorder %s487, %s489
    %p496 = scmp.eq.s32.totalorder %s38, 1
    %p497 = por %p495, %p496
    %p498 = scmp.ne.s32.totalorder %s489, %s490
    %p499 = scmp.eq.s32.totalorder %s38, 0
    %p500 = por %p498, %p499
    %p501 = scmp.ne.s32.totalorder %s489, %s490
    %p502 = scmp.eq.s32.totalorder %s39, 1
    %p503 = por %p501, %p502
    %p505 = scmp.ne.s32.totalorder %s490, %s504
    %p506 = scmp.eq.s32.totalorder %s39, 0
    %p507 = por %p505, %p506
    %s509 = sadd.s32 %s508, 1
    %p512 = scmp.eq.s32.totalorder %s33, 1
    %p513 = scmp.ne.s32.totalorder %s508, %s510
    %p514 = scmp.eq.s32.totalorder %s33, 0
    %p515 = por %p513, %p514
    %p516 = scmp.ne.s32.totalorder %s508, %s510
    %p517 = scmp.eq.s32.totalorder %s38, 1
    %p518 = por %p516, %p517
    %p519 = scmp.ne.s32.totalorder %s510, %s511
    %p520 = scmp.eq.s32.totalorder %s38, 0
    %p521 = por %p519, %p520
    %p522 = scmp.ne.s32.totalorder %s510, %s511
    %p523 = scmp.eq.s32.totalorder %s39, 1
    %p524 = por %p522, %p523
    %p526 = scmp.ne.s32.totalorder %s511, %s525
    %p527 = scmp.eq.s32.totalorder %s39, 0
    %p528 = por %p526, %p527
    %s530 = sadd.s32 %s529, 1
    %p533 = scmp.eq.s32.totalorder %s33, 1
    %p534 = scmp.ne.s32.totalorder %s529, %s531
    %p535 = scmp.eq.s32.totalorder %s33, 0
    %p536 = por %p534, %p535
    %p537 = scmp.ne.s32.totalorder %s529, %s531
    %p538 = scmp.eq.s32.totalorder %s38, 1
    %p539 = por %p537, %p538
    %p540 = scmp.ne.s32.totalorder %s531, %s532
    %p541 = scmp.eq.s32.totalorder %s38, 0
    %p542 = por %p540, %p541
    %p543 = scmp.ne.s32.totalorder %s531, %s532
    %p544 = scmp.eq.s32.totalorder %s39, 1
    %p545 = por %p543, %p544
    %p547 = scmp.ne.s32.totalorder %s532, %s546
    %p548 = scmp.eq.s32.totalorder %s39, 0
    %p549 = por %p547, %p548
    %s551 = sadd.s32 %s550, 1
    %p554 = scmp.eq.s32.totalorder %s33, 1
    %p555 = scmp.ne.s32.totalorder %s550, %s552
    %p556 = scmp.eq.s32.totalorder %s33, 0
    %p557 = por %p555, %p556
    %p558 = scmp.ne.s32.totalorder %s550, %s552
    %p559 = scmp.eq.s32.totalorder %s38, 1
    %p560 = por %p558, %p559
    %p561 = scmp.ne.s32.totalorder %s552, %s553
    %p562 = scmp.eq.s32.totalorder %s38, 0
    %p563 = por %p561, %p562
    %p564 = scmp.ne.s32.totalorder %s552, %s553
    %p565 = scmp.eq.s32.totalorder %s39, 1
    %p566 = por %p564, %p565
    %p568 = scmp.ne.s32.totalorder %s553, %s567
    %p569 = scmp.eq.s32.totalorder %s39, 0
    %p570 = por %p568, %p569
    %s572 = sadd.s32 %s571, 1
    %p575 = scmp.eq.s32.totalorder %s33, 1
    %p576 = scmp.ne.s32.totalorder %s571, %s573
    %p577 = scmp.eq.s32.totalorder %s33, 0
    %p578 = por %p576, %p577
    %p579 = scmp.ne.s32.totalorder %s571, %s573
    %p580 = scmp.eq.s32.totalorder %s38, 1
    %p581 = por %p579, %p580
    %p582 = scmp.ne.s32.totalorder %s573, %s574
    %p583 = scmp.eq.s32.totalorder %s38, 0
    %p584 = por %p582, %p583
    %p585 = scmp.ne.s32.totalorder %s573, %s574
    %p586 = scmp.eq.s32.totalorder %s39, 1
    %p587 = por %p585, %p586
    %p589 = scmp.ne.s32.totalorder %s574, %s588
    %p590 = scmp.eq.s32.totalorder %s39, 0
    %p591 = por %p589, %p590
    %s593 = sadd.s32 %s592, 1
    %p596 = scmp.eq.s32.totalorder %s33, 1
    %p597 = scmp.ne.s32.totalorder %s592, %s594
    %p598 = scmp.eq.s32.totalorder %s33, 0
    %p599 = por %p597, %p598
    %p600 = scmp.ne.s32.totalorder %s592, %s594
    %p601 = scmp.eq.s32.totalorder %s38, 1
    %p602 = por %p600, %p601
    %p603 = scmp.ne.s32.totalorder %s594, %s595
    %p604 = scmp.eq.s32.totalorder %s38, 0
    %p605 = por %p603, %p604
    %p606 = scmp.ne.s32.totalorder %s594, %s595
    %p607 = scmp.eq.s32.totalorder %s39, 1
    %p608 = por %p606, %p607
    %p610 = scmp.ne.s32.totalorder %s595, %s609
    %p611 = scmp.eq.s32.totalorder %s39, 0
    %p612 = por %p610, %p611
    %s613 = ssub.s32 %s33, %s40
    %p614 = scmp.eq.s32.totalorder %s613, 0
    %s616 = sadd.s32 %s615, 1
    %s617 = scalar_select %p614, %s615, %s616
    %p620 = pneg %p614
    %p621 = scmp.eq.s32.totalorder %s33, 1
    %p622 = por %p620, %p621
    %p623 = scmp.ne.s32.totalorder %s615, %s618
    %p624 = scmp.eq.s32.totalorder %s33, 0
    %p625 = por %p623, %p624
    %p626 = scmp.ne.s32.totalorder %s615, %s618
    %p627 = scmp.eq.s32.totalorder %s38, 1
    %p628 = por %p626, %p627
    %p629 = scmp.ne.s32.totalorder %s618, %s619
    %p630 = scmp.eq.s32.totalorder %s38, 0
    %p631 = por %p629, %p630
    %p632 = scmp.ne.s32.totalorder %s618, %s619
    %p633 = scmp.eq.s32.totalorder %s39, 1
    %p634 = por %p632, %p633
    %p636 = scmp.ne.s32.totalorder %s619, %s635
    %p637 = scmp.eq.s32.totalorder %s39, 0
    %p638 = por %p636, %p637
    %p639 = scmp.le.s32.totalorder 1, %s33
    %p640 = scmp.lt.s32.totalorder %s33, 3
    %p641 = pnand %p639, %p640
    %p642 = pneg %p641
    // Predicated region
    $region9: #{fcn_forward.1} parent=5 // pred_check
      _
    $region10: #{fcn_forward.1} parent=5 // pred_check_branch
      %644 = sbr.rel (%p641) target = $region12
    $region11: #{fcn_forward.1} parent=5 // pred_region
      %s645 = ssub.s32 %s33, 1
      // Predicated region
      $region13: #{fcn_forward.1} parent=11 // pred_check
        %p646 = pneg %p80
      $region14: #{fcn_forward.1} parent=11 // pred_check_branch
        %648 = sbr.rel (%p646) target = $region16
      $region15: #{fcn_forward.1} parent=11 // pred_region
        _
      $region16: #{fcn_forward.1} parent=11 // pred_fallthru
        _
      // Predicated region
      $region17: #{fcn_forward.1} parent=11 // pred_check
        %p649 = pneg %p101
      $region18: #{fcn_forward.1} parent=11 // pred_check_branch
        %651 = sbr.rel (%p649) target = $region20
      $region19: #{fcn_forward.1} parent=11 // pred_region
        _
      $region20: #{fcn_forward.1} parent=11 // pred_fallthru
        _
      // Predicated region
      $region21: #{fcn_forward.1} parent=11 // pred_check
        %p652 = pneg %p122
      $region22: #{fcn_forward.1} parent=11 // pred_check_branch
        %654 = sbr.rel (%p652) target = $region24
      $region23: #{fcn_forward.1} parent=11 // pred_region
        _
      $region24: #{fcn_forward.1} parent=11 // pred_fallthru
        _
      // Predicated region
      $region25: #{fcn_forward.1} parent=11 // pred_check
        %p655 = pneg %p143
      $region26: #{fcn_forward.1} parent=11 // pred_check_branch
        %657 = sbr.rel (%p655) target = $region28
      $region27: #{fcn_forward.1} parent=11 // pred_region
        _
      $region28: #{fcn_forward.1} parent=11 // pred_fallthru
        _
      // Predicated region
      $region29: #{fcn_forward.1} parent=11 // pred_check
        %p658 = pneg %p164
      $region30: #{fcn_forward.1} parent=11 // pred_check_branch
        %660 = sbr.rel (%p658) target = $region32
      $region31: #{fcn_forward.1} parent=11 // pred_region
        _
      $region32: #{fcn_forward.1} parent=11 // pred_fallthru
        _
      // Predicated region
      $region33: #{fcn_forward.1} parent=11 // pred_check
        %p661 = pneg %p185
      $region34: #{fcn_forward.1} parent=11 // pred_check_branch
        %663 = sbr.rel (%p661) target = $region36
      $region35: #{fcn_forward.1} parent=11 // pred_region
        _
      $region36: #{fcn_forward.1} parent=11 // pred_fallthru
        _
      // Predicated region
      $region37: #{fcn_forward.1} parent=11 // pred_check
        %p664 = pneg %p206
      $region38: #{fcn_forward.1} parent=11 // pred_check_branch
        %666 = sbr.rel (%p664) target = $region40
      $region39: #{fcn_forward.1} parent=11 // pred_region
        _
      $region40: #{fcn_forward.1} parent=11 // pred_fallthru
        _
      // Predicated region
      $region41: #{fcn_forward.1} parent=11 // pred_check
        %p667 = pneg %p227
      $region42: #{fcn_forward.1} parent=11 // pred_check_branch
        %669 = sbr.rel (%p667) target = $region44
      $region43: #{fcn_forward.1} parent=11 // pred_region
        _
      $region44: #{fcn_forward.1} parent=11 // pred_fallthru
        _
      // Predicated region
      $region45: #{fcn_forward.1} parent=11 // pred_check
        %p670 = pneg %p248
      $region46: #{fcn_forward.1} parent=11 // pred_check_branch
        %672 = sbr.rel (%p670) target = $region48
      $region47: #{fcn_forward.1} parent=11 // pred_region
        _
      $region48: #{fcn_forward.1} parent=11 // pred_fallthru
        _
      // Predicated region
      $region49: #{fcn_forward.1} parent=11 // pred_check
        %p673 = pneg %p269
      $region50: #{fcn_forward.1} parent=11 // pred_check_branch
        %675 = sbr.rel (%p673) target = $region52
      $region51: #{fcn_forward.1} parent=11 // pred_region
        _
      $region52: #{fcn_forward.1} parent=11 // pred_fallthru
        _
      // Predicated region
      $region53: #{fcn_forward.1} parent=11 // pred_check
        %p676 = pneg %p290
      $region54: #{fcn_forward.1} parent=11 // pred_check_branch
        %678 = sbr.rel (%p676) target = $region56
      $region55: #{fcn_forward.1} parent=11 // pred_region
        _
      $region56: #{fcn_forward.1} parent=11 // pred_fallthru
        _
      // Predicated region
      $region57: #{fcn_forward.1} parent=11 // pred_check
        %p679 = pneg %p311
      $region58: #{fcn_forward.1} parent=11 // pred_check_branch
        %681 = sbr.rel (%p679) target = $region60
      $region59: #{fcn_forward.1} parent=11 // pred_region
        _
      $region60: #{fcn_forward.1} parent=11 // pred_fallthru
        _
      // Predicated region
      $region61: #{fcn_forward.1} parent=11 // pred_check
        %p682 = pneg %p332
      $region62: #{fcn_forward.1} parent=11 // pred_check_branch
        %684 = sbr.rel (%p682) target = $region64
      $region63: #{fcn_forward.1} parent=11 // pred_region
        _
      $region64: #{fcn_forward.1} parent=11 // pred_fallthru
        _
      // Predicated region
      $region65: #{fcn_forward.1} parent=11 // pred_check
        %p685 = pneg %p353
      $region66: #{fcn_forward.1} parent=11 // pred_check_branch
        %687 = sbr.rel (%p685) target = $region68
      $region67: #{fcn_forward.1} parent=11 // pred_region
        _
      $region68: #{fcn_forward.1} parent=11 // pred_fallthru
        _
      // Predicated region
      $region69: #{fcn_forward.1} parent=11 // pred_check
        %p688 = pneg %p374
      $region70: #{fcn_forward.1} parent=11 // pred_check_branch
        %690 = sbr.rel (%p688) target = $region72
      $region71: #{fcn_forward.1} parent=11 // pred_region
        _
      $region72: #{fcn_forward.1} parent=11 // pred_fallthru
        _
      // Predicated region
      $region73: #{fcn_forward.1} parent=11 // pred_check
        %p691 = pneg %p395
      $region74: #{fcn_forward.1} parent=11 // pred_check_branch
        %693 = sbr.rel (%p691) target = $region76
      $region75: #{fcn_forward.1} parent=11 // pred_region
        _
      $region76: #{fcn_forward.1} parent=11 // pred_fallthru
        _
      // Predicated region
      $region77: #{fcn_forward.1} parent=11 // pred_check
        %p694 = pneg %p416
      $region78: #{fcn_forward.1} parent=11 // pred_check_branch
        %696 = sbr.rel (%p694) target = $region80
      $region79: #{fcn_forward.1} parent=11 // pred_region
        _
      $region80: #{fcn_forward.1} parent=11 // pred_fallthru
        _
      // Predicated region
      $region81: #{fcn_forward.1} parent=11 // pred_check
        %p697 = pneg %p437
      $region82: #{fcn_forward.1} parent=11 // pred_check_branch
        %699 = sbr.rel (%p697) target = $region84
      $region83: #{fcn_forward.1} parent=11 // pred_region
        _
      $region84: #{fcn_forward.1} parent=11 // pred_fallthru
        _
      // Predicated region
      $region85: #{fcn_forward.1} parent=11 // pred_check
        %p700 = pneg %p458
      $region86: #{fcn_forward.1} parent=11 // pred_check_branch
        %702 = sbr.rel (%p700) target = $region88
      $region87: #{fcn_forward.1} parent=11 // pred_region
        _
      $region88: #{fcn_forward.1} parent=11 // pred_fallthru
        _
      // Predicated region
      $region89: #{fcn_forward.1} parent=11 // pred_check
        %p703 = pneg %p479
      $region90: #{fcn_forward.1} parent=11 // pred_check_branch
        %705 = sbr.rel (%p703) target = $region92
      $region91: #{fcn_forward.1} parent=11 // pred_region
        _
      $region92: #{fcn_forward.1} parent=11 // pred_fallthru
        _
      // Predicated region
      $region93: #{fcn_forward.1} parent=11 // pred_check
        %p706 = pneg %p500
      $region94: #{fcn_forward.1} parent=11 // pred_check_branch
        %708 = sbr.rel (%p706) target = $region96
      $region95: #{fcn_forward.1} parent=11 // pred_region
        _
      $region96: #{fcn_forward.1} parent=11 // pred_fallthru
        _
      // Predicated region
      $region97: #{fcn_forward.1} parent=11 // pred_check
        %p709 = pneg %p521
      $region98: #{fcn_forward.1} parent=11 // pred_check_branch
        %711 = sbr.rel (%p709) target = $region100
      $region99: #{fcn_forward.1} parent=11 // pred_region
        _
      $region100: #{fcn_forward.1} parent=11 // pred_fallthru
        _
      // Predicated region
      $region101: #{fcn_forward.1} parent=11 // pred_check
        %p712 = pneg %p542
      $region102: #{fcn_forward.1} parent=11 // pred_check_branch
        %714 = sbr.rel (%p712) target = $region104
      $region103: #{fcn_forward.1} parent=11 // pred_region
        _
      $region104: #{fcn_forward.1} parent=11 // pred_fallthru
        _
      // Predicated region
      $region105: #{fcn_forward.1} parent=11 // pred_check
        %p715 = pneg %p563
      $region106: #{fcn_forward.1} parent=11 // pred_check_branch
        %717 = sbr.rel (%p715) target = $region108
      $region107: #{fcn_forward.1} parent=11 // pred_region
        _
      $region108: #{fcn_forward.1} parent=11 // pred_fallthru
        _
      // Predicated region
      $region109: #{fcn_forward.1} parent=11 // pred_check
        %p718 = pneg %p584
      $region110: #{fcn_forward.1} parent=11 // pred_check_branch
        %720 = sbr.rel (%p718) target = $region112
      $region111: #{fcn_forward.1} parent=11 // pred_region
        _
      $region112: #{fcn_forward.1} parent=11 // pred_fallthru
        _
      // Predicated region
      $region113: #{fcn_forward.1} parent=11 // pred_check
        %p721 = pneg %p605
      $region114: #{fcn_forward.1} parent=11 // pred_check_branch
        %723 = sbr.rel (%p721) target = $region116
      $region115: #{fcn_forward.1} parent=11 // pred_region
        _
      $region116: #{fcn_forward.1} parent=11 // pred_fallthru
        _
    $region12: #{fcn_forward.1} parent=5 // pred_fallthru
      _
    %p724 = scmp.lt.s32.totalorder %s33, 2
    // Predicated region
    $region117: #{fcn_forward.1} parent=5 // pred_check
      %p725 = pneg %p724
    $region118: #{fcn_forward.1} parent=5 // pred_check_branch
      %727 = sbr.rel (%p725) target = $region120
    $region119: #{fcn_forward.1} parent=5 // pred_region
      // Predicated region
      $region121: #{fcn_forward.1} parent=119 // pred_check
        %p728 = pneg %p53
      $region122: #{fcn_forward.1} parent=119 // pred_check_branch
        %730 = sbr.rel (%p728) target = $region124
      $region123: #{fcn_forward.1} parent=119 // pred_region
        %p731 = scmp.lt.s32.totalorder %s33, 1
        %s732 = scalar_select %p731, %s33, 1
        %s733 = smul.addr %s732, 25
        %s734 = smul.addr %s733, 8
        %s735 = scalar_lea.vmem %s0, %s734
      $region124: #{fcn_forward.1} parent=119 // pred_fallthru
        _
    $region120: #{fcn_forward.1} parent=5 // pred_fallthru
      _
    %p736 = scmp.le.s32.totalorder 1, %s33
    %p737 = scmp.lt.s32.totalorder %s33, 3
    %p738 = pnand %p736, %p737
    %p739 = pneg %p738
    // Predicated region
    $region125: #{fcn_forward.1} parent=5 // pred_check
      _
    $region126: #{fcn_forward.1} parent=5 // pred_check_branch
      %741 = sbr.rel (%p738) target = $region128
    $region127: #{fcn_forward.1} parent=5 // pred_region
      %s742 = ssub.s32 %s33, 1
      %p743 = scmp.lt.s32.totalorder %s38, 1
      %s744 = scalar_select %p743, %s38, 1
      %s745 = smul.addr %s744, 25
      %s746 = smul.addr %s745, 8
      %s747 = scalar_lea.vmem %s0, %s746
      %p748 = pneg %p59
      %p749 = pneg %p56
      %p750 = pneg %p80
      %p751 = pneg %p77
      %p752 = pneg %p101
      %p753 = pneg %p98
      %p754 = pneg %p122
      %p755 = pneg %p119
      %p756 = pneg %p143
      %p757 = pneg %p140
      %p758 = pneg %p164
      %p759 = pneg %p161
      %p760 = pneg %p185
      %p761 = pneg %p182
      %p762 = pneg %p206
      %p763 = pneg %p203
      %p764 = pneg %p227
      %p765 = pneg %p224
      %p766 = pneg %p248
      %p767 = pneg %p245
      %p768 = pneg %p269
      %p769 = pneg %p266
      %p770 = pneg %p290
      %p771 = pneg %p287
      %p772 = pneg %p311
      %p773 = pneg %p308
      %p774 = pneg %p332
      %p775 = pneg %p329
      %p776 = pneg %p353
      %p777 = pneg %p350
      %p778 = pneg %p374
      %p779 = pneg %p371
      %p780 = pneg %p395
      %p781 = pneg %p392
      %p782 = pneg %p416
      %p783 = pneg %p413
      %p784 = pneg %p437
      %p785 = pneg %p434
      %p786 = pneg %p458
      %p787 = pneg %p455
      %p788 = pneg %p479
      %p789 = pneg %p476
      %p790 = pneg %p500
      %p791 = pneg %p497
      %p792 = pneg %p521
      %p793 = pneg %p518
      %p794 = pneg %p542
      %p795 = pneg %p539
      %p796 = pneg %p563
      %p797 = pneg %p560
      %p798 = pneg %p584
      %p799 = pneg %p581
      %p800 = pneg %p605
      %p801 = pneg %p602
      %p802 = pneg %p631
      %p803 = pneg %p628
      %p804 = scmp.lt.s32.totalorder %s38, 1
      %s805 = scalar_select %p804, %s38, 1
      %s806 = smul.addr %s805, 25
      %s807 = smul.addr %s806, 8
      %s808 = scalar_lea.vmem %s27, %s807
      %p809 = scmp.lt.s32.totalorder %s38, 1
      %s810 = scalar_select %p809, %s38, 1
      %s811 = smul.addr %s810, 25
      %s812 = smul.addr %s811, 8
      %s813 = scalar_lea.vmem %s0, %s812
      %p814 = scmp.lt.s32.totalorder %s38, 1
      %s815 = scalar_select %p814, %s38, 1
      %s816 = smul.addr %s815, 25
      %s817 = smul.addr %s816, 8
      %s818 = scalar_lea.vmem %s27, %s817
      %v819 = vld [vmem:[%s813] sm:$0xff]
      %v820 = vld [vmem:[%s813 + $0x8] sm:$0xff]
      %v821 = vld [vmem:[%s813 + $0x10] sm:$0xff]
      %v822 = vld [vmem:[%s813 + $0x18] sm:$0xff]
      %v823 = vld [vmem:[%s813 + $0x20] sm:$0xff]
      %v824 = vld [vmem:[%s813 + $0x28] sm:$0xff]
      %v825 = vld [vmem:[%s813 + $0x30] sm:$0xff]
      %v826 = vld [vmem:[%s813 + $0x38] sm:$0xff]
      %v827 = vld [vmem:[%s813 + $0x40] sm:$0xff]
      %v828 = vld [vmem:[%s813 + $0x48] sm:$0xff]
      %v829 = vld [vmem:[%s813 + $0x50] sm:$0xff]
      %v830 = vld [vmem:[%s813 + $0x58] sm:$0xff]
      %v831 = vld [vmem:[%s813 + $0x60] sm:$0xff]
      %v832 = vld [vmem:[%s813 + $0x68] sm:$0xff]
      %v833 = vld [vmem:[%s813 + $0x70] sm:$0xff]
      %v834 = vld [vmem:[%s813 + $0x78] sm:$0xff]
      %v835 = vld [vmem:[%s813 + $0x80] sm:$0xff]
      %v836 = vld [vmem:[%s813 + $0x88] sm:$0xff]
      %v837 = vld [vmem:[%s813 + $0x90] sm:$0xff]
      %v838 = vld [vmem:[%s813 + $0x98] sm:$0xff]
      %v839 = vld [vmem:[%s813 + $0xa0] sm:$0xff]
      %v840 = vld [vmem:[%s813 + $0xa8] sm:$0xff]
      %v841 = vld [vmem:[%s813 + $0xb0] sm:$0xff]
      %v842 = vld [vmem:[%s813 + $0xb8] sm:$0xff]
      %v843 = vld [vmem:[%s813 + $0xc0] sm:$0xff]
      %v844 = vld [vmem:[%s1] sm:$0xf]
      %s845 = scalar_lea.vmem %s1, 4
      %v846 = vld [vmem:[%s845] sm:$0xf]
      %vm871 = vcmask 1046528
      %v872 = vrot.slane %v819, 1
      %v873 = vrot.slane %v820, 1
      %v874 = vsel %vm871, %v872, %v873
      %v875 = vrot.slane %v821, 1
      %v876 = vsel %vm871, %v873, %v875
      %v877 = vrot.slane %v822, 1
      %v878 = vsel %vm871, %v875, %v877
      %v879 = vrot.slane %v823, 1
      %v880 = vsel %vm871, %v877, %v879
      %v881 = vrot.slane %v824, 1
      %v882 = vsel %vm871, %v879, %v881
      %v883 = vrot.slane %v825, 1
      %v884 = vsel %vm871, %v881, %v883
      %v885 = vrot.slane %v826, 1
      %v886 = vsel %vm871, %v883, %v885
      %v887 = vrot.slane %v827, 1
      %v888 = vsel %vm871, %v885, %v887
      %v889 = vrot.slane %v828, 1
      %v890 = vsel %vm871, %v887, %v889
      %v891 = vrot.slane %v829, 1
      %v892 = vsel %vm871, %v889, %v891
      %v893 = vrot.slane %v830, 1
      %v894 = vsel %vm871, %v891, %v893
      %v895 = vrot.slane %v831, 1
      %v896 = vsel %vm871, %v893, %v895
      %v897 = vrot.slane %v832, 1
      %v898 = vsel %vm871, %v895, %v897
      %v899 = vrot.slane %v833, 1
      %v900 = vsel %vm871, %v897, %v899
      %v901 = vrot.slane %v834, 1
      %v902 = vsel %vm871, %v899, %v901
      %v903 = vrot.slane %v835, 1
      %v904 = vsel %vm871, %v901, %v903
      %v905 = vrot.slane %v836, 1
      %v906 = vsel %vm871, %v903, %v905
      %v907 = vrot.slane %v837, 1
      %v908 = vsel %vm871, %v905, %v907
      %v909 = vrot.slane %v838, 1
      %v910 = vsel %vm871, %v907, %v909
      %v911 = vrot.slane %v839, 1
      %v912 = vsel %vm871, %v909, %v911
      %v913 = vrot.slane %v840, 1
      %v914 = vsel %vm871, %v911, %v913
      %v915 = vrot.slane %v841, 1
      %v916 = vsel %vm871, %v913, %v915
      %v917 = vrot.slane %v842, 1
      %v918 = vsel %vm871, %v915, %v917
      %vm919 = vcmask 31744
      %v920 = vsel %vm919, %v874, 0
      %v922 = vsel %vm919, %v876, 0
      %v924 = vsel %vm919, %v878, 0
      %v926 = vsel %vm919, %v880, 0
      %v928 = vsel %vm919, %v882, 0
      %v930 = vsel %vm919, %v884, 0
      %v932 = vsel %vm919, %v886, 0
      %v934 = vsel %vm919, %v888, 0
      %v936 = vsel %vm919, %v890, 0
      %v938 = vsel %vm919, %v892, 0
      %v940 = vsel %vm919, %v894, 0
      %v942 = vsel %vm919, %v896, 0
      %v944 = vsel %vm919, %v898, 0
      %v946 = vsel %vm919, %v900, 0
      %v948 = vsel %vm919, %v902, 0
      %v950 = vsel %vm919, %v904, 0
      %v952 = vsel %vm919, %v906, 0
      %v954 = vsel %vm919, %v908, 0
      %v956 = vsel %vm919, %v910, 0
      %v958 = vsel %vm919, %v912, 0
      %v960 = vsel %vm919, %v914, 0
      %v962 = vsel %vm919, %v916, 0
      %v964 = vsel %vm919, %v918, 0
      %v966 = vsel %vm919, %v917, 0
      %vm968 = vcmask 1043456
      %v970 = vsel %vm968, %v846, 0
      %972 = vmatprep.subr.mxu0 0.0
      %973 = vmatpush1.msra.mxu0 0.0
      %974 = vmatprep.subr.mxu0 0.0
      %975 = vmatpush1.msra.mxu0 0.0
      %976 = vmatprep.subr.mxu0 0.0
      %977 = vmatpush1.msra.mxu0 0.0
      %978 = vmatprep.subr.mxu0 0.0
      %979 = vmatpush1.msra.mxu0 0.0
      %980 = vmatprep.subr.mxu0 0.0
      %981 = vmatpush1.msra.mxu0 0.0
      %982 = vmatprep.subr.mxu0 0.0
      %983 = vmatpush1.msra.mxu0 0.0
      %984 = vmatprep.subr.mxu0 0.0
      %985 = vmatpush1.msra.mxu0 0.0
      %986 = vmatprep.subr.mxu0 0.0
      %987 = vmatpush1.msra.mxu0 0.0
      %988 = vmatprep.subr.mxu0 0.0
      %989 = vmatpush1.msra.mxu0 0.0
      %990 = vmatprep.subr.mxu0 0.0
      %991 = vmatpush1.msra.mxu0 0.0
      %992 = vmatprep.subr.mxu0 0.0
      %993 = vmatpush1.msra.mxu0 0.0
      %994 = vmatprep.subr.mxu0 0.0
      %995 = vmatpush1.msra.mxu0 0.0
      %996 = vmatprep.subr.mxu0 0.0
      %997 = vmatpush1.msra.mxu0 0.0
      %998 = vmatprep.subr.mxu0 0.0
      %999 = vmatpush1.msra.mxu0 0.0
      %1000 = vmatprep.subr.mxu0 0.0
      %1001 = vmatpush1.msra.mxu0 0.0
      %1002 = vmatprep.subr.mxu0 0.0
      %1003 = vmatpush1.msra.mxu0 %v970
      %1004 = vmatprep.subr.mxu0 0.0
      %1005 = vmatpush2.msra.mxu0 0.0
      %1006 = vmatprep.subr.mxu0 0.0
      %1007 = vmatpush2.msra.mxu0 0.0
      %1008 = vmatprep.subr.mxu0 0.0
      %1009 = vmatpush2.msra.mxu0 0.0
      %1010 = vmatprep.subr.mxu0 0.0
      %1011 = vmatpush2.msra.mxu0 0.0
      %1012 = vmatprep.subr.mxu0 0.0
      %1013 = vmatpush2.msra.mxu0 0.0
      %1014 = vmatprep.subr.mxu0 0.0
      %1015 = vmatpush2.msra.mxu0 0.0
      %1016 = vmatprep.subr.mxu0 0.0
      %1017 = vmatpush2.msra.mxu0 0.0
      %1018 = vmatprep.subr.mxu0 0.0
      %1019 = vmatpush2.msra.mxu0 0.0
      %1020 = vmatprep.subr.mxu0 0.0
      %1021 = vmatpush2.msra.mxu0 0.0
      %1022 = vmatprep.subr.mxu0 0.0
      %1023 = vmatpush2.msra.mxu0 0.0
      %1024 = vmatprep.subr.mxu0 0.0
      %1025 = vmatpush2.msra.mxu0 0.0
      %1026 = vmatprep.subr.mxu0 0.0
      %1027 = vmatpush2.msra.mxu0 0.0
      %1028 = vmatprep.subr.mxu0 0.0
      %1029 = vmatpush2.msra.mxu0 0.0
      %1030 = vmatprep.subr.mxu0 0.0
      %1031 = vmatpush2.msra.mxu0 0.0
      %1032 = vmatprep.subr.mxu0 0.0
      %1033 = vmatpush2.msra.mxu0 0.0
      %1034 = vmatprep.subr.mxu0 0.0
      %1035 = vmatpush2.msra.mxu0 0.0
      %1036 = vmatprep.mubr.f32.mxu0 0.0
      %1037 = vmatmul.mubr.f32.gmra.mxu0 %v920
      %v1038 = vpop.f32.mrf.mxu0
      %v1039 = vadd.f32 0.0, %v1038
      %v1040 = vpop.f32.mrf.mxu0
      %1041 = vmatprep.mubr.f32.mxu0 0.0
      %1042 = vmatmul.mubr.f32.gmra.mxu0 %v922
      %v1043 = vpop.f32.mrf.mxu0
      %v1044 = vadd.f32 0.0, %v1043
      %v1045 = vpop.f32.mrf.mxu0
      %1046 = vmatprep.mubr.f32.mxu0 0.0
      %1047 = vmatmul.mubr.f32.gmra.mxu0 %v924
      %v1048 = vpop.f32.mrf.mxu0
      %v1049 = vadd.f32 0.0, %v1048
      %v1050 = vpop.f32.mrf.mxu0
      %1051 = vmatprep.mubr.f32.mxu0 0.0
      %1052 = vmatmul.mubr.f32.gmra.mxu0 %v926
      %v1053 = vpop.f32.mrf.mxu0
      %v1054 = vadd.f32 0.0, %v1053
      %v1055 = vpop.f32.mrf.mxu0
      %1056 = vmatprep.mubr.f32.mxu0 0.0
      %1057 = vmatmul.mubr.f32.gmra.mxu0 %v928
      %v1058 = vpop.f32.mrf.mxu0
      %v1059 = vadd.f32 0.0, %v1058
      %v1060 = vpop.f32.mrf.mxu0
      %1061 = vmatprep.mubr.f32.mxu0 0.0
      %1062 = vmatmul.mubr.f32.gmra.mxu0 %v930
      %v1063 = vpop.f32.mrf.mxu0
      %v1064 = vadd.f32 0.0, %v1063
      %v1065 = vpop.f32.mrf.mxu0
      %1066 = vmatprep.mubr.f32.mxu0 0.0
      %1067 = vmatmul.mubr.f32.gmra.mxu0 %v932
      %v1068 = vpop.f32.mrf.mxu0
      %v1069 = vadd.f32 0.0, %v1068
      %v1070 = vpop.f32.mrf.mxu0
      %1071 = vmatprep.mubr.f32.mxu0 0.0
      %1072 = vmatmul.mubr.f32.gmra.mxu0 %v934
      %v1073 = vpop.f32.mrf.mxu0
      %v1074 = vadd.f32 0.0, %v1073
      %v1075 = vpop.f32.mrf.mxu0
      %1076 = vmatprep.mubr.f32.mxu0 0.0
      %1077 = vmatmul.mubr.f32.gmra.mxu0 %v936
      %v1078 = vpop.f32.mrf.mxu0
      %v1079 = vadd.f32 0.0, %v1078
      %v1080 = vpop.f32.mrf.mxu0
      %1081 = vmatprep.mubr.f32.mxu0 0.0
      %1082 = vmatmul.mubr.f32.gmra.mxu0 %v938
      %v1083 = vpop.f32.mrf.mxu0
      %v1084 = vadd.f32 0.0, %v1083
      %v1085 = vpop.f32.mrf.mxu0
      %1086 = vmatprep.mubr.f32.mxu0 0.0
      %1087 = vmatmul.mubr.f32.gmra.mxu0 %v940
      %v1088 = vpop.f32.mrf.mxu0
      %v1089 = vadd.f32 0.0, %v1088
      %v1090 = vpop.f32.mrf.mxu0
      %1091 = vmatprep.mubr.f32.mxu0 0.0
      %1092 = vmatmul.mubr.f32.gmra.mxu0 %v942
      %v1093 = vpop.f32.mrf.mxu0
      %v1094 = vadd.f32 0.0, %v1093
      %v1095 = vpop.f32.mrf.mxu0
      %1096 = vmatprep.mubr.f32.mxu0 0.0
      %1097 = vmatmul.mubr.f32.gmra.mxu0 %v944
      %v1098 = vpop.f32.mrf.mxu0
      %v1099 = vadd.f32 0.0, %v1098
      %v1100 = vpop.f32.mrf.mxu0
      %1101 = vmatprep.mubr.f32.mxu0 0.0
      %1102 = vmatmul.mubr.f32.gmra.mxu0 %v946
      %v1103 = vpop.f32.mrf.mxu0
      %v1104 = vadd.f32 0.0, %v1103
      %v1105 = vpop.f32.mrf.mxu0
      %1106 = vmatprep.mubr.f32.mxu0 0.0
      %1107 = vmatmul.mubr.f32.gmra.mxu0 %v948
      %v1108 = vpop.f32.mrf.mxu0
      %v1109 = vadd.f32 0.0, %v1108
      %v1110 = vpop.f32.mrf.mxu0
      %1111 = vmatprep.mubr.f32.mxu0 0.0
      %1112 = vmatmul.mubr.f32.gmra.mxu0 %v950
      %v1113 = vpop.f32.mrf.mxu0
      %v1114 = vadd.f32 0.0, %v1113
      %v1115 = vpop.f32.mrf.mxu0
      %1116 = vmatprep.mubr.f32.mxu0 0.0
      %1117 = vmatmul.mubr.f32.gmra.mxu0 %v952
      %v1118 = vpop.f32.mrf.mxu0
      %v1119 = vadd.f32 0.0, %v1118
      %v1120 = vpop.f32.mrf.mxu0
      %1121 = vmatprep.mubr.f32.mxu0 0.0
      %1122 = vmatmul.mubr.f32.gmra.mxu0 %v954
      %v1123 = vpop.f32.mrf.mxu0
      %v1124 = vadd.f32 0.0, %v1123
      %v1125 = vpop.f32.mrf.mxu0
      %1126 = vmatprep.mubr.f32.mxu0 0.0
      %1127 = vmatmul.mubr.f32.gmra.mxu0 %v956
      %v1128 = vpop.f32.mrf.mxu0
      %v1129 = vadd.f32 0.0, %v1128
      %v1130 = vpop.f32.mrf.mxu0
      %1131 = vmatprep.mubr.f32.mxu0 0.0
      %1132 = vmatmul.mubr.f32.gmra.mxu0 %v958
      %v1133 = vpop.f32.mrf.mxu0
      %v1134 = vadd.f32 0.0, %v1133
      %v1135 = vpop.f32.mrf.mxu0
      %1136 = vmatprep.mubr.f32.mxu0 0.0
      %1137 = vmatmul.mubr.f32.gmra.mxu0 %v960
      %v1138 = vpop.f32.mrf.mxu0
      %v1139 = vadd.f32 0.0, %v1138
      %v1140 = vpop.f32.mrf.mxu0
      %1141 = vmatprep.mubr.f32.mxu0 0.0
      %1142 = vmatmul.mubr.f32.gmra.mxu0 %v962
      %v1143 = vpop.f32.mrf.mxu0
      %v1144 = vadd.f32 0.0, %v1143
      %v1145 = vpop.f32.mrf.mxu0
      %1146 = vmatprep.mubr.f32.mxu0 0.0
      %1147 = vmatmul.mubr.f32.gmra.mxu0 %v964
      %v1148 = vpop.f32.mrf.mxu0
      %v1149 = vadd.f32 0.0, %v1148
      %v1150 = vpop.f32.mrf.mxu0
      %1151 = vmatprep.mubr.f32.mxu0 0.0
      %1152 = vmatmul.mubr.f32.gmra.mxu0 %v966
      %v1153 = vpop.f32.mrf.mxu0
      %v1154 = vadd.f32 0.0, %v1153
      %v1155 = vpop.f32.mrf.mxu0
      %1156 = vdwg.mxu0
      %v1157 = vsel %vm919, %v819, 0
      %v1159 = vsel %vm919, %v820, 0
      %v1161 = vsel %vm919, %v821, 0
      %v1163 = vsel %vm919, %v822, 0
      %v1165 = vsel %vm919, %v823, 0
      %v1167 = vsel %vm919, %v824, 0
      %v1169 = vsel %vm919, %v825, 0
      %v1171 = vsel %vm919, %v826, 0
      %v1173 = vsel %vm919, %v827, 0
      %v1175 = vsel %vm919, %v828, 0
      %v1177 = vsel %vm919, %v829, 0
      %v1179 = vsel %vm919, %v830, 0
      %v1181 = vsel %vm919, %v831, 0
      %v1183 = vsel %vm919, %v832, 0
      %v1185 = vsel %vm919, %v833, 0
      %v1187 = vsel %vm919, %v834, 0
      %v1189 = vsel %vm919, %v835, 0
      %v1191 = vsel %vm919, %v836, 0
      %v1193 = vsel %vm919, %v837, 0
      %v1195 = vsel %vm919, %v838, 0
      %v1197 = vsel %vm919, %v839, 0
      %v1199 = vsel %vm919, %v840, 0
      %v1201 = vsel %vm919, %v841, 0
      %v1203 = vsel %vm919, %v842, 0
      %v1206 = vsel %vm968, %v844, 0
      %1208 = vmatprep.subr.mxu0 0.0
      %1209 = vmatpush1.msra.mxu0 0.0
      %1210 = vmatprep.subr.mxu0 0.0
      %1211 = vmatpush1.msra.mxu0 0.0
      %1212 = vmatprep.subr.mxu0 0.0
      %1213 = vmatpush1.msra.mxu0 0.0
      %1214 = vmatprep.subr.mxu0 0.0
      %1215 = vmatpush1.msra.mxu0 0.0
      %1216 = vmatprep.subr.mxu0 0.0
      %1217 = vmatpush1.msra.mxu0 0.0
      %1218 = vmatprep.subr.mxu0 0.0
      %1219 = vmatpush1.msra.mxu0 0.0
      %1220 = vmatprep.subr.mxu0 0.0
      %1221 = vmatpush1.msra.mxu0 0.0
      %1222 = vmatprep.subr.mxu0 0.0
      %1223 = vmatpush1.msra.mxu0 0.0
      %1224 = vmatprep.subr.mxu0 0.0
      %1225 = vmatpush1.msra.mxu0 0.0
      %1226 = vmatprep.subr.mxu0 0.0
      %1227 = vmatpush1.msra.mxu0 0.0
      %1228 = vmatprep.subr.mxu0 0.0
      %1229 = vmatpush1.msra.mxu0 0.0
      %1230 = vmatprep.subr.mxu0 0.0
      %1231 = vmatpush1.msra.mxu0 0.0
      %1232 = vmatprep.subr.mxu0 0.0
      %1233 = vmatpush1.msra.mxu0 0.0
      %1234 = vmatprep.subr.mxu0 0.0
      %1235 = vmatpush1.msra.mxu0 0.0
      %1236 = vmatprep.subr.mxu0 0.0
      %1237 = vmatpush1.msra.mxu0 0.0
      %1238 = vmatprep.subr.mxu0 0.0
      %1239 = vmatpush1.msra.mxu0 %v1206
      %1240 = vmatprep.subr.mxu0 0.0
      %1241 = vmatpush2.msra.mxu0 0.0
      %1242 = vmatprep.subr.mxu0 0.0
      %1243 = vmatpush2.msra.mxu0 0.0
      %1244 = vmatprep.subr.mxu0 0.0
      %1245 = vmatpush2.msra.mxu0 0.0
      %1246 = vmatprep.subr.mxu0 0.0
      %1247 = vmatpush2.msra.mxu0 0.0
      %1248 = vmatprep.subr.mxu0 0.0
      %1249 = vmatpush2.msra.mxu0 0.0
      %1250 = vmatprep.subr.mxu0 0.0
      %1251 = vmatpush2.msra.mxu0 0.0
      %1252 = vmatprep.subr.mxu0 0.0
      %1253 = vmatpush2.msra.mxu0 0.0
      %1254 = vmatprep.subr.mxu0 0.0
      %1255 = vmatpush2.msra.mxu0 0.0
      %1256 = vmatprep.subr.mxu0 0.0
      %1257 = vmatpush2.msra.mxu0 0.0
      %1258 = vmatprep.subr.mxu0 0.0
      %1259 = vmatpush2.msra.mxu0 0.0
      %1260 = vmatprep.subr.mxu0 0.0
      %1261 = vmatpush2.msra.mxu0 0.0
      %1262 = vmatprep.subr.mxu0 0.0
      %1263 = vmatpush2.msra.mxu0 0.0
      %1264 = vmatprep.subr.mxu0 0.0
      %1265 = vmatpush2.msra.mxu0 0.0
      %1266 = vmatprep.subr.mxu0 0.0
      %1267 = vmatpush2.msra.mxu0 0.0
      %1268 = vmatprep.subr.mxu0 0.0
      %1269 = vmatpush2.msra.mxu0 0.0
      %1270 = vmatprep.subr.mxu0 0.0
      %1271 = vmatpush2.msra.mxu0 0.0
      %1272 = vmatprep.mubr.f32.mxu0 0.0
      %1273 = vmatmul.mubr.f32.gmra.mxu0 %v1157
      %v1274 = vpop.f32.mrf.mxu0
      %v1275 = vadd.f32 %v1039, %v1274
      %v1276 = vpop.f32.mrf.mxu0
      %1277 = vmatprep.mubr.f32.mxu0 0.0
      %1278 = vmatmul.mubr.f32.gmra.mxu0 %v1159
      %v1279 = vpop.f32.mrf.mxu0
      %v1280 = vadd.f32 %v1044, %v1279
      %v1281 = vpop.f32.mrf.mxu0
      %1282 = vmatprep.mubr.f32.mxu0 0.0
      %1283 = vmatmul.mubr.f32.gmra.mxu0 %v1161
      %v1284 = vpop.f32.mrf.mxu0
      %v1285 = vadd.f32 %v1049, %v1284
      %v1286 = vpop.f32.mrf.mxu0
      %1287 = vmatprep.mubr.f32.mxu0 0.0
      %1288 = vmatmul.mubr.f32.gmra.mxu0 %v1163
      %v1289 = vpop.f32.mrf.mxu0
      %v1290 = vadd.f32 %v1054, %v1289
      %v1291 = vpop.f32.mrf.mxu0
      %1292 = vmatprep.mubr.f32.mxu0 0.0
      %1293 = vmatmul.mubr.f32.gmra.mxu0 %v1165
      %v1294 = vpop.f32.mrf.mxu0
      %v1295 = vadd.f32 %v1059, %v1294
      %v1296 = vpop.f32.mrf.mxu0
      %1297 = vmatprep.mubr.f32.mxu0 0.0
      %1298 = vmatmul.mubr.f32.gmra.mxu0 %v1167
      %v1299 = vpop.f32.mrf.mxu0
      %v1300 = vadd.f32 %v1064, %v1299
      %v1301 = vpop.f32.mrf.mxu0
      %1302 = vmatprep.mubr.f32.mxu0 0.0
      %1303 = vmatmul.mubr.f32.gmra.mxu0 %v1169
      %v1304 = vpop.f32.mrf.mxu0
      %v1305 = vadd.f32 %v1069, %v1304
      %v1306 = vpop.f32.mrf.mxu0
      %1307 = vmatprep.mubr.f32.mxu0 0.0
      %1308 = vmatmul.mubr.f32.gmra.mxu0 %v1171
      %v1309 = vpop.f32.mrf.mxu0
      %v1310 = vadd.f32 %v1074, %v1309
      %v1311 = vpop.f32.mrf.mxu0
      %1312 = vmatprep.mubr.f32.mxu0 0.0
      %1313 = vmatmul.mubr.f32.gmra.mxu0 %v1173
      %v1314 = vpop.f32.mrf.mxu0
      %v1315 = vadd.f32 %v1079, %v1314
      %v1316 = vpop.f32.mrf.mxu0
      %1317 = vmatprep.mubr.f32.mxu0 0.0
      %1318 = vmatmul.mubr.f32.gmra.mxu0 %v1175
      %v1319 = vpop.f32.mrf.mxu0
      %v1320 = vadd.f32 %v1084, %v1319
      %v1321 = vpop.f32.mrf.mxu0
      %1322 = vmatprep.mubr.f32.mxu0 0.0
      %1323 = vmatmul.mubr.f32.gmra.mxu0 %v1177
      %v1324 = vpop.f32.mrf.mxu0
      %v1325 = vadd.f32 %v1089, %v1324
      %v1326 = vpop.f32.mrf.mxu0
      %1327 = vmatprep.mubr.f32.mxu0 0.0
      %1328 = vmatmul.mubr.f32.gmra.mxu0 %v1179
      %v1329 = vpop.f32.mrf.mxu0
      %v1330 = vadd.f32 %v1094, %v1329
      %v1331 = vpop.f32.mrf.mxu0
      %1332 = vmatprep.mubr.f32.mxu0 0.0
      %1333 = vmatmul.mubr.f32.gmra.mxu0 %v1181
      %v1334 = vpop.f32.mrf.mxu0
      %v1335 = vadd.f32 %v1099, %v1334
      %v1336 = vpop.f32.mrf.mxu0
      %1337 = vmatprep.mubr.f32.mxu0 0.0
      %1338 = vmatmul.mubr.f32.gmra.mxu0 %v1183
      %v1339 = vpop.f32.mrf.mxu0
      %v1340 = vadd.f32 %v1104, %v1339
      %v1341 = vpop.f32.mrf.mxu0
      %1342 = vmatprep.mubr.f32.mxu0 0.0
      %1343 = vmatmul.mubr.f32.gmra.mxu0 %v1185
      %v1344 = vpop.f32.mrf.mxu0
      %v1345 = vadd.f32 %v1109, %v1344
      %v1346 = vpop.f32.mrf.mxu0
      %1347 = vmatprep.mubr.f32.mxu0 0.0
      %1348 = vmatmul.mubr.f32.gmra.mxu0 %v1187
      %v1349 = vpop.f32.mrf.mxu0
      %v1350 = vadd.f32 %v1114, %v1349
      %v1351 = vpop.f32.mrf.mxu0
      %1352 = vmatprep.mubr.f32.mxu0 0.0
      %1353 = vmatmul.mubr.f32.gmra.mxu0 %v1189
      %v1354 = vpop.f32.mrf.mxu0
      %v1355 = vadd.f32 %v1119, %v1354
      %v1356 = vpop.f32.mrf.mxu0
      %1357 = vmatprep.mubr.f32.mxu0 0.0
      %1358 = vmatmul.mubr.f32.gmra.mxu0 %v1191
      %v1359 = vpop.f32.mrf.mxu0
      %v1360 = vadd.f32 %v1124, %v1359
      %v1361 = vpop.f32.mrf.mxu0
      %1362 = vmatprep.mubr.f32.mxu0 0.0
      %1363 = vmatmul.mubr.f32.gmra.mxu0 %v1193
      %v1364 = vpop.f32.mrf.mxu0
      %v1365 = vadd.f32 %v1129, %v1364
      %v1366 = vpop.f32.mrf.mxu0
      %1367 = vmatprep.mubr.f32.mxu0 0.0
      %1368 = vmatmul.mubr.f32.gmra.mxu0 %v1195
      %v1369 = vpop.f32.mrf.mxu0
      %v1370 = vadd.f32 %v1134, %v1369
      %v1371 = vpop.f32.mrf.mxu0
      %1372 = vmatprep.mubr.f32.mxu0 0.0
      %1373 = vmatmul.mubr.f32.gmra.mxu0 %v1197
      %v1374 = vpop.f32.mrf.mxu0
      %v1375 = vadd.f32 %v1139, %v1374
      %v1376 = vpop.f32.mrf.mxu0
      %1377 = vmatprep.mubr.f32.mxu0 0.0
      %1378 = vmatmul.mubr.f32.gmra.mxu0 %v1199
      %v1379 = vpop.f32.mrf.mxu0
      %v1380 = vadd.f32 %v1144, %v1379
      %v1381 = vpop.f32.mrf.mxu0
      %1382 = vmatprep.mubr.f32.mxu0 0.0
      %1383 = vmatmul.mubr.f32.gmra.mxu0 %v1201
      %v1384 = vpop.f32.mrf.mxu0
      %v1385 = vadd.f32 %v1149, %v1384
      %v1386 = vpop.f32.mrf.mxu0
      %1387 = vmatprep.mubr.f32.mxu0 0.0
      %1388 = vmatmul.mubr.f32.gmra.mxu0 %v1203
      %v1389 = vpop.f32.mrf.mxu0
      %v1390 = vadd.f32 %v1154, %v1389
      %v1391 = vpop.f32.mrf.mxu0
      %1392 = vdwg.mxu0
      %s1393 = scalar_lea.vmem %s1, 8
      %v1394 = vld [vmem:[%s1393] sm:$0xf]
      %vm1395 = vcmask 1045504
      %v1396 = vrot.slane %v819, 2
      %v1397 = vrot.slane %v820, 2
      %v1398 = vsel %vm1395, %v1396, %v1397
      %v1399 = vrot.slane %v821, 2
      %v1400 = vsel %vm1395, %v1397, %v1399
      %v1401 = vrot.slane %v822, 2
      %v1402 = vsel %vm1395, %v1399, %v1401
      %v1403 = vrot.slane %v823, 2
      %v1404 = vsel %vm1395, %v1401, %v1403
      %v1405 = vrot.slane %v824, 2
      %v1406 = vsel %vm1395, %v1403, %v1405
      %v1407 = vrot.slane %v825, 2
      %v1408 = vsel %vm1395, %v1405, %v1407
      %v1409 = vrot.slane %v826, 2
      %v1410 = vsel %vm1395, %v1407, %v1409
      %v1411 = vrot.slane %v827, 2
      %v1412 = vsel %vm1395, %v1409, %v1411
      %v1413 = vrot.slane %v828, 2
      %v1414 = vsel %vm1395, %v1411, %v1413
      %v1415 = vrot.slane %v829, 2
      %v1416 = vsel %vm1395, %v1413, %v1415
      %v1417 = vrot.slane %v830, 2
      %v1418 = vsel %vm1395, %v1415, %v1417
      %v1419 = vrot.slane %v831, 2
      %v1420 = vsel %vm1395, %v1417, %v1419
      %v1421 = vrot.slane %v832, 2
      %v1422 = vsel %vm1395, %v1419, %v1421
      %v1423 = vrot.slane %v833, 2
      %v1424 = vsel %vm1395, %v1421, %v1423
      %v1425 = vrot.slane %v834, 2
      %v1426 = vsel %vm1395, %v1423, %v1425
      %v1427 = vrot.slane %v835, 2
      %v1428 = vsel %vm1395, %v1425, %v1427
      %v1429 = vrot.slane %v836, 2
      %v1430 = vsel %vm1395, %v1427, %v1429
      %v1431 = vrot.slane %v837, 2
      %v1432 = vsel %vm1395, %v1429, %v1431
      %v1433 = vrot.slane %v838, 2
      %v1434 = vsel %vm1395, %v1431, %v1433
      %v1435 = vrot.slane %v839, 2
      %v1436 = vsel %vm1395, %v1433, %v1435
      %v1437 = vrot.slane %v840, 2
      %v1438 = vsel %vm1395, %v1435, %v1437
      %v1439 = vrot.slane %v841, 2
      %v1440 = vsel %vm1395, %v1437, %v1439
      %v1441 = vrot.slane %v842, 2
      %v1442 = vsel %vm1395, %v1439, %v1441
      %v1443 = vsel %vm919, %v1398, 0
      %v1445 = vsel %vm919, %v1400, 0
      %v1447 = vsel %vm919, %v1402, 0
      %v1449 = vsel %vm919, %v1404, 0
      %v1451 = vsel %vm919, %v1406, 0
      %v1453 = vsel %vm919, %v1408, 0
      %v1455 = vsel %vm919, %v1410, 0
      %v1457 = vsel %vm919, %v1412, 0
      %v1459 = vsel %vm919, %v1414, 0
      %v1461 = vsel %vm919, %v1416, 0
      %v1463 = vsel %vm919, %v1418, 0
      %v1465 = vsel %vm919, %v1420, 0
      %v1467 = vsel %vm919, %v1422, 0
      %v1469 = vsel %vm919, %v1424, 0
      %v1471 = vsel %vm919, %v1426, 0
      %v1473 = vsel %vm919, %v1428, 0
      %v1475 = vsel %vm919, %v1430, 0
      %v1477 = vsel %vm919, %v1432, 0
      %v1479 = vsel %vm919, %v1434, 0
      %v1481 = vsel %vm919, %v1436, 0
      %v1483 = vsel %vm919, %v1438, 0
      %v1485 = vsel %vm919, %v1440, 0
      %v1487 = vsel %vm919, %v1442, 0
      %v1489 = vsel %vm919, %v1441, 0
      %v1492 = vsel %vm968, %v1394, 0
      %1494 = vmatprep.subr.mxu0 0.0
      %1495 = vmatpush1.msra.mxu0 0.0
      %1496 = vmatprep.subr.mxu0 0.0
      %1497 = vmatpush1.msra.mxu0 0.0
      %1498 = vmatprep.subr.mxu0 0.0
      %1499 = vmatpush1.msra.mxu0 0.0
      %1500 = vmatprep.subr.mxu0 0.0
      %1501 = vmatpush1.msra.mxu0 0.0
      %1502 = vmatprep.subr.mxu0 0.0
      %1503 = vmatpush1.msra.mxu0 0.0
      %1504 = vmatprep.subr.mxu0 0.0
      %1505 = vmatpush1.msra.mxu0 0.0
      %1506 = vmatprep.subr.mxu0 0.0
      %1507 = vmatpush1.msra.mxu0 0.0
      %1508 = vmatprep.subr.mxu0 0.0
      %1509 = vmatpush1.msra.mxu0 0.0
      %1510 = vmatprep.subr.mxu0 0.0
      %1511 = vmatpush1.msra.mxu0 0.0
      %1512 = vmatprep.subr.mxu0 0.0
      %1513 = vmatpush1.msra.mxu0 0.0
      %1514 = vmatprep.subr.mxu0 0.0
      %1515 = vmatpush1.msra.mxu0 0.0
      %1516 = vmatprep.subr.mxu0 0.0
      %1517 = vmatpush1.msra.mxu0 0.0
      %1518 = vmatprep.subr.mxu0 0.0
      %1519 = vmatpush1.msra.mxu0 0.0
      %1520 = vmatprep.subr.mxu0 0.0
      %1521 = vmatpush1.msra.mxu0 0.0
      %1522 = vmatprep.subr.mxu0 0.0
      %1523 = vmatpush1.msra.mxu0 0.0
      %1524 = vmatprep.subr.mxu0 0.0
      %1525 = vmatpush1.msra.mxu0 %v1492
      %1526 = vmatprep.subr.mxu0 0.0
      %1527 = vmatpush2.msra.mxu0 0.0
      %1528 = vmatprep.subr.mxu0 0.0
      %1529 = vmatpush2.msra.mxu0 0.0
      %1530 = vmatprep.subr.mxu0 0.0
      %1531 = vmatpush2.msra.mxu0 0.0
      %1532 = vmatprep.subr.mxu0 0.0
      %1533 = vmatpush2.msra.mxu0 0.0
      %1534 = vmatprep.subr.mxu0 0.0
      %1535 = vmatpush2.msra.mxu0 0.0
      %1536 = vmatprep.subr.mxu0 0.0
      %1537 = vmatpush2.msra.mxu0 0.0
      %1538 = vmatprep.subr.mxu0 0.0
      %1539 = vmatpush2.msra.mxu0 0.0
      %1540 = vmatprep.subr.mxu0 0.0
      %1541 = vmatpush2.msra.mxu0 0.0
      %1542 = vmatprep.subr.mxu0 0.0
      %1543 = vmatpush2.msra.mxu0 0.0
      %1544 = vmatprep.subr.mxu0 0.0
      %1545 = vmatpush2.msra.mxu0 0.0
      %1546 = vmatprep.subr.mxu0 0.0
      %1547 = vmatpush2.msra.mxu0 0.0
      %1548 = vmatprep.subr.mxu0 0.0
      %1549 = vmatpush2.msra.mxu0 0.0
      %1550 = vmatprep.subr.mxu0 0.0
      %1551 = vmatpush2.msra.mxu0 0.0
      %1552 = vmatprep.subr.mxu0 0.0
      %1553 = vmatpush2.msra.mxu0 0.0
      %1554 = vmatprep.subr.mxu0 0.0
      %1555 = vmatpush2.msra.mxu0 0.0
      %1556 = vmatprep.subr.mxu0 0.0
      %1557 = vmatpush2.msra.mxu0 0.0
      %1558 = vmatprep.mubr.f32.mxu0 0.0
      %1559 = vmatmul.mubr.f32.gmra.mxu0 %v1443
      %v1560 = vpop.f32.mrf.mxu0
      %v1561 = vadd.f32 0.0, %v1560
      %v1562 = vpop.f32.mrf.mxu0
      %1563 = vmatprep.mubr.f32.mxu0 0.0
      %1564 = vmatmul.mubr.f32.gmra.mxu0 %v1445
      %v1565 = vpop.f32.mrf.mxu0
      %v1566 = vadd.f32 0.0, %v1565
      %v1567 = vpop.f32.mrf.mxu0
      %1568 = vmatprep.mubr.f32.mxu0 0.0
      %1569 = vmatmul.mubr.f32.gmra.mxu0 %v1447
      %v1570 = vpop.f32.mrf.mxu0
      %v1571 = vadd.f32 0.0, %v1570
      %v1572 = vpop.f32.mrf.mxu0
      %1573 = vmatprep.mubr.f32.mxu0 0.0
      %1574 = vmatmul.mubr.f32.gmra.mxu0 %v1449
      %v1575 = vpop.f32.mrf.mxu0
      %v1576 = vadd.f32 0.0, %v1575
      %v1577 = vpop.f32.mrf.mxu0
      %1578 = vmatprep.mubr.f32.mxu0 0.0
      %1579 = vmatmul.mubr.f32.gmra.mxu0 %v1451
      %v1580 = vpop.f32.mrf.mxu0
      %v1581 = vadd.f32 0.0, %v1580
      %v1582 = vpop.f32.mrf.mxu0
      %1583 = vmatprep.mubr.f32.mxu0 0.0
      %1584 = vmatmul.mubr.f32.gmra.mxu0 %v1453
      %v1585 = vpop.f32.mrf.mxu0
      %v1586 = vadd.f32 0.0, %v1585
      %v1587 = vpop.f32.mrf.mxu0
      %1588 = vmatprep.mubr.f32.mxu0 0.0
      %1589 = vmatmul.mubr.f32.gmra.mxu0 %v1455
      %v1590 = vpop.f32.mrf.mxu0
      %v1591 = vadd.f32 0.0, %v1590
      %v1592 = vpop.f32.mrf.mxu0
      %1593 = vmatprep.mubr.f32.mxu0 0.0
      %1594 = vmatmul.mubr.f32.gmra.mxu0 %v1457
      %v1595 = vpop.f32.mrf.mxu0
      %v1596 = vadd.f32 0.0, %v1595
      %v1597 = vpop.f32.mrf.mxu0
      %1598 = vmatprep.mubr.f32.mxu0 0.0
      %1599 = vmatmul.mubr.f32.gmra.mxu0 %v1459
      %v1600 = vpop.f32.mrf.mxu0
      %v1601 = vadd.f32 0.0, %v1600
      %v1602 = vpop.f32.mrf.mxu0
      %1603 = vmatprep.mubr.f32.mxu0 0.0
      %1604 = vmatmul.mubr.f32.gmra.mxu0 %v1461
      %v1605 = vpop.f32.mrf.mxu0
      %v1606 = vadd.f32 0.0, %v1605
      %v1607 = vpop.f32.mrf.mxu0
      %1608 = vmatprep.mubr.f32.mxu0 0.0
      %1609 = vmatmul.mubr.f32.gmra.mxu0 %v1463
      %v1610 = vpop.f32.mrf.mxu0
      %v1611 = vadd.f32 0.0, %v1610
      %v1612 = vpop.f32.mrf.mxu0
      %1613 = vmatprep.mubr.f32.mxu0 0.0
      %1614 = vmatmul.mubr.f32.gmra.mxu0 %v1465
      %v1615 = vpop.f32.mrf.mxu0
      %v1616 = vadd.f32 0.0, %v1615
      %v1617 = vpop.f32.mrf.mxu0
      %1618 = vmatprep.mubr.f32.mxu0 0.0
      %1619 = vmatmul.mubr.f32.gmra.mxu0 %v1467
      %v1620 = vpop.f32.mrf.mxu0
      %v1621 = vadd.f32 0.0, %v1620
      %v1622 = vpop.f32.mrf.mxu0
      %1623 = vmatprep.mubr.f32.mxu0 0.0
      %1624 = vmatmul.mubr.f32.gmra.mxu0 %v1469
      %v1625 = vpop.f32.mrf.mxu0
      %v1626 = vadd.f32 0.0, %v1625
      %v1627 = vpop.f32.mrf.mxu0
      %1628 = vmatprep.mubr.f32.mxu0 0.0
      %1629 = vmatmul.mubr.f32.gmra.mxu0 %v1471
      %v1630 = vpop.f32.mrf.mxu0
      %v1631 = vadd.f32 0.0, %v1630
      %v1632 = vpop.f32.mrf.mxu0
      %1633 = vmatprep.mubr.f32.mxu0 0.0
      %1634 = vmatmul.mubr.f32.gmra.mxu0 %v1473
      %v1635 = vpop.f32.mrf.mxu0
      %v1636 = vadd.f32 0.0, %v1635
      %v1637 = vpop.f32.mrf.mxu0
      %1638 = vmatprep.mubr.f32.mxu0 0.0
      %1639 = vmatmul.mubr.f32.gmra.mxu0 %v1475
      %v1640 = vpop.f32.mrf.mxu0
      %v1641 = vadd.f32 0.0, %v1640
      %v1642 = vpop.f32.mrf.mxu0
      %1643 = vmatprep.mubr.f32.mxu0 0.0
      %1644 = vmatmul.mubr.f32.gmra.mxu0 %v1477
      %v1645 = vpop.f32.mrf.mxu0
      %v1646 = vadd.f32 0.0, %v1645
      %v1647 = vpop.f32.mrf.mxu0
      %1648 = vmatprep.mubr.f32.mxu0 0.0
      %1649 = vmatmul.mubr.f32.gmra.mxu0 %v1479
      %v1650 = vpop.f32.mrf.mxu0
      %v1651 = vadd.f32 0.0, %v1650
      %v1652 = vpop.f32.mrf.mxu0
      %1653 = vmatprep.mubr.f32.mxu0 0.0
      %1654 = vmatmul.mubr.f32.gmra.mxu0 %v1481
      %v1655 = vpop.f32.mrf.mxu0
      %v1656 = vadd.f32 0.0, %v1655
      %v1657 = vpop.f32.mrf.mxu0
      %1658 = vmatprep.mubr.f32.mxu0 0.0
      %1659 = vmatmul.mubr.f32.gmra.mxu0 %v1483
      %v1660 = vpop.f32.mrf.mxu0
      %v1661 = vadd.f32 0.0, %v1660
      %v1662 = vpop.f32.mrf.mxu0
      %1663 = vmatprep.mubr.f32.mxu0 0.0
      %1664 = vmatmul.mubr.f32.gmra.mxu0 %v1485
      %v1665 = vpop.f32.mrf.mxu0
      %v1666 = vadd.f32 0.0, %v1665
      %v1667 = vpop.f32.mrf.mxu0
      %1668 = vmatprep.mubr.f32.mxu0 0.0
      %1669 = vmatmul.mubr.f32.gmra.mxu0 %v1487
      %v1670 = vpop.f32.mrf.mxu0
      %v1671 = vadd.f32 0.0, %v1670
      %v1672 = vpop.f32.mrf.mxu0
      %1673 = vmatprep.mubr.f32.mxu0 0.0
      %1674 = vmatmul.mubr.f32.gmra.mxu0 %v1489
      %v1675 = vpop.f32.mrf.mxu0
      %v1676 = vadd.f32 0.0, %v1675
      %v1677 = vpop.f32.mrf.mxu0
      %1678 = vdwg.mxu0
      %v1679 = vadd.f32 %v1275, %v1561
      %v1680 = vadd.f32 %v1280, %v1566
      %v1681 = vadd.f32 %v1285, %v1571
      %v1682 = vadd.f32 %v1290, %v1576
      %v1683 = vadd.f32 %v1295, %v1581
      %v1684 = vadd.f32 %v1300, %v1586
      %v1685 = vadd.f32 %v1305, %v1591
      %v1686 = vadd.f32 %v1310, %v1596
      %v1687 = vadd.f32 %v1315, %v1601
      %v1688 = vadd.f32 %v1320, %v1606
      %v1689 = vadd.f32 %v1325, %v1611
      %v1690 = vadd.f32 %v1330, %v1616
      %v1691 = vadd.f32 %v1335, %v1621
      %v1692 = vadd.f32 %v1340, %v1626
      %v1693 = vadd.f32 %v1345, %v1631
      %v1694 = vadd.f32 %v1350, %v1636
      %v1695 = vadd.f32 %v1355, %v1641
      %v1696 = vadd.f32 %v1360, %v1646
      %v1697 = vadd.f32 %v1365, %v1651
      %v1698 = vadd.f32 %v1370, %v1656
      %v1699 = vadd.f32 %v1375, %v1661
      %v1700 = vadd.f32 %v1380, %v1666
      %v1701 = vadd.f32 %v1385, %v1671
      %v1702 = vadd.f32 %v1390, %v1676
      %s1703 = scalar_lea.vmem %s1, 12
      %v1704 = vld [vmem:[%s1703] sm:$0xf]
      %vm1705 = vcmask 1044480
      %v1706 = vrot.slane %v819, 3
      %v1707 = vrot.slane %v820, 3
      %v1708 = vsel %vm1705, %v1706, %v1707
      %v1709 = vrot.slane %v821, 3
      %v1710 = vsel %vm1705, %v1707, %v1709
      %v1711 = vrot.slane %v822, 3
      %v1712 = vsel %vm1705, %v1709, %v1711
      %v1713 = vrot.slane %v823, 3
      %v1714 = vsel %vm1705, %v1711, %v1713
      %v1715 = vrot.slane %v824, 3
      %v1716 = vsel %vm1705, %v1713, %v1715
      %v1717 = vrot.slane %v825, 3
      %v1718 = vsel %vm1705, %v1715, %v1717
      %v1719 = vrot.slane %v826, 3
      %v1720 = vsel %vm1705, %v1717, %v1719
      %v1721 = vrot.slane %v827, 3
      %v1722 = vsel %vm1705, %v1719, %v1721
      %v1723 = vrot.slane %v828, 3
      %v1724 = vsel %vm1705, %v1721, %v1723
      %v1725 = vrot.slane %v829, 3
      %v1726 = vsel %vm1705, %v1723, %v1725
      %v1727 = vrot.slane %v830, 3
      %v1728 = vsel %vm1705, %v1725, %v1727
      %v1729 = vrot.slane %v831, 3
      %v1730 = vsel %vm1705, %v1727, %v1729
      %v1731 = vrot.slane %v832, 3
      %v1732 = vsel %vm1705, %v1729, %v1731
      %v1733 = vrot.slane %v833, 3
      %v1734 = vsel %vm1705, %v1731, %v1733
      %v1735 = vrot.slane %v834, 3
      %v1736 = vsel %vm1705, %v1733, %v1735
      %v1737 = vrot.slane %v835, 3
      %v1738 = vsel %vm1705, %v1735, %v1737
      %v1739 = vrot.slane %v836, 3
      %v1740 = vsel %vm1705, %v1737, %v1739
      %v1741 = vrot.slane %v837, 3
      %v1742 = vsel %vm1705, %v1739, %v1741
      %v1743 = vrot.slane %v838, 3
      %v1744 = vsel %vm1705, %v1741, %v1743
      %v1745 = vrot.slane %v839, 3
      %v1746 = vsel %vm1705, %v1743, %v1745
      %v1747 = vrot.slane %v840, 3
      %v1748 = vsel %vm1705, %v1745, %v1747
      %v1749 = vrot.slane %v841, 3
      %v1750 = vsel %vm1705, %v1747, %v1749
      %v1751 = vrot.slane %v842, 3
      %v1752 = vsel %vm1705, %v1749, %v1751
      %v1753 = vsel %vm919, %v1708, 0
      %v1755 = vsel %vm919, %v1710, 0
      %v1757 = vsel %vm919, %v1712, 0
      %v1759 = vsel %vm919, %v1714, 0
      %v1761 = vsel %vm919, %v1716, 0
      %v1763 = vsel %vm919, %v1718, 0
      %v1765 = vsel %vm919, %v1720, 0
      %v1767 = vsel %vm919, %v1722, 0
      %v1769 = vsel %vm919, %v1724, 0
      %v1771 = vsel %vm919, %v1726, 0
      %v1773 = vsel %vm919, %v1728, 0
      %v1775 = vsel %vm919, %v1730, 0
      %v1777 = vsel %vm919, %v1732, 0
      %v1779 = vsel %vm919, %v1734, 0
      %v1781 = vsel %vm919, %v1736, 0
      %v1783 = vsel %vm919, %v1738, 0
      %v1785 = vsel %vm919, %v1740, 0
      %v1787 = vsel %vm919, %v1742, 0
      %v1789 = vsel %vm919, %v1744, 0
      %v1791 = vsel %vm919, %v1746, 0
      %v1793 = vsel %vm919, %v1748, 0
      %v1795 = vsel %vm919, %v1750, 0
      %v1797 = vsel %vm919, %v1752, 0
      %v1799 = vsel %vm919, %v1751, 0
      %v1802 = vsel %vm968, %v1704, 0
      %1804 = vmatprep.subr.mxu0 0.0
      %1805 = vmatpush1.msra.mxu0 0.0
      %1806 = vmatprep.subr.mxu0 0.0
      %1807 = vmatpush1.msra.mxu0 0.0
      %1808 = vmatprep.subr.mxu0 0.0
      %1809 = vmatpush1.msra.mxu0 0.0
      %1810 = vmatprep.subr.mxu0 0.0
      %1811 = vmatpush1.msra.mxu0 0.0
      %1812 = vmatprep.subr.mxu0 0.0
      %1813 = vmatpush1.msra.mxu0 0.0
      %1814 = vmatprep.subr.mxu0 0.0
      %1815 = vmatpush1.msra.mxu0 0.0
      %1816 = vmatprep.subr.mxu0 0.0
      %1817 = vmatpush1.msra.mxu0 0.0
      %1818 = vmatprep.subr.mxu0 0.0
      %1819 = vmatpush1.msra.mxu0 0.0
      %1820 = vmatprep.subr.mxu0 0.0
      %1821 = vmatpush1.msra.mxu0 0.0
      %1822 = vmatprep.subr.mxu0 0.0
      %1823 = vmatpush1.msra.mxu0 0.0
      %1824 = vmatprep.subr.mxu0 0.0
      %1825 = vmatpush1.msra.mxu0 0.0
      %1826 = vmatprep.subr.mxu0 0.0
      %1827 = vmatpush1.msra.mxu0 0.0
      %1828 = vmatprep.subr.mxu0 0.0
      %1829 = vmatpush1.msra.mxu0 0.0
      %1830 = vmatprep.subr.mxu0 0.0
      %1831 = vmatpush1.msra.mxu0 0.0
      %1832 = vmatprep.subr.mxu0 0.0
      %1833 = vmatpush1.msra.mxu0 0.0
      %1834 = vmatprep.subr.mxu0 0.0
      %1835 = vmatpush1.msra.mxu0 %v1802
      %1836 = vmatprep.subr.mxu0 0.0
      %1837 = vmatpush2.msra.mxu0 0.0
      %1838 = vmatprep.subr.mxu0 0.0
      %1839 = vmatpush2.msra.mxu0 0.0
      %1840 = vmatprep.subr.mxu0 0.0
      %1841 = vmatpush2.msra.mxu0 0.0
      %1842 = vmatprep.subr.mxu0 0.0
      %1843 = vmatpush2.msra.mxu0 0.0
      %1844 = vmatprep.subr.mxu0 0.0
      %1845 = vmatpush2.msra.mxu0 0.0
      %1846 = vmatprep.subr.mxu0 0.0
      %1847 = vmatpush2.msra.mxu0 0.0
      %1848 = vmatprep.subr.mxu0 0.0
      %1849 = vmatpush2.msra.mxu0 0.0
      %1850 = vmatprep.subr.mxu0 0.0
      %1851 = vmatpush2.msra.mxu0 0.0
      %1852 = vmatprep.subr.mxu0 0.0
      %1853 = vmatpush2.msra.mxu0 0.0
      %1854 = vmatprep.subr.mxu0 0.0
      %1855 = vmatpush2.msra.mxu0 0.0
      %1856 = vmatprep.subr.mxu0 0.0
      %1857 = vmatpush2.msra.mxu0 0.0
      %1858 = vmatprep.subr.mxu0 0.0
      %1859 = vmatpush2.msra.mxu0 0.0
      %1860 = vmatprep.subr.mxu0 0.0
      %1861 = vmatpush2.msra.mxu0 0.0
      %1862 = vmatprep.subr.mxu0 0.0
      %1863 = vmatpush2.msra.mxu0 0.0
      %1864 = vmatprep.subr.mxu0 0.0
      %1865 = vmatpush2.msra.mxu0 0.0
      %1866 = vmatprep.subr.mxu0 0.0
      %1867 = vmatpush2.msra.mxu0 0.0
      %1868 = vmatprep.mubr.f32.mxu0 0.0
      %1869 = vmatmul.mubr.f32.gmra.mxu0 %v1753
      %v1870 = vpop.f32.mrf.mxu0
      %v1871 = vadd.f32 0.0, %v1870
      %v1872 = vpop.f32.mrf.mxu0
      %1873 = vmatprep.mubr.f32.mxu0 0.0
      %1874 = vmatmul.mubr.f32.gmra.mxu0 %v1755
      %v1875 = vpop.f32.mrf.mxu0
      %v1876 = vadd.f32 0.0, %v1875
      %v1877 = vpop.f32.mrf.mxu0
      %1878 = vmatprep.mubr.f32.mxu0 0.0
      %1879 = vmatmul.mubr.f32.gmra.mxu0 %v1757
      %v1880 = vpop.f32.mrf.mxu0
      %v1881 = vadd.f32 0.0, %v1880
      %v1882 = vpop.f32.mrf.mxu0
      %1883 = vmatprep.mubr.f32.mxu0 0.0
      %1884 = vmatmul.mubr.f32.gmra.mxu0 %v1759
      %v1885 = vpop.f32.mrf.mxu0
      %v1886 = vadd.f32 0.0, %v1885
      %v1887 = vpop.f32.mrf.mxu0
      %1888 = vmatprep.mubr.f32.mxu0 0.0
      %1889 = vmatmul.mubr.f32.gmra.mxu0 %v1761
      %v1890 = vpop.f32.mrf.mxu0
      %v1891 = vadd.f32 0.0, %v1890
      %v1892 = vpop.f32.mrf.mxu0
      %1893 = vmatprep.mubr.f32.mxu0 0.0
      %1894 = vmatmul.mubr.f32.gmra.mxu0 %v1763
      %v1895 = vpop.f32.mrf.mxu0
      %v1896 = vadd.f32 0.0, %v1895
      %v1897 = vpop.f32.mrf.mxu0
      %1898 = vmatprep.mubr.f32.mxu0 0.0
      %1899 = vmatmul.mubr.f32.gmra.mxu0 %v1765
      %v1900 = vpop.f32.mrf.mxu0
      %v1901 = vadd.f32 0.0, %v1900
      %v1902 = vpop.f32.mrf.mxu0
      %1903 = vmatprep.mubr.f32.mxu0 0.0
      %1904 = vmatmul.mubr.f32.gmra.mxu0 %v1767
      %v1905 = vpop.f32.mrf.mxu0
      %v1906 = vadd.f32 0.0, %v1905
      %v1907 = vpop.f32.mrf.mxu0
      %1908 = vmatprep.mubr.f32.mxu0 0.0
      %1909 = vmatmul.mubr.f32.gmra.mxu0 %v1769
      %v1910 = vpop.f32.mrf.mxu0
      %v1911 = vadd.f32 0.0, %v1910
      %v1912 = vpop.f32.mrf.mxu0
      %1913 = vmatprep.mubr.f32.mxu0 0.0
      %1914 = vmatmul.mubr.f32.gmra.mxu0 %v1771
      %v1915 = vpop.f32.mrf.mxu0
      %v1916 = vadd.f32 0.0, %v1915
      %v1917 = vpop.f32.mrf.mxu0
      %1918 = vmatprep.mubr.f32.mxu0 0.0
      %1919 = vmatmul.mubr.f32.gmra.mxu0 %v1773
      %v1920 = vpop.f32.mrf.mxu0
      %v1921 = vadd.f32 0.0, %v1920
      %v1922 = vpop.f32.mrf.mxu0
      %1923 = vmatprep.mubr.f32.mxu0 0.0
      %1924 = vmatmul.mubr.f32.gmra.mxu0 %v1775
      %v1925 = vpop.f32.mrf.mxu0
      %v1926 = vadd.f32 0.0, %v1925
      %v1927 = vpop.f32.mrf.mxu0
      %1928 = vmatprep.mubr.f32.mxu0 0.0
      %1929 = vmatmul.mubr.f32.gmra.mxu0 %v1777
      %v1930 = vpop.f32.mrf.mxu0
      %v1931 = vadd.f32 0.0, %v1930
      %v1932 = vpop.f32.mrf.mxu0
      %1933 = vmatprep.mubr.f32.mxu0 0.0
      %1934 = vmatmul.mubr.f32.gmra.mxu0 %v1779
      %v1935 = vpop.f32.mrf.mxu0
      %v1936 = vadd.f32 0.0, %v1935
      %v1937 = vpop.f32.mrf.mxu0
      %1938 = vmatprep.mubr.f32.mxu0 0.0
      %1939 = vmatmul.mubr.f32.gmra.mxu0 %v1781
      %v1940 = vpop.f32.mrf.mxu0
      %v1941 = vadd.f32 0.0, %v1940
      %v1942 = vpop.f32.mrf.mxu0
      %1943 = vmatprep.mubr.f32.mxu0 0.0
      %1944 = vmatmul.mubr.f32.gmra.mxu0 %v1783
      %v1945 = vpop.f32.mrf.mxu0
      %v1946 = vadd.f32 0.0, %v1945
      %v1947 = vpop.f32.mrf.mxu0
      %1948 = vmatprep.mubr.f32.mxu0 0.0
      %1949 = vmatmul.mubr.f32.gmra.mxu0 %v1785
      %v1950 = vpop.f32.mrf.mxu0
      %v1951 = vadd.f32 0.0, %v1950
      %v1952 = vpop.f32.mrf.mxu0
      %1953 = vmatprep.mubr.f32.mxu0 0.0
      %1954 = vmatmul.mubr.f32.gmra.mxu0 %v1787
      %v1955 = vpop.f32.mrf.mxu0
      %v1956 = vadd.f32 0.0, %v1955
      %v1957 = vpop.f32.mrf.mxu0
      %1958 = vmatprep.mubr.f32.mxu0 0.0
      %1959 = vmatmul.mubr.f32.gmra.mxu0 %v1789
      %v1960 = vpop.f32.mrf.mxu0
      %v1961 = vadd.f32 0.0, %v1960
      %v1962 = vpop.f32.mrf.mxu0
      %1963 = vmatprep.mubr.f32.mxu0 0.0
      %1964 = vmatmul.mubr.f32.gmra.mxu0 %v1791
      %v1965 = vpop.f32.mrf.mxu0
      %v1966 = vadd.f32 0.0, %v1965
      %v1967 = vpop.f32.mrf.mxu0
      %1968 = vmatprep.mubr.f32.mxu0 0.0
      %1969 = vmatmul.mubr.f32.gmra.mxu0 %v1793
      %v1970 = vpop.f32.mrf.mxu0
      %v1971 = vadd.f32 0.0, %v1970
      %v1972 = vpop.f32.mrf.mxu0
      %1973 = vmatprep.mubr.f32.mxu0 0.0
      %1974 = vmatmul.mubr.f32.gmra.mxu0 %v1795
      %v1975 = vpop.f32.mrf.mxu0
      %v1976 = vadd.f32 0.0, %v1975
      %v1977 = vpop.f32.mrf.mxu0
      %1978 = vmatprep.mubr.f32.mxu0 0.0
      %1979 = vmatmul.mubr.f32.gmra.mxu0 %v1797
      %v1980 = vpop.f32.mrf.mxu0
      %v1981 = vadd.f32 0.0, %v1980
      %v1982 = vpop.f32.mrf.mxu0
      %1983 = vmatprep.mubr.f32.mxu0 0.0
      %1984 = vmatmul.mubr.f32.gmra.mxu0 %v1799
      %v1985 = vpop.f32.mrf.mxu0
      %v1986 = vadd.f32 0.0, %v1985
      %v1987 = vpop.f32.mrf.mxu0
      %1988 = vdwg.mxu0
      %v1989 = vadd.f32 %v1679, %v1871
      %v1990 = vadd.f32 %v1680, %v1876
      %v1991 = vadd.f32 %v1681, %v1881
      %v1992 = vadd.f32 %v1682, %v1886
      %v1993 = vadd.f32 %v1683, %v1891
      %v1994 = vadd.f32 %v1684, %v1896
      %v1995 = vadd.f32 %v1685, %v1901
      %v1996 = vadd.f32 %v1686, %v1906
      %v1997 = vadd.f32 %v1687, %v1911
      %v1998 = vadd.f32 %v1688, %v1916
      %v1999 = vadd.f32 %v1689, %v1921
      %v2000 = vadd.f32 %v1690, %v1926
      %v2001 = vadd.f32 %v1691, %v1931
      %v2002 = vadd.f32 %v1692, %v1936
      %v2003 = vadd.f32 %v1693, %v1941
      %v2004 = vadd.f32 %v1694, %v1946
      %v2005 = vadd.f32 %v1695, %v1951
      %v2006 = vadd.f32 %v1696, %v1956
      %v2007 = vadd.f32 %v1697, %v1961
      %v2008 = vadd.f32 %v1698, %v1966
      %v2009 = vadd.f32 %v1699, %v1971
      %v2010 = vadd.f32 %v1700, %v1976
      %v2011 = vadd.f32 %v1701, %v1981
      %v2012 = vadd.f32 %v1702, %v1986
      %s2013 = scalar_lea.vmem %s1, 16
      %v2014 = vld [vmem:[%s2013] sm:$0xf]
      %v2015 = vrot.slane %v819, 4
      %v2016 = vrot.slane %v820, 4
      %v2017 = vsel %vm968, %v2015, %v2016
      %v2018 = vrot.slane %v821, 4
      %v2019 = vsel %vm968, %v2016, %v2018
      %v2020 = vrot.slane %v822, 4
      %v2021 = vsel %vm968, %v2018, %v2020
      %v2022 = vrot.slane %v823, 4
      %v2023 = vsel %vm968, %v2020, %v2022
      %v2024 = vrot.slane %v824, 4
      %v2025 = vsel %vm968, %v2022, %v2024
      %v2026 = vrot.slane %v825, 4
      %v2027 = vsel %vm968, %v2024, %v2026
      %v2028 = vrot.slane %v826, 4
      %v2029 = vsel %vm968, %v2026, %v2028
      %v2030 = vrot.slane %v827, 4
      %v2031 = vsel %vm968, %v2028, %v2030
      %v2032 = vrot.slane %v828, 4
      %v2033 = vsel %vm968, %v2030, %v2032
      %v2034 = vrot.slane %v829, 4
      %v2035 = vsel %vm968, %v2032, %v2034
      %v2036 = vrot.slane %v830, 4
      %v2037 = vsel %vm968, %v2034, %v2036
      %v2038 = vrot.slane %v831, 4
      %v2039 = vsel %vm968, %v2036, %v2038
      %v2040 = vrot.slane %v832, 4
      %v2041 = vsel %vm968, %v2038, %v2040
      %v2042 = vrot.slane %v833, 4
      %v2043 = vsel %vm968, %v2040, %v2042
      %v2044 = vrot.slane %v834, 4
      %v2045 = vsel %vm968, %v2042, %v2044
      %v2046 = vrot.slane %v835, 4
      %v2047 = vsel %vm968, %v2044, %v2046
      %v2048 = vrot.slane %v836, 4
      %v2049 = vsel %vm968, %v2046, %v2048
      %v2050 = vrot.slane %v837, 4
      %v2051 = vsel %vm968, %v2048, %v2050
      %v2052 = vrot.slane %v838, 4
      %v2053 = vsel %vm968, %v2050, %v2052
      %v2054 = vrot.slane %v839, 4
      %v2055 = vsel %vm968, %v2052, %v2054
      %v2056 = vrot.slane %v840, 4
      %v2057 = vsel %vm968, %v2054, %v2056
      %v2058 = vrot.slane %v841, 4
      %v2059 = vsel %vm968, %v2056, %v2058
      %v2060 = vrot.slane %v842, 4
      %v2061 = vsel %vm968, %v2058, %v2060
      %v2062 = vsel %vm919, %v2017, 0
      %v2064 = vsel %vm919, %v2019, 0
      %v2066 = vsel %vm919, %v2021, 0
      %v2068 = vsel %vm919, %v2023, 0
      %v2070 = vsel %vm919, %v2025, 0
      %v2072 = vsel %vm919, %v2027, 0
      %v2074 = vsel %vm919, %v2029, 0
      %v2076 = vsel %vm919, %v2031, 0
      %v2078 = vsel %vm919, %v2033, 0
      %v2080 = vsel %vm919, %v2035, 0
      %v2082 = vsel %vm919, %v2037, 0
      %v2084 = vsel %vm919, %v2039, 0
      %v2086 = vsel %vm919, %v2041, 0
      %v2088 = vsel %vm919, %v2043, 0
      %v2090 = vsel %vm919, %v2045, 0
      %v2092 = vsel %vm919, %v2047, 0
      %v2094 = vsel %vm919, %v2049, 0
      %v2096 = vsel %vm919, %v2051, 0
      %v2098 = vsel %vm919, %v2053, 0
      %v2100 = vsel %vm919, %v2055, 0
      %v2102 = vsel %vm919, %v2057, 0
      %v2104 = vsel %vm919, %v2059, 0
      %v2106 = vsel %vm919, %v2061, 0
      %v2108 = vsel %vm919, %v2060, 0
      %v2111 = vsel %vm968, %v2014, 0
      %2113 = vmatprep.subr.mxu0 0.0
      %2114 = vmatpush1.msra.mxu0 0.0
      %2115 = vmatprep.subr.mxu0 0.0
      %2116 = vmatpush1.msra.mxu0 0.0
      %2117 = vmatprep.subr.mxu0 0.0
      %2118 = vmatpush1.msra.mxu0 0.0
      %2119 = vmatprep.subr.mxu0 0.0
      %2120 = vmatpush1.msra.mxu0 0.0
      %2121 = vmatprep.subr.mxu0 0.0
      %2122 = vmatpush1.msra.mxu0 0.0
      %2123 = vmatprep.subr.mxu0 0.0
      %2124 = vmatpush1.msra.mxu0 0.0
      %2125 = vmatprep.subr.mxu0 0.0
      %2126 = vmatpush1.msra.mxu0 0.0
      %2127 = vmatprep.subr.mxu0 0.0
      %2128 = vmatpush1.msra.mxu0 0.0
      %2129 = vmatprep.subr.mxu0 0.0
      %2130 = vmatpush1.msra.mxu0 0.0
      %2131 = vmatprep.subr.mxu0 0.0
      %2132 = vmatpush1.msra.mxu0 0.0
      %2133 = vmatprep.subr.mxu0 0.0
      %2134 = vmatpush1.msra.mxu0 0.0
      %2135 = vmatprep.subr.mxu0 0.0
      %2136 = vmatpush1.msra.mxu0 0.0
      %2137 = vmatprep.subr.mxu0 0.0
      %2138 = vmatpush1.msra.mxu0 0.0
      %2139 = vmatprep.subr.mxu0 0.0
      %2140 = vmatpush1.msra.mxu0 0.0
      %2141 = vmatprep.subr.mxu0 0.0
      %2142 = vmatpush1.msra.mxu0 0.0
      %2143 = vmatprep.subr.mxu0 0.0
      %2144 = vmatpush1.msra.mxu0 %v2111
      %2145 = vmatprep.subr.mxu0 0.0
      %2146 = vmatpush2.msra.mxu0 0.0
      %2147 = vmatprep.subr.mxu0 0.0
      %2148 = vmatpush2.msra.mxu0 0.0
      %2149 = vmatprep.subr.mxu0 0.0
      %2150 = vmatpush2.msra.mxu0 0.0
      %2151 = vmatprep.subr.mxu0 0.0
      %2152 = vmatpush2.msra.mxu0 0.0
      %2153 = vmatprep.subr.mxu0 0.0
      %2154 = vmatpush2.msra.mxu0 0.0
      %2155 = vmatprep.subr.mxu0 0.0
      %2156 = vmatpush2.msra.mxu0 0.0
      %2157 = vmatprep.subr.mxu0 0.0
      %2158 = vmatpush2.msra.mxu0 0.0
      %2159 = vmatprep.subr.mxu0 0.0
      %2160 = vmatpush2.msra.mxu0 0.0
      %2161 = vmatprep.subr.mxu0 0.0
      %2162 = vmatpush2.msra.mxu0 0.0
      %2163 = vmatprep.subr.mxu0 0.0
      %2164 = vmatpush2.msra.mxu0 0.0
      %2165 = vmatprep.subr.mxu0 0.0
      %2166 = vmatpush2.msra.mxu0 0.0
      %2167 = vmatprep.subr.mxu0 0.0
      %2168 = vmatpush2.msra.mxu0 0.0
      %2169 = vmatprep.subr.mxu0 0.0
      %2170 = vmatpush2.msra.mxu0 0.0
      %2171 = vmatprep.subr.mxu0 0.0
      %2172 = vmatpush2.msra.mxu0 0.0
      %2173 = vmatprep.subr.mxu0 0.0
      %2174 = vmatpush2.msra.mxu0 0.0
      %2175 = vmatprep.subr.mxu0 0.0
      %2176 = vmatpush2.msra.mxu0 0.0
      %2177 = vmatprep.mubr.f32.mxu0 0.0
      %2178 = vmatmul.mubr.f32.gmra.mxu0 %v2062
      %v2179 = vpop.f32.mrf.mxu0
      %v2180 = vadd.f32 0.0, %v2179
      %v2181 = vpop.f32.mrf.mxu0
      %2182 = vmatprep.mubr.f32.mxu0 0.0
      %2183 = vmatmul.mubr.f32.gmra.mxu0 %v2064
      %v2184 = vpop.f32.mrf.mxu0
      %v2185 = vadd.f32 0.0, %v2184
      %v2186 = vpop.f32.mrf.mxu0
      %2187 = vmatprep.mubr.f32.mxu0 0.0
      %2188 = vmatmul.mubr.f32.gmra.mxu0 %v2066
      %v2189 = vpop.f32.mrf.mxu0
      %v2190 = vadd.f32 0.0, %v2189
      %v2191 = vpop.f32.mrf.mxu0
      %2192 = vmatprep.mubr.f32.mxu0 0.0
      %2193 = vmatmul.mubr.f32.gmra.mxu0 %v2068
      %v2194 = vpop.f32.mrf.mxu0
      %v2195 = vadd.f32 0.0, %v2194
      %v2196 = vpop.f32.mrf.mxu0
      %2197 = vmatprep.mubr.f32.mxu0 0.0
      %2198 = vmatmul.mubr.f32.gmra.mxu0 %v2070
      %v2199 = vpop.f32.mrf.mxu0
      %v2200 = vadd.f32 0.0, %v2199
      %v2201 = vpop.f32.mrf.mxu0
      %2202 = vmatprep.mubr.f32.mxu0 0.0
      %2203 = vmatmul.mubr.f32.gmra.mxu0 %v2072
      %v2204 = vpop.f32.mrf.mxu0
      %v2205 = vadd.f32 0.0, %v2204
      %v2206 = vpop.f32.mrf.mxu0
      %2207 = vmatprep.mubr.f32.mxu0 0.0
      %2208 = vmatmul.mubr.f32.gmra.mxu0 %v2074
      %v2209 = vpop.f32.mrf.mxu0
      %v2210 = vadd.f32 0.0, %v2209
      %v2211 = vpop.f32.mrf.mxu0
      %2212 = vmatprep.mubr.f32.mxu0 0.0
      %2213 = vmatmul.mubr.f32.gmra.mxu0 %v2076
      %v2214 = vpop.f32.mrf.mxu0
      %v2215 = vadd.f32 0.0, %v2214
      %v2216 = vpop.f32.mrf.mxu0
      %2217 = vmatprep.mubr.f32.mxu0 0.0
      %2218 = vmatmul.mubr.f32.gmra.mxu0 %v2078
      %v2219 = vpop.f32.mrf.mxu0
      %v2220 = vadd.f32 0.0, %v2219
      %v2221 = vpop.f32.mrf.mxu0
      %2222 = vmatprep.mubr.f32.mxu0 0.0
      %2223 = vmatmul.mubr.f32.gmra.mxu0 %v2080
      %v2224 = vpop.f32.mrf.mxu0
      %v2225 = vadd.f32 0.0, %v2224
      %v2226 = vpop.f32.mrf.mxu0
      %2227 = vmatprep.mubr.f32.mxu0 0.0
      %2228 = vmatmul.mubr.f32.gmra.mxu0 %v2082
      %v2229 = vpop.f32.mrf.mxu0
      %v2230 = vadd.f32 0.0, %v2229
      %v2231 = vpop.f32.mrf.mxu0
      %2232 = vmatprep.mubr.f32.mxu0 0.0
      %2233 = vmatmul.mubr.f32.gmra.mxu0 %v2084
      %v2234 = vpop.f32.mrf.mxu0
      %v2235 = vadd.f32 0.0, %v2234
      %v2236 = vpop.f32.mrf.mxu0
      %2237 = vmatprep.mubr.f32.mxu0 0.0
      %2238 = vmatmul.mubr.f32.gmra.mxu0 %v2086
      %v2239 = vpop.f32.mrf.mxu0
      %v2240 = vadd.f32 0.0, %v2239
      %v2241 = vpop.f32.mrf.mxu0
      %2242 = vmatprep.mubr.f32.mxu0 0.0
      %2243 = vmatmul.mubr.f32.gmra.mxu0 %v2088
      %v2244 = vpop.f32.mrf.mxu0
      %v2245 = vadd.f32 0.0, %v2244
      %v2246 = vpop.f32.mrf.mxu0
      %2247 = vmatprep.mubr.f32.mxu0 0.0
      %2248 = vmatmul.mubr.f32.gmra.mxu0 %v2090
      %v2249 = vpop.f32.mrf.mxu0
      %v2250 = vadd.f32 0.0, %v2249
      %v2251 = vpop.f32.mrf.mxu0
      %2252 = vmatprep.mubr.f32.mxu0 0.0
      %2253 = vmatmul.mubr.f32.gmra.mxu0 %v2092
      %v2254 = vpop.f32.mrf.mxu0
      %v2255 = vadd.f32 0.0, %v2254
      %v2256 = vpop.f32.mrf.mxu0
      %2257 = vmatprep.mubr.f32.mxu0 0.0
      %2258 = vmatmul.mubr.f32.gmra.mxu0 %v2094
      %v2259 = vpop.f32.mrf.mxu0
      %v2260 = vadd.f32 0.0, %v2259
      %v2261 = vpop.f32.mrf.mxu0
      %2262 = vmatprep.mubr.f32.mxu0 0.0
      %2263 = vmatmul.mubr.f32.gmra.mxu0 %v2096
      %v2264 = vpop.f32.mrf.mxu0
      %v2265 = vadd.f32 0.0, %v2264
      %v2266 = vpop.f32.mrf.mxu0
      %2267 = vmatprep.mubr.f32.mxu0 0.0
      %2268 = vmatmul.mubr.f32.gmra.mxu0 %v2098
      %v2269 = vpop.f32.mrf.mxu0
      %v2270 = vadd.f32 0.0, %v2269
      %v2271 = vpop.f32.mrf.mxu0
      %2272 = vmatprep.mubr.f32.mxu0 0.0
      %2273 = vmatmul.mubr.f32.gmra.mxu0 %v2100
      %v2274 = vpop.f32.mrf.mxu0
      %v2275 = vadd.f32 0.0, %v2274
      %v2276 = vpop.f32.mrf.mxu0
      %2277 = vmatprep.mubr.f32.mxu0 0.0
      %2278 = vmatmul.mubr.f32.gmra.mxu0 %v2102
      %v2279 = vpop.f32.mrf.mxu0
      %v2280 = vadd.f32 0.0, %v2279
      %v2281 = vpop.f32.mrf.mxu0
      %2282 = vmatprep.mubr.f32.mxu0 0.0
      %2283 = vmatmul.mubr.f32.gmra.mxu0 %v2104
      %v2284 = vpop.f32.mrf.mxu0
      %v2285 = vadd.f32 0.0, %v2284
      %v2286 = vpop.f32.mrf.mxu0
      %2287 = vmatprep.mubr.f32.mxu0 0.0
      %2288 = vmatmul.mubr.f32.gmra.mxu0 %v2106
      %v2289 = vpop.f32.mrf.mxu0
      %v2290 = vadd.f32 0.0, %v2289
      %v2291 = vpop.f32.mrf.mxu0
      %2292 = vmatprep.mubr.f32.mxu0 0.0
      %2293 = vmatmul.mubr.f32.gmra.mxu0 %v2108
      %v2294 = vpop.f32.mrf.mxu0
      %v2295 = vadd.f32 0.0, %v2294
      %v2296 = vpop.f32.mrf.mxu0
      %2297 = vdwg.mxu0
      %v2298 = vadd.f32 %v1989, %v2180
      %v2299 = vadd.f32 %v1990, %v2185
      %v2300 = vadd.f32 %v1991, %v2190
      %v2301 = vadd.f32 %v1992, %v2195
      %v2302 = vadd.f32 %v1993, %v2200
      %v2303 = vadd.f32 %v1994, %v2205
      %v2304 = vadd.f32 %v1995, %v2210
      %v2305 = vadd.f32 %v1996, %v2215
      %v2306 = vadd.f32 %v1997, %v2220
      %v2307 = vadd.f32 %v1998, %v2225
      %v2308 = vadd.f32 %v1999, %v2230
      %v2309 = vadd.f32 %v2000, %v2235
      %v2310 = vadd.f32 %v2001, %v2240
      %v2311 = vadd.f32 %v2002, %v2245
      %v2312 = vadd.f32 %v2003, %v2250
      %v2313 = vadd.f32 %v2004, %v2255
      %v2314 = vadd.f32 %v2005, %v2260
      %v2315 = vadd.f32 %v2006, %v2265
      %v2316 = vadd.f32 %v2007, %v2270
      %v2317 = vadd.f32 %v2008, %v2275
      %v2318 = vadd.f32 %v2009, %v2280
      %v2319 = vadd.f32 %v2010, %v2285
      %v2320 = vadd.f32 %v2011, %v2290
      %v2321 = vadd.f32 %v2012, %v2295
      %s2322 = scalar_lea.vmem %s1, 20
      %v2323 = vld [vmem:[%s2322] sm:$0xf]
      %vm2325 = vcmask 1042432
      %v2326 = vrot.slane %v819, 5
      %v2327 = vrot.slane %v820, 5
      %v2328 = vsel %vm2325, %v2326, %v2327
      %v2329 = vrot.slane %v821, 5
      %v2330 = vsel %vm2325, %v2327, %v2329
      %v2331 = vrot.slane %v822, 5
      %v2332 = vsel %vm2325, %v2329, %v2331
      %v2333 = vrot.slane %v823, 5
      %v2334 = vsel %vm2325, %v2331, %v2333
      %v2335 = vrot.slane %v824, 5
      %v2336 = vsel %vm2325, %v2333, %v2335
      %v2337 = vrot.slane %v825, 5
      %v2338 = vsel %vm2325, %v2335, %v2337
      %v2339 = vrot.slane %v826, 5
      %v2340 = vsel %vm2325, %v2337, %v2339
      %v2341 = vrot.slane %v827, 5
      %v2342 = vsel %vm2325, %v2339, %v2341
      %v2343 = vrot.slane %v828, 5
      %v2344 = vsel %vm2325, %v2341, %v2343
      %v2345 = vrot.slane %v829, 5
      %v2346 = vsel %vm2325, %v2343, %v2345
      %v2347 = vrot.slane %v830, 5
      %v2348 = vsel %vm2325, %v2345, %v2347
      %v2349 = vrot.slane %v831, 5
      %v2350 = vsel %vm2325, %v2347, %v2349
      %v2351 = vrot.slane %v832, 5
      %v2352 = vsel %vm2325, %v2349, %v2351
      %v2353 = vrot.slane %v833, 5
      %v2354 = vsel %vm2325, %v2351, %v2353
      %v2355 = vrot.slane %v834, 5
      %v2356 = vsel %vm2325, %v2353, %v2355
      %v2357 = vrot.slane %v835, 5
      %v2358 = vsel %vm2325, %v2355, %v2357
      %v2359 = vrot.slane %v836, 5
      %v2360 = vsel %vm2325, %v2357, %v2359
      %v2361 = vrot.slane %v837, 5
      %v2362 = vsel %vm2325, %v2359, %v2361
      %v2363 = vrot.slane %v838, 5
      %v2364 = vsel %vm2325, %v2361, %v2363
      %v2365 = vrot.slane %v839, 5
      %v2366 = vsel %vm2325, %v2363, %v2365
      %v2367 = vrot.slane %v840, 5
      %v2368 = vsel %vm2325, %v2365, %v2367
      %v2369 = vrot.slane %v841, 5
      %v2370 = vsel %vm2325, %v2367, %v2369
      %v2371 = vrot.slane %v842, 5
      %v2372 = vsel %vm2325, %v2369, %v2371
      %v2373 = vrot.slane %v843, 5
      %v2374 = vsel %vm2325, %v2371, %v2373
      %v2375 = vsel %vm919, %v2328, 0
      %v2377 = vsel %vm919, %v2330, 0
      %v2379 = vsel %vm919, %v2332, 0
      %v2381 = vsel %vm919, %v2334, 0
      %v2383 = vsel %vm919, %v2336, 0
      %v2385 = vsel %vm919, %v2338, 0
      %v2387 = vsel %vm919, %v2340, 0
      %v2389 = vsel %vm919, %v2342, 0
      %v2391 = vsel %vm919, %v2344, 0
      %v2393 = vsel %vm919, %v2346, 0
      %v2395 = vsel %vm919, %v2348, 0
      %v2397 = vsel %vm919, %v2350, 0
      %v2399 = vsel %vm919, %v2352, 0
      %v2401 = vsel %vm919, %v2354, 0
      %v2403 = vsel %vm919, %v2356, 0
      %v2405 = vsel %vm919, %v2358, 0
      %v2407 = vsel %vm919, %v2360, 0
      %v2409 = vsel %vm919, %v2362, 0
      %v2411 = vsel %vm919, %v2364, 0
      %v2413 = vsel %vm919, %v2366, 0
      %v2415 = vsel %vm919, %v2368, 0
      %v2417 = vsel %vm919, %v2370, 0
      %v2419 = vsel %vm919, %v2372, 0
      %v2421 = vsel %vm919, %v2374, 0
      %v2424 = vsel %vm968, %v2323, 0
      %2426 = vmatprep.subr.mxu0 0.0
      %2427 = vmatpush1.msra.mxu0 0.0
      %2428 = vmatprep.subr.mxu0 0.0
      %2429 = vmatpush1.msra.mxu0 0.0
      %2430 = vmatprep.subr.mxu0 0.0
      %2431 = vmatpush1.msra.mxu0 0.0
      %2432 = vmatprep.subr.mxu0 0.0
      %2433 = vmatpush1.msra.mxu0 0.0
      %2434 = vmatprep.subr.mxu0 0.0
      %2435 = vmatpush1.msra.mxu0 0.0
      %2436 = vmatprep.subr.mxu0 0.0
      %2437 = vmatpush1.msra.mxu0 0.0
      %2438 = vmatprep.subr.mxu0 0.0
      %2439 = vmatpush1.msra.mxu0 0.0
      %2440 = vmatprep.subr.mxu0 0.0
      %2441 = vmatpush1.msra.mxu0 0.0
      %2442 = vmatprep.subr.mxu0 0.0
      %2443 = vmatpush1.msra.mxu0 0.0
      %2444 = vmatprep.subr.mxu0 0.0
      %2445 = vmatpush1.msra.mxu0 0.0
      %2446 = vmatprep.subr.mxu0 0.0
      %2447 = vmatpush1.msra.mxu0 0.0
      %2448 = vmatprep.subr.mxu0 0.0
      %2449 = vmatpush1.msra.mxu0 0.0
      %2450 = vmatprep.subr.mxu0 0.0
      %2451 = vmatpush1.msra.mxu0 0.0
      %2452 = vmatprep.subr.mxu0 0.0
      %2453 = vmatpush1.msra.mxu0 0.0
      %2454 = vmatprep.subr.mxu0 0.0
      %2455 = vmatpush1.msra.mxu0 0.0
      %2456 = vmatprep.subr.mxu0 0.0
      %2457 = vmatpush1.msra.mxu0 %v2424
      %2458 = vmatprep.subr.mxu0 0.0
      %2459 = vmatpush2.msra.mxu0 0.0
      %2460 = vmatprep.subr.mxu0 0.0
      %2461 = vmatpush2.msra.mxu0 0.0
      %2462 = vmatprep.subr.mxu0 0.0
      %2463 = vmatpush2.msra.mxu0 0.0
      %2464 = vmatprep.subr.mxu0 0.0
      %2465 = vmatpush2.msra.mxu0 0.0
      %2466 = vmatprep.subr.mxu0 0.0
      %2467 = vmatpush2.msra.mxu0 0.0
      %2468 = vmatprep.subr.mxu0 0.0
      %2469 = vmatpush2.msra.mxu0 0.0
      %2470 = vmatprep.subr.mxu0 0.0
      %2471 = vmatpush2.msra.mxu0 0.0
      %2472 = vmatprep.subr.mxu0 0.0
      %2473 = vmatpush2.msra.mxu0 0.0
      %2474 = vmatprep.subr.mxu0 0.0
      %2475 = vmatpush2.msra.mxu0 0.0
      %2476 = vmatprep.subr.mxu0 0.0
      %2477 = vmatpush2.msra.mxu0 0.0
      %2478 = vmatprep.subr.mxu0 0.0
      %2479 = vmatpush2.msra.mxu0 0.0
      %2480 = vmatprep.subr.mxu0 0.0
      %2481 = vmatpush2.msra.mxu0 0.0
      %2482 = vmatprep.subr.mxu0 0.0
      %2483 = vmatpush2.msra.mxu0 0.0
      %2484 = vmatprep.subr.mxu0 0.0
      %2485 = vmatpush2.msra.mxu0 0.0
      %2486 = vmatprep.subr.mxu0 0.0
      %2487 = vmatpush2.msra.mxu0 0.0
      %2488 = vmatprep.subr.mxu0 0.0
      %2489 = vmatpush2.msra.mxu0 0.0
      %2490 = vmatprep.mubr.f32.mxu0 0.0
      %2491 = vmatmul.mubr.f32.gmra.mxu0 %v2375
      %v2492 = vpop.f32.mrf.mxu0
      %v2493 = vadd.f32 0.0, %v2492
      %v2494 = vpop.f32.mrf.mxu0
      %2495 = vmatprep.mubr.f32.mxu0 0.0
      %2496 = vmatmul.mubr.f32.gmra.mxu0 %v2377
      %v2497 = vpop.f32.mrf.mxu0
      %v2498 = vadd.f32 0.0, %v2497
      %v2499 = vpop.f32.mrf.mxu0
      %2500 = vmatprep.mubr.f32.mxu0 0.0
      %2501 = vmatmul.mubr.f32.gmra.mxu0 %v2379
      %v2502 = vpop.f32.mrf.mxu0
      %v2503 = vadd.f32 0.0, %v2502
      %v2504 = vpop.f32.mrf.mxu0
      %2505 = vmatprep.mubr.f32.mxu0 0.0
      %2506 = vmatmul.mubr.f32.gmra.mxu0 %v2381
      %v2507 = vpop.f32.mrf.mxu0
      %v2508 = vadd.f32 0.0, %v2507
      %v2509 = vpop.f32.mrf.mxu0
      %2510 = vmatprep.mubr.f32.mxu0 0.0
      %2511 = vmatmul.mubr.f32.gmra.mxu0 %v2383
      %v2512 = vpop.f32.mrf.mxu0
      %v2513 = vadd.f32 0.0, %v2512
      %v2514 = vpop.f32.mrf.mxu0
      %2515 = vmatprep.mubr.f32.mxu0 0.0
      %2516 = vmatmul.mubr.f32.gmra.mxu0 %v2385
      %v2517 = vpop.f32.mrf.mxu0
      %v2518 = vadd.f32 0.0, %v2517
      %v2519 = vpop.f32.mrf.mxu0
      %2520 = vmatprep.mubr.f32.mxu0 0.0
      %2521 = vmatmul.mubr.f32.gmra.mxu0 %v2387
      %v2522 = vpop.f32.mrf.mxu0
      %v2523 = vadd.f32 0.0, %v2522
      %v2524 = vpop.f32.mrf.mxu0
      %2525 = vmatprep.mubr.f32.mxu0 0.0
      %2526 = vmatmul.mubr.f32.gmra.mxu0 %v2389
      %v2527 = vpop.f32.mrf.mxu0
      %v2528 = vadd.f32 0.0, %v2527
      %v2529 = vpop.f32.mrf.mxu0
      %2530 = vmatprep.mubr.f32.mxu0 0.0
      %2531 = vmatmul.mubr.f32.gmra.mxu0 %v2391
      %v2532 = vpop.f32.mrf.mxu0
      %v2533 = vadd.f32 0.0, %v2532
      %v2534 = vpop.f32.mrf.mxu0
      %2535 = vmatprep.mubr.f32.mxu0 0.0
      %2536 = vmatmul.mubr.f32.gmra.mxu0 %v2393
      %v2537 = vpop.f32.mrf.mxu0
      %v2538 = vadd.f32 0.0, %v2537
      %v2539 = vpop.f32.mrf.mxu0
      %2540 = vmatprep.mubr.f32.mxu0 0.0
      %2541 = vmatmul.mubr.f32.gmra.mxu0 %v2395
      %v2542 = vpop.f32.mrf.mxu0
      %v2543 = vadd.f32 0.0, %v2542
      %v2544 = vpop.f32.mrf.mxu0
      %2545 = vmatprep.mubr.f32.mxu0 0.0
      %2546 = vmatmul.mubr.f32.gmra.mxu0 %v2397
      %v2547 = vpop.f32.mrf.mxu0
      %v2548 = vadd.f32 0.0, %v2547
      %v2549 = vpop.f32.mrf.mxu0
      %2550 = vmatprep.mubr.f32.mxu0 0.0
      %2551 = vmatmul.mubr.f32.gmra.mxu0 %v2399
      %v2552 = vpop.f32.mrf.mxu0
      %v2553 = vadd.f32 0.0, %v2552
      %v2554 = vpop.f32.mrf.mxu0
      %2555 = vmatprep.mubr.f32.mxu0 0.0
      %2556 = vmatmul.mubr.f32.gmra.mxu0 %v2401
      %v2557 = vpop.f32.mrf.mxu0
      %v2558 = vadd.f32 0.0, %v2557
      %v2559 = vpop.f32.mrf.mxu0
      %2560 = vmatprep.mubr.f32.mxu0 0.0
      %2561 = vmatmul.mubr.f32.gmra.mxu0 %v2403
      %v2562 = vpop.f32.mrf.mxu0
      %v2563 = vadd.f32 0.0, %v2562
      %v2564 = vpop.f32.mrf.mxu0
      %2565 = vmatprep.mubr.f32.mxu0 0.0
      %2566 = vmatmul.mubr.f32.gmra.mxu0 %v2405
      %v2567 = vpop.f32.mrf.mxu0
      %v2568 = vadd.f32 0.0, %v2567
      %v2569 = vpop.f32.mrf.mxu0
      %2570 = vmatprep.mubr.f32.mxu0 0.0
      %2571 = vmatmul.mubr.f32.gmra.mxu0 %v2407
      %v2572 = vpop.f32.mrf.mxu0
      %v2573 = vadd.f32 0.0, %v2572
      %v2574 = vpop.f32.mrf.mxu0
      %2575 = vmatprep.mubr.f32.mxu0 0.0
      %2576 = vmatmul.mubr.f32.gmra.mxu0 %v2409
      %v2577 = vpop.f32.mrf.mxu0
      %v2578 = vadd.f32 0.0, %v2577
      %v2579 = vpop.f32.mrf.mxu0
      %2580 = vmatprep.mubr.f32.mxu0 0.0
      %2581 = vmatmul.mubr.f32.gmra.mxu0 %v2411
      %v2582 = vpop.f32.mrf.mxu0
      %v2583 = vadd.f32 0.0, %v2582
      %v2584 = vpop.f32.mrf.mxu0
      %2585 = vmatprep.mubr.f32.mxu0 0.0
      %2586 = vmatmul.mubr.f32.gmra.mxu0 %v2413
      %v2587 = vpop.f32.mrf.mxu0
      %v2588 = vadd.f32 0.0, %v2587
      %v2589 = vpop.f32.mrf.mxu0
      %2590 = vmatprep.mubr.f32.mxu0 0.0
      %2591 = vmatmul.mubr.f32.gmra.mxu0 %v2415
      %v2592 = vpop.f32.mrf.mxu0
      %v2593 = vadd.f32 0.0, %v2592
      %v2594 = vpop.f32.mrf.mxu0
      %2595 = vmatprep.mubr.f32.mxu0 0.0
      %2596 = vmatmul.mubr.f32.gmra.mxu0 %v2417
      %v2597 = vpop.f32.mrf.mxu0
      %v2598 = vadd.f32 0.0, %v2597
      %v2599 = vpop.f32.mrf.mxu0
      %2600 = vmatprep.mubr.f32.mxu0 0.0
      %2601 = vmatmul.mubr.f32.gmra.mxu0 %v2419
      %v2602 = vpop.f32.mrf.mxu0
      %v2603 = vadd.f32 0.0, %v2602
      %v2604 = vpop.f32.mrf.mxu0
      %2605 = vmatprep.mubr.f32.mxu0 0.0
      %2606 = vmatmul.mubr.f32.gmra.mxu0 %v2421
      %v2607 = vpop.f32.mrf.mxu0
      %v2608 = vadd.f32 0.0, %v2607
      %v2609 = vpop.f32.mrf.mxu0
      %2610 = vdwg.mxu0
      %v2611 = vadd.f32 %v2298, %v2493
      %v2612 = vadd.f32 %v2299, %v2498
      %v2613 = vadd.f32 %v2300, %v2503
      %v2614 = vadd.f32 %v2301, %v2508
      %v2615 = vadd.f32 %v2302, %v2513
      %v2616 = vadd.f32 %v2303, %v2518
      %v2617 = vadd.f32 %v2304, %v2523
      %v2618 = vadd.f32 %v2305, %v2528
      %v2619 = vadd.f32 %v2306, %v2533
      %v2620 = vadd.f32 %v2307, %v2538
      %v2621 = vadd.f32 %v2308, %v2543
      %v2622 = vadd.f32 %v2309, %v2548
      %v2623 = vadd.f32 %v2310, %v2553
      %v2624 = vadd.f32 %v2311, %v2558
      %v2625 = vadd.f32 %v2312, %v2563
      %v2626 = vadd.f32 %v2313, %v2568
      %v2627 = vadd.f32 %v2314, %v2573
      %v2628 = vadd.f32 %v2315, %v2578
      %v2629 = vadd.f32 %v2316, %v2583
      %v2630 = vadd.f32 %v2317, %v2588
      %v2631 = vadd.f32 %v2318, %v2593
      %v2632 = vadd.f32 %v2319, %v2598
      %v2633 = vadd.f32 %v2320, %v2603
      %v2634 = vadd.f32 %v2321, %v2608
      %s2635 = scalar_lea.vmem %s1, 24
      %v2636 = vld [vmem:[%s2635] sm:$0xf]
      %vm2637 = vcmask 1041408
      %v2638 = vrot.slane %v819, 6
      %v2639 = vrot.slane %v820, 6
      %v2640 = vsel %vm2637, %v2638, %v2639
      %v2641 = vrot.slane %v821, 6
      %v2642 = vsel %vm2637, %v2639, %v2641
      %v2643 = vrot.slane %v822, 6
      %v2644 = vsel %vm2637, %v2641, %v2643
      %v2645 = vrot.slane %v823, 6
      %v2646 = vsel %vm2637, %v2643, %v2645
      %v2647 = vrot.slane %v824, 6
      %v2648 = vsel %vm2637, %v2645, %v2647
      %v2649 = vrot.slane %v825, 6
      %v2650 = vsel %vm2637, %v2647, %v2649
      %v2651 = vrot.slane %v826, 6
      %v2652 = vsel %vm2637, %v2649, %v2651
      %v2653 = vrot.slane %v827, 6
      %v2654 = vsel %vm2637, %v2651, %v2653
      %v2655 = vrot.slane %v828, 6
      %v2656 = vsel %vm2637, %v2653, %v2655
      %v2657 = vrot.slane %v829, 6
      %v2658 = vsel %vm2637, %v2655, %v2657
      %v2659 = vrot.slane %v830, 6
      %v2660 = vsel %vm2637, %v2657, %v2659
      %v2661 = vrot.slane %v831, 6
      %v2662 = vsel %vm2637, %v2659, %v2661
      %v2663 = vrot.slane %v832, 6
      %v2664 = vsel %vm2637, %v2661, %v2663
      %v2665 = vrot.slane %v833, 6
      %v2666 = vsel %vm2637, %v2663, %v2665
      %v2667 = vrot.slane %v834, 6
      %v2668 = vsel %vm2637, %v2665, %v2667
      %v2669 = vrot.slane %v835, 6
      %v2670 = vsel %vm2637, %v2667, %v2669
      %v2671 = vrot.slane %v836, 6
      %v2672 = vsel %vm2637, %v2669, %v2671
      %v2673 = vrot.slane %v837, 6
      %v2674 = vsel %vm2637, %v2671, %v2673
      %v2675 = vrot.slane %v838, 6
      %v2676 = vsel %vm2637, %v2673, %v2675
      %v2677 = vrot.slane %v839, 6
      %v2678 = vsel %vm2637, %v2675, %v2677
      %v2679 = vrot.slane %v840, 6
      %v2680 = vsel %vm2637, %v2677, %v2679
      %v2681 = vrot.slane %v841, 6
      %v2682 = vsel %vm2637, %v2679, %v2681
      %v2683 = vrot.slane %v842, 6
      %v2684 = vsel %vm2637, %v2681, %v2683
      %v2685 = vrot.slane %v843, 6
      %v2686 = vsel %vm2637, %v2683, %v2685
      %v2687 = vsel %vm919, %v2640, 0
      %v2689 = vsel %vm919, %v2642, 0
      %v2691 = vsel %vm919, %v2644, 0
      %v2693 = vsel %vm919, %v2646, 0
      %v2695 = vsel %vm919, %v2648, 0
      %v2697 = vsel %vm919, %v2650, 0
      %v2699 = vsel %vm919, %v2652, 0
      %v2701 = vsel %vm919, %v2654, 0
      %v2703 = vsel %vm919, %v2656, 0
      %v2705 = vsel %vm919, %v2658, 0
      %v2707 = vsel %vm919, %v2660, 0
      %v2709 = vsel %vm919, %v2662, 0
      %v2711 = vsel %vm919, %v2664, 0
      %v2713 = vsel %vm919, %v2666, 0
      %v2715 = vsel %vm919, %v2668, 0
      %v2717 = vsel %vm919, %v2670, 0
      %v2719 = vsel %vm919, %v2672, 0
      %v2721 = vsel %vm919, %v2674, 0
      %v2723 = vsel %vm919, %v2676, 0
      %v2725 = vsel %vm919, %v2678, 0
      %v2727 = vsel %vm919, %v2680, 0
      %v2729 = vsel %vm919, %v2682, 0
      %v2731 = vsel %vm919, %v2684, 0
      %v2733 = vsel %vm919, %v2686, 0
      %v2736 = vsel %vm968, %v2636, 0
      %2738 = vmatprep.subr.mxu0 0.0
      %2739 = vmatpush1.msra.mxu0 0.0
      %2740 = vmatprep.subr.mxu0 0.0
      %2741 = vmatpush1.msra.mxu0 0.0
      %2742 = vmatprep.subr.mxu0 0.0
      %2743 = vmatpush1.msra.mxu0 0.0
      %2744 = vmatprep.subr.mxu0 0.0
      %2745 = vmatpush1.msra.mxu0 0.0
      %2746 = vmatprep.subr.mxu0 0.0
      %2747 = vmatpush1.msra.mxu0 0.0
      %2748 = vmatprep.subr.mxu0 0.0
      %2749 = vmatpush1.msra.mxu0 0.0
      %2750 = vmatprep.subr.mxu0 0.0
      %2751 = vmatpush1.msra.mxu0 0.0
      %2752 = vmatprep.subr.mxu0 0.0
      %2753 = vmatpush1.msra.mxu0 0.0
      %2754 = vmatprep.subr.mxu0 0.0
      %2755 = vmatpush1.msra.mxu0 0.0
      %2756 = vmatprep.subr.mxu0 0.0
      %2757 = vmatpush1.msra.mxu0 0.0
      %2758 = vmatprep.subr.mxu0 0.0
      %2759 = vmatpush1.msra.mxu0 0.0
      %2760 = vmatprep.subr.mxu0 0.0
      %2761 = vmatpush1.msra.mxu0 0.0
      %2762 = vmatprep.subr.mxu0 0.0
      %2763 = vmatpush1.msra.mxu0 0.0
      %2764 = vmatprep.subr.mxu0 0.0
      %2765 = vmatpush1.msra.mxu0 0.0
      %2766 = vmatprep.subr.mxu0 0.0
      %2767 = vmatpush1.msra.mxu0 0.0
      %2768 = vmatprep.subr.mxu0 0.0
      %2769 = vmatpush1.msra.mxu0 %v2736
      %2770 = vmatprep.subr.mxu0 0.0
      %2771 = vmatpush2.msra.mxu0 0.0
      %2772 = vmatprep.subr.mxu0 0.0
      %2773 = vmatpush2.msra.mxu0 0.0
      %2774 = vmatprep.subr.mxu0 0.0
      %2775 = vmatpush2.msra.mxu0 0.0
      %2776 = vmatprep.subr.mxu0 0.0
      %2777 = vmatpush2.msra.mxu0 0.0
      %2778 = vmatprep.subr.mxu0 0.0
      %2779 = vmatpush2.msra.mxu0 0.0
      %2780 = vmatprep.subr.mxu0 0.0
      %2781 = vmatpush2.msra.mxu0 0.0
      %2782 = vmatprep.subr.mxu0 0.0
      %2783 = vmatpush2.msra.mxu0 0.0
      %2784 = vmatprep.subr.mxu0 0.0
      %2785 = vmatpush2.msra.mxu0 0.0
      %2786 = vmatprep.subr.mxu0 0.0
      %2787 = vmatpush2.msra.mxu0 0.0
      %2788 = vmatprep.subr.mxu0 0.0
      %2789 = vmatpush2.msra.mxu0 0.0
      %2790 = vmatprep.subr.mxu0 0.0
      %2791 = vmatpush2.msra.mxu0 0.0
      %2792 = vmatprep.subr.mxu0 0.0
      %2793 = vmatpush2.msra.mxu0 0.0
      %2794 = vmatprep.subr.mxu0 0.0
      %2795 = vmatpush2.msra.mxu0 0.0
      %2796 = vmatprep.subr.mxu0 0.0
      %2797 = vmatpush2.msra.mxu0 0.0
      %2798 = vmatprep.subr.mxu0 0.0
      %2799 = vmatpush2.msra.mxu0 0.0
      %2800 = vmatprep.subr.mxu0 0.0
      %2801 = vmatpush2.msra.mxu0 0.0
      %2802 = vmatprep.mubr.f32.mxu0 0.0
      %2803 = vmatmul.mubr.f32.gmra.mxu0 %v2687
      %v2804 = vpop.f32.mrf.mxu0
      %v2805 = vadd.f32 0.0, %v2804
      %v2806 = vpop.f32.mrf.mxu0
      %2807 = vmatprep.mubr.f32.mxu0 0.0
      %2808 = vmatmul.mubr.f32.gmra.mxu0 %v2689
      %v2809 = vpop.f32.mrf.mxu0
      %v2810 = vadd.f32 0.0, %v2809
      %v2811 = vpop.f32.mrf.mxu0
      %2812 = vmatprep.mubr.f32.mxu0 0.0
      %2813 = vmatmul.mubr.f32.gmra.mxu0 %v2691
      %v2814 = vpop.f32.mrf.mxu0
      %v2815 = vadd.f32 0.0, %v2814
      %v2816 = vpop.f32.mrf.mxu0
      %2817 = vmatprep.mubr.f32.mxu0 0.0
      %2818 = vmatmul.mubr.f32.gmra.mxu0 %v2693
      %v2819 = vpop.f32.mrf.mxu0
      %v2820 = vadd.f32 0.0, %v2819
      %v2821 = vpop.f32.mrf.mxu0
      %2822 = vmatprep.mubr.f32.mxu0 0.0
      %2823 = vmatmul.mubr.f32.gmra.mxu0 %v2695
      %v2824 = vpop.f32.mrf.mxu0
      %v2825 = vadd.f32 0.0, %v2824
      %v2826 = vpop.f32.mrf.mxu0
      %2827 = vmatprep.mubr.f32.mxu0 0.0
      %2828 = vmatmul.mubr.f32.gmra.mxu0 %v2697
      %v2829 = vpop.f32.mrf.mxu0
      %v2830 = vadd.f32 0.0, %v2829
      %v2831 = vpop.f32.mrf.mxu0
      %2832 = vmatprep.mubr.f32.mxu0 0.0
      %2833 = vmatmul.mubr.f32.gmra.mxu0 %v2699
      %v2834 = vpop.f32.mrf.mxu0
      %v2835 = vadd.f32 0.0, %v2834
      %v2836 = vpop.f32.mrf.mxu0
      %2837 = vmatprep.mubr.f32.mxu0 0.0
      %2838 = vmatmul.mubr.f32.gmra.mxu0 %v2701
      %v2839 = vpop.f32.mrf.mxu0
      %v2840 = vadd.f32 0.0, %v2839
      %v2841 = vpop.f32.mrf.mxu0
      %2842 = vmatprep.mubr.f32.mxu0 0.0
      %2843 = vmatmul.mubr.f32.gmra.mxu0 %v2703
      %v2844 = vpop.f32.mrf.mxu0
      %v2845 = vadd.f32 0.0, %v2844
      %v2846 = vpop.f32.mrf.mxu0
      %2847 = vmatprep.mubr.f32.mxu0 0.0
      %2848 = vmatmul.mubr.f32.gmra.mxu0 %v2705
      %v2849 = vpop.f32.mrf.mxu0
      %v2850 = vadd.f32 0.0, %v2849
      %v2851 = vpop.f32.mrf.mxu0
      %2852 = vmatprep.mubr.f32.mxu0 0.0
      %2853 = vmatmul.mubr.f32.gmra.mxu0 %v2707
      %v2854 = vpop.f32.mrf.mxu0
      %v2855 = vadd.f32 0.0, %v2854
      %v2856 = vpop.f32.mrf.mxu0
      %2857 = vmatprep.mubr.f32.mxu0 0.0
      %2858 = vmatmul.mubr.f32.gmra.mxu0 %v2709
      %v2859 = vpop.f32.mrf.mxu0
      %v2860 = vadd.f32 0.0, %v2859
      %v2861 = vpop.f32.mrf.mxu0
      %2862 = vmatprep.mubr.f32.mxu0 0.0
      %2863 = vmatmul.mubr.f32.gmra.mxu0 %v2711
      %v2864 = vpop.f32.mrf.mxu0
      %v2865 = vadd.f32 0.0, %v2864
      %v2866 = vpop.f32.mrf.mxu0
      %2867 = vmatprep.mubr.f32.mxu0 0.0
      %2868 = vmatmul.mubr.f32.gmra.mxu0 %v2713
      %v2869 = vpop.f32.mrf.mxu0
      %v2870 = vadd.f32 0.0, %v2869
      %v2871 = vpop.f32.mrf.mxu0
      %2872 = vmatprep.mubr.f32.mxu0 0.0
      %2873 = vmatmul.mubr.f32.gmra.mxu0 %v2715
      %v2874 = vpop.f32.mrf.mxu0
      %v2875 = vadd.f32 0.0, %v2874
      %v2876 = vpop.f32.mrf.mxu0
      %2877 = vmatprep.mubr.f32.mxu0 0.0
      %2878 = vmatmul.mubr.f32.gmra.mxu0 %v2717
      %v2879 = vpop.f32.mrf.mxu0
      %v2880 = vadd.f32 0.0, %v2879
      %v2881 = vpop.f32.mrf.mxu0
      %2882 = vmatprep.mubr.f32.mxu0 0.0
      %2883 = vmatmul.mubr.f32.gmra.mxu0 %v2719
      %v2884 = vpop.f32.mrf.mxu0
      %v2885 = vadd.f32 0.0, %v2884
      %v2886 = vpop.f32.mrf.mxu0
      %2887 = vmatprep.mubr.f32.mxu0 0.0
      %2888 = vmatmul.mubr.f32.gmra.mxu0 %v2721
      %v2889 = vpop.f32.mrf.mxu0
      %v2890 = vadd.f32 0.0, %v2889
      %v2891 = vpop.f32.mrf.mxu0
      %2892 = vmatprep.mubr.f32.mxu0 0.0
      %2893 = vmatmul.mubr.f32.gmra.mxu0 %v2723
      %v2894 = vpop.f32.mrf.mxu0
      %v2895 = vadd.f32 0.0, %v2894
      %v2896 = vpop.f32.mrf.mxu0
      %2897 = vmatprep.mubr.f32.mxu0 0.0
      %2898 = vmatmul.mubr.f32.gmra.mxu0 %v2725
      %v2899 = vpop.f32.mrf.mxu0
      %v2900 = vadd.f32 0.0, %v2899
      %v2901 = vpop.f32.mrf.mxu0
      %2902 = vmatprep.mubr.f32.mxu0 0.0
      %2903 = vmatmul.mubr.f32.gmra.mxu0 %v2727
      %v2904 = vpop.f32.mrf.mxu0
      %v2905 = vadd.f32 0.0, %v2904
      %v2906 = vpop.f32.mrf.mxu0
      %2907 = vmatprep.mubr.f32.mxu0 0.0
      %2908 = vmatmul.mubr.f32.gmra.mxu0 %v2729
      %v2909 = vpop.f32.mrf.mxu0
      %v2910 = vadd.f32 0.0, %v2909
      %v2911 = vpop.f32.mrf.mxu0
      %2912 = vmatprep.mubr.f32.mxu0 0.0
      %2913 = vmatmul.mubr.f32.gmra.mxu0 %v2731
      %v2914 = vpop.f32.mrf.mxu0
      %v2915 = vadd.f32 0.0, %v2914
      %v2916 = vpop.f32.mrf.mxu0
      %2917 = vmatprep.mubr.f32.mxu0 0.0
      %2918 = vmatmul.mubr.f32.gmra.mxu0 %v2733
      %v2919 = vpop.f32.mrf.mxu0
      %v2920 = vadd.f32 0.0, %v2919
      %v2921 = vpop.f32.mrf.mxu0
      %2922 = vdwg.mxu0
      %v2923 = vadd.f32 %v2611, %v2805
      %v2924 = vadd.f32 %v2612, %v2810
      %v2925 = vadd.f32 %v2613, %v2815
      %v2926 = vadd.f32 %v2614, %v2820
      %v2927 = vadd.f32 %v2615, %v2825
      %v2928 = vadd.f32 %v2616, %v2830
      %v2929 = vadd.f32 %v2617, %v2835
      %v2930 = vadd.f32 %v2618, %v2840
      %v2931 = vadd.f32 %v2619, %v2845
      %v2932 = vadd.f32 %v2620, %v2850
      %v2933 = vadd.f32 %v2621, %v2855
      %v2934 = vadd.f32 %v2622, %v2860
      %v2935 = vadd.f32 %v2623, %v2865
      %v2936 = vadd.f32 %v2624, %v2870
      %v2937 = vadd.f32 %v2625, %v2875
      %v2938 = vadd.f32 %v2626, %v2880
      %v2939 = vadd.f32 %v2627, %v2885
      %v2940 = vadd.f32 %v2628, %v2890
      %v2941 = vadd.f32 %v2629, %v2895
      %v2942 = vadd.f32 %v2630, %v2900
      %v2943 = vadd.f32 %v2631, %v2905
      %v2944 = vadd.f32 %v2632, %v2910
      %v2945 = vadd.f32 %v2633, %v2915
      %v2946 = vadd.f32 %v2634, %v2920
      %s2947 = scalar_lea.vmem %s1, 28
      %v2948 = vld [vmem:[%s2947] sm:$0xf]
      %vm2949 = vcmask 1040384
      %v2950 = vrot.slane %v819, 7
      %v2951 = vrot.slane %v820, 7
      %v2952 = vsel %vm2949, %v2950, %v2951
      %v2953 = vrot.slane %v821, 7
      %v2954 = vsel %vm2949, %v2951, %v2953
      %v2955 = vrot.slane %v822, 7
      %v2956 = vsel %vm2949, %v2953, %v2955
      %v2957 = vrot.slane %v823, 7
      %v2958 = vsel %vm2949, %v2955, %v2957
      %v2959 = vrot.slane %v824, 7
      %v2960 = vsel %vm2949, %v2957, %v2959
      %v2961 = vrot.slane %v825, 7
      %v2962 = vsel %vm2949, %v2959, %v2961
      %v2963 = vrot.slane %v826, 7
      %v2964 = vsel %vm2949, %v2961, %v2963
      %v2965 = vrot.slane %v827, 7
      %v2966 = vsel %vm2949, %v2963, %v2965
      %v2967 = vrot.slane %v828, 7
      %v2968 = vsel %vm2949, %v2965, %v2967
      %v2969 = vrot.slane %v829, 7
      %v2970 = vsel %vm2949, %v2967, %v2969
      %v2971 = vrot.slane %v830, 7
      %v2972 = vsel %vm2949, %v2969, %v2971
      %v2973 = vrot.slane %v831, 7
      %v2974 = vsel %vm2949, %v2971, %v2973
      %v2975 = vrot.slane %v832, 7
      %v2976 = vsel %vm2949, %v2973, %v2975
      %v2977 = vrot.slane %v833, 7
      %v2978 = vsel %vm2949, %v2975, %v2977
      %v2979 = vrot.slane %v834, 7
      %v2980 = vsel %vm2949, %v2977, %v2979
      %v2981 = vrot.slane %v835, 7
      %v2982 = vsel %vm2949, %v2979, %v2981
      %v2983 = vrot.slane %v836, 7
      %v2984 = vsel %vm2949, %v2981, %v2983
      %v2985 = vrot.slane %v837, 7
      %v2986 = vsel %vm2949, %v2983, %v2985
      %v2987 = vrot.slane %v838, 7
      %v2988 = vsel %vm2949, %v2985, %v2987
      %v2989 = vrot.slane %v839, 7
      %v2990 = vsel %vm2949, %v2987, %v2989
      %v2991 = vrot.slane %v840, 7
      %v2992 = vsel %vm2949, %v2989, %v2991
      %v2993 = vrot.slane %v841, 7
      %v2994 = vsel %vm2949, %v2991, %v2993
      %v2995 = vrot.slane %v842, 7
      %v2996 = vsel %vm2949, %v2993, %v2995
      %v2997 = vrot.slane %v843, 7
      %v2998 = vsel %vm2949, %v2995, %v2997
      %v2999 = vsel %vm919, %v2952, 0
      %v3001 = vsel %vm919, %v2954, 0
      %v3003 = vsel %vm919, %v2956, 0
      %v3005 = vsel %vm919, %v2958, 0
      %v3007 = vsel %vm919, %v2960, 0
      %v3009 = vsel %vm919, %v2962, 0
      %v3011 = vsel %vm919, %v2964, 0
      %v3013 = vsel %vm919, %v2966, 0
      %v3015 = vsel %vm919, %v2968, 0
      %v3017 = vsel %vm919, %v2970, 0
      %v3019 = vsel %vm919, %v2972, 0
      %v3021 = vsel %vm919, %v2974, 0
      %v3023 = vsel %vm919, %v2976, 0
      %v3025 = vsel %vm919, %v2978, 0
      %v3027 = vsel %vm919, %v2980, 0
      %v3029 = vsel %vm919, %v2982, 0
      %v3031 = vsel %vm919, %v2984, 0
      %v3033 = vsel %vm919, %v2986, 0
      %v3035 = vsel %vm919, %v2988, 0
      %v3037 = vsel %vm919, %v2990, 0
      %v3039 = vsel %vm919, %v2992, 0
      %v3041 = vsel %vm919, %v2994, 0
      %v3043 = vsel %vm919, %v2996, 0
      %v3045 = vsel %vm919, %v2998, 0
      %v3048 = vsel %vm968, %v2948, 0
      %3050 = vmatprep.subr.mxu0 0.0
      %3051 = vmatpush1.msra.mxu0 0.0
      %3052 = vmatprep.subr.mxu0 0.0
      %3053 = vmatpush1.msra.mxu0 0.0
      %3054 = vmatprep.subr.mxu0 0.0
      %3055 = vmatpush1.msra.mxu0 0.0
      %3056 = vmatprep.subr.mxu0 0.0
      %3057 = vmatpush1.msra.mxu0 0.0
      %3058 = vmatprep.subr.mxu0 0.0
      %3059 = vmatpush1.msra.mxu0 0.0
      %3060 = vmatprep.subr.mxu0 0.0
      %3061 = vmatpush1.msra.mxu0 0.0
      %3062 = vmatprep.subr.mxu0 0.0
      %3063 = vmatpush1.msra.mxu0 0.0
      %3064 = vmatprep.subr.mxu0 0.0
      %3065 = vmatpush1.msra.mxu0 0.0
      %3066 = vmatprep.subr.mxu0 0.0
      %3067 = vmatpush1.msra.mxu0 0.0
      %3068 = vmatprep.subr.mxu0 0.0
      %3069 = vmatpush1.msra.mxu0 0.0
      %3070 = vmatprep.subr.mxu0 0.0
      %3071 = vmatpush1.msra.mxu0 0.0
      %3072 = vmatprep.subr.mxu0 0.0
      %3073 = vmatpush1.msra.mxu0 0.0
      %3074 = vmatprep.subr.mxu0 0.0
      %3075 = vmatpush1.msra.mxu0 0.0
      %3076 = vmatprep.subr.mxu0 0.0
      %3077 = vmatpush1.msra.mxu0 0.0
      %3078 = vmatprep.subr.mxu0 0.0
      %3079 = vmatpush1.msra.mxu0 0.0
      %3080 = vmatprep.subr.mxu0 0.0
      %3081 = vmatpush1.msra.mxu0 %v3048
      %3082 = vmatprep.subr.mxu0 0.0
      %3083 = vmatpush2.msra.mxu0 0.0
      %3084 = vmatprep.subr.mxu0 0.0
      %3085 = vmatpush2.msra.mxu0 0.0
      %3086 = vmatprep.subr.mxu0 0.0
      %3087 = vmatpush2.msra.mxu0 0.0
      %3088 = vmatprep.subr.mxu0 0.0
      %3089 = vmatpush2.msra.mxu0 0.0
      %3090 = vmatprep.subr.mxu0 0.0
      %3091 = vmatpush2.msra.mxu0 0.0
      %3092 = vmatprep.subr.mxu0 0.0
      %3093 = vmatpush2.msra.mxu0 0.0
      %3094 = vmatprep.subr.mxu0 0.0
      %3095 = vmatpush2.msra.mxu0 0.0
      %3096 = vmatprep.subr.mxu0 0.0
      %3097 = vmatpush2.msra.mxu0 0.0
      %3098 = vmatprep.subr.mxu0 0.0
      %3099 = vmatpush2.msra.mxu0 0.0
      %3100 = vmatprep.subr.mxu0 0.0
      %3101 = vmatpush2.msra.mxu0 0.0
      %3102 = vmatprep.subr.mxu0 0.0
      %3103 = vmatpush2.msra.mxu0 0.0
      %3104 = vmatprep.subr.mxu0 0.0
      %3105 = vmatpush2.msra.mxu0 0.0
      %3106 = vmatprep.subr.mxu0 0.0
      %3107 = vmatpush2.msra.mxu0 0.0
      %3108 = vmatprep.subr.mxu0 0.0
      %3109 = vmatpush2.msra.mxu0 0.0
      %3110 = vmatprep.subr.mxu0 0.0
      %3111 = vmatpush2.msra.mxu0 0.0
      %3112 = vmatprep.subr.mxu0 0.0
      %3113 = vmatpush2.msra.mxu0 0.0
      %3114 = vmatprep.mubr.f32.mxu0 0.0
      %3115 = vmatmul.mubr.f32.gmra.mxu0 %v2999
      %v3116 = vpop.f32.mrf.mxu0
      %v3117 = vadd.f32 0.0, %v3116
      %v3118 = vpop.f32.mrf.mxu0
      %3119 = vmatprep.mubr.f32.mxu0 0.0
      %3120 = vmatmul.mubr.f32.gmra.mxu0 %v3001
      %v3121 = vpop.f32.mrf.mxu0
      %v3122 = vadd.f32 0.0, %v3121
      %v3123 = vpop.f32.mrf.mxu0
      %3124 = vmatprep.mubr.f32.mxu0 0.0
      %3125 = vmatmul.mubr.f32.gmra.mxu0 %v3003
      %v3126 = vpop.f32.mrf.mxu0
      %v3127 = vadd.f32 0.0, %v3126
      %v3128 = vpop.f32.mrf.mxu0
      %3129 = vmatprep.mubr.f32.mxu0 0.0
      %3130 = vmatmul.mubr.f32.gmra.mxu0 %v3005
      %v3131 = vpop.f32.mrf.mxu0
      %v3132 = vadd.f32 0.0, %v3131
      %v3133 = vpop.f32.mrf.mxu0
      %3134 = vmatprep.mubr.f32.mxu0 0.0
      %3135 = vmatmul.mubr.f32.gmra.mxu0 %v3007
      %v3136 = vpop.f32.mrf.mxu0
      %v3137 = vadd.f32 0.0, %v3136
      %v3138 = vpop.f32.mrf.mxu0
      %3139 = vmatprep.mubr.f32.mxu0 0.0
      %3140 = vmatmul.mubr.f32.gmra.mxu0 %v3009
      %v3141 = vpop.f32.mrf.mxu0
      %v3142 = vadd.f32 0.0, %v3141
      %v3143 = vpop.f32.mrf.mxu0
      %3144 = vmatprep.mubr.f32.mxu0 0.0
      %3145 = vmatmul.mubr.f32.gmra.mxu0 %v3011
      %v3146 = vpop.f32.mrf.mxu0
      %v3147 = vadd.f32 0.0, %v3146
      %v3148 = vpop.f32.mrf.mxu0
      %3149 = vmatprep.mubr.f32.mxu0 0.0
      %3150 = vmatmul.mubr.f32.gmra.mxu0 %v3013
      %v3151 = vpop.f32.mrf.mxu0
      %v3152 = vadd.f32 0.0, %v3151
      %v3153 = vpop.f32.mrf.mxu0
      %3154 = vmatprep.mubr.f32.mxu0 0.0
      %3155 = vmatmul.mubr.f32.gmra.mxu0 %v3015
      %v3156 = vpop.f32.mrf.mxu0
      %v3157 = vadd.f32 0.0, %v3156
      %v3158 = vpop.f32.mrf.mxu0
      %3159 = vmatprep.mubr.f32.mxu0 0.0
      %3160 = vmatmul.mubr.f32.gmra.mxu0 %v3017
      %v3161 = vpop.f32.mrf.mxu0
      %v3162 = vadd.f32 0.0, %v3161
      %v3163 = vpop.f32.mrf.mxu0
      %3164 = vmatprep.mubr.f32.mxu0 0.0
      %3165 = vmatmul.mubr.f32.gmra.mxu0 %v3019
      %v3166 = vpop.f32.mrf.mxu0
      %v3167 = vadd.f32 0.0, %v3166
      %v3168 = vpop.f32.mrf.mxu0
      %3169 = vmatprep.mubr.f32.mxu0 0.0
      %3170 = vmatmul.mubr.f32.gmra.mxu0 %v3021
      %v3171 = vpop.f32.mrf.mxu0
      %v3172 = vadd.f32 0.0, %v3171
      %v3173 = vpop.f32.mrf.mxu0
      %3174 = vmatprep.mubr.f32.mxu0 0.0
      %3175 = vmatmul.mubr.f32.gmra.mxu0 %v3023
      %v3176 = vpop.f32.mrf.mxu0
      %v3177 = vadd.f32 0.0, %v3176
      %v3178 = vpop.f32.mrf.mxu0
      %3179 = vmatprep.mubr.f32.mxu0 0.0
      %3180 = vmatmul.mubr.f32.gmra.mxu0 %v3025
      %v3181 = vpop.f32.mrf.mxu0
      %v3182 = vadd.f32 0.0, %v3181
      %v3183 = vpop.f32.mrf.mxu0
      %3184 = vmatprep.mubr.f32.mxu0 0.0
      %3185 = vmatmul.mubr.f32.gmra.mxu0 %v3027
      %v3186 = vpop.f32.mrf.mxu0
      %v3187 = vadd.f32 0.0, %v3186
      %v3188 = vpop.f32.mrf.mxu0
      %3189 = vmatprep.mubr.f32.mxu0 0.0
      %3190 = vmatmul.mubr.f32.gmra.mxu0 %v3029
      %v3191 = vpop.f32.mrf.mxu0
      %v3192 = vadd.f32 0.0, %v3191
      %v3193 = vpop.f32.mrf.mxu0
      %3194 = vmatprep.mubr.f32.mxu0 0.0
      %3195 = vmatmul.mubr.f32.gmra.mxu0 %v3031
      %v3196 = vpop.f32.mrf.mxu0
      %v3197 = vadd.f32 0.0, %v3196
      %v3198 = vpop.f32.mrf.mxu0
      %3199 = vmatprep.mubr.f32.mxu0 0.0
      %3200 = vmatmul.mubr.f32.gmra.mxu0 %v3033
      %v3201 = vpop.f32.mrf.mxu0
      %v3202 = vadd.f32 0.0, %v3201
      %v3203 = vpop.f32.mrf.mxu0
      %3204 = vmatprep.mubr.f32.mxu0 0.0
      %3205 = vmatmul.mubr.f32.gmra.mxu0 %v3035
      %v3206 = vpop.f32.mrf.mxu0
      %v3207 = vadd.f32 0.0, %v3206
      %v3208 = vpop.f32.mrf.mxu0
      %3209 = vmatprep.mubr.f32.mxu0 0.0
      %3210 = vmatmul.mubr.f32.gmra.mxu0 %v3037
      %v3211 = vpop.f32.mrf.mxu0
      %v3212 = vadd.f32 0.0, %v3211
      %v3213 = vpop.f32.mrf.mxu0
      %3214 = vmatprep.mubr.f32.mxu0 0.0
      %3215 = vmatmul.mubr.f32.gmra.mxu0 %v3039
      %v3216 = vpop.f32.mrf.mxu0
      %v3217 = vadd.f32 0.0, %v3216
      %v3218 = vpop.f32.mrf.mxu0
      %3219 = vmatprep.mubr.f32.mxu0 0.0
      %3220 = vmatmul.mubr.f32.gmra.mxu0 %v3041
      %v3221 = vpop.f32.mrf.mxu0
      %v3222 = vadd.f32 0.0, %v3221
      %v3223 = vpop.f32.mrf.mxu0
      %3224 = vmatprep.mubr.f32.mxu0 0.0
      %3225 = vmatmul.mubr.f32.gmra.mxu0 %v3043
      %v3226 = vpop.f32.mrf.mxu0
      %v3227 = vadd.f32 0.0, %v3226
      %v3228 = vpop.f32.mrf.mxu0
      %3229 = vmatprep.mubr.f32.mxu0 0.0
      %3230 = vmatmul.mubr.f32.gmra.mxu0 %v3045
      %v3231 = vpop.f32.mrf.mxu0
      %v3232 = vadd.f32 0.0, %v3231
      %v3233 = vpop.f32.mrf.mxu0
      %3234 = vdwg.mxu0
      %v3235 = vadd.f32 %v2923, %v3117
      %v3236 = vadd.f32 %v2924, %v3122
      %v3237 = vadd.f32 %v2925, %v3127
      %v3238 = vadd.f32 %v2926, %v3132
      %v3239 = vadd.f32 %v2927, %v3137
      %v3240 = vadd.f32 %v2928, %v3142
      %v3241 = vadd.f32 %v2929, %v3147
      %v3242 = vadd.f32 %v2930, %v3152
      %v3243 = vadd.f32 %v2931, %v3157
      %v3244 = vadd.f32 %v2932, %v3162
      %v3245 = vadd.f32 %v2933, %v3167
      %v3246 = vadd.f32 %v2934, %v3172
      %v3247 = vadd.f32 %v2935, %v3177
      %v3248 = vadd.f32 %v2936, %v3182
      %v3249 = vadd.f32 %v2937, %v3187
      %v3250 = vadd.f32 %v2938, %v3192
      %v3251 = vadd.f32 %v2939, %v3197
      %v3252 = vadd.f32 %v2940, %v3202
      %v3253 = vadd.f32 %v2941, %v3207
      %v3254 = vadd.f32 %v2942, %v3212
      %v3255 = vadd.f32 %v2943, %v3217
      %v3256 = vadd.f32 %v2944, %v3222
      %v3257 = vadd.f32 %v2945, %v3227
      %v3258 = vadd.f32 %v2946, %v3232
      %s3259 = scalar_lea.vmem %s1, 32
      %v3260 = vld [vmem:[%s3259] sm:$0xf]
      %v3261 = vsel %vm919, %v843, 0
      %v3264 = vsel %vm968, %v3260, 0
      %3266 = vmatprep.subr.mxu0 0.0
      %3267 = vmatpush1.msra.mxu0 0.0
      %3268 = vmatprep.subr.mxu0 0.0
      %3269 = vmatpush1.msra.mxu0 0.0
      %3270 = vmatprep.subr.mxu0 0.0
      %3271 = vmatpush1.msra.mxu0 0.0
      %3272 = vmatprep.subr.mxu0 0.0
      %3273 = vmatpush1.msra.mxu0 0.0
      %3274 = vmatprep.subr.mxu0 0.0
      %3275 = vmatpush1.msra.mxu0 0.0
      %3276 = vmatprep.subr.mxu0 0.0
      %3277 = vmatpush1.msra.mxu0 0.0
      %3278 = vmatprep.subr.mxu0 0.0
      %3279 = vmatpush1.msra.mxu0 0.0
      %3280 = vmatprep.subr.mxu0 0.0
      %3281 = vmatpush1.msra.mxu0 0.0
      %3282 = vmatprep.subr.mxu0 0.0
      %3283 = vmatpush1.msra.mxu0 0.0
      %3284 = vmatprep.subr.mxu0 0.0
      %3285 = vmatpush1.msra.mxu0 0.0
      %3286 = vmatprep.subr.mxu0 0.0
      %3287 = vmatpush1.msra.mxu0 0.0
      %3288 = vmatprep.subr.mxu0 0.0
      %3289 = vmatpush1.msra.mxu0 0.0
      %3290 = vmatprep.subr.mxu0 0.0
      %3291 = vmatpush1.msra.mxu0 0.0
      %3292 = vmatprep.subr.mxu0 0.0
      %3293 = vmatpush1.msra.mxu0 0.0
      %3294 = vmatprep.subr.mxu0 0.0
      %3295 = vmatpush1.msra.mxu0 0.0
      %3296 = vmatprep.subr.mxu0 0.0
      %3297 = vmatpush1.msra.mxu0 %v3264
      %3298 = vmatprep.subr.mxu0 0.0
      %3299 = vmatpush2.msra.mxu0 0.0
      %3300 = vmatprep.subr.mxu0 0.0
      %3301 = vmatpush2.msra.mxu0 0.0
      %3302 = vmatprep.subr.mxu0 0.0
      %3303 = vmatpush2.msra.mxu0 0.0
      %3304 = vmatprep.subr.mxu0 0.0
      %3305 = vmatpush2.msra.mxu0 0.0
      %3306 = vmatprep.subr.mxu0 0.0
      %3307 = vmatpush2.msra.mxu0 0.0
      %3308 = vmatprep.subr.mxu0 0.0
      %3309 = vmatpush2.msra.mxu0 0.0
      %3310 = vmatprep.subr.mxu0 0.0
      %3311 = vmatpush2.msra.mxu0 0.0
      %3312 = vmatprep.subr.mxu0 0.0
      %3313 = vmatpush2.msra.mxu0 0.0
      %3314 = vmatprep.subr.mxu0 0.0
      %3315 = vmatpush2.msra.mxu0 0.0
      %3316 = vmatprep.subr.mxu0 0.0
      %3317 = vmatpush2.msra.mxu0 0.0
      %3318 = vmatprep.subr.mxu0 0.0
      %3319 = vmatpush2.msra.mxu0 0.0
      %3320 = vmatprep.subr.mxu0 0.0
      %3321 = vmatpush2.msra.mxu0 0.0
      %3322 = vmatprep.subr.mxu0 0.0
      %3323 = vmatpush2.msra.mxu0 0.0
      %3324 = vmatprep.subr.mxu0 0.0
      %3325 = vmatpush2.msra.mxu0 0.0
      %3326 = vmatprep.subr.mxu0 0.0
      %3327 = vmatpush2.msra.mxu0 0.0
      %3328 = vmatprep.subr.mxu0 0.0
      %3329 = vmatpush2.msra.mxu0 0.0
      %3330 = vmatprep.mubr.f32.mxu0 0.0
      %3331 = vmatmul.mubr.f32.gmra.mxu0 %v1159
      %v3332 = vpop.f32.mrf.mxu0
      %v3333 = vadd.f32 0.0, %v3332
      %v3334 = vpop.f32.mrf.mxu0
      %3335 = vmatprep.mubr.f32.mxu0 0.0
      %3336 = vmatmul.mubr.f32.gmra.mxu0 %v1161
      %v3337 = vpop.f32.mrf.mxu0
      %v3338 = vadd.f32 0.0, %v3337
      %v3339 = vpop.f32.mrf.mxu0
      %3340 = vmatprep.mubr.f32.mxu0 0.0
      %3341 = vmatmul.mubr.f32.gmra.mxu0 %v1163
      %v3342 = vpop.f32.mrf.mxu0
      %v3343 = vadd.f32 0.0, %v3342
      %v3344 = vpop.f32.mrf.mxu0
      %3345 = vmatprep.mubr.f32.mxu0 0.0
      %3346 = vmatmul.mubr.f32.gmra.mxu0 %v1165
      %v3347 = vpop.f32.mrf.mxu0
      %v3348 = vadd.f32 0.0, %v3347
      %v3349 = vpop.f32.mrf.mxu0
      %3350 = vmatprep.mubr.f32.mxu0 0.0
      %3351 = vmatmul.mubr.f32.gmra.mxu0 %v1167
      %v3352 = vpop.f32.mrf.mxu0
      %v3353 = vadd.f32 0.0, %v3352
      %v3354 = vpop.f32.mrf.mxu0
      %3355 = vmatprep.mubr.f32.mxu0 0.0
      %3356 = vmatmul.mubr.f32.gmra.mxu0 %v1169
      %v3357 = vpop.f32.mrf.mxu0
      %v3358 = vadd.f32 0.0, %v3357
      %v3359 = vpop.f32.mrf.mxu0
      %3360 = vmatprep.mubr.f32.mxu0 0.0
      %3361 = vmatmul.mubr.f32.gmra.mxu0 %v1171
      %v3362 = vpop.f32.mrf.mxu0
      %v3363 = vadd.f32 0.0, %v3362
      %v3364 = vpop.f32.mrf.mxu0
      %3365 = vmatprep.mubr.f32.mxu0 0.0
      %3366 = vmatmul.mubr.f32.gmra.mxu0 %v1173
      %v3367 = vpop.f32.mrf.mxu0
      %v3368 = vadd.f32 0.0, %v3367
      %v3369 = vpop.f32.mrf.mxu0
      %3370 = vmatprep.mubr.f32.mxu0 0.0
      %3371 = vmatmul.mubr.f32.gmra.mxu0 %v1175
      %v3372 = vpop.f32.mrf.mxu0
      %v3373 = vadd.f32 0.0, %v3372
      %v3374 = vpop.f32.mrf.mxu0
      %3375 = vmatprep.mubr.f32.mxu0 0.0
      %3376 = vmatmul.mubr.f32.gmra.mxu0 %v1177
      %v3377 = vpop.f32.mrf.mxu0
      %v3378 = vadd.f32 0.0, %v3377
      %v3379 = vpop.f32.mrf.mxu0
      %3380 = vmatprep.mubr.f32.mxu0 0.0
      %3381 = vmatmul.mubr.f32.gmra.mxu0 %v1179
      %v3382 = vpop.f32.mrf.mxu0
      %v3383 = vadd.f32 0.0, %v3382
      %v3384 = vpop.f32.mrf.mxu0
      %3385 = vmatprep.mubr.f32.mxu0 0.0
      %3386 = vmatmul.mubr.f32.gmra.mxu0 %v1181
      %v3387 = vpop.f32.mrf.mxu0
      %v3388 = vadd.f32 0.0, %v3387
      %v3389 = vpop.f32.mrf.mxu0
      %3390 = vmatprep.mubr.f32.mxu0 0.0
      %3391 = vmatmul.mubr.f32.gmra.mxu0 %v1183
      %v3392 = vpop.f32.mrf.mxu0
      %v3393 = vadd.f32 0.0, %v3392
      %v3394 = vpop.f32.mrf.mxu0
      %3395 = vmatprep.mubr.f32.mxu0 0.0
      %3396 = vmatmul.mubr.f32.gmra.mxu0 %v1185
      %v3397 = vpop.f32.mrf.mxu0
      %v3398 = vadd.f32 0.0, %v3397
      %v3399 = vpop.f32.mrf.mxu0
      %3400 = vmatprep.mubr.f32.mxu0 0.0
      %3401 = vmatmul.mubr.f32.gmra.mxu0 %v1187
      %v3402 = vpop.f32.mrf.mxu0
      %v3403 = vadd.f32 0.0, %v3402
      %v3404 = vpop.f32.mrf.mxu0
      %3405 = vmatprep.mubr.f32.mxu0 0.0
      %3406 = vmatmul.mubr.f32.gmra.mxu0 %v1189
      %v3407 = vpop.f32.mrf.mxu0
      %v3408 = vadd.f32 0.0, %v3407
      %v3409 = vpop.f32.mrf.mxu0
      %3410 = vmatprep.mubr.f32.mxu0 0.0
      %3411 = vmatmul.mubr.f32.gmra.mxu0 %v1191
      %v3412 = vpop.f32.mrf.mxu0
      %v3413 = vadd.f32 0.0, %v3412
      %v3414 = vpop.f32.mrf.mxu0
      %3415 = vmatprep.mubr.f32.mxu0 0.0
      %3416 = vmatmul.mubr.f32.gmra.mxu0 %v1193
      %v3417 = vpop.f32.mrf.mxu0
      %v3418 = vadd.f32 0.0, %v3417
      %v3419 = vpop.f32.mrf.mxu0
      %3420 = vmatprep.mubr.f32.mxu0 0.0
      %3421 = vmatmul.mubr.f32.gmra.mxu0 %v1195
      %v3422 = vpop.f32.mrf.mxu0
      %v3423 = vadd.f32 0.0, %v3422
      %v3424 = vpop.f32.mrf.mxu0
      %3425 = vmatprep.mubr.f32.mxu0 0.0
      %3426 = vmatmul.mubr.f32.gmra.mxu0 %v1197
      %v3427 = vpop.f32.mrf.mxu0
      %v3428 = vadd.f32 0.0, %v3427
      %v3429 = vpop.f32.mrf.mxu0
      %3430 = vmatprep.mubr.f32.mxu0 0.0
      %3431 = vmatmul.mubr.f32.gmra.mxu0 %v1199
      %v3432 = vpop.f32.mrf.mxu0
      %v3433 = vadd.f32 0.0, %v3432
      %v3434 = vpop.f32.mrf.mxu0
      %3435 = vmatprep.mubr.f32.mxu0 0.0
      %3436 = vmatmul.mubr.f32.gmra.mxu0 %v1201
      %v3437 = vpop.f32.mrf.mxu0
      %v3438 = vadd.f32 0.0, %v3437
      %v3439 = vpop.f32.mrf.mxu0
      %3440 = vmatprep.mubr.f32.mxu0 0.0
      %3441 = vmatmul.mubr.f32.gmra.mxu0 %v1203
      %v3442 = vpop.f32.mrf.mxu0
      %v3443 = vadd.f32 0.0, %v3442
      %v3444 = vpop.f32.mrf.mxu0
      %3445 = vmatprep.mubr.f32.mxu0 0.0
      %3446 = vmatmul.mubr.f32.gmra.mxu0 %v3261
      %v3447 = vpop.f32.mrf.mxu0
      %v3448 = vadd.f32 0.0, %v3447
      %v3449 = vpop.f32.mrf.mxu0
      %3450 = vdwg.mxu0
      %v3451 = vadd.f32 %v3235, %v3333
      %v3452 = vadd.f32 %v3236, %v3338
      %v3453 = vadd.f32 %v3237, %v3343
      %v3454 = vadd.f32 %v3238, %v3348
      %v3455 = vadd.f32 %v3239, %v3353
      %v3456 = vadd.f32 %v3240, %v3358
      %v3457 = vadd.f32 %v3241, %v3363
      %v3458 = vadd.f32 %v3242, %v3368
      %v3459 = vadd.f32 %v3243, %v3373
      %v3460 = vadd.f32 %v3244, %v3378
      %v3461 = vadd.f32 %v3245, %v3383
      %v3462 = vadd.f32 %v3246, %v3388
      %v3463 = vadd.f32 %v3247, %v3393
      %v3464 = vadd.f32 %v3248, %v3398
      %v3465 = vadd.f32 %v3249, %v3403
      %v3466 = vadd.f32 %v3250, %v3408
      %v3467 = vadd.f32 %v3251, %v3413
      %v3468 = vadd.f32 %v3252, %v3418
      %v3469 = vadd.f32 %v3253, %v3423
      %v3470 = vadd.f32 %v3254, %v3428
      %v3471 = vadd.f32 %v3255, %v3433
      %v3472 = vadd.f32 %v3256, %v3438
      %v3473 = vadd.f32 %v3257, %v3443
      %v3474 = vadd.f32 %v3258, %v3448
      %s3475 = scalar_lea.vmem %s1, 36
      %v3476 = vld [vmem:[%s3475] sm:$0xf]
      %v3477 = vrot.slane %v843, 1
      %v3478 = vsel %vm871, %v917, %v3477
      %v3479 = vsel %vm919, %v3478, 0
      %v3481 = vsel %vm919, %v3477, 0
      %v3484 = vsel %vm968, %v3476, 0
      %3486 = vmatprep.subr.mxu0 0.0
      %3487 = vmatpush1.msra.mxu0 0.0
      %3488 = vmatprep.subr.mxu0 0.0
      %3489 = vmatpush1.msra.mxu0 0.0
      %3490 = vmatprep.subr.mxu0 0.0
      %3491 = vmatpush1.msra.mxu0 0.0
      %3492 = vmatprep.subr.mxu0 0.0
      %3493 = vmatpush1.msra.mxu0 0.0
      %3494 = vmatprep.subr.mxu0 0.0
      %3495 = vmatpush1.msra.mxu0 0.0
      %3496 = vmatprep.subr.mxu0 0.0
      %3497 = vmatpush1.msra.mxu0 0.0
      %3498 = vmatprep.subr.mxu0 0.0
      %3499 = vmatpush1.msra.mxu0 0.0
      %3500 = vmatprep.subr.mxu0 0.0
      %3501 = vmatpush1.msra.mxu0 0.0
      %3502 = vmatprep.subr.mxu0 0.0
      %3503 = vmatpush1.msra.mxu0 0.0
      %3504 = vmatprep.subr.mxu0 0.0
      %3505 = vmatpush1.msra.mxu0 0.0
      %3506 = vmatprep.subr.mxu0 0.0
      %3507 = vmatpush1.msra.mxu0 0.0
      %3508 = vmatprep.subr.mxu0 0.0
      %3509 = vmatpush1.msra.mxu0 0.0
      %3510 = vmatprep.subr.mxu0 0.0
      %3511 = vmatpush1.msra.mxu0 0.0
      %3512 = vmatprep.subr.mxu0 0.0
      %3513 = vmatpush1.msra.mxu0 0.0
      %3514 = vmatprep.subr.mxu0 0.0
      %3515 = vmatpush1.msra.mxu0 0.0
      %3516 = vmatprep.subr.mxu0 0.0
      %3517 = vmatpush1.msra.mxu0 %v3484
      %3518 = vmatprep.subr.mxu0 0.0
      %3519 = vmatpush2.msra.mxu0 0.0
      %3520 = vmatprep.subr.mxu0 0.0
      %3521 = vmatpush2.msra.mxu0 0.0
      %3522 = vmatprep.subr.mxu0 0.0
      %3523 = vmatpush2.msra.mxu0 0.0
      %3524 = vmatprep.subr.mxu0 0.0
      %3525 = vmatpush2.msra.mxu0 0.0
      %3526 = vmatprep.subr.mxu0 0.0
      %3527 = vmatpush2.msra.mxu0 0.0
      %3528 = vmatprep.subr.mxu0 0.0
      %3529 = vmatpush2.msra.mxu0 0.0
      %3530 = vmatprep.subr.mxu0 0.0
      %3531 = vmatpush2.msra.mxu0 0.0
      %3532 = vmatprep.subr.mxu0 0.0
      %3533 = vmatpush2.msra.mxu0 0.0
      %3534 = vmatprep.subr.mxu0 0.0
      %3535 = vmatpush2.msra.mxu0 0.0
      %3536 = vmatprep.subr.mxu0 0.0
      %3537 = vmatpush2.msra.mxu0 0.0
      %3538 = vmatprep.subr.mxu0 0.0
      %3539 = vmatpush2.msra.mxu0 0.0
      %3540 = vmatprep.subr.mxu0 0.0
      %3541 = vmatpush2.msra.mxu0 0.0
      %3542 = vmatprep.subr.mxu0 0.0
      %3543 = vmatpush2.msra.mxu0 0.0
      %3544 = vmatprep.subr.mxu0 0.0
      %3545 = vmatpush2.msra.mxu0 0.0
      %3546 = vmatprep.subr.mxu0 0.0
      %3547 = vmatpush2.msra.mxu0 0.0
      %3548 = vmatprep.subr.mxu0 0.0
      %3549 = vmatpush2.msra.mxu0 0.0
      %3550 = vmatprep.mubr.f32.mxu0 0.0
      %3551 = vmatmul.mubr.f32.gmra.mxu0 %v922
      %v3552 = vpop.f32.mrf.mxu0
      %v3553 = vadd.f32 0.0, %v3552
      %v3554 = vpop.f32.mrf.mxu0
      %3555 = vmatprep.mubr.f32.mxu0 0.0
      %3556 = vmatmul.mubr.f32.gmra.mxu0 %v924
      %v3557 = vpop.f32.mrf.mxu0
      %v3558 = vadd.f32 0.0, %v3557
      %v3559 = vpop.f32.mrf.mxu0
      %3560 = vmatprep.mubr.f32.mxu0 0.0
      %3561 = vmatmul.mubr.f32.gmra.mxu0 %v926
      %v3562 = vpop.f32.mrf.mxu0
      %v3563 = vadd.f32 0.0, %v3562
      %v3564 = vpop.f32.mrf.mxu0
      %3565 = vmatprep.mubr.f32.mxu0 0.0
      %3566 = vmatmul.mubr.f32.gmra.mxu0 %v928
      %v3567 = vpop.f32.mrf.mxu0
      %v3568 = vadd.f32 0.0, %v3567
      %v3569 = vpop.f32.mrf.mxu0
      %3570 = vmatprep.mubr.f32.mxu0 0.0
      %3571 = vmatmul.mubr.f32.gmra.mxu0 %v930
      %v3572 = vpop.f32.mrf.mxu0
      %v3573 = vadd.f32 0.0, %v3572
      %v3574 = vpop.f32.mrf.mxu0
      %3575 = vmatprep.mubr.f32.mxu0 0.0
      %3576 = vmatmul.mubr.f32.gmra.mxu0 %v932
      %v3577 = vpop.f32.mrf.mxu0
      %v3578 = vadd.f32 0.0, %v3577
      %v3579 = vpop.f32.mrf.mxu0
      %3580 = vmatprep.mubr.f32.mxu0 0.0
      %3581 = vmatmul.mubr.f32.gmra.mxu0 %v934
      %v3582 = vpop.f32.mrf.mxu0
      %v3583 = vadd.f32 0.0, %v3582
      %v3584 = vpop.f32.mrf.mxu0
      %3585 = vmatprep.mubr.f32.mxu0 0.0
      %3586 = vmatmul.mubr.f32.gmra.mxu0 %v936
      %v3587 = vpop.f32.mrf.mxu0
      %v3588 = vadd.f32 0.0, %v3587
      %v3589 = vpop.f32.mrf.mxu0
      %3590 = vmatprep.mubr.f32.mxu0 0.0
      %3591 = vmatmul.mubr.f32.gmra.mxu0 %v938
      %v3592 = vpop.f32.mrf.mxu0
      %v3593 = vadd.f32 0.0, %v3592
      %v3594 = vpop.f32.mrf.mxu0
      %3595 = vmatprep.mubr.f32.mxu0 0.0
      %3596 = vmatmul.mubr.f32.gmra.mxu0 %v940
      %v3597 = vpop.f32.mrf.mxu0
      %v3598 = vadd.f32 0.0, %v3597
      %v3599 = vpop.f32.mrf.mxu0
      %3600 = vmatprep.mubr.f32.mxu0 0.0
      %3601 = vmatmul.mubr.f32.gmra.mxu0 %v942
      %v3602 = vpop.f32.mrf.mxu0
      %v3603 = vadd.f32 0.0, %v3602
      %v3604 = vpop.f32.mrf.mxu0
      %3605 = vmatprep.mubr.f32.mxu0 0.0
      %3606 = vmatmul.mubr.f32.gmra.mxu0 %v944
      %v3607 = vpop.f32.mrf.mxu0
      %v3608 = vadd.f32 0.0, %v3607
      %v3609 = vpop.f32.mrf.mxu0
      %3610 = vmatprep.mubr.f32.mxu0 0.0
      %3611 = vmatmul.mubr.f32.gmra.mxu0 %v946
      %v3612 = vpop.f32.mrf.mxu0
      %v3613 = vadd.f32 0.0, %v3612
      %v3614 = vpop.f32.mrf.mxu0
      %3615 = vmatprep.mubr.f32.mxu0 0.0
      %3616 = vmatmul.mubr.f32.gmra.mxu0 %v948
      %v3617 = vpop.f32.mrf.mxu0
      %v3618 = vadd.f32 0.0, %v3617
      %v3619 = vpop.f32.mrf.mxu0
      %3620 = vmatprep.mubr.f32.mxu0 0.0
      %3621 = vmatmul.mubr.f32.gmra.mxu0 %v950
      %v3622 = vpop.f32.mrf.mxu0
      %v3623 = vadd.f32 0.0, %v3622
      %v3624 = vpop.f32.mrf.mxu0
      %3625 = vmatprep.mubr.f32.mxu0 0.0
      %3626 = vmatmul.mubr.f32.gmra.mxu0 %v952
      %v3627 = vpop.f32.mrf.mxu0
      %v3628 = vadd.f32 0.0, %v3627
      %v3629 = vpop.f32.mrf.mxu0
      %3630 = vmatprep.mubr.f32.mxu0 0.0
      %3631 = vmatmul.mubr.f32.gmra.mxu0 %v954
      %v3632 = vpop.f32.mrf.mxu0
      %v3633 = vadd.f32 0.0, %v3632
      %v3634 = vpop.f32.mrf.mxu0
      %3635 = vmatprep.mubr.f32.mxu0 0.0
      %3636 = vmatmul.mubr.f32.gmra.mxu0 %v956
      %v3637 = vpop.f32.mrf.mxu0
      %v3638 = vadd.f32 0.0, %v3637
      %v3639 = vpop.f32.mrf.mxu0
      %3640 = vmatprep.mubr.f32.mxu0 0.0
      %3641 = vmatmul.mubr.f32.gmra.mxu0 %v958
      %v3642 = vpop.f32.mrf.mxu0
      %v3643 = vadd.f32 0.0, %v3642
      %v3644 = vpop.f32.mrf.mxu0
      %3645 = vmatprep.mubr.f32.mxu0 0.0
      %3646 = vmatmul.mubr.f32.gmra.mxu0 %v960
      %v3647 = vpop.f32.mrf.mxu0
      %v3648 = vadd.f32 0.0, %v3647
      %v3649 = vpop.f32.mrf.mxu0
      %3650 = vmatprep.mubr.f32.mxu0 0.0
      %3651 = vmatmul.mubr.f32.gmra.mxu0 %v962
      %v3652 = vpop.f32.mrf.mxu0
      %v3653 = vadd.f32 0.0, %v3652
      %v3654 = vpop.f32.mrf.mxu0
      %3655 = vmatprep.mubr.f32.mxu0 0.0
      %3656 = vmatmul.mubr.f32.gmra.mxu0 %v964
      %v3657 = vpop.f32.mrf.mxu0
      %v3658 = vadd.f32 0.0, %v3657
      %v3659 = vpop.f32.mrf.mxu0
      %3660 = vmatprep.mubr.f32.mxu0 0.0
      %3661 = vmatmul.mubr.f32.gmra.mxu0 %v3479
      %v3662 = vpop.f32.mrf.mxu0
      %v3663 = vadd.f32 0.0, %v3662
      %v3664 = vpop.f32.mrf.mxu0
      %3665 = vmatprep.mubr.f32.mxu0 0.0
      %3666 = vmatmul.mubr.f32.gmra.mxu0 %v3481
      %v3667 = vpop.f32.mrf.mxu0
      %v3668 = vadd.f32 0.0, %v3667
      %v3669 = vpop.f32.mrf.mxu0
      %3670 = vdwg.mxu0
      %v3671 = vadd.f32 %v3451, %v3553
      %v3672 = vadd.f32 %v3452, %v3558
      %v3673 = vadd.f32 %v3453, %v3563
      %v3674 = vadd.f32 %v3454, %v3568
      %v3675 = vadd.f32 %v3455, %v3573
      %v3676 = vadd.f32 %v3456, %v3578
      %v3677 = vadd.f32 %v3457, %v3583
      %v3678 = vadd.f32 %v3458, %v3588
      %v3679 = vadd.f32 %v3459, %v3593
      %v3680 = vadd.f32 %v3460, %v3598
      %v3681 = vadd.f32 %v3461, %v3603
      %v3682 = vadd.f32 %v3462, %v3608
      %v3683 = vadd.f32 %v3463, %v3613
      %v3684 = vadd.f32 %v3464, %v3618
      %v3685 = vadd.f32 %v3465, %v3623
      %v3686 = vadd.f32 %v3466, %v3628
      %v3687 = vadd.f32 %v3467, %v3633
      %v3688 = vadd.f32 %v3468, %v3638
      %v3689 = vadd.f32 %v3469, %v3643
      %v3690 = vadd.f32 %v3470, %v3648
      %v3691 = vadd.f32 %v3471, %v3653
      %v3692 = vadd.f32 %v3472, %v3658
      %v3693 = vadd.f32 %v3473, %v3663
      %v3694 = vadd.f32 %v3474, %v3668
      %s3695 = scalar_lea.vmem %s1, 40
      %v3696 = vld [vmem:[%s3695] sm:$0xf]
      %v3697 = vrot.slane %v843, 2
      %v3698 = vsel %vm1395, %v1441, %v3697
      %v3699 = vsel %vm919, %v3698, 0
      %v3701 = vsel %vm919, %v3697, 0
      %v3704 = vsel %vm968, %v3696, 0
      %3706 = vmatprep.subr.mxu0 0.0
      %3707 = vmatpush1.msra.mxu0 0.0
      %3708 = vmatprep.subr.mxu0 0.0
      %3709 = vmatpush1.msra.mxu0 0.0
      %3710 = vmatprep.subr.mxu0 0.0
      %3711 = vmatpush1.msra.mxu0 0.0
      %3712 = vmatprep.subr.mxu0 0.0
      %3713 = vmatpush1.msra.mxu0 0.0
      %3714 = vmatprep.subr.mxu0 0.0
      %3715 = vmatpush1.msra.mxu0 0.0
      %3716 = vmatprep.subr.mxu0 0.0
      %3717 = vmatpush1.msra.mxu0 0.0
      %3718 = vmatprep.subr.mxu0 0.0
      %3719 = vmatpush1.msra.mxu0 0.0
      %3720 = vmatprep.subr.mxu0 0.0
      %3721 = vmatpush1.msra.mxu0 0.0
      %3722 = vmatprep.subr.mxu0 0.0
      %3723 = vmatpush1.msra.mxu0 0.0
      %3724 = vmatprep.subr.mxu0 0.0
      %3725 = vmatpush1.msra.mxu0 0.0
      %3726 = vmatprep.subr.mxu0 0.0
      %3727 = vmatpush1.msra.mxu0 0.0
      %3728 = vmatprep.subr.mxu0 0.0
      %3729 = vmatpush1.msra.mxu0 0.0
      %3730 = vmatprep.subr.mxu0 0.0
      %3731 = vmatpush1.msra.mxu0 0.0
      %3732 = vmatprep.subr.mxu0 0.0
      %3733 = vmatpush1.msra.mxu0 0.0
      %3734 = vmatprep.subr.mxu0 0.0
      %3735 = vmatpush1.msra.mxu0 0.0
      %3736 = vmatprep.subr.mxu0 0.0
      %3737 = vmatpush1.msra.mxu0 %v3704
      %3738 = vmatprep.subr.mxu0 0.0
      %3739 = vmatpush2.msra.mxu0 0.0
      %3740 = vmatprep.subr.mxu0 0.0
      %3741 = vmatpush2.msra.mxu0 0.0
      %3742 = vmatprep.subr.mxu0 0.0
      %3743 = vmatpush2.msra.mxu0 0.0
      %3744 = vmatprep.subr.mxu0 0.0
      %3745 = vmatpush2.msra.mxu0 0.0
      %3746 = vmatprep.subr.mxu0 0.0
      %3747 = vmatpush2.msra.mxu0 0.0
      %3748 = vmatprep.subr.mxu0 0.0
      %3749 = vmatpush2.msra.mxu0 0.0
      %3750 = vmatprep.subr.mxu0 0.0
      %3751 = vmatpush2.msra.mxu0 0.0
      %3752 = vmatprep.subr.mxu0 0.0
      %3753 = vmatpush2.msra.mxu0 0.0
      %3754 = vmatprep.subr.mxu0 0.0
      %3755 = vmatpush2.msra.mxu0 0.0
      %3756 = vmatprep.subr.mxu0 0.0
      %3757 = vmatpush2.msra.mxu0 0.0
      %3758 = vmatprep.subr.mxu0 0.0
      %3759 = vmatpush2.msra.mxu0 0.0
      %3760 = vmatprep.subr.mxu0 0.0
      %3761 = vmatpush2.msra.mxu0 0.0
      %3762 = vmatprep.subr.mxu0 0.0
      %3763 = vmatpush2.msra.mxu0 0.0
      %3764 = vmatprep.subr.mxu0 0.0
      %3765 = vmatpush2.msra.mxu0 0.0
      %3766 = vmatprep.subr.mxu0 0.0
      %3767 = vmatpush2.msra.mxu0 0.0
      %3768 = vmatprep.subr.mxu0 0.0
      %3769 = vmatpush2.msra.mxu0 0.0
      %3770 = vmatprep.mubr.f32.mxu0 0.0
      %3771 = vmatmul.mubr.f32.gmra.mxu0 %v1445
      %v3772 = vpop.f32.mrf.mxu0
      %v3773 = vadd.f32 0.0, %v3772
      %v3774 = vpop.f32.mrf.mxu0
      %3775 = vmatprep.mubr.f32.mxu0 0.0
      %3776 = vmatmul.mubr.f32.gmra.mxu0 %v1447
      %v3777 = vpop.f32.mrf.mxu0
      %v3778 = vadd.f32 0.0, %v3777
      %v3779 = vpop.f32.mrf.mxu0
      %3780 = vmatprep.mubr.f32.mxu0 0.0
      %3781 = vmatmul.mubr.f32.gmra.mxu0 %v1449
      %v3782 = vpop.f32.mrf.mxu0
      %v3783 = vadd.f32 0.0, %v3782
      %v3784 = vpop.f32.mrf.mxu0
      %3785 = vmatprep.mubr.f32.mxu0 0.0
      %3786 = vmatmul.mubr.f32.gmra.mxu0 %v1451
      %v3787 = vpop.f32.mrf.mxu0
      %v3788 = vadd.f32 0.0, %v3787
      %v3789 = vpop.f32.mrf.mxu0
      %3790 = vmatprep.mubr.f32.mxu0 0.0
      %3791 = vmatmul.mubr.f32.gmra.mxu0 %v1453
      %v3792 = vpop.f32.mrf.mxu0
      %v3793 = vadd.f32 0.0, %v3792
      %v3794 = vpop.f32.mrf.mxu0
      %3795 = vmatprep.mubr.f32.mxu0 0.0
      %3796 = vmatmul.mubr.f32.gmra.mxu0 %v1455
      %v3797 = vpop.f32.mrf.mxu0
      %v3798 = vadd.f32 0.0, %v3797
      %v3799 = vpop.f32.mrf.mxu0
      %3800 = vmatprep.mubr.f32.mxu0 0.0
      %3801 = vmatmul.mubr.f32.gmra.mxu0 %v1457
      %v3802 = vpop.f32.mrf.mxu0
      %v3803 = vadd.f32 0.0, %v3802
      %v3804 = vpop.f32.mrf.mxu0
      %3805 = vmatprep.mubr.f32.mxu0 0.0
      %3806 = vmatmul.mubr.f32.gmra.mxu0 %v1459
      %v3807 = vpop.f32.mrf.mxu0
      %v3808 = vadd.f32 0.0, %v3807
      %v3809 = vpop.f32.mrf.mxu0
      %3810 = vmatprep.mubr.f32.mxu0 0.0
      %3811 = vmatmul.mubr.f32.gmra.mxu0 %v1461
      %v3812 = vpop.f32.mrf.mxu0
      %v3813 = vadd.f32 0.0, %v3812
      %v3814 = vpop.f32.mrf.mxu0
      %3815 = vmatprep.mubr.f32.mxu0 0.0
      %3816 = vmatmul.mubr.f32.gmra.mxu0 %v1463
      %v3817 = vpop.f32.mrf.mxu0
      %v3818 = vadd.f32 0.0, %v3817
      %v3819 = vpop.f32.mrf.mxu0
      %3820 = vmatprep.mubr.f32.mxu0 0.0
      %3821 = vmatmul.mubr.f32.gmra.mxu0 %v1465
      %v3822 = vpop.f32.mrf.mxu0
      %v3823 = vadd.f32 0.0, %v3822
      %v3824 = vpop.f32.mrf.mxu0
      %3825 = vmatprep.mubr.f32.mxu0 0.0
      %3826 = vmatmul.mubr.f32.gmra.mxu0 %v1467
      %v3827 = vpop.f32.mrf.mxu0
      %v3828 = vadd.f32 0.0, %v3827
      %v3829 = vpop.f32.mrf.mxu0
      %3830 = vmatprep.mubr.f32.mxu0 0.0
      %3831 = vmatmul.mubr.f32.gmra.mxu0 %v1469
      %v3832 = vpop.f32.mrf.mxu0
      %v3833 = vadd.f32 0.0, %v3832
      %v3834 = vpop.f32.mrf.mxu0
      %3835 = vmatprep.mubr.f32.mxu0 0.0
      %3836 = vmatmul.mubr.f32.gmra.mxu0 %v1471
      %v3837 = vpop.f32.mrf.mxu0
      %v3838 = vadd.f32 0.0, %v3837
      %v3839 = vpop.f32.mrf.mxu0
      %3840 = vmatprep.mubr.f32.mxu0 0.0
      %3841 = vmatmul.mubr.f32.gmra.mxu0 %v1473
      %v3842 = vpop.f32.mrf.mxu0
      %v3843 = vadd.f32 0.0, %v3842
      %v3844 = vpop.f32.mrf.mxu0
      %3845 = vmatprep.mubr.f32.mxu0 0.0
      %3846 = vmatmul.mubr.f32.gmra.mxu0 %v1475
      %v3847 = vpop.f32.mrf.mxu0
      %v3848 = vadd.f32 0.0, %v3847
      %v3849 = vpop.f32.mrf.mxu0
      %3850 = vmatprep.mubr.f32.mxu0 0.0
      %3851 = vmatmul.mubr.f32.gmra.mxu0 %v1477
      %v3852 = vpop.f32.mrf.mxu0
      %v3853 = vadd.f32 0.0, %v3852
      %v3854 = vpop.f32.mrf.mxu0
      %3855 = vmatprep.mubr.f32.mxu0 0.0
      %3856 = vmatmul.mubr.f32.gmra.mxu0 %v1479
      %v3857 = vpop.f32.mrf.mxu0
      %v3858 = vadd.f32 0.0, %v3857
      %v3859 = vpop.f32.mrf.mxu0
      %3860 = vmatprep.mubr.f32.mxu0 0.0
      %3861 = vmatmul.mubr.f32.gmra.mxu0 %v1481
      %v3862 = vpop.f32.mrf.mxu0
      %v3863 = vadd.f32 0.0, %v3862
      %v3864 = vpop.f32.mrf.mxu0
      %3865 = vmatprep.mubr.f32.mxu0 0.0
      %3866 = vmatmul.mubr.f32.gmra.mxu0 %v1483
      %v3867 = vpop.f32.mrf.mxu0
      %v3868 = vadd.f32 0.0, %v3867
      %v3869 = vpop.f32.mrf.mxu0
      %3870 = vmatprep.mubr.f32.mxu0 0.0
      %3871 = vmatmul.mubr.f32.gmra.mxu0 %v1485
      %v3872 = vpop.f32.mrf.mxu0
      %v3873 = vadd.f32 0.0, %v3872
      %v3874 = vpop.f32.mrf.mxu0
      %3875 = vmatprep.mubr.f32.mxu0 0.0
      %3876 = vmatmul.mubr.f32.gmra.mxu0 %v1487
      %v3877 = vpop.f32.mrf.mxu0
      %v3878 = vadd.f32 0.0, %v3877
      %v3879 = vpop.f32.mrf.mxu0
      %3880 = vmatprep.mubr.f32.mxu0 0.0
      %3881 = vmatmul.mubr.f32.gmra.mxu0 %v3699
      %v3882 = vpop.f32.mrf.mxu0
      %v3883 = vadd.f32 0.0, %v3882
      %v3884 = vpop.f32.mrf.mxu0
      %3885 = vmatprep.mubr.f32.mxu0 0.0
      %3886 = vmatmul.mubr.f32.gmra.mxu0 %v3701
      %v3887 = vpop.f32.mrf.mxu0
      %v3888 = vadd.f32 0.0, %v3887
      %v3889 = vpop.f32.mrf.mxu0
      %3890 = vdwg.mxu0
      %v3891 = vadd.f32 %v3671, %v3773
      %v3892 = vadd.f32 %v3672, %v3778
      %v3893 = vadd.f32 %v3673, %v3783
      %v3894 = vadd.f32 %v3674, %v3788
      %v3895 = vadd.f32 %v3675, %v3793
      %v3896 = vadd.f32 %v3676, %v3798
      %v3897 = vadd.f32 %v3677, %v3803
      %v3898 = vadd.f32 %v3678, %v3808
      %v3899 = vadd.f32 %v3679, %v3813
      %v3900 = vadd.f32 %v3680, %v3818
      %v3901 = vadd.f32 %v3681, %v3823
      %v3902 = vadd.f32 %v3682, %v3828
      %v3903 = vadd.f32 %v3683, %v3833
      %v3904 = vadd.f32 %v3684, %v3838
      %v3905 = vadd.f32 %v3685, %v3843
      %v3906 = vadd.f32 %v3686, %v3848
      %v3907 = vadd.f32 %v3687, %v3853
      %v3908 = vadd.f32 %v3688, %v3858
      %v3909 = vadd.f32 %v3689, %v3863
      %v3910 = vadd.f32 %v3690, %v3868
      %v3911 = vadd.f32 %v3691, %v3873
      %v3912 = vadd.f32 %v3692, %v3878
      %v3913 = vadd.f32 %v3693, %v3883
      %v3914 = vadd.f32 %v3694, %v3888
      %s3915 = scalar_lea.vmem %s1, 44
      %v3916 = vld [vmem:[%s3915] sm:$0xf]
      %v3917 = vrot.slane %v843, 3
      %v3918 = vsel %vm1705, %v1751, %v3917
      %v3919 = vsel %vm919, %v3918, 0
      %v3921 = vsel %vm919, %v3917, 0
      %v3924 = vsel %vm968, %v3916, 0
      %3926 = vmatprep.subr.mxu0 0.0
      %3927 = vmatpush1.msra.mxu0 0.0
      %3928 = vmatprep.subr.mxu0 0.0
      %3929 = vmatpush1.msra.mxu0 0.0
      %3930 = vmatprep.subr.mxu0 0.0
      %3931 = vmatpush1.msra.mxu0 0.0
      %3932 = vmatprep.subr.mxu0 0.0
      %3933 = vmatpush1.msra.mxu0 0.0
      %3934 = vmatprep.subr.mxu0 0.0
      %3935 = vmatpush1.msra.mxu0 0.0
      %3936 = vmatprep.subr.mxu0 0.0
      %3937 = vmatpush1.msra.mxu0 0.0
      %3938 = vmatprep.subr.mxu0 0.0
      %3939 = vmatpush1.msra.mxu0 0.0
      %3940 = vmatprep.subr.mxu0 0.0
      %3941 = vmatpush1.msra.mxu0 0.0
      %3942 = vmatprep.subr.mxu0 0.0
      %3943 = vmatpush1.msra.mxu0 0.0
      %3944 = vmatprep.subr.mxu0 0.0
      %3945 = vmatpush1.msra.mxu0 0.0
      %3946 = vmatprep.subr.mxu0 0.0
      %3947 = vmatpush1.msra.mxu0 0.0
      %3948 = vmatprep.subr.mxu0 0.0
      %3949 = vmatpush1.msra.mxu0 0.0
      %3950 = vmatprep.subr.mxu0 0.0
      %3951 = vmatpush1.msra.mxu0 0.0
      %3952 = vmatprep.subr.mxu0 0.0
      %3953 = vmatpush1.msra.mxu0 0.0
      %3954 = vmatprep.subr.mxu0 0.0
      %3955 = vmatpush1.msra.mxu0 0.0
      %3956 = vmatprep.subr.mxu0 0.0
      %3957 = vmatpush1.msra.mxu0 %v3924
      %3958 = vmatprep.subr.mxu0 0.0
      %3959 = vmatpush2.msra.mxu0 0.0
      %3960 = vmatprep.subr.mxu0 0.0
      %3961 = vmatpush2.msra.mxu0 0.0
      %3962 = vmatprep.subr.mxu0 0.0
      %3963 = vmatpush2.msra.mxu0 0.0
      %3964 = vmatprep.subr.mxu0 0.0
      %3965 = vmatpush2.msra.mxu0 0.0
      %3966 = vmatprep.subr.mxu0 0.0
      %3967 = vmatpush2.msra.mxu0 0.0
      %3968 = vmatprep.subr.mxu0 0.0
      %3969 = vmatpush2.msra.mxu0 0.0
      %3970 = vmatprep.subr.mxu0 0.0
      %3971 = vmatpush2.msra.mxu0 0.0
      %3972 = vmatprep.subr.mxu0 0.0
      %3973 = vmatpush2.msra.mxu0 0.0
      %3974 = vmatprep.subr.mxu0 0.0
      %3975 = vmatpush2.msra.mxu0 0.0
      %3976 = vmatprep.subr.mxu0 0.0
      %3977 = vmatpush2.msra.mxu0 0.0
      %3978 = vmatprep.subr.mxu0 0.0
      %3979 = vmatpush2.msra.mxu0 0.0
      %3980 = vmatprep.subr.mxu0 0.0
      %3981 = vmatpush2.msra.mxu0 0.0
      %3982 = vmatprep.subr.mxu0 0.0
      %3983 = vmatpush2.msra.mxu0 0.0
      %3984 = vmatprep.subr.mxu0 0.0
      %3985 = vmatpush2.msra.mxu0 0.0
      %3986 = vmatprep.subr.mxu0 0.0
      %3987 = vmatpush2.msra.mxu0 0.0
      %3988 = vmatprep.subr.mxu0 0.0
      %3989 = vmatpush2.msra.mxu0 0.0
      %3990 = vmatprep.mubr.f32.mxu0 0.0
      %3991 = vmatmul.mubr.f32.gmra.mxu0 %v1755
      %v3992 = vpop.f32.mrf.mxu0
      %v3993 = vadd.f32 0.0, %v3992
      %v3994 = vpop.f32.mrf.mxu0
      %3995 = vmatprep.mubr.f32.mxu0 0.0
      %3996 = vmatmul.mubr.f32.gmra.mxu0 %v1757
      %v3997 = vpop.f32.mrf.mxu0
      %v3998 = vadd.f32 0.0, %v3997
      %v3999 = vpop.f32.mrf.mxu0
      %4000 = vmatprep.mubr.f32.mxu0 0.0
      %4001 = vmatmul.mubr.f32.gmra.mxu0 %v1759
      %v4002 = vpop.f32.mrf.mxu0
      %v4003 = vadd.f32 0.0, %v4002
      %v4004 = vpop.f32.mrf.mxu0
      %4005 = vmatprep.mubr.f32.mxu0 0.0
      %4006 = vmatmul.mubr.f32.gmra.mxu0 %v1761
      %v4007 = vpop.f32.mrf.mxu0
      %v4008 = vadd.f32 0.0, %v4007
      %v4009 = vpop.f32.mrf.mxu0
      %4010 = vmatprep.mubr.f32.mxu0 0.0
      %4011 = vmatmul.mubr.f32.gmra.mxu0 %v1763
      %v4012 = vpop.f32.mrf.mxu0
      %v4013 = vadd.f32 0.0, %v4012
      %v4014 = vpop.f32.mrf.mxu0
      %4015 = vmatprep.mubr.f32.mxu0 0.0
      %4016 = vmatmul.mubr.f32.gmra.mxu0 %v1765
      %v4017 = vpop.f32.mrf.mxu0
      %v4018 = vadd.f32 0.0, %v4017
      %v4019 = vpop.f32.mrf.mxu0
      %4020 = vmatprep.mubr.f32.mxu0 0.0
      %4021 = vmatmul.mubr.f32.gmra.mxu0 %v1767
      %v4022 = vpop.f32.mrf.mxu0
      %v4023 = vadd.f32 0.0, %v4022
      %v4024 = vpop.f32.mrf.mxu0
      %4025 = vmatprep.mubr.f32.mxu0 0.0
      %4026 = vmatmul.mubr.f32.gmra.mxu0 %v1769
      %v4027 = vpop.f32.mrf.mxu0
      %v4028 = vadd.f32 0.0, %v4027
      %v4029 = vpop.f32.mrf.mxu0
      %4030 = vmatprep.mubr.f32.mxu0 0.0
      %4031 = vmatmul.mubr.f32.gmra.mxu0 %v1771
      %v4032 = vpop.f32.mrf.mxu0
      %v4033 = vadd.f32 0.0, %v4032
      %v4034 = vpop.f32.mrf.mxu0
      %4035 = vmatprep.mubr.f32.mxu0 0.0
      %4036 = vmatmul.mubr.f32.gmra.mxu0 %v1773
      %v4037 = vpop.f32.mrf.mxu0
      %v4038 = vadd.f32 0.0, %v4037
      %v4039 = vpop.f32.mrf.mxu0
      %4040 = vmatprep.mubr.f32.mxu0 0.0
      %4041 = vmatmul.mubr.f32.gmra.mxu0 %v1775
      %v4042 = vpop.f32.mrf.mxu0
      %v4043 = vadd.f32 0.0, %v4042
      %v4044 = vpop.f32.mrf.mxu0
      %4045 = vmatprep.mubr.f32.mxu0 0.0
      %4046 = vmatmul.mubr.f32.gmra.mxu0 %v1777
      %v4047 = vpop.f32.mrf.mxu0
      %v4048 = vadd.f32 0.0, %v4047
      %v4049 = vpop.f32.mrf.mxu0
      %4050 = vmatprep.mubr.f32.mxu0 0.0
      %4051 = vmatmul.mubr.f32.gmra.mxu0 %v1779
      %v4052 = vpop.f32.mrf.mxu0
      %v4053 = vadd.f32 0.0, %v4052
      %v4054 = vpop.f32.mrf.mxu0
      %4055 = vmatprep.mubr.f32.mxu0 0.0
      %4056 = vmatmul.mubr.f32.gmra.mxu0 %v1781
      %v4057 = vpop.f32.mrf.mxu0
      %v4058 = vadd.f32 0.0, %v4057
      %v4059 = vpop.f32.mrf.mxu0
      %4060 = vmatprep.mubr.f32.mxu0 0.0
      %4061 = vmatmul.mubr.f32.gmra.mxu0 %v1783
      %v4062 = vpop.f32.mrf.mxu0
      %v4063 = vadd.f32 0.0, %v4062
      %v4064 = vpop.f32.mrf.mxu0
      %4065 = vmatprep.mubr.f32.mxu0 0.0
      %4066 = vmatmul.mubr.f32.gmra.mxu0 %v1785
      %v4067 = vpop.f32.mrf.mxu0
      %v4068 = vadd.f32 0.0, %v4067
      %v4069 = vpop.f32.mrf.mxu0
      %4070 = vmatprep.mubr.f32.mxu0 0.0
      %4071 = vmatmul.mubr.f32.gmra.mxu0 %v1787
      %v4072 = vpop.f32.mrf.mxu0
      %v4073 = vadd.f32 0.0, %v4072
      %v4074 = vpop.f32.mrf.mxu0
      %4075 = vmatprep.mubr.f32.mxu0 0.0
      %4076 = vmatmul.mubr.f32.gmra.mxu0 %v1789
      %v4077 = vpop.f32.mrf.mxu0
      %v4078 = vadd.f32 0.0, %v4077
      %v4079 = vpop.f32.mrf.mxu0
      %4080 = vmatprep.mubr.f32.mxu0 0.0
      %4081 = vmatmul.mubr.f32.gmra.mxu0 %v1791
      %v4082 = vpop.f32.mrf.mxu0
      %v4083 = vadd.f32 0.0, %v4082
      %v4084 = vpop.f32.mrf.mxu0
      %4085 = vmatprep.mubr.f32.mxu0 0.0
      %4086 = vmatmul.mubr.f32.gmra.mxu0 %v1793
      %v4087 = vpop.f32.mrf.mxu0
      %v4088 = vadd.f32 0.0, %v4087
      %v4089 = vpop.f32.mrf.mxu0
      %4090 = vmatprep.mubr.f32.mxu0 0.0
      %4091 = vmatmul.mubr.f32.gmra.mxu0 %v1795
      %v4092 = vpop.f32.mrf.mxu0
      %v4093 = vadd.f32 0.0, %v4092
      %v4094 = vpop.f32.mrf.mxu0
      %4095 = vmatprep.mubr.f32.mxu0 0.0
      %4096 = vmatmul.mubr.f32.gmra.mxu0 %v1797
      %v4097 = vpop.f32.mrf.mxu0
      %v4098 = vadd.f32 0.0, %v4097
      %v4099 = vpop.f32.mrf.mxu0
      %4100 = vmatprep.mubr.f32.mxu0 0.0
      %4101 = vmatmul.mubr.f32.gmra.mxu0 %v3919
      %v4102 = vpop.f32.mrf.mxu0
      %v4103 = vadd.f32 0.0, %v4102
      %v4104 = vpop.f32.mrf.mxu0
      %4105 = vmatprep.mubr.f32.mxu0 0.0
      %4106 = vmatmul.mubr.f32.gmra.mxu0 %v3921
      %v4107 = vpop.f32.mrf.mxu0
      %v4108 = vadd.f32 0.0, %v4107
      %v4109 = vpop.f32.mrf.mxu0
      %4110 = vdwg.mxu0
      %v4111 = vadd.f32 %v3891, %v3993
      %v4112 = vadd.f32 %v3892, %v3998
      %v4113 = vadd.f32 %v3893, %v4003
      %v4114 = vadd.f32 %v3894, %v4008
      %v4115 = vadd.f32 %v3895, %v4013
      %v4116 = vadd.f32 %v3896, %v4018
      %v4117 = vadd.f32 %v3897, %v4023
      %v4118 = vadd.f32 %v3898, %v4028
      %v4119 = vadd.f32 %v3899, %v4033
      %v4120 = vadd.f32 %v3900, %v4038
      %v4121 = vadd.f32 %v3901, %v4043
      %v4122 = vadd.f32 %v3902, %v4048
      %v4123 = vadd.f32 %v3903, %v4053
      %v4124 = vadd.f32 %v3904, %v4058
      %v4125 = vadd.f32 %v3905, %v4063
      %v4126 = vadd.f32 %v3906, %v4068
      %v4127 = vadd.f32 %v3907, %v4073
      %v4128 = vadd.f32 %v3908, %v4078
      %v4129 = vadd.f32 %v3909, %v4083
      %v4130 = vadd.f32 %v3910, %v4088
      %v4131 = vadd.f32 %v3911, %v4093
      %v4132 = vadd.f32 %v3912, %v4098
      %v4133 = vadd.f32 %v3913, %v4103
      %v4134 = vadd.f32 %v3914, %v4108
      %s4135 = scalar_lea.vmem %s1, 48
      %v4136 = vld [vmem:[%s4135] sm:$0xf]
      %v4137 = vrot.slane %v843, 4
      %v4138 = vsel %vm968, %v2060, %v4137
      %v4139 = vsel %vm919, %v4138, 0
      %v4141 = vsel %vm919, %v4137, 0
      %v4144 = vsel %vm968, %v4136, 0
      %4146 = vmatprep.subr.mxu0 0.0
      %4147 = vmatpush1.msra.mxu0 0.0
      %4148 = vmatprep.subr.mxu0 0.0
      %4149 = vmatpush1.msra.mxu0 0.0
      %4150 = vmatprep.subr.mxu0 0.0
      %4151 = vmatpush1.msra.mxu0 0.0
      %4152 = vmatprep.subr.mxu0 0.0
      %4153 = vmatpush1.msra.mxu0 0.0
      %4154 = vmatprep.subr.mxu0 0.0
      %4155 = vmatpush1.msra.mxu0 0.0
      %4156 = vmatprep.subr.mxu0 0.0
      %4157 = vmatpush1.msra.mxu0 0.0
      %4158 = vmatprep.subr.mxu0 0.0
      %4159 = vmatpush1.msra.mxu0 0.0
      %4160 = vmatprep.subr.mxu0 0.0
      %4161 = vmatpush1.msra.mxu0 0.0
      %4162 = vmatprep.subr.mxu0 0.0
      %4163 = vmatpush1.msra.mxu0 0.0
      %4164 = vmatprep.subr.mxu0 0.0
      %4165 = vmatpush1.msra.mxu0 0.0
      %4166 = vmatprep.subr.mxu0 0.0
      %4167 = vmatpush1.msra.mxu0 0.0
      %4168 = vmatprep.subr.mxu0 0.0
      %4169 = vmatpush1.msra.mxu0 0.0
      %4170 = vmatprep.subr.mxu0 0.0
      %4171 = vmatpush1.msra.mxu0 0.0
      %4172 = vmatprep.subr.mxu0 0.0
      %4173 = vmatpush1.msra.mxu0 0.0
      %4174 = vmatprep.subr.mxu0 0.0
      %4175 = vmatpush1.msra.mxu0 0.0
      %4176 = vmatprep.subr.mxu0 0.0
      %4177 = vmatpush1.msra.mxu0 %v4144
      %4178 = vmatprep.subr.mxu0 0.0
      %4179 = vmatpush2.msra.mxu0 0.0
      %4180 = vmatprep.subr.mxu0 0.0
      %4181 = vmatpush2.msra.mxu0 0.0
      %4182 = vmatprep.subr.mxu0 0.0
      %4183 = vmatpush2.msra.mxu0 0.0
      %4184 = vmatprep.subr.mxu0 0.0
      %4185 = vmatpush2.msra.mxu0 0.0
      %4186 = vmatprep.subr.mxu0 0.0
      %4187 = vmatpush2.msra.mxu0 0.0
      %4188 = vmatprep.subr.mxu0 0.0
      %4189 = vmatpush2.msra.mxu0 0.0
      %4190 = vmatprep.subr.mxu0 0.0
      %4191 = vmatpush2.msra.mxu0 0.0
      %4192 = vmatprep.subr.mxu0 0.0
      %4193 = vmatpush2.msra.mxu0 0.0
      %4194 = vmatprep.subr.mxu0 0.0
      %4195 = vmatpush2.msra.mxu0 0.0
      %4196 = vmatprep.subr.mxu0 0.0
      %4197 = vmatpush2.msra.mxu0 0.0
      %4198 = vmatprep.subr.mxu0 0.0
      %4199 = vmatpush2.msra.mxu0 0.0
      %4200 = vmatprep.subr.mxu0 0.0
      %4201 = vmatpush2.msra.mxu0 0.0
      %4202 = vmatprep.subr.mxu0 0.0
      %4203 = vmatpush2.msra.mxu0 0.0
      %4204 = vmatprep.subr.mxu0 0.0
      %4205 = vmatpush2.msra.mxu0 0.0
      %4206 = vmatprep.subr.mxu0 0.0
      %4207 = vmatpush2.msra.mxu0 0.0
      %4208 = vmatprep.subr.mxu0 0.0
      %4209 = vmatpush2.msra.mxu0 0.0
      %4210 = vmatprep.mubr.f32.mxu0 0.0
      %4211 = vmatmul.mubr.f32.gmra.mxu0 %v2064
      %v4212 = vpop.f32.mrf.mxu0
      %v4213 = vadd.f32 0.0, %v4212
      %v4214 = vpop.f32.mrf.mxu0
      %4215 = vmatprep.mubr.f32.mxu0 0.0
      %4216 = vmatmul.mubr.f32.gmra.mxu0 %v2066
      %v4217 = vpop.f32.mrf.mxu0
      %v4218 = vadd.f32 0.0, %v4217
      %v4219 = vpop.f32.mrf.mxu0
      %4220 = vmatprep.mubr.f32.mxu0 0.0
      %4221 = vmatmul.mubr.f32.gmra.mxu0 %v2068
      %v4222 = vpop.f32.mrf.mxu0
      %v4223 = vadd.f32 0.0, %v4222
      %v4224 = vpop.f32.mrf.mxu0
      %4225 = vmatprep.mubr.f32.mxu0 0.0
      %4226 = vmatmul.mubr.f32.gmra.mxu0 %v2070
      %v4227 = vpop.f32.mrf.mxu0
      %v4228 = vadd.f32 0.0, %v4227
      %v4229 = vpop.f32.mrf.mxu0
      %4230 = vmatprep.mubr.f32.mxu0 0.0
      %4231 = vmatmul.mubr.f32.gmra.mxu0 %v2072
      %v4232 = vpop.f32.mrf.mxu0
      %v4233 = vadd.f32 0.0, %v4232
      %v4234 = vpop.f32.mrf.mxu0
      %4235 = vmatprep.mubr.f32.mxu0 0.0
      %4236 = vmatmul.mubr.f32.gmra.mxu0 %v2074
      %v4237 = vpop.f32.mrf.mxu0
      %v4238 = vadd.f32 0.0, %v4237
      %v4239 = vpop.f32.mrf.mxu0
      %4240 = vmatprep.mubr.f32.mxu0 0.0
      %4241 = vmatmul.mubr.f32.gmra.mxu0 %v2076
      %v4242 = vpop.f32.mrf.mxu0
      %v4243 = vadd.f32 0.0, %v4242
      %v4244 = vpop.f32.mrf.mxu0
      %4245 = vmatprep.mubr.f32.mxu0 0.0
      %4246 = vmatmul.mubr.f32.gmra.mxu0 %v2078
      %v4247 = vpop.f32.mrf.mxu0
      %v4248 = vadd.f32 0.0, %v4247
      %v4249 = vpop.f32.mrf.mxu0
      %4250 = vmatprep.mubr.f32.mxu0 0.0
      %4251 = vmatmul.mubr.f32.gmra.mxu0 %v2080
      %v4252 = vpop.f32.mrf.mxu0
      %v4253 = vadd.f32 0.0, %v4252
      %v4254 = vpop.f32.mrf.mxu0
      %4255 = vmatprep.mubr.f32.mxu0 0.0
      %4256 = vmatmul.mubr.f32.gmra.mxu0 %v2082
      %v4257 = vpop.f32.mrf.mxu0
      %v4258 = vadd.f32 0.0, %v4257
      %v4259 = vpop.f32.mrf.mxu0
      %4260 = vmatprep.mubr.f32.mxu0 0.0
      %4261 = vmatmul.mubr.f32.gmra.mxu0 %v2084
      %v4262 = vpop.f32.mrf.mxu0
      %v4263 = vadd.f32 0.0, %v4262
      %v4264 = vpop.f32.mrf.mxu0
      %4265 = vmatprep.mubr.f32.mxu0 0.0
      %4266 = vmatmul.mubr.f32.gmra.mxu0 %v2086
      %v4267 = vpop.f32.mrf.mxu0
      %v4268 = vadd.f32 0.0, %v4267
      %v4269 = vpop.f32.mrf.mxu0
      %4270 = vmatprep.mubr.f32.mxu0 0.0
      %4271 = vmatmul.mubr.f32.gmra.mxu0 %v2088
      %v4272 = vpop.f32.mrf.mxu0
      %v4273 = vadd.f32 0.0, %v4272
      %v4274 = vpop.f32.mrf.mxu0
      %4275 = vmatprep.mubr.f32.mxu0 0.0
      %4276 = vmatmul.mubr.f32.gmra.mxu0 %v2090
      %v4277 = vpop.f32.mrf.mxu0
      %v4278 = vadd.f32 0.0, %v4277
      %v4279 = vpop.f32.mrf.mxu0
      %4280 = vmatprep.mubr.f32.mxu0 0.0
      %4281 = vmatmul.mubr.f32.gmra.mxu0 %v2092
      %v4282 = vpop.f32.mrf.mxu0
      %v4283 = vadd.f32 0.0, %v4282
      %v4284 = vpop.f32.mrf.mxu0
      %4285 = vmatprep.mubr.f32.mxu0 0.0
      %4286 = vmatmul.mubr.f32.gmra.mxu0 %v2094
      %v4287 = vpop.f32.mrf.mxu0
      %v4288 = vadd.f32 0.0, %v4287
      %v4289 = vpop.f32.mrf.mxu0
      %4290 = vmatprep.mubr.f32.mxu0 0.0
      %4291 = vmatmul.mubr.f32.gmra.mxu0 %v2096
      %v4292 = vpop.f32.mrf.mxu0
      %v4293 = vadd.f32 0.0, %v4292
      %v4294 = vpop.f32.mrf.mxu0
      %4295 = vmatprep.mubr.f32.mxu0 0.0
      %4296 = vmatmul.mubr.f32.gmra.mxu0 %v2098
      %v4297 = vpop.f32.mrf.mxu0
      %v4298 = vadd.f32 0.0, %v4297
      %v4299 = vpop.f32.mrf.mxu0
      %4300 = vmatprep.mubr.f32.mxu0 0.0
      %4301 = vmatmul.mubr.f32.gmra.mxu0 %v2100
      %v4302 = vpop.f32.mrf.mxu0
      %v4303 = vadd.f32 0.0, %v4302
      %v4304 = vpop.f32.mrf.mxu0
      %4305 = vmatprep.mubr.f32.mxu0 0.0
      %4306 = vmatmul.mubr.f32.gmra.mxu0 %v2102
      %v4307 = vpop.f32.mrf.mxu0
      %v4308 = vadd.f32 0.0, %v4307
      %v4309 = vpop.f32.mrf.mxu0
      %4310 = vmatprep.mubr.f32.mxu0 0.0
      %4311 = vmatmul.mubr.f32.gmra.mxu0 %v2104
      %v4312 = vpop.f32.mrf.mxu0
      %v4313 = vadd.f32 0.0, %v4312
      %v4314 = vpop.f32.mrf.mxu0
      %4315 = vmatprep.mubr.f32.mxu0 0.0
      %4316 = vmatmul.mubr.f32.gmra.mxu0 %v2106
      %v4317 = vpop.f32.mrf.mxu0
      %v4318 = vadd.f32 0.0, %v4317
      %v4319 = vpop.f32.mrf.mxu0
      %4320 = vmatprep.mubr.f32.mxu0 0.0
      %4321 = vmatmul.mubr.f32.gmra.mxu0 %v4139
      %v4322 = vpop.f32.mrf.mxu0
      %v4323 = vadd.f32 0.0, %v4322
      %v4324 = vpop.f32.mrf.mxu0
      %4325 = vmatprep.mubr.f32.mxu0 0.0
      %4326 = vmatmul.mubr.f32.gmra.mxu0 %v4141
      %v4327 = vpop.f32.mrf.mxu0
      %v4328 = vadd.f32 0.0, %v4327
      %v4329 = vpop.f32.mrf.mxu0
      %4330 = vdwg.mxu0
      %v4331 = vadd.f32 %v4111, %v4213
      %v4332 = vadd.f32 %v4112, %v4218
      %v4333 = vadd.f32 %v4113, %v4223
      %v4334 = vadd.f32 %v4114, %v4228
      %v4335 = vadd.f32 %v4115, %v4233
      %v4336 = vadd.f32 %v4116, %v4238
      %v4337 = vadd.f32 %v4117, %v4243
      %v4338 = vadd.f32 %v4118, %v4248
      %v4339 = vadd.f32 %v4119, %v4253
      %v4340 = vadd.f32 %v4120, %v4258
      %v4341 = vadd.f32 %v4121, %v4263
      %v4342 = vadd.f32 %v4122, %v4268
      %v4343 = vadd.f32 %v4123, %v4273
      %v4344 = vadd.f32 %v4124, %v4278
      %v4345 = vadd.f32 %v4125, %v4283
      %v4346 = vadd.f32 %v4126, %v4288
      %v4347 = vadd.f32 %v4127, %v4293
      %v4348 = vadd.f32 %v4128, %v4298
      %v4349 = vadd.f32 %v4129, %v4303
      %v4350 = vadd.f32 %v4130, %v4308
      %v4351 = vadd.f32 %v4131, %v4313
      %v4352 = vadd.f32 %v4132, %v4318
      %v4353 = vadd.f32 %v4133, %v4323
      %v4354 = vadd.f32 %v4134, %v4328
      %v4355 = vld [vmem:[%s2] sm:$0x1]
      %v4357 = vlaneseq
      %v4358 = vshrl.u32 %v4357, 7
      %v4359 = vsub.s32 0, %v4358
      %v4360 = vrot.slane %v4355, %v4359
      %v4362 = vadd.f32 %v4331, %v4360
      %v4363 = vadd.f32 %v4332, %v4360
      %v4364 = vadd.f32 %v4333, %v4360
      %v4365 = vadd.f32 %v4334, %v4360
      %v4366 = vadd.f32 %v4335, %v4360
      %v4367 = vadd.f32 %v4336, %v4360
      %v4368 = vadd.f32 %v4337, %v4360
      %v4369 = vadd.f32 %v4338, %v4360
      %v4370 = vadd.f32 %v4339, %v4360
      %v4371 = vadd.f32 %v4340, %v4360
      %v4372 = vadd.f32 %v4341, %v4360
      %v4373 = vadd.f32 %v4342, %v4360
      %v4374 = vadd.f32 %v4343, %v4360
      %v4375 = vadd.f32 %v4344, %v4360
      %v4376 = vadd.f32 %v4345, %v4360
      %v4377 = vadd.f32 %v4346, %v4360
      %v4378 = vadd.f32 %v4347, %v4360
      %v4379 = vadd.f32 %v4348, %v4360
      %v4380 = vadd.f32 %v4349, %v4360
      %v4381 = vadd.f32 %v4350, %v4360
      %v4382 = vadd.f32 %v4351, %v4360
      %v4383 = vadd.f32 %v4352, %v4360
      %v4384 = vadd.f32 %v4353, %v4360
      %v4385 = vadd.f32 %v4354, %v4360
      %v4386 = vmax.f32 %v4362, 0.0
      %v4387 = vmax.f32 %v4363, 0.0
      %v4388 = vmax.f32 %v4364, 0.0
      %v4389 = vmax.f32 %v4365, 0.0
      %v4390 = vmax.f32 %v4366, 0.0
      %v4391 = vmax.f32 %v4367, 0.0
      %v4392 = vmax.f32 %v4368, 0.0
      %v4393 = vmax.f32 %v4369, 0.0
      %v4394 = vmax.f32 %v4370, 0.0
      %v4395 = vmax.f32 %v4371, 0.0
      %v4396 = vmax.f32 %v4372, 0.0
      %v4397 = vmax.f32 %v4373, 0.0
      %v4398 = vmax.f32 %v4374, 0.0
      %v4399 = vmax.f32 %v4375, 0.0
      %v4400 = vmax.f32 %v4376, 0.0
      %v4401 = vmax.f32 %v4377, 0.0
      %v4402 = vmax.f32 %v4378, 0.0
      %v4403 = vmax.f32 %v4379, 0.0
      %v4404 = vmax.f32 %v4380, 0.0
      %v4405 = vmax.f32 %v4381, 0.0
      %v4406 = vmax.f32 %v4382, 0.0
      %v4407 = vmax.f32 %v4383, 0.0
      %v4408 = vmax.f32 %v4384, 0.0
      %v4409 = vmax.f32 %v4385, 0.0
      %v4434 = vrot.slane %v4386, 1
      %v4435 = vrot.slane %v4387, 1
      %v4436 = vsel %vm871, %v4434, %v4435
      %v4437 = vrot.slane %v4388, 1
      %v4438 = vsel %vm871, %v4435, %v4437
      %v4439 = vrot.slane %v4389, 1
      %v4440 = vsel %vm871, %v4437, %v4439
      %v4441 = vrot.slane %v4390, 1
      %v4442 = vsel %vm871, %v4439, %v4441
      %v4443 = vrot.slane %v4391, 1
      %v4444 = vsel %vm871, %v4441, %v4443
      %v4445 = vrot.slane %v4392, 1
      %v4446 = vsel %vm871, %v4443, %v4445
      %v4447 = vrot.slane %v4393, 1
      %v4448 = vsel %vm871, %v4445, %v4447
      %v4449 = vrot.slane %v4394, 1
      %v4450 = vsel %vm871, %v4447, %v4449
      %v4451 = vrot.slane %v4395, 1
      %v4452 = vsel %vm871, %v4449, %v4451
      %v4453 = vrot.slane %v4396, 1
      %v4454 = vsel %vm871, %v4451, %v4453
      %v4455 = vrot.slane %v4397, 1
      %v4456 = vsel %vm871, %v4453, %v4455
      %v4457 = vrot.slane %v4398, 1
      %v4458 = vsel %vm871, %v4455, %v4457
      %v4459 = vrot.slane %v4399, 1
      %v4460 = vsel %vm871, %v4457, %v4459
      %v4461 = vrot.slane %v4400, 1
      %v4462 = vsel %vm871, %v4459, %v4461
      %v4463 = vrot.slane %v4401, 1
      %v4464 = vsel %vm871, %v4461, %v4463
      %v4465 = vrot.slane %v4402, 1
      %v4466 = vsel %vm871, %v4463, %v4465
      %v4467 = vrot.slane %v4403, 1
      %v4468 = vsel %vm871, %v4465, %v4467
      %v4469 = vrot.slane %v4404, 1
      %v4470 = vsel %vm871, %v4467, %v4469
      %v4471 = vrot.slane %v4405, 1
      %v4472 = vsel %vm871, %v4469, %v4471
      %v4473 = vrot.slane %v4406, 1
      %v4474 = vsel %vm871, %v4471, %v4473
      %v4475 = vrot.slane %v4407, 1
      %v4476 = vsel %vm871, %v4473, %v4475
      %v4477 = vrot.slane %v4408, 1
      %v4478 = vsel %vm871, %v4475, %v4477
      %v4479 = vrot.slane %v4409, 1
      %v4480 = vsel %vm871, %v4477, %v4479
      %v4505 = vmax.f32 %v4386, %v4436
      %v4506 = vmax.f32 %v4387, %v4438
      %v4507 = vmax.f32 %v4388, %v4440
      %v4508 = vmax.f32 %v4389, %v4442
      %v4509 = vmax.f32 %v4390, %v4444
      %v4510 = vmax.f32 %v4391, %v4446
      %v4511 = vmax.f32 %v4392, %v4448
      %v4512 = vmax.f32 %v4393, %v4450
      %v4513 = vmax.f32 %v4394, %v4452
      %v4514 = vmax.f32 %v4395, %v4454
      %v4515 = vmax.f32 %v4396, %v4456
      %v4516 = vmax.f32 %v4397, %v4458
      %v4517 = vmax.f32 %v4398, %v4460
      %v4518 = vmax.f32 %v4399, %v4462
      %v4519 = vmax.f32 %v4400, %v4464
      %v4520 = vmax.f32 %v4401, %v4466
      %v4521 = vmax.f32 %v4402, %v4468
      %v4522 = vmax.f32 %v4403, %v4470
      %v4523 = vmax.f32 %v4404, %v4472
      %v4524 = vmax.f32 %v4405, %v4474
      %v4525 = vmax.f32 %v4406, %v4476
      %v4526 = vmax.f32 %v4407, %v4478
      %v4527 = vmax.f32 %v4408, %v4480
      %v4528 = vmax.f32 %v4409, %v4479
      %v4529 = vrot.slane %v4386, 2
      %v4530 = vrot.slane %v4387, 2
      %v4531 = vsel %vm1395, %v4529, %v4530
      %v4532 = vrot.slane %v4388, 2
      %v4533 = vsel %vm1395, %v4530, %v4532
      %v4534 = vrot.slane %v4389, 2
      %v4535 = vsel %vm1395, %v4532, %v4534
      %v4536 = vrot.slane %v4390, 2
      %v4537 = vsel %vm1395, %v4534, %v4536
      %v4538 = vrot.slane %v4391, 2
      %v4539 = vsel %vm1395, %v4536, %v4538
      %v4540 = vrot.slane %v4392, 2
      %v4541 = vsel %vm1395, %v4538, %v4540
      %v4542 = vrot.slane %v4393, 2
      %v4543 = vsel %vm1395, %v4540, %v4542
      %v4544 = vrot.slane %v4394, 2
      %v4545 = vsel %vm1395, %v4542, %v4544
      %v4546 = vrot.slane %v4395, 2
      %v4547 = vsel %vm1395, %v4544, %v4546
      %v4548 = vrot.slane %v4396, 2
      %v4549 = vsel %vm1395, %v4546, %v4548
      %v4550 = vrot.slane %v4397, 2
      %v4551 = vsel %vm1395, %v4548, %v4550
      %v4552 = vrot.slane %v4398, 2
      %v4553 = vsel %vm1395, %v4550, %v4552
      %v4554 = vrot.slane %v4399, 2
      %v4555 = vsel %vm1395, %v4552, %v4554
      %v4556 = vrot.slane %v4400, 2
      %v4557 = vsel %vm1395, %v4554, %v4556
      %v4558 = vrot.slane %v4401, 2
      %v4559 = vsel %vm1395, %v4556, %v4558
      %v4560 = vrot.slane %v4402, 2
      %v4561 = vsel %vm1395, %v4558, %v4560
      %v4562 = vrot.slane %v4403, 2
      %v4563 = vsel %vm1395, %v4560, %v4562
      %v4564 = vrot.slane %v4404, 2
      %v4565 = vsel %vm1395, %v4562, %v4564
      %v4566 = vrot.slane %v4405, 2
      %v4567 = vsel %vm1395, %v4564, %v4566
      %v4568 = vrot.slane %v4406, 2
      %v4569 = vsel %vm1395, %v4566, %v4568
      %v4570 = vrot.slane %v4407, 2
      %v4571 = vsel %vm1395, %v4568, %v4570
      %v4572 = vrot.slane %v4408, 2
      %v4573 = vsel %vm1395, %v4570, %v4572
      %v4574 = vrot.slane %v4409, 2
      %v4575 = vsel %vm1395, %v4572, %v4574
      %v4600 = vmax.f32 %v4505, %v4531
      %v4601 = vmax.f32 %v4506, %v4533
      %v4602 = vmax.f32 %v4507, %v4535
      %v4603 = vmax.f32 %v4508, %v4537
      %v4604 = vmax.f32 %v4509, %v4539
      %v4605 = vmax.f32 %v4510, %v4541
      %v4606 = vmax.f32 %v4511, %v4543
      %v4607 = vmax.f32 %v4512, %v4545
      %v4608 = vmax.f32 %v4513, %v4547
      %v4609 = vmax.f32 %v4514, %v4549
      %v4610 = vmax.f32 %v4515, %v4551
      %v4611 = vmax.f32 %v4516, %v4553
      %v4612 = vmax.f32 %v4517, %v4555
      %v4613 = vmax.f32 %v4518, %v4557
      %v4614 = vmax.f32 %v4519, %v4559
      %v4615 = vmax.f32 %v4520, %v4561
      %v4616 = vmax.f32 %v4521, %v4563
      %v4617 = vmax.f32 %v4522, %v4565
      %v4618 = vmax.f32 %v4523, %v4567
      %v4619 = vmax.f32 %v4524, %v4569
      %v4620 = vmax.f32 %v4525, %v4571
      %v4621 = vmax.f32 %v4526, %v4573
      %v4622 = vmax.f32 %v4527, %v4575
      %v4623 = vmax.f32 %v4528, %v4574
      %v4624 = vrot.slane %v4386, 3
      %v4625 = vrot.slane %v4387, 3
      %v4626 = vsel %vm1705, %v4624, %v4625
      %v4627 = vrot.slane %v4388, 3
      %v4628 = vsel %vm1705, %v4625, %v4627
      %v4629 = vrot.slane %v4389, 3
      %v4630 = vsel %vm1705, %v4627, %v4629
      %v4631 = vrot.slane %v4390, 3
      %v4632 = vsel %vm1705, %v4629, %v4631
      %v4633 = vrot.slane %v4391, 3
      %v4634 = vsel %vm1705, %v4631, %v4633
      %v4635 = vrot.slane %v4392, 3
      %v4636 = vsel %vm1705, %v4633, %v4635
      %v4637 = vrot.slane %v4393, 3
      %v4638 = vsel %vm1705, %v4635, %v4637
      %v4639 = vrot.slane %v4394, 3
      %v4640 = vsel %vm1705, %v4637, %v4639
      %v4641 = vrot.slane %v4395, 3
      %v4642 = vsel %vm1705, %v4639, %v4641
      %v4643 = vrot.slane %v4396, 3
      %v4644 = vsel %vm1705, %v4641, %v4643
      %v4645 = vrot.slane %v4397, 3
      %v4646 = vsel %vm1705, %v4643, %v4645
      %v4647 = vrot.slane %v4398, 3
      %v4648 = vsel %vm1705, %v4645, %v4647
      %v4649 = vrot.slane %v4399, 3
      %v4650 = vsel %vm1705, %v4647, %v4649
      %v4651 = vrot.slane %v4400, 3
      %v4652 = vsel %vm1705, %v4649, %v4651
      %v4653 = vrot.slane %v4401, 3
      %v4654 = vsel %vm1705, %v4651, %v4653
      %v4655 = vrot.slane %v4402, 3
      %v4656 = vsel %vm1705, %v4653, %v4655
      %v4657 = vrot.slane %v4403, 3
      %v4658 = vsel %vm1705, %v4655, %v4657
      %v4659 = vrot.slane %v4404, 3
      %v4660 = vsel %vm1705, %v4657, %v4659
      %v4661 = vrot.slane %v4405, 3
      %v4662 = vsel %vm1705, %v4659, %v4661
      %v4663 = vrot.slane %v4406, 3
      %v4664 = vsel %vm1705, %v4661, %v4663
      %v4665 = vrot.slane %v4407, 3
      %v4666 = vsel %vm1705, %v4663, %v4665
      %v4667 = vrot.slane %v4408, 3
      %v4668 = vsel %vm1705, %v4665, %v4667
      %v4669 = vrot.slane %v4409, 3
      %v4670 = vsel %vm1705, %v4667, %v4669
      %v4695 = vmax.f32 %v4600, %v4626
      %v4696 = vmax.f32 %v4601, %v4628
      %v4697 = vmax.f32 %v4602, %v4630
      %v4698 = vmax.f32 %v4603, %v4632
      %v4699 = vmax.f32 %v4604, %v4634
      %v4700 = vmax.f32 %v4605, %v4636
      %v4701 = vmax.f32 %v4606, %v4638
      %v4702 = vmax.f32 %v4607, %v4640
      %v4703 = vmax.f32 %v4608, %v4642
      %v4704 = vmax.f32 %v4609, %v4644
      %v4705 = vmax.f32 %v4610, %v4646
      %v4706 = vmax.f32 %v4611, %v4648
      %v4707 = vmax.f32 %v4612, %v4650
      %v4708 = vmax.f32 %v4613, %v4652
      %v4709 = vmax.f32 %v4614, %v4654
      %v4710 = vmax.f32 %v4615, %v4656
      %v4711 = vmax.f32 %v4616, %v4658
      %v4712 = vmax.f32 %v4617, %v4660
      %v4713 = vmax.f32 %v4618, %v4662
      %v4714 = vmax.f32 %v4619, %v4664
      %v4715 = vmax.f32 %v4620, %v4666
      %v4716 = vmax.f32 %v4621, %v4668
      %v4717 = vmax.f32 %v4622, %v4670
      %v4718 = vmax.f32 %v4623, %v4669
      %v4719 = vlaneseq
      %v4720 = vshrl.u32 %v4719, 7
      %v4721 = vadd.s32 %v4720, 8
      %v4722 = vadd.s32 %v4720, 16
      %v4723 = vadd.s32 %v4720, 24
      %v4724 = vadd.s32 %v4720, 32
      %v4725 = vadd.s32 %v4720, 40
      %v4726 = vlaneseq
      %v4727 = vand.u32 %v4726, 127
      %v4728 = vadd.s32 %v4727, 128
      %v4729 = vmul.u32 %v4720, 4
      %v4730 = vmul.u32 %v4721, 4
      %v4731 = vmul.u32 %v4722, 4
      %v4732 = vmul.u32 %v4723, 4
      %v4733 = vmul.u32 %v4724, 4
      %v4734 = vmul.u32 %v4725, 4
      %vm4735 = vcmp.eq.s32.totalorder %v4727, %v4729
      %vm4736 = vcmp.eq.s32.totalorder %v4728, %v4729
      %vm4737 = vcmp.eq.s32.totalorder %v4727, %v4730
      %vm4738 = vcmp.eq.s32.totalorder %v4728, %v4730
      %vm4739 = vcmp.eq.s32.totalorder %v4727, %v4731
      %vm4740 = vcmp.eq.s32.totalorder %v4728, %v4731
      %vm4741 = vcmp.eq.s32.totalorder %v4727, %v4732
      %vm4742 = vcmp.eq.s32.totalorder %v4728, %v4732
      %vm4743 = vcmp.eq.s32.totalorder %v4727, %v4733
      %vm4744 = vcmp.eq.s32.totalorder %v4728, %v4733
      %vm4745 = vcmp.eq.s32.totalorder %v4727, %v4734
      %vm4746 = vcmp.eq.s32.totalorder %v4728, %v4734
      %v4747 = vsel %vm4735, 1, 0
      %v4748 = vsel %vm4736, 1, 0
      %v4749 = vsel %vm4737, 1, 0
      %v4750 = vsel %vm4738, 1, 0
      %v4751 = vsel %vm4739, 1, 0
      %v4752 = vsel %vm4740, 1, 0
      %v4753 = vsel %vm4741, 1, 0
      %v4754 = vsel %vm4742, 1, 0
      %v4755 = vsel %vm4743, 1, 0
      %v4756 = vsel %vm4744, 1, 0
      %v4757 = vsel %vm4745, 1, 0
      %v4758 = vsel %vm4746, 1, 0
      %v4759 = vcvt.s32.f32 %v4747
      %v4760 = vcvt.s32.f32 %v4748
      %v4761 = vcvt.s32.f32 %v4749
      %v4762 = vcvt.s32.f32 %v4750
      %v4763 = vcvt.s32.f32 %v4751
      %v4764 = vcvt.s32.f32 %v4752
      %v4765 = vcvt.s32.f32 %v4753
      %v4766 = vcvt.s32.f32 %v4754
      %v4767 = vcvt.s32.f32 %v4755
      %v4768 = vcvt.s32.f32 %v4756
      %v4769 = vcvt.s32.f32 %v4757
      %v4770 = vcvt.s32.f32 %v4758
      %vm4771 = vcmask 465920
      %v4773 = vsel %vm4771, %v4760, 0
      %v4776 = vsel %vm4771, %v4762, 0
      %v4779 = vsel %vm4771, %v4764, 0
      %v4782 = vsel %vm4771, %v4766, 0
      %v4785 = vsel %vm4771, %v4768, 0
      %v4788 = vsel %vm4771, %v4770, 0
      %v4791 = vsel %vm2949, %v4718, 0
      %4793 = vmatprep.subr.mxu0 0.0
      %4794 = vmatpush1.msra.mxu0 %v4710
      %4795 = vmatprep.subr.mxu0 0.0
      %4796 = vmatpush1.msra.mxu0 %v4709
      %4797 = vmatprep.subr.mxu0 0.0
      %4798 = vmatpush1.msra.mxu0 %v4708
      %4799 = vmatprep.subr.mxu0 0.0
      %4800 = vmatpush1.msra.mxu0 %v4707
      %4801 = vmatprep.subr.mxu0 0.0
      %4802 = vmatpush1.msra.mxu0 %v4706
      %4803 = vmatprep.subr.mxu0 0.0
      %4804 = vmatpush1.msra.mxu0 %v4705
      %4805 = vmatprep.subr.mxu0 0.0
      %4806 = vmatpush1.msra.mxu0 %v4704
      %4807 = vmatprep.subr.mxu0 0.0
      %4808 = vmatpush1.msra.mxu0 %v4703
      %4809 = vmatprep.subr.mxu0 0.0
      %4810 = vmatpush1.msra.mxu0 %v4702
      %4811 = vmatprep.subr.mxu0 0.0
      %4812 = vmatpush1.msra.mxu0 %v4701
      %4813 = vmatprep.subr.mxu0 0.0
      %4814 = vmatpush1.msra.mxu0 %v4700
      %4815 = vmatprep.subr.mxu0 0.0
      %4816 = vmatpush1.msra.mxu0 %v4699
      %4817 = vmatprep.subr.mxu0 0.0
      %4818 = vmatpush1.msra.mxu0 %v4698
      %4819 = vmatprep.subr.mxu0 0.0
      %4820 = vmatpush1.msra.mxu0 %v4697
      %4821 = vmatprep.subr.mxu0 0.0
      %4822 = vmatpush1.msra.mxu0 %v4696
      %4823 = vmatprep.subr.mxu0 0.0
      %4824 = vmatpush1.msra.mxu0 %v4695
      %4825 = vmatprep.subr.mxu0 0.0
      %4826 = vmatpush2.msra.mxu0 0.0
      %4827 = vmatprep.subr.mxu0 0.0
      %4828 = vmatpush2.msra.mxu0 0.0
      %4829 = vmatprep.subr.mxu0 0.0
      %4830 = vmatpush2.msra.mxu0 0.0
      %4831 = vmatprep.subr.mxu0 0.0
      %4832 = vmatpush2.msra.mxu0 0.0
      %4833 = vmatprep.subr.mxu0 0.0
      %4834 = vmatpush2.msra.mxu0 0.0
      %4835 = vmatprep.subr.mxu0 0.0
      %4836 = vmatpush2.msra.mxu0 0.0
      %4837 = vmatprep.subr.mxu0 0.0
      %4838 = vmatpush2.msra.mxu0 0.0
      %4839 = vmatprep.subr.mxu0 0.0
      %4840 = vmatpush2.msra.mxu0 0.0
      %4841 = vmatprep.subr.mxu0 0.0
      %4842 = vmatpush2.msra.mxu0 %v4791
      %4843 = vmatprep.subr.mxu0 0.0
      %4844 = vmatpush2.msra.mxu0 %v4717
      %4845 = vmatprep.subr.mxu0 0.0
      %4846 = vmatpush2.msra.mxu0 %v4716
      %4847 = vmatprep.subr.mxu0 0.0
      %4848 = vmatpush2.msra.mxu0 %v4715
      %4849 = vmatprep.subr.mxu0 0.0
      %4850 = vmatpush2.msra.mxu0 %v4714
      %4851 = vmatprep.subr.mxu0 0.0
      %4852 = vmatpush2.msra.mxu0 %v4713
      %4853 = vmatprep.subr.mxu0 0.0
      %4854 = vmatpush2.msra.mxu0 %v4712
      %4855 = vmatprep.subr.mxu0 0.0
      %4856 = vmatpush2.msra.mxu0 %v4711
      %4857 = vmatprep.mubr.f32.mxu0 %v4773
      %4858 = vmatmul.mubr.f32.gmra.mxu0 %v4759
      %v4859 = vpop.f32.mrf.mxu0
      %v4860 = vadd.f32 0.0, %v4859
      %v4861 = vpop.f32.mrf.mxu0
      %4862 = vmatprep.mubr.f32.mxu0 %v4776
      %4863 = vmatmul.mubr.f32.gmra.mxu0 %v4761
      %v4864 = vpop.f32.mrf.mxu0
      %v4865 = vadd.f32 0.0, %v4864
      %v4866 = vpop.f32.mrf.mxu0
      %4867 = vmatprep.mubr.f32.mxu0 %v4779
      %4868 = vmatmul.mubr.f32.gmra.mxu0 %v4763
      %v4869 = vpop.f32.mrf.mxu0
      %v4870 = vadd.f32 0.0, %v4869
      %v4871 = vpop.f32.mrf.mxu0
      %4872 = vmatprep.mubr.f32.mxu0 %v4782
      %4873 = vmatmul.mubr.f32.gmra.mxu0 %v4765
      %v4874 = vpop.f32.mrf.mxu0
      %v4875 = vadd.f32 0.0, %v4874
      %v4876 = vpop.f32.mrf.mxu0
      %4877 = vmatprep.mubr.f32.mxu0 %v4785
      %4878 = vmatmul.mubr.f32.gmra.mxu0 %v4767
      %v4879 = vpop.f32.mrf.mxu0
      %v4880 = vadd.f32 0.0, %v4879
      %v4881 = vpop.f32.mrf.mxu0
      %4882 = vmatprep.mubr.f32.mxu0 %v4788
      %4883 = vmatmul.mubr.f32.gmra.mxu0 %v4769
      %v4884 = vpop.f32.mrf.mxu0
      %v4885 = vadd.f32 0.0, %v4884
      %v4886 = vpop.f32.mrf.mxu0
      %4887 = vdwg.mxu0
      %v4888 = vld [vmem:[%s3] sm:$0xff]
      %v4889 = vld [vmem:[%s3 + $0x8] sm:$0xff]
      %v4890 = vld [vmem:[%s3 + $0x10] sm:$0xff]
      %v4891 = vld [vmem:[%s3 + $0x18] sm:$0xff]
      %v4892 = vld [vmem:[%s3 + $0x20] sm:$0xff]
      %v4893 = vld [vmem:[%s3 + $0x28] sm:$0xff]
      %v4894 = vld [vmem:[%s3 + $0x30] sm:$0xff]
      %v4895 = vld [vmem:[%s3 + $0x38] sm:$0xff]
      %v4896 = vld [vmem:[%s3 + $0x40] sm:$0xff]
      %v4897 = vld [vmem:[%s3 + $0x48] sm:$0xff]
      %v4898 = vld [vmem:[%s3 + $0x50] sm:$0xff]
      %v4899 = vld [vmem:[%s3 + $0x58] sm:$0xff]
      %v4900 = vld [vmem:[%s3 + $0x60] sm:$0xff]
      %v4901 = vld [vmem:[%s3 + $0x68] sm:$0xff]
      %v4902 = vld [vmem:[%s3 + $0x70] sm:$0xff]
      %v4903 = vld [vmem:[%s3 + $0x78] sm:$0xff]
      %s4904 = scalar_lea.vmem %s3, 128
      %v4905 = vld [vmem:[%s4904] sm:$0xff]
      %v4906 = vld [vmem:[%s4904 + $0x8] sm:$0xff]
      %v4907 = vld [vmem:[%s4904 + $0x10] sm:$0xff]
      %v4908 = vld [vmem:[%s4904 + $0x18] sm:$0xff]
      %v4909 = vld [vmem:[%s4904 + $0x20] sm:$0xff]
      %v4910 = vld [vmem:[%s4904 + $0x28] sm:$0xff]
      %v4911 = vld [vmem:[%s4904 + $0x30] sm:$0xff]
      %v4912 = vld [vmem:[%s4904 + $0x38] sm:$0xff]
      %v4913 = vld [vmem:[%s4904 + $0x40] sm:$0xff]
      %v4914 = vld [vmem:[%s4904 + $0x48] sm:$0xff]
      %v4915 = vld [vmem:[%s4904 + $0x50] sm:$0xff]
      %v4916 = vld [vmem:[%s4904 + $0x58] sm:$0xff]
      %v4917 = vld [vmem:[%s4904 + $0x60] sm:$0xff]
      %v4918 = vld [vmem:[%s4904 + $0x68] sm:$0xff]
      %v4919 = vld [vmem:[%s4904 + $0x70] sm:$0xff]
      %v4920 = vld [vmem:[%s4904 + $0x78] sm:$0xff]
      %v4927 = vrot.slane %v4860, 1
      %v4928 = vrot.slane %v4865, 1
      %v4929 = vsel %vm871, %v4927, %v4928
      %v4930 = vrot.slane %v4870, 1
      %v4931 = vsel %vm871, %v4928, %v4930
      %v4932 = vrot.slane %v4875, 1
      %v4933 = vsel %vm871, %v4930, %v4932
      %v4934 = vrot.slane %v4880, 1
      %v4935 = vsel %vm871, %v4932, %v4934
      %v4936 = vrot.slane %v4885, 1
      %v4937 = vsel %vm871, %v4934, %v4936
      %4944 = vmatprep.subr.mxu0 0.0
      %4945 = vmatpush1.msra.mxu0 %v4920
      %4946 = vmatprep.subr.mxu0 0.0
      %4947 = vmatpush1.msra.mxu0 %v4919
      %4948 = vmatprep.subr.mxu0 0.0
      %4949 = vmatpush1.msra.mxu0 %v4918
      %4950 = vmatprep.subr.mxu0 0.0
      %4951 = vmatpush1.msra.mxu0 %v4917
      %4952 = vmatprep.subr.mxu0 0.0
      %4953 = vmatpush1.msra.mxu0 %v4916
      %4954 = vmatprep.subr.mxu0 0.0
      %4955 = vmatpush1.msra.mxu0 %v4915
      %4956 = vmatprep.subr.mxu0 0.0
      %4957 = vmatpush1.msra.mxu0 %v4914
      %4958 = vmatprep.subr.mxu0 0.0
      %4959 = vmatpush1.msra.mxu0 %v4913
      %4960 = vmatprep.subr.mxu0 0.0
      %4961 = vmatpush1.msra.mxu0 %v4912
      %4962 = vmatprep.subr.mxu0 0.0
      %4963 = vmatpush1.msra.mxu0 %v4911
      %4964 = vmatprep.subr.mxu0 0.0
      %4965 = vmatpush1.msra.mxu0 %v4910
      %4966 = vmatprep.subr.mxu0 0.0
      %4967 = vmatpush1.msra.mxu0 %v4909
      %4968 = vmatprep.subr.mxu0 0.0
      %4969 = vmatpush1.msra.mxu0 %v4908
      %4970 = vmatprep.subr.mxu0 0.0
      %4971 = vmatpush1.msra.mxu0 %v4907
      %4972 = vmatprep.subr.mxu0 0.0
      %4973 = vmatpush1.msra.mxu0 %v4906
      %4974 = vmatprep.subr.mxu0 0.0
      %4975 = vmatpush1.msra.mxu0 %v4905
      %4976 = vmatprep.subr.mxu0 0.0
      %4977 = vmatpush2.msra.mxu0 0.0
      %4978 = vmatprep.subr.mxu0 0.0
      %4979 = vmatpush2.msra.mxu0 0.0
      %4980 = vmatprep.subr.mxu0 0.0
      %4981 = vmatpush2.msra.mxu0 0.0
      %4982 = vmatprep.subr.mxu0 0.0
      %4983 = vmatpush2.msra.mxu0 0.0
      %4984 = vmatprep.subr.mxu0 0.0
      %4985 = vmatpush2.msra.mxu0 0.0
      %4986 = vmatprep.subr.mxu0 0.0
      %4987 = vmatpush2.msra.mxu0 0.0
      %4988 = vmatprep.subr.mxu0 0.0
      %4989 = vmatpush2.msra.mxu0 0.0
      %4990 = vmatprep.subr.mxu0 0.0
      %4991 = vmatpush2.msra.mxu0 0.0
      %4992 = vmatprep.subr.mxu0 0.0
      %4993 = vmatpush2.msra.mxu0 0.0
      %4994 = vmatprep.subr.mxu0 0.0
      %4995 = vmatpush2.msra.mxu0 0.0
      %4996 = vmatprep.subr.mxu0 0.0
      %4997 = vmatpush2.msra.mxu0 0.0
      %4998 = vmatprep.subr.mxu0 0.0
      %4999 = vmatpush2.msra.mxu0 0.0
      %5000 = vmatprep.subr.mxu0 0.0
      %5001 = vmatpush2.msra.mxu0 0.0
      %5002 = vmatprep.subr.mxu0 0.0
      %5003 = vmatpush2.msra.mxu0 0.0
      %5004 = vmatprep.subr.mxu0 0.0
      %5005 = vmatpush2.msra.mxu0 0.0
      %5006 = vmatprep.subr.mxu0 0.0
      %5007 = vmatpush2.msra.mxu0 0.0
      %5008 = vmatprep.mubr.f32.mxu0 0.0
      %5009 = vmatmul.mubr.f32.gmra.mxu0 %v4929
      %v5010 = vpop.f32.mrf.mxu0
      %v5011 = vadd.f32 0.0, %v5010
      %v5012 = vpop.f32.mrf.mxu0
      %5013 = vmatprep.mubr.f32.mxu0 0.0
      %5014 = vmatmul.mubr.f32.gmra.mxu0 %v4931
      %v5015 = vpop.f32.mrf.mxu0
      %v5016 = vadd.f32 0.0, %v5015
      %v5017 = vpop.f32.mrf.mxu0
      %5018 = vmatprep.mubr.f32.mxu0 0.0
      %5019 = vmatmul.mubr.f32.gmra.mxu0 %v4933
      %v5020 = vpop.f32.mrf.mxu0
      %v5021 = vadd.f32 0.0, %v5020
      %v5022 = vpop.f32.mrf.mxu0
      %5023 = vmatprep.mubr.f32.mxu0 0.0
      %5024 = vmatmul.mubr.f32.gmra.mxu0 %v4935
      %v5025 = vpop.f32.mrf.mxu0
      %v5026 = vadd.f32 0.0, %v5025
      %v5027 = vpop.f32.mrf.mxu0
      %5028 = vmatprep.mubr.f32.mxu0 0.0
      %5029 = vmatmul.mubr.f32.gmra.mxu0 %v4937
      %v5030 = vpop.f32.mrf.mxu0
      %v5031 = vadd.f32 0.0, %v5030
      %v5032 = vpop.f32.mrf.mxu0
      %5033 = vmatprep.mubr.f32.mxu0 0.0
      %5034 = vmatmul.mubr.f32.gmra.mxu0 %v4936
      %v5035 = vpop.f32.mrf.mxu0
      %v5036 = vadd.f32 0.0, %v5035
      %v5037 = vpop.f32.mrf.mxu0
      %5038 = vdwg.mxu0
      %5039 = vmatprep.subr.mxu0 0.0
      %5040 = vmatpush1.msra.mxu0 %v4903
      %5041 = vmatprep.subr.mxu0 0.0
      %5042 = vmatpush1.msra.mxu0 %v4902
      %5043 = vmatprep.subr.mxu0 0.0
      %5044 = vmatpush1.msra.mxu0 %v4901
      %5045 = vmatprep.subr.mxu0 0.0
      %5046 = vmatpush1.msra.mxu0 %v4900
      %5047 = vmatprep.subr.mxu0 0.0
      %5048 = vmatpush1.msra.mxu0 %v4899
      %5049 = vmatprep.subr.mxu0 0.0
      %5050 = vmatpush1.msra.mxu0 %v4898
      %5051 = vmatprep.subr.mxu0 0.0
      %5052 = vmatpush1.msra.mxu0 %v4897
      %5053 = vmatprep.subr.mxu0 0.0
      %5054 = vmatpush1.msra.mxu0 %v4896
      %5055 = vmatprep.subr.mxu0 0.0
      %5056 = vmatpush1.msra.mxu0 %v4895
      %5057 = vmatprep.subr.mxu0 0.0
      %5058 = vmatpush1.msra.mxu0 %v4894
      %5059 = vmatprep.subr.mxu0 0.0
      %5060 = vmatpush1.msra.mxu0 %v4893
      %5061 = vmatprep.subr.mxu0 0.0
      %5062 = vmatpush1.msra.mxu0 %v4892
      %5063 = vmatprep.subr.mxu0 0.0
      %5064 = vmatpush1.msra.mxu0 %v4891
      %5065 = vmatprep.subr.mxu0 0.0
      %5066 = vmatpush1.msra.mxu0 %v4890
      %5067 = vmatprep.subr.mxu0 0.0
      %5068 = vmatpush1.msra.mxu0 %v4889
      %5069 = vmatprep.subr.mxu0 0.0
      %5070 = vmatpush1.msra.mxu0 %v4888
      %5071 = vmatprep.subr.mxu0 0.0
      %5072 = vmatpush2.msra.mxu0 0.0
      %5073 = vmatprep.subr.mxu0 0.0
      %5074 = vmatpush2.msra.mxu0 0.0
      %5075 = vmatprep.subr.mxu0 0.0
      %5076 = vmatpush2.msra.mxu0 0.0
      %5077 = vmatprep.subr.mxu0 0.0
      %5078 = vmatpush2.msra.mxu0 0.0
      %5079 = vmatprep.subr.mxu0 0.0
      %5080 = vmatpush2.msra.mxu0 0.0
      %5081 = vmatprep.subr.mxu0 0.0
      %5082 = vmatpush2.msra.mxu0 0.0
      %5083 = vmatprep.subr.mxu0 0.0
      %5084 = vmatpush2.msra.mxu0 0.0
      %5085 = vmatprep.subr.mxu0 0.0
      %5086 = vmatpush2.msra.mxu0 0.0
      %5087 = vmatprep.subr.mxu0 0.0
      %5088 = vmatpush2.msra.mxu0 0.0
      %5089 = vmatprep.subr.mxu0 0.0
      %5090 = vmatpush2.msra.mxu0 0.0
      %5091 = vmatprep.subr.mxu0 0.0
      %5092 = vmatpush2.msra.mxu0 0.0
      %5093 = vmatprep.subr.mxu0 0.0
      %5094 = vmatpush2.msra.mxu0 0.0
      %5095 = vmatprep.subr.mxu0 0.0
      %5096 = vmatpush2.msra.mxu0 0.0
      %5097 = vmatprep.subr.mxu0 0.0
      %5098 = vmatpush2.msra.mxu0 0.0
      %5099 = vmatprep.subr.mxu0 0.0
      %5100 = vmatpush2.msra.mxu0 0.0
      %5101 = vmatprep.subr.mxu0 0.0
      %5102 = vmatpush2.msra.mxu0 0.0
      %5103 = vmatprep.mubr.f32.mxu0 0.0
      %5104 = vmatmul.mubr.f32.gmra.mxu0 %v4860
      %v5105 = vpop.f32.mrf.mxu0
      %v5106 = vadd.f32 %v5011, %v5105
      %v5107 = vpop.f32.mrf.mxu0
      %5108 = vmatprep.mubr.f32.mxu0 0.0
      %5109 = vmatmul.mubr.f32.gmra.mxu0 %v4865
      %v5110 = vpop.f32.mrf.mxu0
      %v5111 = vadd.f32 %v5016, %v5110
      %v5112 = vpop.f32.mrf.mxu0
      %5113 = vmatprep.mubr.f32.mxu0 0.0
      %5114 = vmatmul.mubr.f32.gmra.mxu0 %v4870
      %v5115 = vpop.f32.mrf.mxu0
      %v5116 = vadd.f32 %v5021, %v5115
      %v5117 = vpop.f32.mrf.mxu0
      %5118 = vmatprep.mubr.f32.mxu0 0.0
      %5119 = vmatmul.mubr.f32.gmra.mxu0 %v4875
      %v5120 = vpop.f32.mrf.mxu0
      %v5121 = vadd.f32 %v5026, %v5120
      %v5122 = vpop.f32.mrf.mxu0
      %5123 = vmatprep.mubr.f32.mxu0 0.0
      %5124 = vmatmul.mubr.f32.gmra.mxu0 %v4880
      %v5125 = vpop.f32.mrf.mxu0
      %v5126 = vadd.f32 %v5031, %v5125
      %v5127 = vpop.f32.mrf.mxu0
      %5128 = vmatprep.mubr.f32.mxu0 0.0
      %5129 = vmatmul.mubr.f32.gmra.mxu0 %v4885
      %v5130 = vpop.f32.mrf.mxu0
      %v5131 = vadd.f32 %v5036, %v5130
      %v5132 = vpop.f32.mrf.mxu0
      %5133 = vdwg.mxu0
      %s5134 = scalar_lea.vmem %s3, 256
      %v5135 = vld [vmem:[%s5134] sm:$0xff]
      %v5136 = vld [vmem:[%s5134 + $0x8] sm:$0xff]
      %v5137 = vld [vmem:[%s5134 + $0x10] sm:$0xff]
      %v5138 = vld [vmem:[%s5134 + $0x18] sm:$0xff]
      %v5139 = vld [vmem:[%s5134 + $0x20] sm:$0xff]
      %v5140 = vld [vmem:[%s5134 + $0x28] sm:$0xff]
      %v5141 = vld [vmem:[%s5134 + $0x30] sm:$0xff]
      %v5142 = vld [vmem:[%s5134 + $0x38] sm:$0xff]
      %v5143 = vld [vmem:[%s5134 + $0x40] sm:$0xff]
      %v5144 = vld [vmem:[%s5134 + $0x48] sm:$0xff]
      %v5145 = vld [vmem:[%s5134 + $0x50] sm:$0xff]
      %v5146 = vld [vmem:[%s5134 + $0x58] sm:$0xff]
      %v5147 = vld [vmem:[%s5134 + $0x60] sm:$0xff]
      %v5148 = vld [vmem:[%s5134 + $0x68] sm:$0xff]
      %v5149 = vld [vmem:[%s5134 + $0x70] sm:$0xff]
      %v5150 = vld [vmem:[%s5134 + $0x78] sm:$0xff]
      %v5151 = vrot.slane %v4860, 2
      %v5152 = vrot.slane %v4865, 2
      %v5153 = vsel %vm1395, %v5151, %v5152
      %v5154 = vrot.slane %v4870, 2
      %v5155 = vsel %vm1395, %v5152, %v5154
      %v5156 = vrot.slane %v4875, 2
      %v5157 = vsel %vm1395, %v5154, %v5156
      %v5158 = vrot.slane %v4880, 2
      %v5159 = vsel %vm1395, %v5156, %v5158
      %v5160 = vrot.slane %v4885, 2
      %v5161 = vsel %vm1395, %v5158, %v5160
      %5168 = vmatprep.subr.mxu0 0.0
      %5169 = vmatpush1.msra.mxu0 %v5150
      %5170 = vmatprep.subr.mxu0 0.0
      %5171 = vmatpush1.msra.mxu0 %v5149
      %5172 = vmatprep.subr.mxu0 0.0
      %5173 = vmatpush1.msra.mxu0 %v5148
      %5174 = vmatprep.subr.mxu0 0.0
      %5175 = vmatpush1.msra.mxu0 %v5147
      %5176 = vmatprep.subr.mxu0 0.0
      %5177 = vmatpush1.msra.mxu0 %v5146
      %5178 = vmatprep.subr.mxu0 0.0
      %5179 = vmatpush1.msra.mxu0 %v5145
      %5180 = vmatprep.subr.mxu0 0.0
      %5181 = vmatpush1.msra.mxu0 %v5144
      %5182 = vmatprep.subr.mxu0 0.0
      %5183 = vmatpush1.msra.mxu0 %v5143
      %5184 = vmatprep.subr.mxu0 0.0
      %5185 = vmatpush1.msra.mxu0 %v5142
      %5186 = vmatprep.subr.mxu0 0.0
      %5187 = vmatpush1.msra.mxu0 %v5141
      %5188 = vmatprep.subr.mxu0 0.0
      %5189 = vmatpush1.msra.mxu0 %v5140
      %5190 = vmatprep.subr.mxu0 0.0
      %5191 = vmatpush1.msra.mxu0 %v5139
      %5192 = vmatprep.subr.mxu0 0.0
      %5193 = vmatpush1.msra.mxu0 %v5138
      %5194 = vmatprep.subr.mxu0 0.0
      %5195 = vmatpush1.msra.mxu0 %v5137
      %5196 = vmatprep.subr.mxu0 0.0
      %5197 = vmatpush1.msra.mxu0 %v5136
      %5198 = vmatprep.subr.mxu0 0.0
      %5199 = vmatpush1.msra.mxu0 %v5135
      %5200 = vmatprep.subr.mxu0 0.0
      %5201 = vmatpush2.msra.mxu0 0.0
      %5202 = vmatprep.subr.mxu0 0.0
      %5203 = vmatpush2.msra.mxu0 0.0
      %5204 = vmatprep.subr.mxu0 0.0
      %5205 = vmatpush2.msra.mxu0 0.0
      %5206 = vmatprep.subr.mxu0 0.0
      %5207 = vmatpush2.msra.mxu0 0.0
      %5208 = vmatprep.subr.mxu0 0.0
      %5209 = vmatpush2.msra.mxu0 0.0
      %5210 = vmatprep.subr.mxu0 0.0
      %5211 = vmatpush2.msra.mxu0 0.0
      %5212 = vmatprep.subr.mxu0 0.0
      %5213 = vmatpush2.msra.mxu0 0.0
      %5214 = vmatprep.subr.mxu0 0.0
      %5215 = vmatpush2.msra.mxu0 0.0
      %5216 = vmatprep.subr.mxu0 0.0
      %5217 = vmatpush2.msra.mxu0 0.0
      %5218 = vmatprep.subr.mxu0 0.0
      %5219 = vmatpush2.msra.mxu0 0.0
      %5220 = vmatprep.subr.mxu0 0.0
      %5221 = vmatpush2.msra.mxu0 0.0
      %5222 = vmatprep.subr.mxu0 0.0
      %5223 = vmatpush2.msra.mxu0 0.0
      %5224 = vmatprep.subr.mxu0 0.0
      %5225 = vmatpush2.msra.mxu0 0.0
      %5226 = vmatprep.subr.mxu0 0.0
      %5227 = vmatpush2.msra.mxu0 0.0
      %5228 = vmatprep.subr.mxu0 0.0
      %5229 = vmatpush2.msra.mxu0 0.0
      %5230 = vmatprep.subr.mxu0 0.0
      %5231 = vmatpush2.msra.mxu0 0.0
      %5232 = vmatprep.mubr.f32.mxu0 0.0
      %5233 = vmatmul.mubr.f32.gmra.mxu0 %v5153
      %v5234 = vpop.f32.mrf.mxu0
      %v5235 = vadd.f32 0.0, %v5234
      %v5236 = vpop.f32.mrf.mxu0
      %5237 = vmatprep.mubr.f32.mxu0 0.0
      %5238 = vmatmul.mubr.f32.gmra.mxu0 %v5155
      %v5239 = vpop.f32.mrf.mxu0
      %v5240 = vadd.f32 0.0, %v5239
      %v5241 = vpop.f32.mrf.mxu0
      %5242 = vmatprep.mubr.f32.mxu0 0.0
      %5243 = vmatmul.mubr.f32.gmra.mxu0 %v5157
      %v5244 = vpop.f32.mrf.mxu0
      %v5245 = vadd.f32 0.0, %v5244
      %v5246 = vpop.f32.mrf.mxu0
      %5247 = vmatprep.mubr.f32.mxu0 0.0
      %5248 = vmatmul.mubr.f32.gmra.mxu0 %v5159
      %v5249 = vpop.f32.mrf.mxu0
      %v5250 = vadd.f32 0.0, %v5249
      %v5251 = vpop.f32.mrf.mxu0
      %5252 = vmatprep.mubr.f32.mxu0 0.0
      %5253 = vmatmul.mubr.f32.gmra.mxu0 %v5161
      %v5254 = vpop.f32.mrf.mxu0
      %v5255 = vadd.f32 0.0, %v5254
      %v5256 = vpop.f32.mrf.mxu0
      %5257 = vmatprep.mubr.f32.mxu0 0.0
      %5258 = vmatmul.mubr.f32.gmra.mxu0 %v5160
      %v5259 = vpop.f32.mrf.mxu0
      %v5260 = vadd.f32 0.0, %v5259
      %v5261 = vpop.f32.mrf.mxu0
      %5262 = vdwg.mxu0
      %v5263 = vadd.f32 %v5106, %v5235
      %v5264 = vadd.f32 %v5111, %v5240
      %v5265 = vadd.f32 %v5116, %v5245
      %v5266 = vadd.f32 %v5121, %v5250
      %v5267 = vadd.f32 %v5126, %v5255
      %v5268 = vadd.f32 %v5131, %v5260
      %s5269 = scalar_lea.vmem %s3, 384
      %v5270 = vld [vmem:[%s5269] sm:$0xff]
      %v5271 = vld [vmem:[%s5269 + $0x8] sm:$0xff]
      %v5272 = vld [vmem:[%s5269 + $0x10] sm:$0xff]
      %v5273 = vld [vmem:[%s5269 + $0x18] sm:$0xff]
      %v5274 = vld [vmem:[%s5269 + $0x20] sm:$0xff]
      %v5275 = vld [vmem:[%s5269 + $0x28] sm:$0xff]
      %v5276 = vld [vmem:[%s5269 + $0x30] sm:$0xff]
      %v5277 = vld [vmem:[%s5269 + $0x38] sm:$0xff]
      %v5278 = vld [vmem:[%s5269 + $0x40] sm:$0xff]
      %v5279 = vld [vmem:[%s5269 + $0x48] sm:$0xff]
      %v5280 = vld [vmem:[%s5269 + $0x50] sm:$0xff]
      %v5281 = vld [vmem:[%s5269 + $0x58] sm:$0xff]
      %v5282 = vld [vmem:[%s5269 + $0x60] sm:$0xff]
      %v5283 = vld [vmem:[%s5269 + $0x68] sm:$0xff]
      %v5284 = vld [vmem:[%s5269 + $0x70] sm:$0xff]
      %v5285 = vld [vmem:[%s5269 + $0x78] sm:$0xff]
      %v5286 = vrot.slane %v4860, 3
      %v5287 = vrot.slane %v4865, 3
      %v5288 = vsel %vm1705, %v5286, %v5287
      %v5289 = vrot.slane %v4870, 3
      %v5290 = vsel %vm1705, %v5287, %v5289
      %v5291 = vrot.slane %v4875, 3
      %v5292 = vsel %vm1705, %v5289, %v5291
      %v5293 = vrot.slane %v4880, 3
      %v5294 = vsel %vm1705, %v5291, %v5293
      %v5295 = vrot.slane %v4885, 3
      %v5296 = vsel %vm1705, %v5293, %v5295
      %5303 = vmatprep.subr.mxu0 0.0
      %5304 = vmatpush1.msra.mxu0 %v5285
      %5305 = vmatprep.subr.mxu0 0.0
      %5306 = vmatpush1.msra.mxu0 %v5284
      %5307 = vmatprep.subr.mxu0 0.0
      %5308 = vmatpush1.msra.mxu0 %v5283
      %5309 = vmatprep.subr.mxu0 0.0
      %5310 = vmatpush1.msra.mxu0 %v5282
      %5311 = vmatprep.subr.mxu0 0.0
      %5312 = vmatpush1.msra.mxu0 %v5281
      %5313 = vmatprep.subr.mxu0 0.0
      %5314 = vmatpush1.msra.mxu0 %v5280
      %5315 = vmatprep.subr.mxu0 0.0
      %5316 = vmatpush1.msra.mxu0 %v5279
      %5317 = vmatprep.subr.mxu0 0.0
      %5318 = vmatpush1.msra.mxu0 %v5278
      %5319 = vmatprep.subr.mxu0 0.0
      %5320 = vmatpush1.msra.mxu0 %v5277
      %5321 = vmatprep.subr.mxu0 0.0
      %5322 = vmatpush1.msra.mxu0 %v5276
      %5323 = vmatprep.subr.mxu0 0.0
      %5324 = vmatpush1.msra.mxu0 %v5275
      %5325 = vmatprep.subr.mxu0 0.0
      %5326 = vmatpush1.msra.mxu0 %v5274
      %5327 = vmatprep.subr.mxu0 0.0
      %5328 = vmatpush1.msra.mxu0 %v5273
      %5329 = vmatprep.subr.mxu0 0.0
      %5330 = vmatpush1.msra.mxu0 %v5272
      %5331 = vmatprep.subr.mxu0 0.0
      %5332 = vmatpush1.msra.mxu0 %v5271
      %5333 = vmatprep.subr.mxu0 0.0
      %5334 = vmatpush1.msra.mxu0 %v5270
      %5335 = vmatprep.subr.mxu0 0.0
      %5336 = vmatpush2.msra.mxu0 0.0
      %5337 = vmatprep.subr.mxu0 0.0
      %5338 = vmatpush2.msra.mxu0 0.0
      %5339 = vmatprep.subr.mxu0 0.0
      %5340 = vmatpush2.msra.mxu0 0.0
      %5341 = vmatprep.subr.mxu0 0.0
      %5342 = vmatpush2.msra.mxu0 0.0
      %5343 = vmatprep.subr.mxu0 0.0
      %5344 = vmatpush2.msra.mxu0 0.0
      %5345 = vmatprep.subr.mxu0 0.0
      %5346 = vmatpush2.msra.mxu0 0.0
      %5347 = vmatprep.subr.mxu0 0.0
      %5348 = vmatpush2.msra.mxu0 0.0
      %5349 = vmatprep.subr.mxu0 0.0
      %5350 = vmatpush2.msra.mxu0 0.0
      %5351 = vmatprep.subr.mxu0 0.0
      %5352 = vmatpush2.msra.mxu0 0.0
      %5353 = vmatprep.subr.mxu0 0.0
      %5354 = vmatpush2.msra.mxu0 0.0
      %5355 = vmatprep.subr.mxu0 0.0
      %5356 = vmatpush2.msra.mxu0 0.0
      %5357 = vmatprep.subr.mxu0 0.0
      %5358 = vmatpush2.msra.mxu0 0.0
      %5359 = vmatprep.subr.mxu0 0.0
      %5360 = vmatpush2.msra.mxu0 0.0
      %5361 = vmatprep.subr.mxu0 0.0
      %5362 = vmatpush2.msra.mxu0 0.0
      %5363 = vmatprep.subr.mxu0 0.0
      %5364 = vmatpush2.msra.mxu0 0.0
      %5365 = vmatprep.subr.mxu0 0.0
      %5366 = vmatpush2.msra.mxu0 0.0
      %5367 = vmatprep.mubr.f32.mxu0 0.0
      %5368 = vmatmul.mubr.f32.gmra.mxu0 %v5288
      %v5369 = vpop.f32.mrf.mxu0
      %v5370 = vadd.f32 0.0, %v5369
      %v5371 = vpop.f32.mrf.mxu0
      %5372 = vmatprep.mubr.f32.mxu0 0.0
      %5373 = vmatmul.mubr.f32.gmra.mxu0 %v5290
      %v5374 = vpop.f32.mrf.mxu0
      %v5375 = vadd.f32 0.0, %v5374
      %v5376 = vpop.f32.mrf.mxu0
      %5377 = vmatprep.mubr.f32.mxu0 0.0
      %5378 = vmatmul.mubr.f32.gmra.mxu0 %v5292
      %v5379 = vpop.f32.mrf.mxu0
      %v5380 = vadd.f32 0.0, %v5379
      %v5381 = vpop.f32.mrf.mxu0
      %5382 = vmatprep.mubr.f32.mxu0 0.0
      %5383 = vmatmul.mubr.f32.gmra.mxu0 %v5294
      %v5384 = vpop.f32.mrf.mxu0
      %v5385 = vadd.f32 0.0, %v5384
      %v5386 = vpop.f32.mrf.mxu0
      %5387 = vmatprep.mubr.f32.mxu0 0.0
      %5388 = vmatmul.mubr.f32.gmra.mxu0 %v5296
      %v5389 = vpop.f32.mrf.mxu0
      %v5390 = vadd.f32 0.0, %v5389
      %v5391 = vpop.f32.mrf.mxu0
      %5392 = vmatprep.mubr.f32.mxu0 0.0
      %5393 = vmatmul.mubr.f32.gmra.mxu0 %v5295
      %v5394 = vpop.f32.mrf.mxu0
      %v5395 = vadd.f32 0.0, %v5394
      %v5396 = vpop.f32.mrf.mxu0
      %5397 = vdwg.mxu0
      %v5398 = vadd.f32 %v5263, %v5370
      %v5399 = vadd.f32 %v5264, %v5375
      %v5400 = vadd.f32 %v5265, %v5380
      %v5401 = vadd.f32 %v5266, %v5385
      %v5402 = vadd.f32 %v5267, %v5390
      %v5403 = vadd.f32 %v5268, %v5395
      %s5404 = scalar_lea.vmem %s3, 512
      %v5405 = vld [vmem:[%s5404] sm:$0xff]
      %v5406 = vld [vmem:[%s5404 + $0x8] sm:$0xff]
      %v5407 = vld [vmem:[%s5404 + $0x10] sm:$0xff]
      %v5408 = vld [vmem:[%s5404 + $0x18] sm:$0xff]
      %v5409 = vld [vmem:[%s5404 + $0x20] sm:$0xff]
      %v5410 = vld [vmem:[%s5404 + $0x28] sm:$0xff]
      %v5411 = vld [vmem:[%s5404 + $0x30] sm:$0xff]
      %v5412 = vld [vmem:[%s5404 + $0x38] sm:$0xff]
      %v5413 = vld [vmem:[%s5404 + $0x40] sm:$0xff]
      %v5414 = vld [vmem:[%s5404 + $0x48] sm:$0xff]
      %v5415 = vld [vmem:[%s5404 + $0x50] sm:$0xff]
      %v5416 = vld [vmem:[%s5404 + $0x58] sm:$0xff]
      %v5417 = vld [vmem:[%s5404 + $0x60] sm:$0xff]
      %v5418 = vld [vmem:[%s5404 + $0x68] sm:$0xff]
      %v5419 = vld [vmem:[%s5404 + $0x70] sm:$0xff]
      %v5420 = vld [vmem:[%s5404 + $0x78] sm:$0xff]
      %v5421 = vrot.slane %v4860, 4
      %v5422 = vrot.slane %v4865, 4
      %v5423 = vsel %vm968, %v5421, %v5422
      %v5424 = vrot.slane %v4870, 4
      %v5425 = vsel %vm968, %v5422, %v5424
      %v5426 = vrot.slane %v4875, 4
      %v5427 = vsel %vm968, %v5424, %v5426
      %v5428 = vrot.slane %v4880, 4
      %v5429 = vsel %vm968, %v5426, %v5428
      %v5430 = vrot.slane %v4885, 4
      %v5431 = vsel %vm968, %v5428, %v5430
      %5438 = vmatprep.subr.mxu0 0.0
      %5439 = vmatpush1.msra.mxu0 %v5420
      %5440 = vmatprep.subr.mxu0 0.0
      %5441 = vmatpush1.msra.mxu0 %v5419
      %5442 = vmatprep.subr.mxu0 0.0
      %5443 = vmatpush1.msra.mxu0 %v5418
      %5444 = vmatprep.subr.mxu0 0.0
      %5445 = vmatpush1.msra.mxu0 %v5417
      %5446 = vmatprep.subr.mxu0 0.0
      %5447 = vmatpush1.msra.mxu0 %v5416
      %5448 = vmatprep.subr.mxu0 0.0
      %5449 = vmatpush1.msra.mxu0 %v5415
      %5450 = vmatprep.subr.mxu0 0.0
      %5451 = vmatpush1.msra.mxu0 %v5414
      %5452 = vmatprep.subr.mxu0 0.0
      %5453 = vmatpush1.msra.mxu0 %v5413
      %5454 = vmatprep.subr.mxu0 0.0
      %5455 = vmatpush1.msra.mxu0 %v5412
      %5456 = vmatprep.subr.mxu0 0.0
      %5457 = vmatpush1.msra.mxu0 %v5411
      %5458 = vmatprep.subr.mxu0 0.0
      %5459 = vmatpush1.msra.mxu0 %v5410
      %5460 = vmatprep.subr.mxu0 0.0
      %5461 = vmatpush1.msra.mxu0 %v5409
      %5462 = vmatprep.subr.mxu0 0.0
      %5463 = vmatpush1.msra.mxu0 %v5408
      %5464 = vmatprep.subr.mxu0 0.0
      %5465 = vmatpush1.msra.mxu0 %v5407
      %5466 = vmatprep.subr.mxu0 0.0
      %5467 = vmatpush1.msra.mxu0 %v5406
      %5468 = vmatprep.subr.mxu0 0.0
      %5469 = vmatpush1.msra.mxu0 %v5405
      %5470 = vmatprep.subr.mxu0 0.0
      %5471 = vmatpush2.msra.mxu0 0.0
      %5472 = vmatprep.subr.mxu0 0.0
      %5473 = vmatpush2.msra.mxu0 0.0
      %5474 = vmatprep.subr.mxu0 0.0
      %5475 = vmatpush2.msra.mxu0 0.0
      %5476 = vmatprep.subr.mxu0 0.0
      %5477 = vmatpush2.msra.mxu0 0.0
      %5478 = vmatprep.subr.mxu0 0.0
      %5479 = vmatpush2.msra.mxu0 0.0
      %5480 = vmatprep.subr.mxu0 0.0
      %5481 = vmatpush2.msra.mxu0 0.0
      %5482 = vmatprep.subr.mxu0 0.0
      %5483 = vmatpush2.msra.mxu0 0.0
      %5484 = vmatprep.subr.mxu0 0.0
      %5485 = vmatpush2.msra.mxu0 0.0
      %5486 = vmatprep.subr.mxu0 0.0
      %5487 = vmatpush2.msra.mxu0 0.0
      %5488 = vmatprep.subr.mxu0 0.0
      %5489 = vmatpush2.msra.mxu0 0.0
      %5490 = vmatprep.subr.mxu0 0.0
      %5491 = vmatpush2.msra.mxu0 0.0
      %5492 = vmatprep.subr.mxu0 0.0
      %5493 = vmatpush2.msra.mxu0 0.0
      %5494 = vmatprep.subr.mxu0 0.0
      %5495 = vmatpush2.msra.mxu0 0.0
      %5496 = vmatprep.subr.mxu0 0.0
      %5497 = vmatpush2.msra.mxu0 0.0
      %5498 = vmatprep.subr.mxu0 0.0
      %5499 = vmatpush2.msra.mxu0 0.0
      %5500 = vmatprep.subr.mxu0 0.0
      %5501 = vmatpush2.msra.mxu0 0.0
      %5502 = vmatprep.mubr.f32.mxu0 0.0
      %5503 = vmatmul.mubr.f32.gmra.mxu0 %v5423
      %v5504 = vpop.f32.mrf.mxu0
      %v5505 = vadd.f32 0.0, %v5504
      %v5506 = vpop.f32.mrf.mxu0
      %5507 = vmatprep.mubr.f32.mxu0 0.0
      %5508 = vmatmul.mubr.f32.gmra.mxu0 %v5425
      %v5509 = vpop.f32.mrf.mxu0
      %v5510 = vadd.f32 0.0, %v5509
      %v5511 = vpop.f32.mrf.mxu0
      %5512 = vmatprep.mubr.f32.mxu0 0.0
      %5513 = vmatmul.mubr.f32.gmra.mxu0 %v5427
      %v5514 = vpop.f32.mrf.mxu0
      %v5515 = vadd.f32 0.0, %v5514
      %v5516 = vpop.f32.mrf.mxu0
      %5517 = vmatprep.mubr.f32.mxu0 0.0
      %5518 = vmatmul.mubr.f32.gmra.mxu0 %v5429
      %v5519 = vpop.f32.mrf.mxu0
      %v5520 = vadd.f32 0.0, %v5519
      %v5521 = vpop.f32.mrf.mxu0
      %5522 = vmatprep.mubr.f32.mxu0 0.0
      %5523 = vmatmul.mubr.f32.gmra.mxu0 %v5431
      %v5524 = vpop.f32.mrf.mxu0
      %v5525 = vadd.f32 0.0, %v5524
      %v5526 = vpop.f32.mrf.mxu0
      %5527 = vmatprep.mubr.f32.mxu0 0.0
      %5528 = vmatmul.mubr.f32.gmra.mxu0 %v5430
      %v5529 = vpop.f32.mrf.mxu0
      %v5530 = vadd.f32 0.0, %v5529
      %v5531 = vpop.f32.mrf.mxu0
      %5532 = vdwg.mxu0
      %v5533 = vadd.f32 %v5398, %v5505
      %v5534 = vadd.f32 %v5399, %v5510
      %v5535 = vadd.f32 %v5400, %v5515
      %v5536 = vadd.f32 %v5401, %v5520
      %v5537 = vadd.f32 %v5402, %v5525
      %v5538 = vadd.f32 %v5403, %v5530
      %v5539 = vld [vmem:[%s4] sm:$0x1]
      %v5541 = vlaneseq
      %v5542 = vshrl.u32 %v5541, 7
      %v5543 = vsub.s32 0, %v5542
      %v5544 = vrot.slane %v5539, %v5543
      %v5546 = vadd.f32 %v5533, %v5544
      %v5547 = vadd.f32 %v5534, %v5544
      %v5548 = vadd.f32 %v5535, %v5544
      %v5549 = vadd.f32 %v5536, %v5544
      %v5550 = vadd.f32 %v5537, %v5544
      %v5551 = vadd.f32 %v5538, %v5544
      %v5552 = vmax.f32 %v5546, 0.0
      %v5553 = vmax.f32 %v5547, 0.0
      %v5554 = vmax.f32 %v5548, 0.0
      %v5555 = vmax.f32 %v5549, 0.0
      %v5556 = vmax.f32 %v5550, 0.0
      %v5557 = vmax.f32 %v5551, 0.0
      %v5564 = vrot.slane %v5552, 1
      %v5565 = vrot.slane %v5553, 1
      %v5566 = vsel %vm871, %v5564, %v5565
      %v5567 = vrot.slane %v5554, 1
      %v5568 = vsel %vm871, %v5565, %v5567
      %v5569 = vrot.slane %v5555, 1
      %v5570 = vsel %vm871, %v5567, %v5569
      %v5571 = vrot.slane %v5556, 1
      %v5572 = vsel %vm871, %v5569, %v5571
      %v5573 = vrot.slane %v5557, 1
      %v5574 = vsel %vm871, %v5571, %v5573
      %v5580 = vmax.f32 %v5552, %v5566
      %v5581 = vmax.f32 %v5553, %v5568
      %v5582 = vmax.f32 %v5554, %v5570
      %v5583 = vmax.f32 %v5555, %v5572
      %v5584 = vmax.f32 %v5556, %v5574
      %v5585 = vrot.slane %v5552, 2
      %v5586 = vrot.slane %v5553, 2
      %v5587 = vsel %vm1395, %v5585, %v5586
      %v5588 = vrot.slane %v5554, 2
      %v5589 = vsel %vm1395, %v5586, %v5588
      %v5590 = vrot.slane %v5555, 2
      %v5591 = vsel %vm1395, %v5588, %v5590
      %v5592 = vrot.slane %v5556, 2
      %v5593 = vsel %vm1395, %v5590, %v5592
      %v5594 = vrot.slane %v5557, 2
      %v5595 = vsel %vm1395, %v5592, %v5594
      %v5601 = vmax.f32 %v5580, %v5587
      %v5602 = vmax.f32 %v5581, %v5589
      %v5603 = vmax.f32 %v5582, %v5591
      %v5604 = vmax.f32 %v5583, %v5593
      %v5605 = vmax.f32 %v5584, %v5595
      %v5606 = vrot.slane %v5552, 3
      %v5607 = vrot.slane %v5553, 3
      %v5608 = vsel %vm1705, %v5606, %v5607
      %v5609 = vrot.slane %v5554, 3
      %v5610 = vsel %vm1705, %v5607, %v5609
      %v5611 = vrot.slane %v5555, 3
      %v5612 = vsel %vm1705, %v5609, %v5611
      %v5613 = vrot.slane %v5556, 3
      %v5614 = vsel %vm1705, %v5611, %v5613
      %v5615 = vrot.slane %v5557, 3
      %v5616 = vsel %vm1705, %v5613, %v5615
      %v5622 = vmax.f32 %v5601, %v5608
      %v5623 = vmax.f32 %v5602, %v5610
      %v5624 = vmax.f32 %v5603, %v5612
      %v5625 = vmax.f32 %v5604, %v5614
      %v5626 = vmax.f32 %v5605, %v5616
      %vm5627 = vcmask 326656
      %v5629 = vsel %vm5627, %v4759, 0
      %v5632 = vsel %vm5627, %v4761, 0
      %5634 = vmatprep.subr.mxu0 0.0
      %5635 = vmatpush1.msra.mxu0 0.0
      %5636 = vmatprep.subr.mxu0 0.0
      %5637 = vmatpush1.msra.mxu0 0.0
      %5638 = vmatprep.subr.mxu0 0.0
      %5639 = vmatpush1.msra.mxu0 0.0
      %5640 = vmatprep.subr.mxu0 0.0
      %5641 = vmatpush1.msra.mxu0 0.0
      %5642 = vmatprep.subr.mxu0 0.0
      %5643 = vmatpush1.msra.mxu0 0.0
      %5644 = vmatprep.subr.mxu0 0.0
      %5645 = vmatpush1.msra.mxu0 0.0
      %5646 = vmatprep.subr.mxu0 0.0
      %5647 = vmatpush1.msra.mxu0 0.0
      %5648 = vmatprep.subr.mxu0 0.0
      %5649 = vmatpush1.msra.mxu0 0.0
      %5650 = vmatprep.subr.mxu0 0.0
      %5651 = vmatpush1.msra.mxu0 0.0
      %5652 = vmatprep.subr.mxu0 0.0
      %5653 = vmatpush1.msra.mxu0 0.0
      %5654 = vmatprep.subr.mxu0 0.0
      %5655 = vmatpush1.msra.mxu0 0.0
      %5656 = vmatprep.subr.mxu0 0.0
      %5657 = vmatpush1.msra.mxu0 %v5626
      %5658 = vmatprep.subr.mxu0 0.0
      %5659 = vmatpush1.msra.mxu0 %v5625
      %5660 = vmatprep.subr.mxu0 0.0
      %5661 = vmatpush1.msra.mxu0 %v5624
      %5662 = vmatprep.subr.mxu0 0.0
      %5663 = vmatpush1.msra.mxu0 %v5623
      %5664 = vmatprep.subr.mxu0 0.0
      %5665 = vmatpush1.msra.mxu0 %v5622
      %5666 = vmatprep.subr.mxu0 0.0
      %5667 = vmatpush2.msra.mxu0 0.0
      %5668 = vmatprep.subr.mxu0 0.0
      %5669 = vmatpush2.msra.mxu0 0.0
      %5670 = vmatprep.subr.mxu0 0.0
      %5671 = vmatpush2.msra.mxu0 0.0
      %5672 = vmatprep.subr.mxu0 0.0
      %5673 = vmatpush2.msra.mxu0 0.0
      %5674 = vmatprep.subr.mxu0 0.0
      %5675 = vmatpush2.msra.mxu0 0.0
      %5676 = vmatprep.subr.mxu0 0.0
      %5677 = vmatpush2.msra.mxu0 0.0
      %5678 = vmatprep.subr.mxu0 0.0
      %5679 = vmatpush2.msra.mxu0 0.0
      %5680 = vmatprep.subr.mxu0 0.0
      %5681 = vmatpush2.msra.mxu0 0.0
      %5682 = vmatprep.subr.mxu0 0.0
      %5683 = vmatpush2.msra.mxu0 0.0
      %5684 = vmatprep.subr.mxu0 0.0
      %5685 = vmatpush2.msra.mxu0 0.0
      %5686 = vmatprep.subr.mxu0 0.0
      %5687 = vmatpush2.msra.mxu0 0.0
      %5688 = vmatprep.subr.mxu0 0.0
      %5689 = vmatpush2.msra.mxu0 0.0
      %5690 = vmatprep.subr.mxu0 0.0
      %5691 = vmatpush2.msra.mxu0 0.0
      %5692 = vmatprep.subr.mxu0 0.0
      %5693 = vmatpush2.msra.mxu0 0.0
      %5694 = vmatprep.subr.mxu0 0.0
      %5695 = vmatpush2.msra.mxu0 0.0
      %5696 = vmatprep.subr.mxu0 0.0
      %5697 = vmatpush2.msra.mxu0 0.0
      %5698 = vmatprep.mubr.f32.mxu0 0.0
      %5699 = vmatmul.mubr.f32.gmra.mxu0 %v5629
      %v5700 = vpop.f32.mrf.mxu0
      %v5701 = vadd.f32 0.0, %v5700
      %v5702 = vpop.f32.mrf.mxu0
      %5703 = vmatprep.mubr.f32.mxu0 0.0
      %5704 = vmatmul.mubr.f32.gmra.mxu0 %v5632
      %v5705 = vpop.f32.mrf.mxu0
      %v5706 = vadd.f32 0.0, %v5705
      %v5707 = vpop.f32.mrf.mxu0
      %5708 = vdwg.mxu0
      %v5709 = vld [vmem:[%s5] sm:$0xff]
      %v5710 = vld [vmem:[%s5 + $0x8] sm:$0xff]
      %v5711 = vld [vmem:[%s5 + $0x10] sm:$0xff]
      %v5712 = vld [vmem:[%s5 + $0x18] sm:$0xff]
      %v5713 = vld [vmem:[%s5 + $0x20] sm:$0xff]
      %v5714 = vld [vmem:[%s5 + $0x28] sm:$0xff]
      %v5715 = vld [vmem:[%s5 + $0x30] sm:$0xff]
      %v5716 = vld [vmem:[%s5 + $0x38] sm:$0xff]
      %s5717 = scalar_lea.vmem %s5, 64
      %v5718 = vld [vmem:[%s5717] sm:$0xff]
      %v5719 = vld [vmem:[%s5717 + $0x8] sm:$0xff]
      %v5720 = vld [vmem:[%s5717 + $0x10] sm:$0xff]
      %v5721 = vld [vmem:[%s5717 + $0x18] sm:$0xff]
      %v5722 = vld [vmem:[%s5717 + $0x20] sm:$0xff]
      %v5723 = vld [vmem:[%s5717 + $0x28] sm:$0xff]
      %v5724 = vld [vmem:[%s5717 + $0x30] sm:$0xff]
      %v5725 = vld [vmem:[%s5717 + $0x38] sm:$0xff]
      %v5728 = vrot.slane %v5701, 1
      %v5729 = vrot.slane %v5706, 1
      %v5730 = vsel %vm871, %v5728, %v5729
      %vm5731 = vcmask 523264
      %v5732 = vsel %vm5731, %v5730, 0
      %5734 = vmatprep.subr.mxu0 0.0
      %5735 = vmatpush1.msra.mxu0 0.0
      %5736 = vmatprep.subr.mxu0 0.0
      %5737 = vmatpush1.msra.mxu0 0.0
      %5738 = vmatprep.subr.mxu0 0.0
      %5739 = vmatpush1.msra.mxu0 0.0
      %5740 = vmatprep.subr.mxu0 0.0
      %5741 = vmatpush1.msra.mxu0 0.0
      %5742 = vmatprep.subr.mxu0 0.0
      %5743 = vmatpush1.msra.mxu0 0.0
      %5744 = vmatprep.subr.mxu0 0.0
      %5745 = vmatpush1.msra.mxu0 0.0
      %5746 = vmatprep.subr.mxu0 0.0
      %5747 = vmatpush1.msra.mxu0 0.0
      %5748 = vmatprep.subr.mxu0 0.0
      %5749 = vmatpush1.msra.mxu0 0.0
      %5750 = vmatprep.subr.mxu0 0.0
      %5751 = vmatpush1.msra.mxu0 %v5725
      %5752 = vmatprep.subr.mxu0 0.0
      %5753 = vmatpush1.msra.mxu0 %v5724
      %5754 = vmatprep.subr.mxu0 0.0
      %5755 = vmatpush1.msra.mxu0 %v5723
      %5756 = vmatprep.subr.mxu0 0.0
      %5757 = vmatpush1.msra.mxu0 %v5722
      %5758 = vmatprep.subr.mxu0 0.0
      %5759 = vmatpush1.msra.mxu0 %v5721
      %5760 = vmatprep.subr.mxu0 0.0
      %5761 = vmatpush1.msra.mxu0 %v5720
      %5762 = vmatprep.subr.mxu0 0.0
      %5763 = vmatpush1.msra.mxu0 %v5719
      %5764 = vmatprep.subr.mxu0 0.0
      %5765 = vmatpush1.msra.mxu0 %v5718
      %5766 = vmatprep.subr.mxu0 0.0
      %5767 = vmatpush2.msra.mxu0 0.0
      %5768 = vmatprep.subr.mxu0 0.0
      %5769 = vmatpush2.msra.mxu0 0.0
      %5770 = vmatprep.subr.mxu0 0.0
      %5771 = vmatpush2.msra.mxu0 0.0
      %5772 = vmatprep.subr.mxu0 0.0
      %5773 = vmatpush2.msra.mxu0 0.0
      %5774 = vmatprep.subr.mxu0 0.0
      %5775 = vmatpush2.msra.mxu0 0.0
      %5776 = vmatprep.subr.mxu0 0.0
      %5777 = vmatpush2.msra.mxu0 0.0
      %5778 = vmatprep.subr.mxu0 0.0
      %5779 = vmatpush2.msra.mxu0 0.0
      %5780 = vmatprep.subr.mxu0 0.0
      %5781 = vmatpush2.msra.mxu0 0.0
      %5782 = vmatprep.subr.mxu0 0.0
      %5783 = vmatpush2.msra.mxu0 0.0
      %5784 = vmatprep.subr.mxu0 0.0
      %5785 = vmatpush2.msra.mxu0 0.0
      %5786 = vmatprep.subr.mxu0 0.0
      %5787 = vmatpush2.msra.mxu0 0.0
      %5788 = vmatprep.subr.mxu0 0.0
      %5789 = vmatpush2.msra.mxu0 0.0
      %5790 = vmatprep.subr.mxu0 0.0
      %5791 = vmatpush2.msra.mxu0 0.0
      %5792 = vmatprep.subr.mxu0 0.0
      %5793 = vmatpush2.msra.mxu0 0.0
      %5794 = vmatprep.subr.mxu0 0.0
      %5795 = vmatpush2.msra.mxu0 0.0
      %5796 = vmatprep.subr.mxu0 0.0
      %5797 = vmatpush2.msra.mxu0 0.0
      %5798 = vmatprep.mubr.f32.mxu0 0.0
      %5799 = vmatmul.mubr.f32.gmra.mxu0 %v5732
      %v5800 = vpop.f32.mrf.mxu0
      %v5801 = vadd.f32 0.0, %v5800
      %v5802 = vpop.f32.mrf.mxu0
      %5803 = vdwg.mxu0
      %v5804 = vsel %vm5731, %v5701, 0
      %5806 = vmatprep.subr.mxu0 0.0
      %5807 = vmatpush1.msra.mxu0 0.0
      %5808 = vmatprep.subr.mxu0 0.0
      %5809 = vmatpush1.msra.mxu0 0.0
      %5810 = vmatprep.subr.mxu0 0.0
      %5811 = vmatpush1.msra.mxu0 0.0
      %5812 = vmatprep.subr.mxu0 0.0
      %5813 = vmatpush1.msra.mxu0 0.0
      %5814 = vmatprep.subr.mxu0 0.0
      %5815 = vmatpush1.msra.mxu0 0.0
      %5816 = vmatprep.subr.mxu0 0.0
      %5817 = vmatpush1.msra.mxu0 0.0
      %5818 = vmatprep.subr.mxu0 0.0
      %5819 = vmatpush1.msra.mxu0 0.0
      %5820 = vmatprep.subr.mxu0 0.0
      %5821 = vmatpush1.msra.mxu0 0.0
      %5822 = vmatprep.subr.mxu0 0.0
      %5823 = vmatpush1.msra.mxu0 %v5716
      %5824 = vmatprep.subr.mxu0 0.0
      %5825 = vmatpush1.msra.mxu0 %v5715
      %5826 = vmatprep.subr.mxu0 0.0
      %5827 = vmatpush1.msra.mxu0 %v5714
      %5828 = vmatprep.subr.mxu0 0.0
      %5829 = vmatpush1.msra.mxu0 %v5713
      %5830 = vmatprep.subr.mxu0 0.0
      %5831 = vmatpush1.msra.mxu0 %v5712
      %5832 = vmatprep.subr.mxu0 0.0
      %5833 = vmatpush1.msra.mxu0 %v5711
      %5834 = vmatprep.subr.mxu0 0.0
      %5835 = vmatpush1.msra.mxu0 %v5710
      %5836 = vmatprep.subr.mxu0 0.0
      %5837 = vmatpush1.msra.mxu0 %v5709
      %5838 = vmatprep.subr.mxu0 0.0
      %5839 = vmatpush2.msra.mxu0 0.0
      %5840 = vmatprep.subr.mxu0 0.0
      %5841 = vmatpush2.msra.mxu0 0.0
      %5842 = vmatprep.subr.mxu0 0.0
      %5843 = vmatpush2.msra.mxu0 0.0
      %5844 = vmatprep.subr.mxu0 0.0
      %5845 = vmatpush2.msra.mxu0 0.0
      %5846 = vmatprep.subr.mxu0 0.0
      %5847 = vmatpush2.msra.mxu0 0.0
      %5848 = vmatprep.subr.mxu0 0.0
      %5849 = vmatpush2.msra.mxu0 0.0
      %5850 = vmatprep.subr.mxu0 0.0
      %5851 = vmatpush2.msra.mxu0 0.0
      %5852 = vmatprep.subr.mxu0 0.0
      %5853 = vmatpush2.msra.mxu0 0.0
      %5854 = vmatprep.subr.mxu0 0.0
      %5855 = vmatpush2.msra.mxu0 0.0
      %5856 = vmatprep.subr.mxu0 0.0
      %5857 = vmatpush2.msra.mxu0 0.0
      %5858 = vmatprep.subr.mxu0 0.0
      %5859 = vmatpush2.msra.mxu0 0.0
      %5860 = vmatprep.subr.mxu0 0.0
      %5861 = vmatpush2.msra.mxu0 0.0
      %5862 = vmatprep.subr.mxu0 0.0
      %5863 = vmatpush2.msra.mxu0 0.0
      %5864 = vmatprep.subr.mxu0 0.0
      %5865 = vmatpush2.msra.mxu0 0.0
      %5866 = vmatprep.subr.mxu0 0.0
      %5867 = vmatpush2.msra.mxu0 0.0
      %5868 = vmatprep.subr.mxu0 0.0
      %5869 = vmatpush2.msra.mxu0 0.0
      %5870 = vmatprep.mubr.f32.mxu0 0.0
      %5871 = vmatmul.mubr.f32.gmra.mxu0 %v5804
      %v5872 = vpop.f32.mrf.mxu0
      %v5873 = vadd.f32 %v5801, %v5872
      %v5874 = vpop.f32.mrf.mxu0
      %5875 = vdwg.mxu0
      %s5876 = scalar_lea.vmem %s5, 128
      %v5877 = vld [vmem:[%s5876] sm:$0xff]
      %v5878 = vld [vmem:[%s5876 + $0x8] sm:$0xff]
      %v5879 = vld [vmem:[%s5876 + $0x10] sm:$0xff]
      %v5880 = vld [vmem:[%s5876 + $0x18] sm:$0xff]
      %v5881 = vld [vmem:[%s5876 + $0x20] sm:$0xff]
      %v5882 = vld [vmem:[%s5876 + $0x28] sm:$0xff]
      %v5883 = vld [vmem:[%s5876 + $0x30] sm:$0xff]
      %v5884 = vld [vmem:[%s5876 + $0x38] sm:$0xff]
      %v5885 = vrot.slane %v5701, 2
      %v5886 = vrot.slane %v5706, 2
      %v5887 = vsel %vm1395, %v5885, %v5886
      %v5888 = vsel %vm5731, %v5887, 0
      %5890 = vmatprep.subr.mxu0 0.0
      %5891 = vmatpush1.msra.mxu0 0.0
      %5892 = vmatprep.subr.mxu0 0.0
      %5893 = vmatpush1.msra.mxu0 0.0
      %5894 = vmatprep.subr.mxu0 0.0
      %5895 = vmatpush1.msra.mxu0 0.0
      %5896 = vmatprep.subr.mxu0 0.0
      %5897 = vmatpush1.msra.mxu0 0.0
      %5898 = vmatprep.subr.mxu0 0.0
      %5899 = vmatpush1.msra.mxu0 0.0
      %5900 = vmatprep.subr.mxu0 0.0
      %5901 = vmatpush1.msra.mxu0 0.0
      %5902 = vmatprep.subr.mxu0 0.0
      %5903 = vmatpush1.msra.mxu0 0.0
      %5904 = vmatprep.subr.mxu0 0.0
      %5905 = vmatpush1.msra.mxu0 0.0
      %5906 = vmatprep.subr.mxu0 0.0
      %5907 = vmatpush1.msra.mxu0 %v5884
      %5908 = vmatprep.subr.mxu0 0.0
      %5909 = vmatpush1.msra.mxu0 %v5883
      %5910 = vmatprep.subr.mxu0 0.0
      %5911 = vmatpush1.msra.mxu0 %v5882
      %5912 = vmatprep.subr.mxu0 0.0
      %5913 = vmatpush1.msra.mxu0 %v5881
      %5914 = vmatprep.subr.mxu0 0.0
      %5915 = vmatpush1.msra.mxu0 %v5880
      %5916 = vmatprep.subr.mxu0 0.0
      %5917 = vmatpush1.msra.mxu0 %v5879
      %5918 = vmatprep.subr.mxu0 0.0
      %5919 = vmatpush1.msra.mxu0 %v5878
      %5920 = vmatprep.subr.mxu0 0.0
      %5921 = vmatpush1.msra.mxu0 %v5877
      %5922 = vmatprep.subr.mxu0 0.0
      %5923 = vmatpush2.msra.mxu0 0.0
      %5924 = vmatprep.subr.mxu0 0.0
      %5925 = vmatpush2.msra.mxu0 0.0
      %5926 = vmatprep.subr.mxu0 0.0
      %5927 = vmatpush2.msra.mxu0 0.0
      %5928 = vmatprep.subr.mxu0 0.0
      %5929 = vmatpush2.msra.mxu0 0.0
      %5930 = vmatprep.subr.mxu0 0.0
      %5931 = vmatpush2.msra.mxu0 0.0
      %5932 = vmatprep.subr.mxu0 0.0
      %5933 = vmatpush2.msra.mxu0 0.0
      %5934 = vmatprep.subr.mxu0 0.0
      %5935 = vmatpush2.msra.mxu0 0.0
      %5936 = vmatprep.subr.mxu0 0.0
      %5937 = vmatpush2.msra.mxu0 0.0
      %5938 = vmatprep.subr.mxu0 0.0
      %5939 = vmatpush2.msra.mxu0 0.0
      %5940 = vmatprep.subr.mxu0 0.0
      %5941 = vmatpush2.msra.mxu0 0.0
      %5942 = vmatprep.subr.mxu0 0.0
      %5943 = vmatpush2.msra.mxu0 0.0
      %5944 = vmatprep.subr.mxu0 0.0
      %5945 = vmatpush2.msra.mxu0 0.0
      %5946 = vmatprep.subr.mxu0 0.0
      %5947 = vmatpush2.msra.mxu0 0.0
      %5948 = vmatprep.subr.mxu0 0.0
      %5949 = vmatpush2.msra.mxu0 0.0
      %5950 = vmatprep.subr.mxu0 0.0
      %5951 = vmatpush2.msra.mxu0 0.0
      %5952 = vmatprep.subr.mxu0 0.0
      %5953 = vmatpush2.msra.mxu0 0.0
      %5954 = vmatprep.mubr.f32.mxu0 0.0
      %5955 = vmatmul.mubr.f32.gmra.mxu0 %v5888
      %v5956 = vpop.f32.mrf.mxu0
      %v5957 = vadd.f32 0.0, %v5956
      %v5958 = vpop.f32.mrf.mxu0
      %5959 = vdwg.mxu0
      %v5960 = vadd.f32 %v5873, %v5957
      %v5961 = vld [vmem:[%s6] sm:$0x1]
      %v5963 = vlaneseq
      %v5964 = vshrl.u32 %v5963, 7
      %v5965 = vsub.s32 0, %v5964
      %v5966 = vrot.slane %v5961, %v5965
      %v5968 = vadd.f32 %v5960, %v5966
      %v5969 = vmax.f32 %v5968, 0.0
      %v5971 = vrot.slane %v5969, 1
      %v5973 = vmax.f32 %v5969, %v5971
      %v5974 = vmul.u32 %v4720, 2
      %vm5975 = vcmp.eq.s32.totalorder %v4727, %v5974
      %v5976 = vsel %vm5975, 1, 0
      %v5977 = vcvt.s32.f32 %v5976
      %vm5978 = vcmask 56320
      %v5980 = vsel %vm5978, %v5977, 0
      %v5983 = vsel %vm871, %v5973, 0
      %5985 = vmatprep.subr.mxu0 0.0
      %5986 = vmatpush1.msra.mxu0 0.0
      %5987 = vmatprep.subr.mxu0 0.0
      %5988 = vmatpush1.msra.mxu0 0.0
      %5989 = vmatprep.subr.mxu0 0.0
      %5990 = vmatpush1.msra.mxu0 0.0
      %5991 = vmatprep.subr.mxu0 0.0
      %5992 = vmatpush1.msra.mxu0 0.0
      %5993 = vmatprep.subr.mxu0 0.0
      %5994 = vmatpush1.msra.mxu0 0.0
      %5995 = vmatprep.subr.mxu0 0.0
      %5996 = vmatpush1.msra.mxu0 0.0
      %5997 = vmatprep.subr.mxu0 0.0
      %5998 = vmatpush1.msra.mxu0 0.0
      %5999 = vmatprep.subr.mxu0 0.0
      %6000 = vmatpush1.msra.mxu0 0.0
      %6001 = vmatprep.subr.mxu0 0.0
      %6002 = vmatpush1.msra.mxu0 0.0
      %6003 = vmatprep.subr.mxu0 0.0
      %6004 = vmatpush1.msra.mxu0 0.0
      %6005 = vmatprep.subr.mxu0 0.0
      %6006 = vmatpush1.msra.mxu0 0.0
      %6007 = vmatprep.subr.mxu0 0.0
      %6008 = vmatpush1.msra.mxu0 0.0
      %6009 = vmatprep.subr.mxu0 0.0
      %6010 = vmatpush1.msra.mxu0 0.0
      %6011 = vmatprep.subr.mxu0 0.0
      %6012 = vmatpush1.msra.mxu0 0.0
      %6013 = vmatprep.subr.mxu0 0.0
      %6014 = vmatpush1.msra.mxu0 0.0
      %6015 = vmatprep.subr.mxu0 0.0
      %6016 = vmatpush1.msra.mxu0 %v5983
      %6017 = vmatprep.subr.mxu0 0.0
      %6018 = vmatpush2.msra.mxu0 0.0
      %6019 = vmatprep.subr.mxu0 0.0
      %6020 = vmatpush2.msra.mxu0 0.0
      %6021 = vmatprep.subr.mxu0 0.0
      %6022 = vmatpush2.msra.mxu0 0.0
      %6023 = vmatprep.subr.mxu0 0.0
      %6024 = vmatpush2.msra.mxu0 0.0
      %6025 = vmatprep.subr.mxu0 0.0
      %6026 = vmatpush2.msra.mxu0 0.0
      %6027 = vmatprep.subr.mxu0 0.0
      %6028 = vmatpush2.msra.mxu0 0.0
      %6029 = vmatprep.subr.mxu0 0.0
      %6030 = vmatpush2.msra.mxu0 0.0
      %6031 = vmatprep.subr.mxu0 0.0
      %6032 = vmatpush2.msra.mxu0 0.0
      %6033 = vmatprep.subr.mxu0 0.0
      %6034 = vmatpush2.msra.mxu0 0.0
      %6035 = vmatprep.subr.mxu0 0.0
      %6036 = vmatpush2.msra.mxu0 0.0
      %6037 = vmatprep.subr.mxu0 0.0
      %6038 = vmatpush2.msra.mxu0 0.0
      %6039 = vmatprep.subr.mxu0 0.0
      %6040 = vmatpush2.msra.mxu0 0.0
      %6041 = vmatprep.subr.mxu0 0.0
      %6042 = vmatpush2.msra.mxu0 0.0
      %6043 = vmatprep.subr.mxu0 0.0
      %6044 = vmatpush2.msra.mxu0 0.0
      %6045 = vmatprep.subr.mxu0 0.0
      %6046 = vmatpush2.msra.mxu0 0.0
      %6047 = vmatprep.subr.mxu0 0.0
      %6048 = vmatpush2.msra.mxu0 0.0
      %6049 = vmatprep.mubr.f32.mxu0 0.0
      %6050 = vmatmul.mubr.f32.gmra.mxu0 %v5980
      %v6051 = vpop.f32.mrf.mxu0
      %v6052 = vadd.f32 0.0, %v6051
      %v6053 = vpop.f32.mrf.mxu0
      %6054 = vdwg.mxu0
      %v6055 = vld [vmem:[%s7] sm:$0xff]
      %v6056 = vld [vmem:[%s7 + $0x8] sm:$0xff]
      %v6057 = vld [vmem:[%s7 + $0x10] sm:$0xff]
      %v6058 = vld [vmem:[%s7 + $0x18] sm:$0xff]
      %v6059 = vld [vmem:[%s8] sm:$0x1]
      %v6061 = vlaneseq
      %v6062 = vshrl.u32 %v6061, 7
      %v6063 = vsub.s32 0, %v6062
      %v6064 = vrot.slane %v6059, %v6063
      %vm6066 = vcmask 261120
      %v6068 = vsel %vm6066, %v6052, 0
      %6070 = vmatprep.subr.mxu0 0.0
      %6071 = vmatpush1.msra.mxu0 0.0
      %6072 = vmatprep.subr.mxu0 0.0
      %6073 = vmatpush1.msra.mxu0 0.0
      %6074 = vmatprep.subr.mxu0 0.0
      %6075 = vmatpush1.msra.mxu0 0.0
      %6076 = vmatprep.subr.mxu0 0.0
      %6077 = vmatpush1.msra.mxu0 0.0
      %6078 = vmatprep.subr.mxu0 0.0
      %6079 = vmatpush1.msra.mxu0 0.0
      %6080 = vmatprep.subr.mxu0 0.0
      %6081 = vmatpush1.msra.mxu0 0.0
      %6082 = vmatprep.subr.mxu0 0.0
      %6083 = vmatpush1.msra.mxu0 0.0
      %6084 = vmatprep.subr.mxu0 0.0
      %6085 = vmatpush1.msra.mxu0 0.0
      %6086 = vmatprep.subr.mxu0 0.0
      %6087 = vmatpush1.msra.mxu0 0.0
      %6088 = vmatprep.subr.mxu0 0.0
      %6089 = vmatpush1.msra.mxu0 0.0
      %6090 = vmatprep.subr.mxu0 0.0
      %6091 = vmatpush1.msra.mxu0 0.0
      %6092 = vmatprep.subr.mxu0 0.0
      %6093 = vmatpush1.msra.mxu0 0.0
      %6094 = vmatprep.subr.mxu0 0.0
      %6095 = vmatpush1.msra.mxu0 %v6058
      %6096 = vmatprep.subr.mxu0 0.0
      %6097 = vmatpush1.msra.mxu0 %v6057
      %6098 = vmatprep.subr.mxu0 0.0
      %6099 = vmatpush1.msra.mxu0 %v6056
      %6100 = vmatprep.subr.mxu0 0.0
      %6101 = vmatpush1.msra.mxu0 %v6055
      %6102 = vmatprep.subr.mxu0 0.0
      %6103 = vmatpush2.msra.mxu0 0.0
      %6104 = vmatprep.subr.mxu0 0.0
      %6105 = vmatpush2.msra.mxu0 0.0
      %6106 = vmatprep.subr.mxu0 0.0
      %6107 = vmatpush2.msra.mxu0 0.0
      %6108 = vmatprep.subr.mxu0 0.0
      %6109 = vmatpush2.msra.mxu0 0.0
      %6110 = vmatprep.subr.mxu0 0.0
      %6111 = vmatpush2.msra.mxu0 0.0
      %6112 = vmatprep.subr.mxu0 0.0
      %6113 = vmatpush2.msra.mxu0 0.0
      %6114 = vmatprep.subr.mxu0 0.0
      %6115 = vmatpush2.msra.mxu0 0.0
      %6116 = vmatprep.subr.mxu0 0.0
      %6117 = vmatpush2.msra.mxu0 0.0
      %6118 = vmatprep.subr.mxu0 0.0
      %6119 = vmatpush2.msra.mxu0 0.0
      %6120 = vmatprep.subr.mxu0 0.0
      %6121 = vmatpush2.msra.mxu0 0.0
      %6122 = vmatprep.subr.mxu0 0.0
      %6123 = vmatpush2.msra.mxu0 0.0
      %6124 = vmatprep.subr.mxu0 0.0
      %6125 = vmatpush2.msra.mxu0 0.0
      %6126 = vmatprep.subr.mxu0 0.0
      %6127 = vmatpush2.msra.mxu0 0.0
      %6128 = vmatprep.subr.mxu0 0.0
      %6129 = vmatpush2.msra.mxu0 0.0
      %6130 = vmatprep.subr.mxu0 0.0
      %6131 = vmatpush2.msra.mxu0 0.0
      %6132 = vmatprep.subr.mxu0 0.0
      %6133 = vmatpush2.msra.mxu0 0.0
      %6134 = vmatprep.mubr.f32.mxu0 0.0
      %6135 = vmatmul.mubr.f32.gmra.mxu0 %v6068
      %v6136 = vpop.f32.mrf.mxu0
      %v6137 = vadd.f32 %v6064, %v6136
      %v6138 = vpop.f32.mrf.mxu0
      %6139 = vdwg.mxu0
      %v6140 = vmax.f32 %v6137, 0.0
      %vm6141 = vcmask 257024
      %v6142 = vsel %vm6141, %v6140, 0.0
      %v6143 = vrot.slane %v6142, 4
      %v6144 = vadd.f32 %v6142, %v6143
      %v6145 = vrot.slane %v6144, 2
      %v6146 = vadd.f32 %v6144, %v6145
      %v6147 = vrot.slane %v6146, 1
      %v6148 = vadd.f32 %v6146, %v6147
      %v6149 = vrcp.pop 4.0
      %v6150 = vmul.f32 %v6148, %v6149
      %v6151 = vadd.f32 %v6140, %v6150
      %v6152 = vld [vmem:[%s9] sm:$0x1]
      %v6154 = vlaneseq
      %v6155 = vshrl.u32 %v6154, 7
      %v6156 = vsub.s32 0, %v6155
      %v6157 = vrot.slane %v6152, %v6156
      %v6159 = vmul.f32 %v6151, %v6157
      %v6160 = vld [vmem:[%s10] sm:$0x1]
      %v6162 = vlaneseq
      %v6163 = vshrl.u32 %v6162, 7
      %v6164 = vsub.s32 0, %v6163
      %v6165 = vrot.slane %v6160, %v6164
      %v6167 = vadd.f32 %v6159, %v6165
      %v6168 = vmax.f32 %v6167, 0.0
      %vm6169 = vcmask 253952
      %6170 = vst.msk [vmem:[#allocation2] sm:$0x1] %vm6169, 0.0
      %6171 = vst.msk [vmem:[#allocation2 + $0x5] sm:$0x1] %vm6169, 0.0
      %6172 = vst.msk [vmem:[#allocation2 + $0x1] sm:$0xf] %vm6141, %v6168
      %v6173 = vld [vmem:[#allocation2] sm:$0xf]
      %v6174 = vld [vmem:[%s11] sm:$0xff]
      %v6175 = vld [vmem:[%s11 + $0x8] sm:$0xff]
      %v6176 = vld [vmem:[%s11 + $0x10] sm:$0xff]
      %v6177 = vld [vmem:[%s11 + $0x18] sm:$0xff]
      %v6178 = vld [vmem:[#allocation2 + $0x1] sm:$0xf]
      %s6179 = scalar_lea.vmem %s11, 32
      %v6180 = vld [vmem:[%s6179] sm:$0xff]
      %v6181 = vld [vmem:[%s6179 + $0x8] sm:$0xff]
      %v6182 = vld [vmem:[%s6179 + $0x10] sm:$0xff]
      %v6183 = vld [vmem:[%s6179 + $0x18] sm:$0xff]
      %v6185 = vsel %vm6066, %v6178, 0
      %6187 = vmatprep.subr.mxu0 0.0
      %6188 = vmatpush1.msra.mxu0 0.0
      %6189 = vmatprep.subr.mxu0 0.0
      %6190 = vmatpush1.msra.mxu0 0.0
      %6191 = vmatprep.subr.mxu0 0.0
      %6192 = vmatpush1.msra.mxu0 0.0
      %6193 = vmatprep.subr.mxu0 0.0
      %6194 = vmatpush1.msra.mxu0 0.0
      %6195 = vmatprep.subr.mxu0 0.0
      %6196 = vmatpush1.msra.mxu0 0.0
      %6197 = vmatprep.subr.mxu0 0.0
      %6198 = vmatpush1.msra.mxu0 0.0
      %6199 = vmatprep.subr.mxu0 0.0
      %6200 = vmatpush1.msra.mxu0 0.0
      %6201 = vmatprep.subr.mxu0 0.0
      %6202 = vmatpush1.msra.mxu0 0.0
      %6203 = vmatprep.subr.mxu0 0.0
      %6204 = vmatpush1.msra.mxu0 0.0
      %6205 = vmatprep.subr.mxu0 0.0
      %6206 = vmatpush1.msra.mxu0 0.0
      %6207 = vmatprep.subr.mxu0 0.0
      %6208 = vmatpush1.msra.mxu0 0.0
      %6209 = vmatprep.subr.mxu0 0.0
      %6210 = vmatpush1.msra.mxu0 0.0
      %6211 = vmatprep.subr.mxu0 0.0
      %6212 = vmatpush1.msra.mxu0 %v6183
      %6213 = vmatprep.subr.mxu0 0.0
      %6214 = vmatpush1.msra.mxu0 %v6182
      %6215 = vmatprep.subr.mxu0 0.0
      %6216 = vmatpush1.msra.mxu0 %v6181
      %6217 = vmatprep.subr.mxu0 0.0
      %6218 = vmatpush1.msra.mxu0 %v6180
      %6219 = vmatprep.subr.mxu0 0.0
      %6220 = vmatpush2.msra.mxu0 0.0
      %6221 = vmatprep.subr.mxu0 0.0
      %6222 = vmatpush2.msra.mxu0 0.0
      %6223 = vmatprep.subr.mxu0 0.0
      %6224 = vmatpush2.msra.mxu0 0.0
      %6225 = vmatprep.subr.mxu0 0.0
      %6226 = vmatpush2.msra.mxu0 0.0
      %6227 = vmatprep.subr.mxu0 0.0
      %6228 = vmatpush2.msra.mxu0 0.0
      %6229 = vmatprep.subr.mxu0 0.0
      %6230 = vmatpush2.msra.mxu0 0.0
      %6231 = vmatprep.subr.mxu0 0.0
      %6232 = vmatpush2.msra.mxu0 0.0
      %6233 = vmatprep.subr.mxu0 0.0
      %6234 = vmatpush2.msra.mxu0 0.0
      %6235 = vmatprep.subr.mxu0 0.0
      %6236 = vmatpush2.msra.mxu0 0.0
      %6237 = vmatprep.subr.mxu0 0.0
      %6238 = vmatpush2.msra.mxu0 0.0
      %6239 = vmatprep.subr.mxu0 0.0
      %6240 = vmatpush2.msra.mxu0 0.0
      %6241 = vmatprep.subr.mxu0 0.0
      %6242 = vmatpush2.msra.mxu0 0.0
      %6243 = vmatprep.subr.mxu0 0.0
      %6244 = vmatpush2.msra.mxu0 0.0
      %6245 = vmatprep.subr.mxu0 0.0
      %6246 = vmatpush2.msra.mxu0 0.0
      %6247 = vmatprep.subr.mxu0 0.0
      %6248 = vmatpush2.msra.mxu0 0.0
      %6249 = vmatprep.subr.mxu0 0.0
      %6250 = vmatpush2.msra.mxu0 0.0
      %6251 = vmatprep.mubr.f32.mxu0 0.0
      %6252 = vmatmul.mubr.f32.gmra.mxu0 %v6185
      %v6253 = vpop.f32.mrf.mxu0
      %v6254 = vadd.f32 0.0, %v6253
      %v6255 = vpop.f32.mrf.mxu0
      %6256 = vdwg.mxu0
      %v6258 = vsel %vm6066, %v6173, 0
      %6260 = vmatprep.subr.mxu0 0.0
      %6261 = vmatpush1.msra.mxu0 0.0
      %6262 = vmatprep.subr.mxu0 0.0
      %6263 = vmatpush1.msra.mxu0 0.0
      %6264 = vmatprep.subr.mxu0 0.0
      %6265 = vmatpush1.msra.mxu0 0.0
      %6266 = vmatprep.subr.mxu0 0.0
      %6267 = vmatpush1.msra.mxu0 0.0
      %6268 = vmatprep.subr.mxu0 0.0
      %6269 = vmatpush1.msra.mxu0 0.0
      %6270 = vmatprep.subr.mxu0 0.0
      %6271 = vmatpush1.msra.mxu0 0.0
      %6272 = vmatprep.subr.mxu0 0.0
      %6273 = vmatpush1.msra.mxu0 0.0
      %6274 = vmatprep.subr.mxu0 0.0
      %6275 = vmatpush1.msra.mxu0 0.0
      %6276 = vmatprep.subr.mxu0 0.0
      %6277 = vmatpush1.msra.mxu0 0.0
      %6278 = vmatprep.subr.mxu0 0.0
      %6279 = vmatpush1.msra.mxu0 0.0
      %6280 = vmatprep.subr.mxu0 0.0
      %6281 = vmatpush1.msra.mxu0 0.0
      %6282 = vmatprep.subr.mxu0 0.0
      %6283 = vmatpush1.msra.mxu0 0.0
      %6284 = vmatprep.subr.mxu0 0.0
      %6285 = vmatpush1.msra.mxu0 %v6177
      %6286 = vmatprep.subr.mxu0 0.0
      %6287 = vmatpush1.msra.mxu0 %v6176
      %6288 = vmatprep.subr.mxu0 0.0
      %6289 = vmatpush1.msra.mxu0 %v6175
      %6290 = vmatprep.subr.mxu0 0.0
      %6291 = vmatpush1.msra.mxu0 %v6174
      %6292 = vmatprep.subr.mxu0 0.0
      %6293 = vmatpush2.msra.mxu0 0.0
      %6294 = vmatprep.subr.mxu0 0.0
      %6295 = vmatpush2.msra.mxu0 0.0
      %6296 = vmatprep.subr.mxu0 0.0
      %6297 = vmatpush2.msra.mxu0 0.0
      %6298 = vmatprep.subr.mxu0 0.0
      %6299 = vmatpush2.msra.mxu0 0.0
      %6300 = vmatprep.subr.mxu0 0.0
      %6301 = vmatpush2.msra.mxu0 0.0
      %6302 = vmatprep.subr.mxu0 0.0
      %6303 = vmatpush2.msra.mxu0 0.0
      %6304 = vmatprep.subr.mxu0 0.0
      %6305 = vmatpush2.msra.mxu0 0.0
      %6306 = vmatprep.subr.mxu0 0.0
      %6307 = vmatpush2.msra.mxu0 0.0
      %6308 = vmatprep.subr.mxu0 0.0
      %6309 = vmatpush2.msra.mxu0 0.0
      %6310 = vmatprep.subr.mxu0 0.0
      %6311 = vmatpush2.msra.mxu0 0.0
      %6312 = vmatprep.subr.mxu0 0.0
      %6313 = vmatpush2.msra.mxu0 0.0
      %6314 = vmatprep.subr.mxu0 0.0
      %6315 = vmatpush2.msra.mxu0 0.0
      %6316 = vmatprep.subr.mxu0 0.0
      %6317 = vmatpush2.msra.mxu0 0.0
      %6318 = vmatprep.subr.mxu0 0.0
      %6319 = vmatpush2.msra.mxu0 0.0
      %6320 = vmatprep.subr.mxu0 0.0
      %6321 = vmatpush2.msra.mxu0 0.0
      %6322 = vmatprep.subr.mxu0 0.0
      %6323 = vmatpush2.msra.mxu0 0.0
      %6324 = vmatprep.mubr.f32.mxu0 0.0
      %6325 = vmatmul.mubr.f32.gmra.mxu0 %v6258
      %v6326 = vpop.f32.mrf.mxu0
      %v6327 = vadd.f32 %v6254, %v6326
      %v6328 = vpop.f32.mrf.mxu0
      %6329 = vdwg.mxu0
      %v6330 = vld [vmem:[#allocation2 + $0x2] sm:$0xf]
      %s6331 = scalar_lea.vmem %s11, 64
      %v6332 = vld [vmem:[%s6331] sm:$0xff]
      %v6333 = vld [vmem:[%s6331 + $0x8] sm:$0xff]
      %v6334 = vld [vmem:[%s6331 + $0x10] sm:$0xff]
      %v6335 = vld [vmem:[%s6331 + $0x18] sm:$0xff]
      %v6337 = vsel %vm6066, %v6330, 0
      %6339 = vmatprep.subr.mxu0 0.0
      %6340 = vmatpush1.msra.mxu0 0.0
      %6341 = vmatprep.subr.mxu0 0.0
      %6342 = vmatpush1.msra.mxu0 0.0
      %6343 = vmatprep.subr.mxu0 0.0
      %6344 = vmatpush1.msra.mxu0 0.0
      %6345 = vmatprep.subr.mxu0 0.0
      %6346 = vmatpush1.msra.mxu0 0.0
      %6347 = vmatprep.subr.mxu0 0.0
      %6348 = vmatpush1.msra.mxu0 0.0
      %6349 = vmatprep.subr.mxu0 0.0
      %6350 = vmatpush1.msra.mxu0 0.0
      %6351 = vmatprep.subr.mxu0 0.0
      %6352 = vmatpush1.msra.mxu0 0.0
      %6353 = vmatprep.subr.mxu0 0.0
      %6354 = vmatpush1.msra.mxu0 0.0
      %6355 = vmatprep.subr.mxu0 0.0
      %6356 = vmatpush1.msra.mxu0 0.0
      %6357 = vmatprep.subr.mxu0 0.0
      %6358 = vmatpush1.msra.mxu0 0.0
      %6359 = vmatprep.subr.mxu0 0.0
      %6360 = vmatpush1.msra.mxu0 0.0
      %6361 = vmatprep.subr.mxu0 0.0
      %6362 = vmatpush1.msra.mxu0 0.0
      %6363 = vmatprep.subr.mxu0 0.0
      %6364 = vmatpush1.msra.mxu0 %v6335
      %6365 = vmatprep.subr.mxu0 0.0
      %6366 = vmatpush1.msra.mxu0 %v6334
      %6367 = vmatprep.subr.mxu0 0.0
      %6368 = vmatpush1.msra.mxu0 %v6333
      %6369 = vmatprep.subr.mxu0 0.0
      %6370 = vmatpush1.msra.mxu0 %v6332
      %6371 = vmatprep.subr.mxu0 0.0
      %6372 = vmatpush2.msra.mxu0 0.0
      %6373 = vmatprep.subr.mxu0 0.0
      %6374 = vmatpush2.msra.mxu0 0.0
      %6375 = vmatprep.subr.mxu0 0.0
      %6376 = vmatpush2.msra.mxu0 0.0
      %6377 = vmatprep.subr.mxu0 0.0
      %6378 = vmatpush2.msra.mxu0 0.0
      %6379 = vmatprep.subr.mxu0 0.0
      %6380 = vmatpush2.msra.mxu0 0.0
      %6381 = vmatprep.subr.mxu0 0.0
      %6382 = vmatpush2.msra.mxu0 0.0
      %6383 = vmatprep.subr.mxu0 0.0
      %6384 = vmatpush2.msra.mxu0 0.0
      %6385 = vmatprep.subr.mxu0 0.0
      %6386 = vmatpush2.msra.mxu0 0.0
      %6387 = vmatprep.subr.mxu0 0.0
      %6388 = vmatpush2.msra.mxu0 0.0
      %6389 = vmatprep.subr.mxu0 0.0
      %6390 = vmatpush2.msra.mxu0 0.0
      %6391 = vmatprep.subr.mxu0 0.0
      %6392 = vmatpush2.msra.mxu0 0.0
      %6393 = vmatprep.subr.mxu0 0.0
      %6394 = vmatpush2.msra.mxu0 0.0
      %6395 = vmatprep.subr.mxu0 0.0
      %6396 = vmatpush2.msra.mxu0 0.0
      %6397 = vmatprep.subr.mxu0 0.0
      %6398 = vmatpush2.msra.mxu0 0.0
      %6399 = vmatprep.subr.mxu0 0.0
      %6400 = vmatpush2.msra.mxu0 0.0
      %6401 = vmatprep.subr.mxu0 0.0
      %6402 = vmatpush2.msra.mxu0 0.0
      %6403 = vmatprep.mubr.f32.mxu0 0.0
      %6404 = vmatmul.mubr.f32.gmra.mxu0 %v6337
      %v6405 = vpop.f32.mrf.mxu0
      %v6406 = vadd.f32 0.0, %v6405
      %v6407 = vpop.f32.mrf.mxu0
      %6408 = vdwg.mxu0
      %v6409 = vadd.f32 %v6327, %v6406
      %v6410 = vadd.f32 %v6409, %v6052
      %v6411 = vld [vmem:[%s12] sm:$0x1]
      %v6413 = vlaneseq
      %v6414 = vshrl.u32 %v6413, 7
      %v6415 = vsub.s32 0, %v6414
      %v6416 = vrot.slane %v6411, %v6415
      %v6418 = vmul.f32 %v6410, %v6416
      %v6419 = vld [vmem:[%s13] sm:$0x1]
      %v6421 = vlaneseq
      %v6422 = vshrl.u32 %v6421, 7
      %v6423 = vsub.s32 0, %v6422
      %v6424 = vrot.slane %v6419, %v6423
      %v6426 = vadd.f32 %v6418, %v6424
      %v6427 = vmax.f32 %v6426, 0.0
      %6428 = vst.msk [vmem:[#allocation2] sm:$0x1] %vm6169, 0.0
      %6429 = vst.msk [vmem:[#allocation2 + $0x5] sm:$0x1] %vm6169, 0.0
      %6430 = vst.msk [vmem:[#allocation2 + $0x1] sm:$0xf] %vm6141, %v6427
      %v6431 = vld [vmem:[#allocation2] sm:$0xf]
      %v6432 = vld [vmem:[%s14] sm:$0xff]
      %v6433 = vld [vmem:[%s14 + $0x8] sm:$0xff]
      %v6434 = vld [vmem:[%s14 + $0x10] sm:$0xff]
      %v6435 = vld [vmem:[%s14 + $0x18] sm:$0xff]
      %v6436 = vld [vmem:[#allocation2 + $0x1] sm:$0xf]
      %s6437 = scalar_lea.vmem %s14, 32
      %v6438 = vld [vmem:[%s6437] sm:$0xff]
      %v6439 = vld [vmem:[%s6437 + $0x8] sm:$0xff]
      %v6440 = vld [vmem:[%s6437 + $0x10] sm:$0xff]
      %v6441 = vld [vmem:[%s6437 + $0x18] sm:$0xff]
      %v6443 = vsel %vm6066, %v6436, 0
      %6445 = vmatprep.subr.mxu0 0.0
      %6446 = vmatpush1.msra.mxu0 0.0
      %6447 = vmatprep.subr.mxu0 0.0
      %6448 = vmatpush1.msra.mxu0 0.0
      %6449 = vmatprep.subr.mxu0 0.0
      %6450 = vmatpush1.msra.mxu0 0.0
      %6451 = vmatprep.subr.mxu0 0.0
      %6452 = vmatpush1.msra.mxu0 0.0
      %6453 = vmatprep.subr.mxu0 0.0
      %6454 = vmatpush1.msra.mxu0 0.0
      %6455 = vmatprep.subr.mxu0 0.0
      %6456 = vmatpush1.msra.mxu0 0.0
      %6457 = vmatprep.subr.mxu0 0.0
      %6458 = vmatpush1.msra.mxu0 0.0
      %6459 = vmatprep.subr.mxu0 0.0
      %6460 = vmatpush1.msra.mxu0 0.0
      %6461 = vmatprep.subr.mxu0 0.0
      %6462 = vmatpush1.msra.mxu0 0.0
      %6463 = vmatprep.subr.mxu0 0.0
      %6464 = vmatpush1.msra.mxu0 0.0
      %6465 = vmatprep.subr.mxu0 0.0
      %6466 = vmatpush1.msra.mxu0 0.0
      %6467 = vmatprep.subr.mxu0 0.0
      %6468 = vmatpush1.msra.mxu0 0.0
      %6469 = vmatprep.subr.mxu0 0.0
      %6470 = vmatpush1.msra.mxu0 %v6441
      %6471 = vmatprep.subr.mxu0 0.0
      %6472 = vmatpush1.msra.mxu0 %v6440
      %6473 = vmatprep.subr.mxu0 0.0
      %6474 = vmatpush1.msra.mxu0 %v6439
      %6475 = vmatprep.subr.mxu0 0.0
      %6476 = vmatpush1.msra.mxu0 %v6438
      %6477 = vmatprep.subr.mxu0 0.0
      %6478 = vmatpush2.msra.mxu0 0.0
      %6479 = vmatprep.subr.mxu0 0.0
      %6480 = vmatpush2.msra.mxu0 0.0
      %6481 = vmatprep.subr.mxu0 0.0
      %6482 = vmatpush2.msra.mxu0 0.0
      %6483 = vmatprep.subr.mxu0 0.0
      %6484 = vmatpush2.msra.mxu0 0.0
      %6485 = vmatprep.subr.mxu0 0.0
      %6486 = vmatpush2.msra.mxu0 0.0
      %6487 = vmatprep.subr.mxu0 0.0
      %6488 = vmatpush2.msra.mxu0 0.0
      %6489 = vmatprep.subr.mxu0 0.0
      %6490 = vmatpush2.msra.mxu0 0.0
      %6491 = vmatprep.subr.mxu0 0.0
      %6492 = vmatpush2.msra.mxu0 0.0
      %6493 = vmatprep.subr.mxu0 0.0
      %6494 = vmatpush2.msra.mxu0 0.0
      %6495 = vmatprep.subr.mxu0 0.0
      %6496 = vmatpush2.msra.mxu0 0.0
      %6497 = vmatprep.subr.mxu0 0.0
      %6498 = vmatpush2.msra.mxu0 0.0
      %6499 = vmatprep.subr.mxu0 0.0
      %6500 = vmatpush2.msra.mxu0 0.0
      %6501 = vmatprep.subr.mxu0 0.0
      %6502 = vmatpush2.msra.mxu0 0.0
      %6503 = vmatprep.subr.mxu0 0.0
      %6504 = vmatpush2.msra.mxu0 0.0
      %6505 = vmatprep.subr.mxu0 0.0
      %6506 = vmatpush2.msra.mxu0 0.0
      %6507 = vmatprep.subr.mxu0 0.0
      %6508 = vmatpush2.msra.mxu0 0.0
      %6509 = vmatprep.mubr.f32.mxu0 0.0
      %6510 = vmatmul.mubr.f32.gmra.mxu0 %v6443
      %v6511 = vpop.f32.mrf.mxu0
      %v6512 = vadd.f32 0.0, %v6511
      %v6513 = vpop.f32.mrf.mxu0
      %6514 = vdwg.mxu0
      %v6516 = vsel %vm6066, %v6431, 0
      %6518 = vmatprep.subr.mxu0 0.0
      %6519 = vmatpush1.msra.mxu0 0.0
      %6520 = vmatprep.subr.mxu0 0.0
      %6521 = vmatpush1.msra.mxu0 0.0
      %6522 = vmatprep.subr.mxu0 0.0
      %6523 = vmatpush1.msra.mxu0 0.0
      %6524 = vmatprep.subr.mxu0 0.0
      %6525 = vmatpush1.msra.mxu0 0.0
      %6526 = vmatprep.subr.mxu0 0.0
      %6527 = vmatpush1.msra.mxu0 0.0
      %6528 = vmatprep.subr.mxu0 0.0
      %6529 = vmatpush1.msra.mxu0 0.0
      %6530 = vmatprep.subr.mxu0 0.0
      %6531 = vmatpush1.msra.mxu0 0.0
      %6532 = vmatprep.subr.mxu0 0.0
      %6533 = vmatpush1.msra.mxu0 0.0
      %6534 = vmatprep.subr.mxu0 0.0
      %6535 = vmatpush1.msra.mxu0 0.0
      %6536 = vmatprep.subr.mxu0 0.0
      %6537 = vmatpush1.msra.mxu0 0.0
      %6538 = vmatprep.subr.mxu0 0.0
      %6539 = vmatpush1.msra.mxu0 0.0
      %6540 = vmatprep.subr.mxu0 0.0
      %6541 = vmatpush1.msra.mxu0 0.0
      %6542 = vmatprep.subr.mxu0 0.0
      %6543 = vmatpush1.msra.mxu0 %v6435
      %6544 = vmatprep.subr.mxu0 0.0
      %6545 = vmatpush1.msra.mxu0 %v6434
      %6546 = vmatprep.subr.mxu0 0.0
      %6547 = vmatpush1.msra.mxu0 %v6433
      %6548 = vmatprep.subr.mxu0 0.0
      %6549 = vmatpush1.msra.mxu0 %v6432
      %6550 = vmatprep.subr.mxu0 0.0
      %6551 = vmatpush2.msra.mxu0 0.0
      %6552 = vmatprep.subr.mxu0 0.0
      %6553 = vmatpush2.msra.mxu0 0.0
      %6554 = vmatprep.subr.mxu0 0.0
      %6555 = vmatpush2.msra.mxu0 0.0
      %6556 = vmatprep.subr.mxu0 0.0
      %6557 = vmatpush2.msra.mxu0 0.0
      %6558 = vmatprep.subr.mxu0 0.0
      %6559 = vmatpush2.msra.mxu0 0.0
      %6560 = vmatprep.subr.mxu0 0.0
      %6561 = vmatpush2.msra.mxu0 0.0
      %6562 = vmatprep.subr.mxu0 0.0
      %6563 = vmatpush2.msra.mxu0 0.0
      %6564 = vmatprep.subr.mxu0 0.0
      %6565 = vmatpush2.msra.mxu0 0.0
      %6566 = vmatprep.subr.mxu0 0.0
      %6567 = vmatpush2.msra.mxu0 0.0
      %6568 = vmatprep.subr.mxu0 0.0
      %6569 = vmatpush2.msra.mxu0 0.0
      %6570 = vmatprep.subr.mxu0 0.0
      %6571 = vmatpush2.msra.mxu0 0.0
      %6572 = vmatprep.subr.mxu0 0.0
      %6573 = vmatpush2.msra.mxu0 0.0
      %6574 = vmatprep.subr.mxu0 0.0
      %6575 = vmatpush2.msra.mxu0 0.0
      %6576 = vmatprep.subr.mxu0 0.0
      %6577 = vmatpush2.msra.mxu0 0.0
      %6578 = vmatprep.subr.mxu0 0.0
      %6579 = vmatpush2.msra.mxu0 0.0
      %6580 = vmatprep.subr.mxu0 0.0
      %6581 = vmatpush2.msra.mxu0 0.0
      %6582 = vmatprep.mubr.f32.mxu0 0.0
      %6583 = vmatmul.mubr.f32.gmra.mxu0 %v6516
      %v6584 = vpop.f32.mrf.mxu0
      %v6585 = vadd.f32 %v6512, %v6584
      %v6586 = vpop.f32.mrf.mxu0
      %6587 = vdwg.mxu0
      %v6588 = vld [vmem:[#allocation2 + $0x2] sm:$0xf]
      %s6589 = scalar_lea.vmem %s14, 64
      %v6590 = vld [vmem:[%s6589] sm:$0xff]
      %v6591 = vld [vmem:[%s6589 + $0x8] sm:$0xff]
      %v6592 = vld [vmem:[%s6589 + $0x10] sm:$0xff]
      %v6593 = vld [vmem:[%s6589 + $0x18] sm:$0xff]
      %v6595 = vsel %vm6066, %v6588, 0
      %6597 = vmatprep.subr.mxu0 0.0
      %6598 = vmatpush1.msra.mxu0 0.0
      %6599 = vmatprep.subr.mxu0 0.0
      %6600 = vmatpush1.msra.mxu0 0.0
      %6601 = vmatprep.subr.mxu0 0.0
      %6602 = vmatpush1.msra.mxu0 0.0
      %6603 = vmatprep.subr.mxu0 0.0
      %6604 = vmatpush1.msra.mxu0 0.0
      %6605 = vmatprep.subr.mxu0 0.0
      %6606 = vmatpush1.msra.mxu0 0.0
      %6607 = vmatprep.subr.mxu0 0.0
      %6608 = vmatpush1.msra.mxu0 0.0
      %6609 = vmatprep.subr.mxu0 0.0
      %6610 = vmatpush1.msra.mxu0 0.0
      %6611 = vmatprep.subr.mxu0 0.0
      %6612 = vmatpush1.msra.mxu0 0.0
      %6613 = vmatprep.subr.mxu0 0.0
      %6614 = vmatpush1.msra.mxu0 0.0
      %6615 = vmatprep.subr.mxu0 0.0
      %6616 = vmatpush1.msra.mxu0 0.0
      %6617 = vmatprep.subr.mxu0 0.0
      %6618 = vmatpush1.msra.mxu0 0.0
      %6619 = vmatprep.subr.mxu0 0.0
      %6620 = vmatpush1.msra.mxu0 0.0
      %6621 = vmatprep.subr.mxu0 0.0
      %6622 = vmatpush1.msra.mxu0 %v6593
      %6623 = vmatprep.subr.mxu0 0.0
      %6624 = vmatpush1.msra.mxu0 %v6592
      %6625 = vmatprep.subr.mxu0 0.0
      %6626 = vmatpush1.msra.mxu0 %v6591
      %6627 = vmatprep.subr.mxu0 0.0
      %6628 = vmatpush1.msra.mxu0 %v6590
      %6629 = vmatprep.subr.mxu0 0.0
      %6630 = vmatpush2.msra.mxu0 0.0
      %6631 = vmatprep.subr.mxu0 0.0
      %6632 = vmatpush2.msra.mxu0 0.0
      %6633 = vmatprep.subr.mxu0 0.0
      %6634 = vmatpush2.msra.mxu0 0.0
      %6635 = vmatprep.subr.mxu0 0.0
      %6636 = vmatpush2.msra.mxu0 0.0
      %6637 = vmatprep.subr.mxu0 0.0
      %6638 = vmatpush2.msra.mxu0 0.0
      %6639 = vmatprep.subr.mxu0 0.0
      %6640 = vmatpush2.msra.mxu0 0.0
      %6641 = vmatprep.subr.mxu0 0.0
      %6642 = vmatpush2.msra.mxu0 0.0
      %6643 = vmatprep.subr.mxu0 0.0
      %6644 = vmatpush2.msra.mxu0 0.0
      %6645 = vmatprep.subr.mxu0 0.0
      %6646 = vmatpush2.msra.mxu0 0.0
      %6647 = vmatprep.subr.mxu0 0.0
      %6648 = vmatpush2.msra.mxu0 0.0
      %6649 = vmatprep.subr.mxu0 0.0
      %6650 = vmatpush2.msra.mxu0 0.0
      %6651 = vmatprep.subr.mxu0 0.0
      %6652 = vmatpush2.msra.mxu0 0.0
      %6653 = vmatprep.subr.mxu0 0.0
      %6654 = vmatpush2.msra.mxu0 0.0
      %6655 = vmatprep.subr.mxu0 0.0
      %6656 = vmatpush2.msra.mxu0 0.0
      %6657 = vmatprep.subr.mxu0 0.0
      %6658 = vmatpush2.msra.mxu0 0.0
      %6659 = vmatprep.subr.mxu0 0.0
      %6660 = vmatpush2.msra.mxu0 0.0
      %6661 = vmatprep.mubr.f32.mxu0 0.0
      %6662 = vmatmul.mubr.f32.gmra.mxu0 %v6595
      %v6663 = vpop.f32.mrf.mxu0
      %v6664 = vadd.f32 0.0, %v6663
      %v6665 = vpop.f32.mrf.mxu0
      %6666 = vdwg.mxu0
      %v6667 = vadd.f32 %v6585, %v6664
      %v6668 = vld [vmem:[%s24] sm:$0xff]
      %v6669 = vld [vmem:[%s24 + $0x8] sm:$0x3]
      %v6671 = vsel %vm919, %v6668, 0
      %v6674 = vsel %vm919, %v6669, 0
      %v6677 = vsel %vm968, %v6667, 0
      %6679 = vmatprep.subr.mxu0 0.0
      %6680 = vmatpush1.msra.mxu0 0.0
      %6681 = vmatprep.subr.mxu0 0.0
      %6682 = vmatpush1.msra.mxu0 0.0
      %6683 = vmatprep.subr.mxu0 0.0
      %6684 = vmatpush1.msra.mxu0 0.0
      %6685 = vmatprep.subr.mxu0 0.0
      %6686 = vmatpush1.msra.mxu0 0.0
      %6687 = vmatprep.subr.mxu0 0.0
      %6688 = vmatpush1.msra.mxu0 0.0
      %6689 = vmatprep.subr.mxu0 0.0
      %6690 = vmatpush1.msra.mxu0 0.0
      %6691 = vmatprep.subr.mxu0 0.0
      %6692 = vmatpush1.msra.mxu0 0.0
      %6693 = vmatprep.subr.mxu0 0.0
      %6694 = vmatpush1.msra.mxu0 0.0
      %6695 = vmatprep.subr.mxu0 0.0
      %6696 = vmatpush1.msra.mxu0 0.0
      %6697 = vmatprep.subr.mxu0 0.0
      %6698 = vmatpush1.msra.mxu0 0.0
      %6699 = vmatprep.subr.mxu0 0.0
      %6700 = vmatpush1.msra.mxu0 0.0
      %6701 = vmatprep.subr.mxu0 0.0
      %6702 = vmatpush1.msra.mxu0 0.0
      %6703 = vmatprep.subr.mxu0 0.0
      %6704 = vmatpush1.msra.mxu0 0.0
      %6705 = vmatprep.subr.mxu0 0.0
      %6706 = vmatpush1.msra.mxu0 0.0
      %6707 = vmatprep.subr.mxu0 0.0
      %6708 = vmatpush1.msra.mxu0 0.0
      %6709 = vmatprep.subr.mxu0 0.0
      %6710 = vmatpush1.msra.mxu0 %v6677
      %6711 = vmatprep.subr.mxu0 0.0
      %6712 = vmatpush2.msra.mxu0 0.0
      %6713 = vmatprep.subr.mxu0 0.0
      %6714 = vmatpush2.msra.mxu0 0.0
      %6715 = vmatprep.subr.mxu0 0.0
      %6716 = vmatpush2.msra.mxu0 0.0
      %6717 = vmatprep.subr.mxu0 0.0
      %6718 = vmatpush2.msra.mxu0 0.0
      %6719 = vmatprep.subr.mxu0 0.0
      %6720 = vmatpush2.msra.mxu0 0.0
      %6721 = vmatprep.subr.mxu0 0.0
      %6722 = vmatpush2.msra.mxu0 0.0
      %6723 = vmatprep.subr.mxu0 0.0
      %6724 = vmatpush2.msra.mxu0 0.0
      %6725 = vmatprep.subr.mxu0 0.0
      %6726 = vmatpush2.msra.mxu0 0.0
      %6727 = vmatprep.subr.mxu0 0.0
      %6728 = vmatpush2.msra.mxu0 0.0
      %6729 = vmatprep.subr.mxu0 0.0
      %6730 = vmatpush2.msra.mxu0 0.0
      %6731 = vmatprep.subr.mxu0 0.0
      %6732 = vmatpush2.msra.mxu0 0.0
      %6733 = vmatprep.subr.mxu0 0.0
      %6734 = vmatpush2.msra.mxu0 0.0
      %6735 = vmatprep.subr.mxu0 0.0
      %6736 = vmatpush2.msra.mxu0 0.0
      %6737 = vmatprep.subr.mxu0 0.0
      %6738 = vmatpush2.msra.mxu0 0.0
      %6739 = vmatprep.subr.mxu0 0.0
      %6740 = vmatpush2.msra.mxu0 0.0
      %6741 = vmatprep.subr.mxu0 0.0
      %6742 = vmatpush2.msra.mxu0 0.0
      %6743 = vmatprep.mubr.f32.mxu0 0.0
      %6744 = vmatmul.mubr.f32.gmra.mxu0 %v6671
      %v6745 = vpop.f32.mrf.mxu0
      %v6746 = vadd.f32 %v5701, %v6745
      %v6747 = vpop.f32.mrf.mxu0
      %6748 = vmatprep.mubr.f32.mxu0 0.0
      %6749 = vmatmul.mubr.f32.gmra.mxu0 %v6674
      %v6750 = vpop.f32.mrf.mxu0
      %v6751 = vadd.f32 %v5706, %v6750
      %v6752 = vpop.f32.mrf.mxu0
      %6753 = vdwg.mxu0
      %v6754 = vld [vmem:[%s15] sm:$0x1]
      %v6756 = vlaneseq
      %v6757 = vshrl.u32 %v6756, 7
      %v6758 = vsub.s32 0, %v6757
      %v6759 = vrot.slane %v6754, %v6758
      %v6761 = vmul.f32 %v6746, %v6759
      %v6762 = vmul.f32 %v6751, %v6759
      %v6763 = vld [vmem:[%s16] sm:$0x1]
      %v6765 = vlaneseq
      %v6766 = vshrl.u32 %v6765, 7
      %v6767 = vsub.s32 0, %v6766
      %v6768 = vrot.slane %v6763, %v6767
      %v6770 = vadd.f32 %v6761, %v6768
      %v6771 = vadd.f32 %v6762, %v6768
      %v6772 = vmax.f32 %v6770, 0.0
      %v6773 = vmax.f32 %v6771, 0.0
      %vm6774 = vcmask 516096
      %6775 = vst.msk [vmem:[#allocation2] sm:$0x1] %vm6774, 0.0
      %6776 = vst.msk [vmem:[#allocation2 + $0xb] sm:$0x1] %vm6774, 0.0
      %6777 = vst.msk [vmem:[#allocation2 + $0x1] sm:$0xff] %vm5731, %v6772
      %vm6778 = vcmask 517120
      %6779 = vst.msk [vmem:[#allocation2 + $0x9] sm:$0x3] %vm6778, %v6773
      %v6780 = vld [vmem:[#allocation2] sm:$0xff]
      %v6781 = vld [vmem:[#allocation2 + $0x8] sm:$0x3]
      %v6782 = vld [vmem:[%s17] sm:$0xff]
      %v6783 = vld [vmem:[%s17 + $0x8] sm:$0xff]
      %v6784 = vld [vmem:[%s17 + $0x10] sm:$0xff]
      %v6785 = vld [vmem:[%s17 + $0x18] sm:$0xff]
      %v6786 = vld [vmem:[%s17 + $0x20] sm:$0xff]
      %v6787 = vld [vmem:[%s17 + $0x28] sm:$0xff]
      %v6788 = vld [vmem:[%s17 + $0x30] sm:$0xff]
      %v6789 = vld [vmem:[%s17 + $0x38] sm:$0xff]
      %v6790 = vld [vmem:[#allocation2 + $0x1] sm:$0xff]
      %v6791 = vld [vmem:[#allocation2 + $0x9] sm:$0x3]
      %s6792 = scalar_lea.vmem %s17, 64
      %v6793 = vld [vmem:[%s6792] sm:$0xff]
      %v6794 = vld [vmem:[%s6792 + $0x8] sm:$0xff]
      %v6795 = vld [vmem:[%s6792 + $0x10] sm:$0xff]
      %v6796 = vld [vmem:[%s6792 + $0x18] sm:$0xff]
      %v6797 = vld [vmem:[%s6792 + $0x20] sm:$0xff]
      %v6798 = vld [vmem:[%s6792 + $0x28] sm:$0xff]
      %v6799 = vld [vmem:[%s6792 + $0x30] sm:$0xff]
      %v6800 = vld [vmem:[%s6792 + $0x38] sm:$0xff]
      %v6802 = vsel %vm5731, %v6790, 0
      %v6805 = vsel %vm5731, %v6791, 0
      %6807 = vmatprep.subr.mxu0 0.0
      %6808 = vmatpush1.msra.mxu0 0.0
      %6809 = vmatprep.subr.mxu0 0.0
      %6810 = vmatpush1.msra.mxu0 0.0
      %6811 = vmatprep.subr.mxu0 0.0
      %6812 = vmatpush1.msra.mxu0 0.0
      %6813 = vmatprep.subr.mxu0 0.0
      %6814 = vmatpush1.msra.mxu0 0.0
      %6815 = vmatprep.subr.mxu0 0.0
      %6816 = vmatpush1.msra.mxu0 0.0
      %6817 = vmatprep.subr.mxu0 0.0
      %6818 = vmatpush1.msra.mxu0 0.0
      %6819 = vmatprep.subr.mxu0 0.0
      %6820 = vmatpush1.msra.mxu0 0.0
      %6821 = vmatprep.subr.mxu0 0.0
      %6822 = vmatpush1.msra.mxu0 0.0
      %6823 = vmatprep.subr.mxu0 0.0
      %6824 = vmatpush1.msra.mxu0 %v6800
      %6825 = vmatprep.subr.mxu0 0.0
      %6826 = vmatpush1.msra.mxu0 %v6799
      %6827 = vmatprep.subr.mxu0 0.0
      %6828 = vmatpush1.msra.mxu0 %v6798
      %6829 = vmatprep.subr.mxu0 0.0
      %6830 = vmatpush1.msra.mxu0 %v6797
      %6831 = vmatprep.subr.mxu0 0.0
      %6832 = vmatpush1.msra.mxu0 %v6796
      %6833 = vmatprep.subr.mxu0 0.0
      %6834 = vmatpush1.msra.mxu0 %v6795
      %6835 = vmatprep.subr.mxu0 0.0
      %6836 = vmatpush1.msra.mxu0 %v6794
      %6837 = vmatprep.subr.mxu0 0.0
      %6838 = vmatpush1.msra.mxu0 %v6793
      %6839 = vmatprep.subr.mxu0 0.0
      %6840 = vmatpush2.msra.mxu0 0.0
      %6841 = vmatprep.subr.mxu0 0.0
      %6842 = vmatpush2.msra.mxu0 0.0
      %6843 = vmatprep.subr.mxu0 0.0
      %6844 = vmatpush2.msra.mxu0 0.0
      %6845 = vmatprep.subr.mxu0 0.0
      %6846 = vmatpush2.msra.mxu0 0.0
      %6847 = vmatprep.subr.mxu0 0.0
      %6848 = vmatpush2.msra.mxu0 0.0
      %6849 = vmatprep.subr.mxu0 0.0
      %6850 = vmatpush2.msra.mxu0 0.0
      %6851 = vmatprep.subr.mxu0 0.0
      %6852 = vmatpush2.msra.mxu0 0.0
      %6853 = vmatprep.subr.mxu0 0.0
      %6854 = vmatpush2.msra.mxu0 0.0
      %6855 = vmatprep.subr.mxu0 0.0
      %6856 = vmatpush2.msra.mxu0 0.0
      %6857 = vmatprep.subr.mxu0 0.0
      %6858 = vmatpush2.msra.mxu0 0.0
      %6859 = vmatprep.subr.mxu0 0.0
      %6860 = vmatpush2.msra.mxu0 0.0
      %6861 = vmatprep.subr.mxu0 0.0
      %6862 = vmatpush2.msra.mxu0 0.0
      %6863 = vmatprep.subr.mxu0 0.0
      %6864 = vmatpush2.msra.mxu0 0.0
      %6865 = vmatprep.subr.mxu0 0.0
      %6866 = vmatpush2.msra.mxu0 0.0
      %6867 = vmatprep.subr.mxu0 0.0
      %6868 = vmatpush2.msra.mxu0 0.0
      %6869 = vmatprep.subr.mxu0 0.0
      %6870 = vmatpush2.msra.mxu0 0.0
      %6871 = vmatprep.mubr.f32.mxu0 0.0
      %6872 = vmatmul.mubr.f32.gmra.mxu0 %v6802
      %v6873 = vpop.f32.mrf.mxu0
      %v6874 = vadd.f32 0.0, %v6873
      %v6875 = vpop.f32.mrf.mxu0
      %6876 = vmatprep.mubr.f32.mxu0 0.0
      %6877 = vmatmul.mubr.f32.gmra.mxu0 %v6805
      %v6878 = vpop.f32.mrf.mxu0
      %v6879 = vadd.f32 0.0, %v6878
      %v6880 = vpop.f32.mrf.mxu0
      %6881 = vdwg.mxu0
      %v6883 = vsel %vm5731, %v6780, 0
      %v6886 = vsel %vm5731, %v6781, 0
      %6888 = vmatprep.subr.mxu0 0.0
      %6889 = vmatpush1.msra.mxu0 0.0
      %6890 = vmatprep.subr.mxu0 0.0
      %6891 = vmatpush1.msra.mxu0 0.0
      %6892 = vmatprep.subr.mxu0 0.0
      %6893 = vmatpush1.msra.mxu0 0.0
      %6894 = vmatprep.subr.mxu0 0.0
      %6895 = vmatpush1.msra.mxu0 0.0
      %6896 = vmatprep.subr.mxu0 0.0
      %6897 = vmatpush1.msra.mxu0 0.0
      %6898 = vmatprep.subr.mxu0 0.0
      %6899 = vmatpush1.msra.mxu0 0.0
      %6900 = vmatprep.subr.mxu0 0.0
      %6901 = vmatpush1.msra.mxu0 0.0
      %6902 = vmatprep.subr.mxu0 0.0
      %6903 = vmatpush1.msra.mxu0 0.0
      %6904 = vmatprep.subr.mxu0 0.0
      %6905 = vmatpush1.msra.mxu0 %v6789
      %6906 = vmatprep.subr.mxu0 0.0
      %6907 = vmatpush1.msra.mxu0 %v6788
      %6908 = vmatprep.subr.mxu0 0.0
      %6909 = vmatpush1.msra.mxu0 %v6787
      %6910 = vmatprep.subr.mxu0 0.0
      %6911 = vmatpush1.msra.mxu0 %v6786
      %6912 = vmatprep.subr.mxu0 0.0
      %6913 = vmatpush1.msra.mxu0 %v6785
      %6914 = vmatprep.subr.mxu0 0.0
      %6915 = vmatpush1.msra.mxu0 %v6784
      %6916 = vmatprep.subr.mxu0 0.0
      %6917 = vmatpush1.msra.mxu0 %v6783
      %6918 = vmatprep.subr.mxu0 0.0
      %6919 = vmatpush1.msra.mxu0 %v6782
      %6920 = vmatprep.subr.mxu0 0.0
      %6921 = vmatpush2.msra.mxu0 0.0
      %6922 = vmatprep.subr.mxu0 0.0
      %6923 = vmatpush2.msra.mxu0 0.0
      %6924 = vmatprep.subr.mxu0 0.0
      %6925 = vmatpush2.msra.mxu0 0.0
      %6926 = vmatprep.subr.mxu0 0.0
      %6927 = vmatpush2.msra.mxu0 0.0
      %6928 = vmatprep.subr.mxu0 0.0
      %6929 = vmatpush2.msra.mxu0 0.0
      %6930 = vmatprep.subr.mxu0 0.0
      %6931 = vmatpush2.msra.mxu0 0.0
      %6932 = vmatprep.subr.mxu0 0.0
      %6933 = vmatpush2.msra.mxu0 0.0
      %6934 = vmatprep.subr.mxu0 0.0
      %6935 = vmatpush2.msra.mxu0 0.0
      %6936 = vmatprep.subr.mxu0 0.0
      %6937 = vmatpush2.msra.mxu0 0.0
      %6938 = vmatprep.subr.mxu0 0.0
      %6939 = vmatpush2.msra.mxu0 0.0
      %6940 = vmatprep.subr.mxu0 0.0
      %6941 = vmatpush2.msra.mxu0 0.0
      %6942 = vmatprep.subr.mxu0 0.0
      %6943 = vmatpush2.msra.mxu0 0.0
      %6944 = vmatprep.subr.mxu0 0.0
      %6945 = vmatpush2.msra.mxu0 0.0
      %6946 = vmatprep.subr.mxu0 0.0
      %6947 = vmatpush2.msra.mxu0 0.0
      %6948 = vmatprep.subr.mxu0 0.0
      %6949 = vmatpush2.msra.mxu0 0.0
      %6950 = vmatprep.subr.mxu0 0.0
      %6951 = vmatpush2.msra.mxu0 0.0
      %6952 = vmatprep.mubr.f32.mxu0 0.0
      %6953 = vmatmul.mubr.f32.gmra.mxu0 %v6883
      %v6954 = vpop.f32.mrf.mxu0
      %v6955 = vadd.f32 %v6874, %v6954
      %v6956 = vpop.f32.mrf.mxu0
      %6957 = vmatprep.mubr.f32.mxu0 0.0
      %6958 = vmatmul.mubr.f32.gmra.mxu0 %v6886
      %v6959 = vpop.f32.mrf.mxu0
      %v6960 = vadd.f32 %v6879, %v6959
      %v6961 = vpop.f32.mrf.mxu0
      %6962 = vdwg.mxu0
      %v6963 = vld [vmem:[#allocation2 + $0x2] sm:$0xff]
      %v6964 = vld [vmem:[#allocation2 + $0xa] sm:$0x3]
      %s6965 = scalar_lea.vmem %s17, 128
      %v6966 = vld [vmem:[%s6965] sm:$0xff]
      %v6967 = vld [vmem:[%s6965 + $0x8] sm:$0xff]
      %v6968 = vld [vmem:[%s6965 + $0x10] sm:$0xff]
      %v6969 = vld [vmem:[%s6965 + $0x18] sm:$0xff]
      %v6970 = vld [vmem:[%s6965 + $0x20] sm:$0xff]
      %v6971 = vld [vmem:[%s6965 + $0x28] sm:$0xff]
      %v6972 = vld [vmem:[%s6965 + $0x30] sm:$0xff]
      %v6973 = vld [vmem:[%s6965 + $0x38] sm:$0xff]
      %v6975 = vsel %vm5731, %v6963, 0
      %v6978 = vsel %vm5731, %v6964, 0
      %6980 = vmatprep.subr.mxu0 0.0
      %6981 = vmatpush1.msra.mxu0 0.0
      %6982 = vmatprep.subr.mxu0 0.0
      %6983 = vmatpush1.msra.mxu0 0.0
      %6984 = vmatprep.subr.mxu0 0.0
      %6985 = vmatpush1.msra.mxu0 0.0
      %6986 = vmatprep.subr.mxu0 0.0
      %6987 = vmatpush1.msra.mxu0 0.0
      %6988 = vmatprep.subr.mxu0 0.0
      %6989 = vmatpush1.msra.mxu0 0.0
      %6990 = vmatprep.subr.mxu0 0.0
      %6991 = vmatpush1.msra.mxu0 0.0
      %6992 = vmatprep.subr.mxu0 0.0
      %6993 = vmatpush1.msra.mxu0 0.0
      %6994 = vmatprep.subr.mxu0 0.0
      %6995 = vmatpush1.msra.mxu0 0.0
      %6996 = vmatprep.subr.mxu0 0.0
      %6997 = vmatpush1.msra.mxu0 %v6973
      %6998 = vmatprep.subr.mxu0 0.0
      %6999 = vmatpush1.msra.mxu0 %v6972
      %7000 = vmatprep.subr.mxu0 0.0
      %7001 = vmatpush1.msra.mxu0 %v6971
      %7002 = vmatprep.subr.mxu0 0.0
      %7003 = vmatpush1.msra.mxu0 %v6970
      %7004 = vmatprep.subr.mxu0 0.0
      %7005 = vmatpush1.msra.mxu0 %v6969
      %7006 = vmatprep.subr.mxu0 0.0
      %7007 = vmatpush1.msra.mxu0 %v6968
      %7008 = vmatprep.subr.mxu0 0.0
      %7009 = vmatpush1.msra.mxu0 %v6967
      %7010 = vmatprep.subr.mxu0 0.0
      %7011 = vmatpush1.msra.mxu0 %v6966
      %7012 = vmatprep.subr.mxu0 0.0
      %7013 = vmatpush2.msra.mxu0 0.0
      %7014 = vmatprep.subr.mxu0 0.0
      %7015 = vmatpush2.msra.mxu0 0.0
      %7016 = vmatprep.subr.mxu0 0.0
      %7017 = vmatpush2.msra.mxu0 0.0
      %7018 = vmatprep.subr.mxu0 0.0
      %7019 = vmatpush2.msra.mxu0 0.0
      %7020 = vmatprep.subr.mxu0 0.0
      %7021 = vmatpush2.msra.mxu0 0.0
      %7022 = vmatprep.subr.mxu0 0.0
      %7023 = vmatpush2.msra.mxu0 0.0
      %7024 = vmatprep.subr.mxu0 0.0
      %7025 = vmatpush2.msra.mxu0 0.0
      %7026 = vmatprep.subr.mxu0 0.0
      %7027 = vmatpush2.msra.mxu0 0.0
      %7028 = vmatprep.subr.mxu0 0.0
      %7029 = vmatpush2.msra.mxu0 0.0
      %7030 = vmatprep.subr.mxu0 0.0
      %7031 = vmatpush2.msra.mxu0 0.0
      %7032 = vmatprep.subr.mxu0 0.0
      %7033 = vmatpush2.msra.mxu0 0.0
      %7034 = vmatprep.subr.mxu0 0.0
      %7035 = vmatpush2.msra.mxu0 0.0
      %7036 = vmatprep.subr.mxu0 0.0
      %7037 = vmatpush2.msra.mxu0 0.0
      %7038 = vmatprep.subr.mxu0 0.0
      %7039 = vmatpush2.msra.mxu0 0.0
      %7040 = vmatprep.subr.mxu0 0.0
      %7041 = vmatpush2.msra.mxu0 0.0
      %7042 = vmatprep.subr.mxu0 0.0
      %7043 = vmatpush2.msra.mxu0 0.0
      %7044 = vmatprep.mubr.f32.mxu0 0.0
      %7045 = vmatmul.mubr.f32.gmra.mxu0 %v6975
      %v7046 = vpop.f32.mrf.mxu0
      %v7047 = vadd.f32 0.0, %v7046
      %v7048 = vpop.f32.mrf.mxu0
      %7049 = vmatprep.mubr.f32.mxu0 0.0
      %7050 = vmatmul.mubr.f32.gmra.mxu0 %v6978
      %v7051 = vpop.f32.mrf.mxu0
      %v7052 = vadd.f32 0.0, %v7051
      %v7053 = vpop.f32.mrf.mxu0
      %7054 = vdwg.mxu0
      %v7055 = vadd.f32 %v6955, %v7047
      %v7056 = vadd.f32 %v6960, %v7052
      %v7057 = vld [vmem:[%s25] sm:$0xff]
      %v7058 = vld [vmem:[%s25 + $0x8] sm:$0xff]
      %v7059 = vld [vmem:[%s25 + $0x10] sm:$0xff]
      %v7060 = vld [vmem:[%s25 + $0x18] sm:$0xff]
      %v7061 = vld [vmem:[%s25 + $0x20] sm:$0xff]
      %v7062 = vld [vmem:[%s25 + $0x28] sm:$0x7f]
      %vm7063 = vcmask 80896
      %v7065 = vsel %vm7063, %v7057, 0
      %v7068 = vsel %vm7063, %v7058, 0
      %v7071 = vsel %vm7063, %v7059, 0
      %v7074 = vsel %vm7063, %v7060, 0
      %v7077 = vsel %vm7063, %v7061, 0
      %v7080 = vsel %vm7063, %v7062, 0
      %v7083 = vsel %vm2637, %v7056, 0
      %7085 = vmatprep.subr.mxu0 0.0
      %7086 = vmatpush1.msra.mxu0 0.0
      %7087 = vmatprep.subr.mxu0 0.0
      %7088 = vmatpush1.msra.mxu0 0.0
      %7089 = vmatprep.subr.mxu0 0.0
      %7090 = vmatpush1.msra.mxu0 0.0
      %7091 = vmatprep.subr.mxu0 0.0
      %7092 = vmatpush1.msra.mxu0 0.0
      %7093 = vmatprep.subr.mxu0 0.0
      %7094 = vmatpush1.msra.mxu0 0.0
      %7095 = vmatprep.subr.mxu0 0.0
      %7096 = vmatpush1.msra.mxu0 0.0
      %7097 = vmatprep.subr.mxu0 0.0
      %7098 = vmatpush1.msra.mxu0 0.0
      %7099 = vmatprep.subr.mxu0 0.0
      %7100 = vmatpush1.msra.mxu0 0.0
      %7101 = vmatprep.subr.mxu0 0.0
      %7102 = vmatpush1.msra.mxu0 0.0
      %7103 = vmatprep.subr.mxu0 0.0
      %7104 = vmatpush1.msra.mxu0 0.0
      %7105 = vmatprep.subr.mxu0 0.0
      %7106 = vmatpush1.msra.mxu0 0.0
      %7107 = vmatprep.subr.mxu0 0.0
      %7108 = vmatpush1.msra.mxu0 0.0
      %7109 = vmatprep.subr.mxu0 0.0
      %7110 = vmatpush1.msra.mxu0 0.0
      %7111 = vmatprep.subr.mxu0 0.0
      %7112 = vmatpush1.msra.mxu0 0.0
      %7113 = vmatprep.subr.mxu0 0.0
      %7114 = vmatpush1.msra.mxu0 %v7083
      %7115 = vmatprep.subr.mxu0 0.0
      %7116 = vmatpush1.msra.mxu0 %v7055
      %7117 = vmatprep.subr.mxu0 0.0
      %7118 = vmatpush2.msra.mxu0 0.0
      %7119 = vmatprep.subr.mxu0 0.0
      %7120 = vmatpush2.msra.mxu0 0.0
      %7121 = vmatprep.subr.mxu0 0.0
      %7122 = vmatpush2.msra.mxu0 0.0
      %7123 = vmatprep.subr.mxu0 0.0
      %7124 = vmatpush2.msra.mxu0 0.0
      %7125 = vmatprep.subr.mxu0 0.0
      %7126 = vmatpush2.msra.mxu0 0.0
      %7127 = vmatprep.subr.mxu0 0.0
      %7128 = vmatpush2.msra.mxu0 0.0
      %7129 = vmatprep.subr.mxu0 0.0
      %7130 = vmatpush2.msra.mxu0 0.0
      %7131 = vmatprep.subr.mxu0 0.0
      %7132 = vmatpush2.msra.mxu0 0.0
      %7133 = vmatprep.subr.mxu0 0.0
      %7134 = vmatpush2.msra.mxu0 0.0
      %7135 = vmatprep.subr.mxu0 0.0
      %7136 = vmatpush2.msra.mxu0 0.0
      %7137 = vmatprep.subr.mxu0 0.0
      %7138 = vmatpush2.msra.mxu0 0.0
      %7139 = vmatprep.subr.mxu0 0.0
      %7140 = vmatpush2.msra.mxu0 0.0
      %7141 = vmatprep.subr.mxu0 0.0
      %7142 = vmatpush2.msra.mxu0 0.0
      %7143 = vmatprep.subr.mxu0 0.0
      %7144 = vmatpush2.msra.mxu0 0.0
      %7145 = vmatprep.subr.mxu0 0.0
      %7146 = vmatpush2.msra.mxu0 0.0
      %7147 = vmatprep.subr.mxu0 0.0
      %7148 = vmatpush2.msra.mxu0 0.0
      %7149 = vmatprep.mubr.f32.mxu0 0.0
      %7150 = vmatmul.mubr.f32.gmra.mxu0 %v7065
      %v7151 = vpop.f32.mrf.mxu0
      %v7152 = vadd.f32 %v4860, %v7151
      %v7153 = vpop.f32.mrf.mxu0
      %7154 = vmatprep.mubr.f32.mxu0 0.0
      %7155 = vmatmul.mubr.f32.gmra.mxu0 %v7068
      %v7156 = vpop.f32.mrf.mxu0
      %v7157 = vadd.f32 %v4865, %v7156
      %v7158 = vpop.f32.mrf.mxu0
      %7159 = vmatprep.mubr.f32.mxu0 0.0
      %7160 = vmatmul.mubr.f32.gmra.mxu0 %v7071
      %v7161 = vpop.f32.mrf.mxu0
      %v7162 = vadd.f32 %v4870, %v7161
      %v7163 = vpop.f32.mrf.mxu0
      %7164 = vmatprep.mubr.f32.mxu0 0.0
      %7165 = vmatmul.mubr.f32.gmra.mxu0 %v7074
      %v7166 = vpop.f32.mrf.mxu0
      %v7167 = vadd.f32 %v4875, %v7166
      %v7168 = vpop.f32.mrf.mxu0
      %7169 = vmatprep.mubr.f32.mxu0 0.0
      %7170 = vmatmul.mubr.f32.gmra.mxu0 %v7077
      %v7171 = vpop.f32.mrf.mxu0
      %v7172 = vadd.f32 %v4880, %v7171
      %v7173 = vpop.f32.mrf.mxu0
      %7174 = vmatprep.mubr.f32.mxu0 0.0
      %7175 = vmatmul.mubr.f32.gmra.mxu0 %v7080
      %v7176 = vpop.f32.mrf.mxu0
      %v7177 = vadd.f32 %v4885, %v7176
      %v7178 = vpop.f32.mrf.mxu0
      %7179 = vdwg.mxu0
      %v7180 = vld [vmem:[%s18] sm:$0x1]
      %v7182 = vlaneseq
      %v7183 = vshrl.u32 %v7182, 7
      %v7184 = vsub.s32 0, %v7183
      %v7185 = vrot.slane %v7180, %v7184
      %v7187 = vmul.f32 %v7152, %v7185
      %v7188 = vmul.f32 %v7157, %v7185
      %v7189 = vmul.f32 %v7162, %v7185
      %v7190 = vmul.f32 %v7167, %v7185
      %v7191 = vmul.f32 %v7172, %v7185
      %v7192 = vmul.f32 %v7177, %v7185
      %v7193 = vld [vmem:[%s19] sm:$0x1]
      %v7195 = vlaneseq
      %v7196 = vshrl.u32 %v7195, 7
      %v7197 = vsub.s32 0, %v7196
      %v7198 = vrot.slane %v7193, %v7197
      %v7200 = vadd.f32 %v7187, %v7198
      %v7201 = vadd.f32 %v7188, %v7198
      %v7202 = vadd.f32 %v7189, %v7198
      %v7203 = vadd.f32 %v7190, %v7198
      %v7204 = vadd.f32 %v7191, %v7198
      %v7205 = vadd.f32 %v7192, %v7198
      %v7206 = vmax.f32 %v7200, 0.0
      %v7207 = vmax.f32 %v7201, 0.0
      %v7208 = vmax.f32 %v7202, 0.0
      %v7209 = vmax.f32 %v7203, 0.0
      %v7210 = vmax.f32 %v7204, 0.0
      %v7211 = vmax.f32 %v7205, 0.0
      %7212 = vst [vmem:[#allocation2] sm:$0x1] 0.0
      %7213 = vst [vmem:[#allocation2 + $0x30] sm:$0x1] 0.0
      %7214 = vst [vmem:[#allocation2 + $0x1] sm:$0xff] %v7206
      %7215 = vst [vmem:[#allocation2 + $0x9] sm:$0xff] %v7207
      %7216 = vst [vmem:[#allocation2 + $0x11] sm:$0xff] %v7208
      %7217 = vst [vmem:[#allocation2 + $0x19] sm:$0xff] %v7209
      %7218 = vst [vmem:[#allocation2 + $0x21] sm:$0xff] %v7210
      %7219 = vst [vmem:[#allocation2 + $0x29] sm:$0x7f] %v7211
      %v7220 = vld [vmem:[#allocation2] sm:$0xff]
      %v7221 = vld [vmem:[#allocation2 + $0x8] sm:$0xff]
      %v7222 = vld [vmem:[#allocation2 + $0x10] sm:$0xff]
      %v7223 = vld [vmem:[#allocation2 + $0x18] sm:$0xff]
      %v7224 = vld [vmem:[#allocation2 + $0x20] sm:$0xff]
      %v7225 = vld [vmem:[#allocation2 + $0x28] sm:$0x7f]
      %v7226 = vld [vmem:[%s20] sm:$0xff]
      %v7227 = vld [vmem:[%s20 + $0x8] sm:$0xff]
      %v7228 = vld [vmem:[%s20 + $0x10] sm:$0xff]
      %v7229 = vld [vmem:[%s20 + $0x18] sm:$0xff]
      %v7230 = vld [vmem:[%s20 + $0x20] sm:$0xff]
      %v7231 = vld [vmem:[%s20 + $0x28] sm:$0xff]
      %v7232 = vld [vmem:[%s20 + $0x30] sm:$0xff]
      %v7233 = vld [vmem:[%s20 + $0x38] sm:$0xff]
      %v7234 = vld [vmem:[%s20 + $0x40] sm:$0xff]
      %v7235 = vld [vmem:[%s20 + $0x48] sm:$0xff]
      %v7236 = vld [vmem:[%s20 + $0x50] sm:$0xff]
      %v7237 = vld [vmem:[%s20 + $0x58] sm:$0xff]
      %v7238 = vld [vmem:[%s20 + $0x60] sm:$0xff]
      %v7239 = vld [vmem:[%s20 + $0x68] sm:$0xff]
      %v7240 = vld [vmem:[%s20 + $0x70] sm:$0xff]
      %v7241 = vld [vmem:[%s20 + $0x78] sm:$0xff]
      %v7242 = vld [vmem:[#allocation2 + $0x1] sm:$0xff]
      %v7243 = vld [vmem:[#allocation2 + $0x9] sm:$0xff]
      %v7244 = vld [vmem:[#allocation2 + $0x11] sm:$0xff]
      %v7245 = vld [vmem:[#allocation2 + $0x19] sm:$0xff]
      %v7246 = vld [vmem:[#allocation2 + $0x21] sm:$0xff]
      %v7247 = vld [vmem:[#allocation2 + $0x29] sm:$0x7f]
      %s7248 = scalar_lea.vmem %s20, 128
      %v7249 = vld [vmem:[%s7248] sm:$0xff]
      %v7250 = vld [vmem:[%s7248 + $0x8] sm:$0xff]
      %v7251 = vld [vmem:[%s7248 + $0x10] sm:$0xff]
      %v7252 = vld [vmem:[%s7248 + $0x18] sm:$0xff]
      %v7253 = vld [vmem:[%s7248 + $0x20] sm:$0xff]
      %v7254 = vld [vmem:[%s7248 + $0x28] sm:$0xff]
      %v7255 = vld [vmem:[%s7248 + $0x30] sm:$0xff]
      %v7256 = vld [vmem:[%s7248 + $0x38] sm:$0xff]
      %v7257 = vld [vmem:[%s7248 + $0x40] sm:$0xff]
      %v7258 = vld [vmem:[%s7248 + $0x48] sm:$0xff]
      %v7259 = vld [vmem:[%s7248 + $0x50] sm:$0xff]
      %v7260 = vld [vmem:[%s7248 + $0x58] sm:$0xff]
      %v7261 = vld [vmem:[%s7248 + $0x60] sm:$0xff]
      %v7262 = vld [vmem:[%s7248 + $0x68] sm:$0xff]
      %v7263 = vld [vmem:[%s7248 + $0x70] sm:$0xff]
      %v7264 = vld [vmem:[%s7248 + $0x78] sm:$0xff]
      %7265 = vmatprep.subr.mxu0 0.0
      %7266 = vmatpush1.msra.mxu0 %v7264
      %7267 = vmatprep.subr.mxu0 0.0
      %7268 = vmatpush1.msra.mxu0 %v7263
      %7269 = vmatprep.subr.mxu0 0.0
      %7270 = vmatpush1.msra.mxu0 %v7262
      %7271 = vmatprep.subr.mxu0 0.0
      %7272 = vmatpush1.msra.mxu0 %v7261
      %7273 = vmatprep.subr.mxu0 0.0
      %7274 = vmatpush1.msra.mxu0 %v7260
      %7275 = vmatprep.subr.mxu0 0.0
      %7276 = vmatpush1.msra.mxu0 %v7259
      %7277 = vmatprep.subr.mxu0 0.0
      %7278 = vmatpush1.msra.mxu0 %v7258
      %7279 = vmatprep.subr.mxu0 0.0
      %7280 = vmatpush1.msra.mxu0 %v7257
      %7281 = vmatprep.subr.mxu0 0.0
      %7282 = vmatpush1.msra.mxu0 %v7256
      %7283 = vmatprep.subr.mxu0 0.0
      %7284 = vmatpush1.msra.mxu0 %v7255
      %7285 = vmatprep.subr.mxu0 0.0
      %7286 = vmatpush1.msra.mxu0 %v7254
      %7287 = vmatprep.subr.mxu0 0.0
      %7288 = vmatpush1.msra.mxu0 %v7253
      %7289 = vmatprep.subr.mxu0 0.0
      %7290 = vmatpush1.msra.mxu0 %v7252
      %7291 = vmatprep.subr.mxu0 0.0
      %7292 = vmatpush1.msra.mxu0 %v7251
      %7293 = vmatprep.subr.mxu0 0.0
      %7294 = vmatpush1.msra.mxu0 %v7250
      %7295 = vmatprep.subr.mxu0 0.0
      %7296 = vmatpush1.msra.mxu0 %v7249
      %7297 = vmatprep.subr.mxu0 0.0
      %7298 = vmatpush2.msra.mxu0 0.0
      %7299 = vmatprep.subr.mxu0 0.0
      %7300 = vmatpush2.msra.mxu0 0.0
      %7301 = vmatprep.subr.mxu0 0.0
      %7302 = vmatpush2.msra.mxu0 0.0
      %7303 = vmatprep.subr.mxu0 0.0
      %7304 = vmatpush2.msra.mxu0 0.0
      %7305 = vmatprep.subr.mxu0 0.0
      %7306 = vmatpush2.msra.mxu0 0.0
      %7307 = vmatprep.subr.mxu0 0.0
      %7308 = vmatpush2.msra.mxu0 0.0
      %7309 = vmatprep.subr.mxu0 0.0
      %7310 = vmatpush2.msra.mxu0 0.0
      %7311 = vmatprep.subr.mxu0 0.0
      %7312 = vmatpush2.msra.mxu0 0.0
      %7313 = vmatprep.subr.mxu0 0.0
      %7314 = vmatpush2.msra.mxu0 0.0
      %7315 = vmatprep.subr.mxu0 0.0
      %7316 = vmatpush2.msra.mxu0 0.0
      %7317 = vmatprep.subr.mxu0 0.0
      %7318 = vmatpush2.msra.mxu0 0.0
      %7319 = vmatprep.subr.mxu0 0.0
      %7320 = vmatpush2.msra.mxu0 0.0
      %7321 = vmatprep.subr.mxu0 0.0
      %7322 = vmatpush2.msra.mxu0 0.0
      %7323 = vmatprep.subr.mxu0 0.0
      %7324 = vmatpush2.msra.mxu0 0.0
      %7325 = vmatprep.subr.mxu0 0.0
      %7326 = vmatpush2.msra.mxu0 0.0
      %7327 = vmatprep.subr.mxu0 0.0
      %7328 = vmatpush2.msra.mxu0 0.0
      %7329 = vmatprep.mubr.f32.mxu0 0.0
      %7330 = vmatmul.mubr.f32.gmra.mxu0 %v7242
      %v7331 = vpop.f32.mrf.mxu0
      %v7332 = vadd.f32 0.0, %v7331
      %v7333 = vpop.f32.mrf.mxu0
      %7334 = vmatprep.mubr.f32.mxu0 0.0
      %7335 = vmatmul.mubr.f32.gmra.mxu0 %v7243
      %v7336 = vpop.f32.mrf.mxu0
      %v7337 = vadd.f32 0.0, %v7336
      %v7338 = vpop.f32.mrf.mxu0
      %7339 = vmatprep.mubr.f32.mxu0 0.0
      %7340 = vmatmul.mubr.f32.gmra.mxu0 %v7244
      %v7341 = vpop.f32.mrf.mxu0
      %v7342 = vadd.f32 0.0, %v7341
      %v7343 = vpop.f32.mrf.mxu0
      %7344 = vmatprep.mubr.f32.mxu0 0.0
      %7345 = vmatmul.mubr.f32.gmra.mxu0 %v7245
      %v7346 = vpop.f32.mrf.mxu0
      %v7347 = vadd.f32 0.0, %v7346
      %v7348 = vpop.f32.mrf.mxu0
      %7349 = vmatprep.mubr.f32.mxu0 0.0
      %7350 = vmatmul.mubr.f32.gmra.mxu0 %v7246
      %v7351 = vpop.f32.mrf.mxu0
      %v7352 = vadd.f32 0.0, %v7351
      %v7353 = vpop.f32.mrf.mxu0
      %7354 = vmatprep.mubr.f32.mxu0 0.0
      %7355 = vmatmul.mubr.f32.gmra.mxu0 %v7247
      %v7356 = vpop.f32.mrf.mxu0
      %v7357 = vadd.f32 0.0, %v7356
      %v7358 = vpop.f32.mrf.mxu0
      %7359 = vdwg.mxu0
      %7360 = vmatprep.subr.mxu0 0.0
      %7361 = vmatpush1.msra.mxu0 %v7241
      %7362 = vmatprep.subr.mxu0 0.0
      %7363 = vmatpush1.msra.mxu0 %v7240
      %7364 = vmatprep.subr.mxu0 0.0
      %7365 = vmatpush1.msra.mxu0 %v7239
      %7366 = vmatprep.subr.mxu0 0.0
      %7367 = vmatpush1.msra.mxu0 %v7238
      %7368 = vmatprep.subr.mxu0 0.0
      %7369 = vmatpush1.msra.mxu0 %v7237
      %7370 = vmatprep.subr.mxu0 0.0
      %7371 = vmatpush1.msra.mxu0 %v7236
      %7372 = vmatprep.subr.mxu0 0.0
      %7373 = vmatpush1.msra.mxu0 %v7235
      %7374 = vmatprep.subr.mxu0 0.0
      %7375 = vmatpush1.msra.mxu0 %v7234
      %7376 = vmatprep.subr.mxu0 0.0
      %7377 = vmatpush1.msra.mxu0 %v7233
      %7378 = vmatprep.subr.mxu0 0.0
      %7379 = vmatpush1.msra.mxu0 %v7232
      %7380 = vmatprep.subr.mxu0 0.0
      %7381 = vmatpush1.msra.mxu0 %v7231
      %7382 = vmatprep.subr.mxu0 0.0
      %7383 = vmatpush1.msra.mxu0 %v7230
      %7384 = vmatprep.subr.mxu0 0.0
      %7385 = vmatpush1.msra.mxu0 %v7229
      %7386 = vmatprep.subr.mxu0 0.0
      %7387 = vmatpush1.msra.mxu0 %v7228
      %7388 = vmatprep.subr.mxu0 0.0
      %7389 = vmatpush1.msra.mxu0 %v7227
      %7390 = vmatprep.subr.mxu0 0.0
      %7391 = vmatpush1.msra.mxu0 %v7226
      %7392 = vmatprep.subr.mxu0 0.0
      %7393 = vmatpush2.msra.mxu0 0.0
      %7394 = vmatprep.subr.mxu0 0.0
      %7395 = vmatpush2.msra.mxu0 0.0
      %7396 = vmatprep.subr.mxu0 0.0
      %7397 = vmatpush2.msra.mxu0 0.0
      %7398 = vmatprep.subr.mxu0 0.0
      %7399 = vmatpush2.msra.mxu0 0.0
      %7400 = vmatprep.subr.mxu0 0.0
      %7401 = vmatpush2.msra.mxu0 0.0
      %7402 = vmatprep.subr.mxu0 0.0
      %7403 = vmatpush2.msra.mxu0 0.0
      %7404 = vmatprep.subr.mxu0 0.0
      %7405 = vmatpush2.msra.mxu0 0.0
      %7406 = vmatprep.subr.mxu0 0.0
      %7407 = vmatpush2.msra.mxu0 0.0
      %7408 = vmatprep.subr.mxu0 0.0
      %7409 = vmatpush2.msra.mxu0 0.0
      %7410 = vmatprep.subr.mxu0 0.0
      %7411 = vmatpush2.msra.mxu0 0.0
      %7412 = vmatprep.subr.mxu0 0.0
      %7413 = vmatpush2.msra.mxu0 0.0
      %7414 = vmatprep.subr.mxu0 0.0
      %7415 = vmatpush2.msra.mxu0 0.0
      %7416 = vmatprep.subr.mxu0 0.0
      %7417 = vmatpush2.msra.mxu0 0.0
      %7418 = vmatprep.subr.mxu0 0.0
      %7419 = vmatpush2.msra.mxu0 0.0
      %7420 = vmatprep.subr.mxu0 0.0
      %7421 = vmatpush2.msra.mxu0 0.0
      %7422 = vmatprep.subr.mxu0 0.0
      %7423 = vmatpush2.msra.mxu0 0.0
      %7424 = vmatprep.mubr.f32.mxu0 0.0
      %7425 = vmatmul.mubr.f32.gmra.mxu0 %v7220
      %v7426 = vpop.f32.mrf.mxu0
      %v7427 = vadd.f32 %v7332, %v7426
      %v7428 = vpop.f32.mrf.mxu0
      %7429 = vmatprep.mubr.f32.mxu0 0.0
      %7430 = vmatmul.mubr.f32.gmra.mxu0 %v7221
      %v7431 = vpop.f32.mrf.mxu0
      %v7432 = vadd.f32 %v7337, %v7431
      %v7433 = vpop.f32.mrf.mxu0
      %7434 = vmatprep.mubr.f32.mxu0 0.0
      %7435 = vmatmul.mubr.f32.gmra.mxu0 %v7222
      %v7436 = vpop.f32.mrf.mxu0
      %v7437 = vadd.f32 %v7342, %v7436
      %v7438 = vpop.f32.mrf.mxu0
      %7439 = vmatprep.mubr.f32.mxu0 0.0
      %7440 = vmatmul.mubr.f32.gmra.mxu0 %v7223
      %v7441 = vpop.f32.mrf.mxu0
      %v7442 = vadd.f32 %v7347, %v7441
      %v7443 = vpop.f32.mrf.mxu0
      %7444 = vmatprep.mubr.f32.mxu0 0.0
      %7445 = vmatmul.mubr.f32.gmra.mxu0 %v7224
      %v7446 = vpop.f32.mrf.mxu0
      %v7447 = vadd.f32 %v7352, %v7446
      %v7448 = vpop.f32.mrf.mxu0
      %7449 = vmatprep.mubr.f32.mxu0 0.0
      %7450 = vmatmul.mubr.f32.gmra.mxu0 %v7225
      %v7451 = vpop.f32.mrf.mxu0
      %v7452 = vadd.f32 %v7357, %v7451
      %v7453 = vpop.f32.mrf.mxu0
      %7454 = vdwg.mxu0
      %v7455 = vld [vmem:[#allocation2 + $0x2] sm:$0xff]
      %v7456 = vld [vmem:[#allocation2 + $0xa] sm:$0xff]
      %v7457 = vld [vmem:[#allocation2 + $0x12] sm:$0xff]
      %v7458 = vld [vmem:[#allocation2 + $0x1a] sm:$0xff]
      %v7459 = vld [vmem:[#allocation2 + $0x22] sm:$0xff]
      %v7460 = vld [vmem:[#allocation2 + $0x2a] sm:$0x7f]
      %s7461 = scalar_lea.vmem %s20, 256
      %v7462 = vld [vmem:[%s7461] sm:$0xff]
      %v7463 = vld [vmem:[%s7461 + $0x8] sm:$0xff]
      %v7464 = vld [vmem:[%s7461 + $0x10] sm:$0xff]
      %v7465 = vld [vmem:[%s7461 + $0x18] sm:$0xff]
      %v7466 = vld [vmem:[%s7461 + $0x20] sm:$0xff]
      %v7467 = vld [vmem:[%s7461 + $0x28] sm:$0xff]
      %v7468 = vld [vmem:[%s7461 + $0x30] sm:$0xff]
      %v7469 = vld [vmem:[%s7461 + $0x38] sm:$0xff]
      %v7470 = vld [vmem:[%s7461 + $0x40] sm:$0xff]
      %v7471 = vld [vmem:[%s7461 + $0x48] sm:$0xff]
      %v7472 = vld [vmem:[%s7461 + $0x50] sm:$0xff]
      %v7473 = vld [vmem:[%s7461 + $0x58] sm:$0xff]
      %v7474 = vld [vmem:[%s7461 + $0x60] sm:$0xff]
      %v7475 = vld [vmem:[%s7461 + $0x68] sm:$0xff]
      %v7476 = vld [vmem:[%s7461 + $0x70] sm:$0xff]
      %v7477 = vld [vmem:[%s7461 + $0x78] sm:$0xff]
      %7478 = vmatprep.subr.mxu0 0.0
      %7479 = vmatpush1.msra.mxu0 %v7477
      %7480 = vmatprep.subr.mxu0 0.0
      %7481 = vmatpush1.msra.mxu0 %v7476
      %7482 = vmatprep.subr.mxu0 0.0
      %7483 = vmatpush1.msra.mxu0 %v7475
      %7484 = vmatprep.subr.mxu0 0.0
      %7485 = vmatpush1.msra.mxu0 %v7474
      %7486 = vmatprep.subr.mxu0 0.0
      %7487 = vmatpush1.msra.mxu0 %v7473
      %7488 = vmatprep.subr.mxu0 0.0
      %7489 = vmatpush1.msra.mxu0 %v7472
      %7490 = vmatprep.subr.mxu0 0.0
      %7491 = vmatpush1.msra.mxu0 %v7471
      %7492 = vmatprep.subr.mxu0 0.0
      %7493 = vmatpush1.msra.mxu0 %v7470
      %7494 = vmatprep.subr.mxu0 0.0
      %7495 = vmatpush1.msra.mxu0 %v7469
      %7496 = vmatprep.subr.mxu0 0.0
      %7497 = vmatpush1.msra.mxu0 %v7468
      %7498 = vmatprep.subr.mxu0 0.0
      %7499 = vmatpush1.msra.mxu0 %v7467
      %7500 = vmatprep.subr.mxu0 0.0
      %7501 = vmatpush1.msra.mxu0 %v7466
      %7502 = vmatprep.subr.mxu0 0.0
      %7503 = vmatpush1.msra.mxu0 %v7465
      %7504 = vmatprep.subr.mxu0 0.0
      %7505 = vmatpush1.msra.mxu0 %v7464
      %7506 = vmatprep.subr.mxu0 0.0
      %7507 = vmatpush1.msra.mxu0 %v7463
      %7508 = vmatprep.subr.mxu0 0.0
      %7509 = vmatpush1.msra.mxu0 %v7462
      %7510 = vmatprep.subr.mxu0 0.0
      %7511 = vmatpush2.msra.mxu0 0.0
      %7512 = vmatprep.subr.mxu0 0.0
      %7513 = vmatpush2.msra.mxu0 0.0
      %7514 = vmatprep.subr.mxu0 0.0
      %7515 = vmatpush2.msra.mxu0 0.0
      %7516 = vmatprep.subr.mxu0 0.0
      %7517 = vmatpush2.msra.mxu0 0.0
      %7518 = vmatprep.subr.mxu0 0.0
      %7519 = vmatpush2.msra.mxu0 0.0
      %7520 = vmatprep.subr.mxu0 0.0
      %7521 = vmatpush2.msra.mxu0 0.0
      %7522 = vmatprep.subr.mxu0 0.0
      %7523 = vmatpush2.msra.mxu0 0.0
      %7524 = vmatprep.subr.mxu0 0.0
      %7525 = vmatpush2.msra.mxu0 0.0
      %7526 = vmatprep.subr.mxu0 0.0
      %7527 = vmatpush2.msra.mxu0 0.0
      %7528 = vmatprep.subr.mxu0 0.0
      %7529 = vmatpush2.msra.mxu0 0.0
      %7530 = vmatprep.subr.mxu0 0.0
      %7531 = vmatpush2.msra.mxu0 0.0
      %7532 = vmatprep.subr.mxu0 0.0
      %7533 = vmatpush2.msra.mxu0 0.0
      %7534 = vmatprep.subr.mxu0 0.0
      %7535 = vmatpush2.msra.mxu0 0.0
      %7536 = vmatprep.subr.mxu0 0.0
      %7537 = vmatpush2.msra.mxu0 0.0
      %7538 = vmatprep.subr.mxu0 0.0
      %7539 = vmatpush2.msra.mxu0 0.0
      %7540 = vmatprep.subr.mxu0 0.0
      %7541 = vmatpush2.msra.mxu0 0.0
      %7542 = vmatprep.mubr.f32.mxu0 0.0
      %7543 = vmatmul.mubr.f32.gmra.mxu0 %v7455
      %v7544 = vpop.f32.mrf.mxu0
      %v7545 = vadd.f32 0.0, %v7544
      %v7546 = vpop.f32.mrf.mxu0
      %7547 = vmatprep.mubr.f32.mxu0 0.0
      %7548 = vmatmul.mubr.f32.gmra.mxu0 %v7456
      %v7549 = vpop.f32.mrf.mxu0
      %v7550 = vadd.f32 0.0, %v7549
      %v7551 = vpop.f32.mrf.mxu0
      %7552 = vmatprep.mubr.f32.mxu0 0.0
      %7553 = vmatmul.mubr.f32.gmra.mxu0 %v7457
      %v7554 = vpop.f32.mrf.mxu0
      %v7555 = vadd.f32 0.0, %v7554
      %v7556 = vpop.f32.mrf.mxu0
      %7557 = vmatprep.mubr.f32.mxu0 0.0
      %7558 = vmatmul.mubr.f32.gmra.mxu0 %v7458
      %v7559 = vpop.f32.mrf.mxu0
      %v7560 = vadd.f32 0.0, %v7559
      %v7561 = vpop.f32.mrf.mxu0
      %7562 = vmatprep.mubr.f32.mxu0 0.0
      %7563 = vmatmul.mubr.f32.gmra.mxu0 %v7459
      %v7564 = vpop.f32.mrf.mxu0
      %v7565 = vadd.f32 0.0, %v7564
      %v7566 = vpop.f32.mrf.mxu0
      %7567 = vmatprep.mubr.f32.mxu0 0.0
      %7568 = vmatmul.mubr.f32.gmra.mxu0 %v7460
      %v7569 = vpop.f32.mrf.mxu0
      %v7570 = vadd.f32 0.0, %v7569
      %v7571 = vpop.f32.mrf.mxu0
      %7572 = vdwg.mxu0
      %v7573 = vadd.f32 %v7427, %v7545
      %v7574 = vadd.f32 %v7432, %v7550
      %v7575 = vadd.f32 %v7437, %v7555
      %v7576 = vadd.f32 %v7442, %v7560
      %v7577 = vadd.f32 %v7447, %v7565
      %v7578 = vadd.f32 %v7452, %v7570
      %v7579 = vld [vmem:[%s26] sm:$0xff]
      %v7580 = vld [vmem:[%s26 + $0x8] sm:$0xff]
      %v7581 = vld [vmem:[%s26 + $0x10] sm:$0xff]
      %v7582 = vld [vmem:[%s26 + $0x18] sm:$0xff]
      %v7583 = vld [vmem:[%s26 + $0x20] sm:$0xff]
      %v7584 = vld [vmem:[%s26 + $0x28] sm:$0xff]
      %v7585 = vld [vmem:[%s26 + $0x30] sm:$0xff]
      %v7586 = vld [vmem:[%s26 + $0x38] sm:$0xff]
      %v7587 = vld [vmem:[%s26 + $0x40] sm:$0xff]
      %v7588 = vld [vmem:[%s26 + $0x48] sm:$0xff]
      %v7589 = vld [vmem:[%s26 + $0x50] sm:$0xff]
      %v7590 = vld [vmem:[%s26 + $0x58] sm:$0xff]
      %v7591 = vld [vmem:[%s26 + $0x60] sm:$0xff]
      %v7592 = vld [vmem:[%s26 + $0x68] sm:$0xff]
      %v7593 = vld [vmem:[%s26 + $0x70] sm:$0xff]
      %v7594 = vld [vmem:[%s26 + $0x78] sm:$0xff]
      %v7595 = vld [vmem:[%s26 + $0x80] sm:$0xff]
      %v7596 = vld [vmem:[%s26 + $0x88] sm:$0xff]
      %v7597 = vld [vmem:[%s26 + $0x90] sm:$0xff]
      %v7598 = vld [vmem:[%s26 + $0x98] sm:$0xff]
      %v7599 = vld [vmem:[%s26 + $0xa0] sm:$0xff]
      %v7600 = vld [vmem:[%s26 + $0xa8] sm:$0xff]
      %v7601 = vld [vmem:[%s26 + $0xb0] sm:$0xff]
      %v7602 = vld [vmem:[%s26 + $0xb8] sm:$0xff]
      %v7603 = vld [vmem:[%s26 + $0xc0] sm:$0xff]
      %vm7604 = vcmask 384000
      %v7606 = vsel %vm7604, %v7579, 0
      %v7609 = vsel %vm7604, %v7580, 0
      %v7612 = vsel %vm7604, %v7581, 0
      %v7615 = vsel %vm7604, %v7582, 0
      %v7618 = vsel %vm7604, %v7583, 0
      %v7621 = vsel %vm7604, %v7584, 0
      %v7624 = vsel %vm7604, %v7585, 0
      %v7627 = vsel %vm7604, %v7586, 0
      %v7630 = vsel %vm7604, %v7587, 0
      %v7633 = vsel %vm7604, %v7588, 0
      %v7636 = vsel %vm7604, %v7589, 0
      %v7639 = vsel %vm7604, %v7590, 0
      %v7642 = vsel %vm7604, %v7591, 0
      %v7645 = vsel %vm7604, %v7592, 0
      %v7648 = vsel %vm7604, %v7593, 0
      %v7651 = vsel %vm7604, %v7594, 0
      %v7654 = vsel %vm7604, %v7595, 0
      %v7657 = vsel %vm7604, %v7596, 0
      %v7660 = vsel %vm7604, %v7597, 0
      %v7663 = vsel %vm7604, %v7598, 0
      %v7666 = vsel %vm7604, %v7599, 0
      %v7669 = vsel %vm7604, %v7600, 0
      %v7672 = vsel %vm7604, %v7601, 0
      %v7675 = vsel %vm7604, %v7602, 0
      %v7678 = vsel %vm7604, %v7603, 0
      %v7681 = vsel %vm871, %v7578, 0
      %7683 = vmatprep.subr.mxu0 0.0
      %7684 = vmatpush1.msra.mxu0 0.0
      %7685 = vmatprep.subr.mxu0 0.0
      %7686 = vmatpush1.msra.mxu0 0.0
      %7687 = vmatprep.subr.mxu0 0.0
      %7688 = vmatpush1.msra.mxu0 0.0
      %7689 = vmatprep.subr.mxu0 0.0
      %7690 = vmatpush1.msra.mxu0 0.0
      %7691 = vmatprep.subr.mxu0 0.0
      %7692 = vmatpush1.msra.mxu0 0.0
      %7693 = vmatprep.subr.mxu0 0.0
      %7694 = vmatpush1.msra.mxu0 0.0
      %7695 = vmatprep.subr.mxu0 0.0
      %7696 = vmatpush1.msra.mxu0 0.0
      %7697 = vmatprep.subr.mxu0 0.0
      %7698 = vmatpush1.msra.mxu0 0.0
      %7699 = vmatprep.subr.mxu0 0.0
      %7700 = vmatpush1.msra.mxu0 0.0
      %7701 = vmatprep.subr.mxu0 0.0
      %7702 = vmatpush1.msra.mxu0 0.0
      %7703 = vmatprep.subr.mxu0 0.0
      %7704 = vmatpush1.msra.mxu0 %v7681
      %7705 = vmatprep.subr.mxu0 0.0
      %7706 = vmatpush1.msra.mxu0 %v7577
      %7707 = vmatprep.subr.mxu0 0.0
      %7708 = vmatpush1.msra.mxu0 %v7576
      %7709 = vmatprep.subr.mxu0 0.0
      %7710 = vmatpush1.msra.mxu0 %v7575
      %7711 = vmatprep.subr.mxu0 0.0
      %7712 = vmatpush1.msra.mxu0 %v7574
      %7713 = vmatprep.subr.mxu0 0.0
      %7714 = vmatpush1.msra.mxu0 %v7573
      %7715 = vmatprep.subr.mxu0 0.0
      %7716 = vmatpush2.msra.mxu0 0.0
      %7717 = vmatprep.subr.mxu0 0.0
      %7718 = vmatpush2.msra.mxu0 0.0
      %7719 = vmatprep.subr.mxu0 0.0
      %7720 = vmatpush2.msra.mxu0 0.0
      %7721 = vmatprep.subr.mxu0 0.0
      %7722 = vmatpush2.msra.mxu0 0.0
      %7723 = vmatprep.subr.mxu0 0.0
      %7724 = vmatpush2.msra.mxu0 0.0
      %7725 = vmatprep.subr.mxu0 0.0
      %7726 = vmatpush2.msra.mxu0 0.0
      %7727 = vmatprep.subr.mxu0 0.0
      %7728 = vmatpush2.msra.mxu0 0.0
      %7729 = vmatprep.subr.mxu0 0.0
      %7730 = vmatpush2.msra.mxu0 0.0
      %7731 = vmatprep.subr.mxu0 0.0
      %7732 = vmatpush2.msra.mxu0 0.0
      %7733 = vmatprep.subr.mxu0 0.0
      %7734 = vmatpush2.msra.mxu0 0.0
      %7735 = vmatprep.subr.mxu0 0.0
      %7736 = vmatpush2.msra.mxu0 0.0
      %7737 = vmatprep.subr.mxu0 0.0
      %7738 = vmatpush2.msra.mxu0 0.0
      %7739 = vmatprep.subr.mxu0 0.0
      %7740 = vmatpush2.msra.mxu0 0.0
      %7741 = vmatprep.subr.mxu0 0.0
      %7742 = vmatpush2.msra.mxu0 0.0
      %7743 = vmatprep.subr.mxu0 0.0
      %7744 = vmatpush2.msra.mxu0 0.0
      %7745 = vmatprep.subr.mxu0 0.0
      %7746 = vmatpush2.msra.mxu0 0.0
      %7747 = vmatprep.mubr.f32.mxu0 0.0
      %7748 = vmatmul.mubr.f32.gmra.mxu0 %v7606
      %v7749 = vpop.f32.mrf.mxu0
      %v7750 = vadd.f32 %v819, %v7749
      %v7751 = vpop.f32.mrf.mxu0
      %7752 = vmatprep.mubr.f32.mxu0 0.0
      %7753 = vmatmul.mubr.f32.gmra.mxu0 %v7609
      %v7754 = vpop.f32.mrf.mxu0
      %v7755 = vadd.f32 %v820, %v7754
      %v7756 = vpop.f32.mrf.mxu0
      %7757 = vmatprep.mubr.f32.mxu0 0.0
      %7758 = vmatmul.mubr.f32.gmra.mxu0 %v7612
      %v7759 = vpop.f32.mrf.mxu0
      %v7760 = vadd.f32 %v821, %v7759
      %v7761 = vpop.f32.mrf.mxu0
      %7762 = vmatprep.mubr.f32.mxu0 0.0
      %7763 = vmatmul.mubr.f32.gmra.mxu0 %v7615
      %v7764 = vpop.f32.mrf.mxu0
      %v7765 = vadd.f32 %v822, %v7764
      %v7766 = vpop.f32.mrf.mxu0
      %7767 = vmatprep.mubr.f32.mxu0 0.0
      %7768 = vmatmul.mubr.f32.gmra.mxu0 %v7618
      %v7769 = vpop.f32.mrf.mxu0
      %v7770 = vadd.f32 %v823, %v7769
      %v7771 = vpop.f32.mrf.mxu0
      %7772 = vmatprep.mubr.f32.mxu0 0.0
      %7773 = vmatmul.mubr.f32.gmra.mxu0 %v7621
      %v7774 = vpop.f32.mrf.mxu0
      %v7775 = vadd.f32 %v824, %v7774
      %v7776 = vpop.f32.mrf.mxu0
      %7777 = vmatprep.mubr.f32.mxu0 0.0
      %7778 = vmatmul.mubr.f32.gmra.mxu0 %v7624
      %v7779 = vpop.f32.mrf.mxu0
      %v7780 = vadd.f32 %v825, %v7779
      %v7781 = vpop.f32.mrf.mxu0
      %7782 = vmatprep.mubr.f32.mxu0 0.0
      %7783 = vmatmul.mubr.f32.gmra.mxu0 %v7627
      %v7784 = vpop.f32.mrf.mxu0
      %v7785 = vadd.f32 %v826, %v7784
      %v7786 = vpop.f32.mrf.mxu0
      %7787 = vmatprep.mubr.f32.mxu0 0.0
      %7788 = vmatmul.mubr.f32.gmra.mxu0 %v7630
      %v7789 = vpop.f32.mrf.mxu0
      %v7790 = vadd.f32 %v827, %v7789
      %v7791 = vpop.f32.mrf.mxu0
      %7792 = vmatprep.mubr.f32.mxu0 0.0
      %7793 = vmatmul.mubr.f32.gmra.mxu0 %v7633
      %v7794 = vpop.f32.mrf.mxu0
      %v7795 = vadd.f32 %v828, %v7794
      %v7796 = vpop.f32.mrf.mxu0
      %7797 = vmatprep.mubr.f32.mxu0 0.0
      %7798 = vmatmul.mubr.f32.gmra.mxu0 %v7636
      %v7799 = vpop.f32.mrf.mxu0
      %v7800 = vadd.f32 %v829, %v7799
      %v7801 = vpop.f32.mrf.mxu0
      %7802 = vmatprep.mubr.f32.mxu0 0.0
      %7803 = vmatmul.mubr.f32.gmra.mxu0 %v7639
      %v7804 = vpop.f32.mrf.mxu0
      %v7805 = vadd.f32 %v830, %v7804
      %v7806 = vpop.f32.mrf.mxu0
      %7807 = vmatprep.mubr.f32.mxu0 0.0
      %7808 = vmatmul.mubr.f32.gmra.mxu0 %v7642
      %v7809 = vpop.f32.mrf.mxu0
      %v7810 = vadd.f32 %v831, %v7809
      %v7811 = vpop.f32.mrf.mxu0
      %7812 = vmatprep.mubr.f32.mxu0 0.0
      %7813 = vmatmul.mubr.f32.gmra.mxu0 %v7645
      %v7814 = vpop.f32.mrf.mxu0
      %v7815 = vadd.f32 %v832, %v7814
      %v7816 = vpop.f32.mrf.mxu0
      %7817 = vmatprep.mubr.f32.mxu0 0.0
      %7818 = vmatmul.mubr.f32.gmra.mxu0 %v7648
      %v7819 = vpop.f32.mrf.mxu0
      %v7820 = vadd.f32 %v833, %v7819
      %v7821 = vpop.f32.mrf.mxu0
      %7822 = vmatprep.mubr.f32.mxu0 0.0
      %7823 = vmatmul.mubr.f32.gmra.mxu0 %v7651
      %v7824 = vpop.f32.mrf.mxu0
      %v7825 = vadd.f32 %v834, %v7824
      %v7826 = vpop.f32.mrf.mxu0
      %7827 = vmatprep.mubr.f32.mxu0 0.0
      %7828 = vmatmul.mubr.f32.gmra.mxu0 %v7654
      %v7829 = vpop.f32.mrf.mxu0
      %v7830 = vadd.f32 %v835, %v7829
      %v7831 = vpop.f32.mrf.mxu0
      %7832 = vmatprep.mubr.f32.mxu0 0.0
      %7833 = vmatmul.mubr.f32.gmra.mxu0 %v7657
      %v7834 = vpop.f32.mrf.mxu0
      %v7835 = vadd.f32 %v836, %v7834
      %v7836 = vpop.f32.mrf.mxu0
      %7837 = vmatprep.mubr.f32.mxu0 0.0
      %7838 = vmatmul.mubr.f32.gmra.mxu0 %v7660
      %v7839 = vpop.f32.mrf.mxu0
      %v7840 = vadd.f32 %v837, %v7839
      %v7841 = vpop.f32.mrf.mxu0
      %7842 = vmatprep.mubr.f32.mxu0 0.0
      %7843 = vmatmul.mubr.f32.gmra.mxu0 %v7663
      %v7844 = vpop.f32.mrf.mxu0
      %v7845 = vadd.f32 %v838, %v7844
      %v7846 = vpop.f32.mrf.mxu0
      %7847 = vmatprep.mubr.f32.mxu0 0.0
      %7848 = vmatmul.mubr.f32.gmra.mxu0 %v7666
      %v7849 = vpop.f32.mrf.mxu0
      %v7850 = vadd.f32 %v839, %v7849
      %v7851 = vpop.f32.mrf.mxu0
      %7852 = vmatprep.mubr.f32.mxu0 0.0
      %7853 = vmatmul.mubr.f32.gmra.mxu0 %v7669
      %v7854 = vpop.f32.mrf.mxu0
      %v7855 = vadd.f32 %v840, %v7854
      %v7856 = vpop.f32.mrf.mxu0
      %7857 = vmatprep.mubr.f32.mxu0 0.0
      %7858 = vmatmul.mubr.f32.gmra.mxu0 %v7672
      %v7859 = vpop.f32.mrf.mxu0
      %v7860 = vadd.f32 %v841, %v7859
      %v7861 = vpop.f32.mrf.mxu0
      %7862 = vmatprep.mubr.f32.mxu0 0.0
      %7863 = vmatmul.mubr.f32.gmra.mxu0 %v7675
      %v7864 = vpop.f32.mrf.mxu0
      %v7865 = vadd.f32 %v842, %v7864
      %v7866 = vpop.f32.mrf.mxu0
      %7867 = vmatprep.mubr.f32.mxu0 0.0
      %7868 = vmatmul.mubr.f32.gmra.mxu0 %v7678
      %v7869 = vpop.f32.mrf.mxu0
      %v7870 = vadd.f32 %v843, %v7869
      %v7871 = vpop.f32.mrf.mxu0
      %7872 = vdwg.mxu0
      %v7873 = vld [vmem:[%s21] sm:$0x1]
      %v7875 = vlaneseq
      %v7876 = vshrl.u32 %v7875, 7
      %v7877 = vsub.s32 0, %v7876
      %v7878 = vrot.slane %v7873, %v7877
      %v7880 = vmul.f32 %v7750, %v7878
      %v7881 = vmul.f32 %v7755, %v7878
      %v7882 = vmul.f32 %v7760, %v7878
      %v7883 = vmul.f32 %v7765, %v7878
      %v7884 = vmul.f32 %v7770, %v7878
      %v7885 = vmul.f32 %v7775, %v7878
      %v7886 = vmul.f32 %v7780, %v7878
      %v7887 = vmul.f32 %v7785, %v7878
      %v7888 = vmul.f32 %v7790, %v7878
      %v7889 = vmul.f32 %v7795, %v7878
      %v7890 = vmul.f32 %v7800, %v7878
      %v7891 = vmul.f32 %v7805, %v7878
      %v7892 = vmul.f32 %v7810, %v7878
      %v7893 = vmul.f32 %v7815, %v7878
      %v7894 = vmul.f32 %v7820, %v7878
      %v7895 = vmul.f32 %v7825, %v7878
      %v7896 = vmul.f32 %v7830, %v7878
      %v7897 = vmul.f32 %v7835, %v7878
      %v7898 = vmul.f32 %v7840, %v7878
      %v7899 = vmul.f32 %v7845, %v7878
      %v7900 = vmul.f32 %v7850, %v7878
      %v7901 = vmul.f32 %v7855, %v7878
      %v7902 = vmul.f32 %v7860, %v7878
      %v7903 = vmul.f32 %v7865, %v7878
      %v7904 = vmul.f32 %v7870, %v7878
      %v7905 = vld [vmem:[%s22] sm:$0x1]
      %v7907 = vlaneseq
      %v7908 = vshrl.u32 %v7907, 7
      %v7909 = vsub.s32 0, %v7908
      %v7910 = vrot.slane %v7905, %v7909
      %v7912 = vadd.f32 %v7880, %v7910
      %v7913 = vadd.f32 %v7881, %v7910
      %v7914 = vadd.f32 %v7882, %v7910
      %v7915 = vadd.f32 %v7883, %v7910
      %v7916 = vadd.f32 %v7884, %v7910
      %v7917 = vadd.f32 %v7885, %v7910
      %v7918 = vadd.f32 %v7886, %v7910
      %v7919 = vadd.f32 %v7887, %v7910
      %v7920 = vadd.f32 %v7888, %v7910
      %v7921 = vadd.f32 %v7889, %v7910
      %v7922 = vadd.f32 %v7890, %v7910
      %v7923 = vadd.f32 %v7891, %v7910
      %v7924 = vadd.f32 %v7892, %v7910
      %v7925 = vadd.f32 %v7893, %v7910
      %v7926 = vadd.f32 %v7894, %v7910
      %v7927 = vadd.f32 %v7895, %v7910
      %v7928 = vadd.f32 %v7896, %v7910
      %v7929 = vadd.f32 %v7897, %v7910
      %v7930 = vadd.f32 %v7898, %v7910
      %v7931 = vadd.f32 %v7899, %v7910
      %v7932 = vadd.f32 %v7900, %v7910
      %v7933 = vadd.f32 %v7901, %v7910
      %v7934 = vadd.f32 %v7902, %v7910
      %v7935 = vadd.f32 %v7903, %v7910
      %v7936 = vadd.f32 %v7904, %v7910
      %v7937 = vmax.f32 %v7912, 0.0
      %v7938 = vmax.f32 %v7913, 0.0
      %v7939 = vmax.f32 %v7914, 0.0
      %v7940 = vmax.f32 %v7915, 0.0
      %v7941 = vmax.f32 %v7916, 0.0
      %v7942 = vmax.f32 %v7917, 0.0
      %v7943 = vmax.f32 %v7918, 0.0
      %v7944 = vmax.f32 %v7919, 0.0
      %v7945 = vmax.f32 %v7920, 0.0
      %v7946 = vmax.f32 %v7921, 0.0
      %v7947 = vmax.f32 %v7922, 0.0
      %v7948 = vmax.f32 %v7923, 0.0
      %v7949 = vmax.f32 %v7924, 0.0
      %v7950 = vmax.f32 %v7925, 0.0
      %v7951 = vmax.f32 %v7926, 0.0
      %v7952 = vmax.f32 %v7927, 0.0
      %v7953 = vmax.f32 %v7928, 0.0
      %v7954 = vmax.f32 %v7929, 0.0
      %v7955 = vmax.f32 %v7930, 0.0
      %v7956 = vmax.f32 %v7931, 0.0
      %v7957 = vmax.f32 %v7932, 0.0
      %v7958 = vmax.f32 %v7933, 0.0
      %v7959 = vmax.f32 %v7934, 0.0
      %v7960 = vmax.f32 %v7935, 0.0
      %v7961 = vmax.f32 %v7936, 0.0
      %vm7962 = vcmask 24576
      %7963 = vst.msk [vmem:[#allocation2] sm:$0x1] %vm7962, 0.0
      %7964 = vst.msk [vmem:[#allocation2 + $0xc9] sm:$0x1] %vm7962, 0.0
      %7965 = vst.msk [vmem:[#allocation2 + $0x1] sm:$0xff] %vm919, %v7937
      %7966 = vst.msk [vmem:[#allocation2 + $0x9] sm:$0xff] %vm919, %v7938
      %7967 = vst.msk [vmem:[#allocation2 + $0x11] sm:$0xff] %vm919, %v7939
      %7968 = vst.msk [vmem:[#allocation2 + $0x19] sm:$0xff] %vm919, %v7940
      %7969 = vst.msk [vmem:[#allocation2 + $0x21] sm:$0xff] %vm919, %v7941
      %7970 = vst.msk [vmem:[#allocation2 + $0x29] sm:$0xff] %vm919, %v7942
      %7971 = vst.msk [vmem:[#allocation2 + $0x31] sm:$0xff] %vm919, %v7943
      %7972 = vst.msk [vmem:[#allocation2 + $0x39] sm:$0xff] %vm919, %v7944
      %7973 = vst.msk [vmem:[#allocation2 + $0x41] sm:$0xff] %vm919, %v7945
      %7974 = vst.msk [vmem:[#allocation2 + $0x49] sm:$0xff] %vm919, %v7946
      %7975 = vst.msk [vmem:[#allocation2 + $0x51] sm:$0xff] %vm919, %v7947
      %7976 = vst.msk [vmem:[#allocation2 + $0x59] sm:$0xff] %vm919, %v7948
      %7977 = vst.msk [vmem:[#allocation2 + $0x61] sm:$0xff] %vm919, %v7949
      %7978 = vst.msk [vmem:[#allocation2 + $0x69] sm:$0xff] %vm919, %v7950
      %7979 = vst.msk [vmem:[#allocation2 + $0x71] sm:$0xff] %vm919, %v7951
      %7980 = vst.msk [vmem:[#allocation2 + $0x79] sm:$0xff] %vm919, %v7952
      %7981 = vst.msk [vmem:[#allocation2 + $0x81] sm:$0xff] %vm919, %v7953
      %7982 = vst.msk [vmem:[#allocation2 + $0x89] sm:$0xff] %vm919, %v7954
      %7983 = vst.msk [vmem:[#allocation2 + $0x91] sm:$0xff] %vm919, %v7955
      %7984 = vst.msk [vmem:[#allocation2 + $0x99] sm:$0xff] %vm919, %v7956
      %7985 = vst.msk [vmem:[#allocation2 + $0xa1] sm:$0xff] %vm919, %v7957
      %7986 = vst.msk [vmem:[#allocation2 + $0xa9] sm:$0xff] %vm919, %v7958
      %7987 = vst.msk [vmem:[#allocation2 + $0xb1] sm:$0xff] %vm919, %v7959
      %7988 = vst.msk [vmem:[#allocation2 + $0xb9] sm:$0xff] %vm919, %v7960
      %7989 = vst.msk [vmem:[#allocation2 + $0xc1] sm:$0xff] %vm919, %v7961
      %v7990 = vld [vmem:[#allocation2] sm:$0xff]
      %v7991 = vld [vmem:[#allocation2 + $0x8] sm:$0xff]
      %v7992 = vld [vmem:[#allocation2 + $0x10] sm:$0xff]
      %v7993 = vld [vmem:[#allocation2 + $0x18] sm:$0xff]
      %v7994 = vld [vmem:[#allocation2 + $0x20] sm:$0xff]
      %v7995 = vld [vmem:[#allocation2 + $0x28] sm:$0xff]
      %v7996 = vld [vmem:[#allocation2 + $0x30] sm:$0xff]
      %v7997 = vld [vmem:[#allocation2 + $0x38] sm:$0xff]
      %v7998 = vld [vmem:[#allocation2 + $0x40] sm:$0xff]
      %v7999 = vld [vmem:[#allocation2 + $0x48] sm:$0xff]
      %v8000 = vld [vmem:[#allocation2 + $0x50] sm:$0xff]
      %v8001 = vld [vmem:[#allocation2 + $0x58] sm:$0xff]
      %v8002 = vld [vmem:[#allocation2 + $0x60] sm:$0xff]
      %v8003 = vld [vmem:[#allocation2 + $0x68] sm:$0xff]
      %v8004 = vld [vmem:[#allocation2 + $0x70] sm:$0xff]
      %v8005 = vld [vmem:[#allocation2 + $0x78] sm:$0xff]
      %v8006 = vld [vmem:[#allocation2 + $0x80] sm:$0xff]
      %v8007 = vld [vmem:[#allocation2 + $0x88] sm:$0xff]
      %v8008 = vld [vmem:[#allocation2 + $0x90] sm:$0xff]
      %v8009 = vld [vmem:[#allocation2 + $0x98] sm:$0xff]
      %v8010 = vld [vmem:[#allocation2 + $0xa0] sm:$0xff]
      %v8011 = vld [vmem:[#allocation2 + $0xa8] sm:$0xff]
      %v8012 = vld [vmem:[#allocation2 + $0xb0] sm:$0xff]
      %v8013 = vld [vmem:[#allocation2 + $0xb8] sm:$0xff]
      %v8014 = vld [vmem:[#allocation2 + $0xc0] sm:$0xff]
      %v8015 = vld [vmem:[%s23] sm:$0xf]
      %v8016 = vld [vmem:[#allocation2 + $0x1] sm:$0xff]
      %v8017 = vld [vmem:[#allocation2 + $0x9] sm:$0xff]
      %v8018 = vld [vmem:[#allocation2 + $0x11] sm:$0xff]
      %v8019 = vld [vmem:[#allocation2 + $0x19] sm:$0xff]
      %v8020 = vld [vmem:[#allocation2 + $0x21] sm:$0xff]
      %v8021 = vld [vmem:[#allocation2 + $0x29] sm:$0xff]
      %v8022 = vld [vmem:[#allocation2 + $0x31] sm:$0xff]
      %v8023 = vld [vmem:[#allocation2 + $0x39] sm:$0xff]
      %v8024 = vld [vmem:[#allocation2 + $0x41] sm:$0xff]
      %v8025 = vld [vmem:[#allocation2 + $0x49] sm:$0xff]
      %v8026 = vld [vmem:[#allocation2 + $0x51] sm:$0xff]
      %v8027 = vld [vmem:[#allocation2 + $0x59] sm:$0xff]
      %v8028 = vld [vmem:[#allocation2 + $0x61] sm:$0xff]
      %v8029 = vld [vmem:[#allocation2 + $0x69] sm:$0xff]
      %v8030 = vld [vmem:[#allocation2 + $0x71] sm:$0xff]
      %v8031 = vld [vmem:[#allocation2 + $0x79] sm:$0xff]
      %v8032 = vld [vmem:[#allocation2 + $0x81] sm:$0xff]
      %v8033 = vld [vmem:[#allocation2 + $0x89] sm:$0xff]
      %v8034 = vld [vmem:[#allocation2 + $0x91] sm:$0xff]
      %v8035 = vld [vmem:[#allocation2 + $0x99] sm:$0xff]
      %v8036 = vld [vmem:[#allocation2 + $0xa1] sm:$0xff]
      %v8037 = vld [vmem:[#allocation2 + $0xa9] sm:$0xff]
      %v8038 = vld [vmem:[#allocation2 + $0xb1] sm:$0xff]
      %v8039 = vld [vmem:[#allocation2 + $0xb9] sm:$0xff]
      %v8040 = vld [vmem:[#allocation2 + $0xc1] sm:$0xff]
      %s8041 = scalar_lea.vmem %s23, 4
      %v8042 = vld [vmem:[%s8041] sm:$0xf]
      %v8044 = vsel %vm919, %v8016, 0
      %v8047 = vsel %vm919, %v8017, 0
      %v8050 = vsel %vm919, %v8018, 0
      %v8053 = vsel %vm919, %v8019, 0
      %v8056 = vsel %vm919, %v8020, 0
      %v8059 = vsel %vm919, %v8021, 0
      %v8062 = vsel %vm919, %v8022, 0
      %v8065 = vsel %vm919, %v8023, 0
      %v8068 = vsel %vm919, %v8024, 0
      %v8071 = vsel %vm919, %v8025, 0
      %v8074 = vsel %vm919, %v8026, 0
      %v8077 = vsel %vm919, %v8027, 0
      %v8080 = vsel %vm919, %v8028, 0
      %v8083 = vsel %vm919, %v8029, 0
      %v8086 = vsel %vm919, %v8030, 0
      %v8089 = vsel %vm919, %v8031, 0
      %v8092 = vsel %vm919, %v8032, 0
      %v8095 = vsel %vm919, %v8033, 0
      %v8098 = vsel %vm919, %v8034, 0
      %v8101 = vsel %vm919, %v8035, 0
      %v8104 = vsel %vm919, %v8036, 0
      %v8107 = vsel %vm919, %v8037, 0
      %v8110 = vsel %vm919, %v8038, 0
      %v8113 = vsel %vm919, %v8039, 0
      %v8116 = vsel %vm919, %v8040, 0
      %v8119 = vsel %vm968, %v8042, 0
      %8121 = vmatprep.subr.mxu0 0.0
      %8122 = vmatpush1.msra.mxu0 0.0
      %8123 = vmatprep.subr.mxu0 0.0
      %8124 = vmatpush1.msra.mxu0 0.0
      %8125 = vmatprep.subr.mxu0 0.0
      %8126 = vmatpush1.msra.mxu0 0.0
      %8127 = vmatprep.subr.mxu0 0.0
      %8128 = vmatpush1.msra.mxu0 0.0
      %8129 = vmatprep.subr.mxu0 0.0
      %8130 = vmatpush1.msra.mxu0 0.0
      %8131 = vmatprep.subr.mxu0 0.0
      %8132 = vmatpush1.msra.mxu0 0.0
      %8133 = vmatprep.subr.mxu0 0.0
      %8134 = vmatpush1.msra.mxu0 0.0
      %8135 = vmatprep.subr.mxu0 0.0
      %8136 = vmatpush1.msra.mxu0 0.0
      %8137 = vmatprep.subr.mxu0 0.0
      %8138 = vmatpush1.msra.mxu0 0.0
      %8139 = vmatprep.subr.mxu0 0.0
      %8140 = vmatpush1.msra.mxu0 0.0
      %8141 = vmatprep.subr.mxu0 0.0
      %8142 = vmatpush1.msra.mxu0 0.0
      %8143 = vmatprep.subr.mxu0 0.0
      %8144 = vmatpush1.msra.mxu0 0.0
      %8145 = vmatprep.subr.mxu0 0.0
      %8146 = vmatpush1.msra.mxu0 0.0
      %8147 = vmatprep.subr.mxu0 0.0
      %8148 = vmatpush1.msra.mxu0 0.0
      %8149 = vmatprep.subr.mxu0 0.0
      %8150 = vmatpush1.msra.mxu0 0.0
      %8151 = vmatprep.subr.mxu0 0.0
      %8152 = vmatpush1.msra.mxu0 %v8119
      %8153 = vmatprep.subr.mxu0 0.0
      %8154 = vmatpush2.msra.mxu0 0.0
      %8155 = vmatprep.subr.mxu0 0.0
      %8156 = vmatpush2.msra.mxu0 0.0
      %8157 = vmatprep.subr.mxu0 0.0
      %8158 = vmatpush2.msra.mxu0 0.0
      %8159 = vmatprep.subr.mxu0 0.0
      %8160 = vmatpush2.msra.mxu0 0.0
      %8161 = vmatprep.subr.mxu0 0.0
      %8162 = vmatpush2.msra.mxu0 0.0
      %8163 = vmatprep.subr.mxu0 0.0
      %8164 = vmatpush2.msra.mxu0 0.0
      %8165 = vmatprep.subr.mxu0 0.0
      %8166 = vmatpush2.msra.mxu0 0.0
      %8167 = vmatprep.subr.mxu0 0.0
      %8168 = vmatpush2.msra.mxu0 0.0
      %8169 = vmatprep.subr.mxu0 0.0
      %8170 = vmatpush2.msra.mxu0 0.0
      %8171 = vmatprep.subr.mxu0 0.0
      %8172 = vmatpush2.msra.mxu0 0.0
      %8173 = vmatprep.subr.mxu0 0.0
      %8174 = vmatpush2.msra.mxu0 0.0
      %8175 = vmatprep.subr.mxu0 0.0
      %8176 = vmatpush2.msra.mxu0 0.0
      %8177 = vmatprep.subr.mxu0 0.0
      %8178 = vmatpush2.msra.mxu0 0.0
      %8179 = vmatprep.subr.mxu0 0.0
      %8180 = vmatpush2.msra.mxu0 0.0
      %8181 = vmatprep.subr.mxu0 0.0
      %8182 = vmatpush2.msra.mxu0 0.0
      %8183 = vmatprep.subr.mxu0 0.0
      %8184 = vmatpush2.msra.mxu0 0.0
      %8185 = vmatprep.mubr.f32.mxu0 0.0
      %8186 = vmatmul.mubr.f32.gmra.mxu0 %v8044
      %v8187 = vpop.f32.mrf.mxu0
      %v8188 = vadd.f32 0.0, %v8187
      %v8189 = vpop.f32.mrf.mxu0
      %8190 = vmatprep.mubr.f32.mxu0 0.0
      %8191 = vmatmul.mubr.f32.gmra.mxu0 %v8047
      %v8192 = vpop.f32.mrf.mxu0
      %v8193 = vadd.f32 0.0, %v8192
      %v8194 = vpop.f32.mrf.mxu0
      %8195 = vmatprep.mubr.f32.mxu0 0.0
      %8196 = vmatmul.mubr.f32.gmra.mxu0 %v8050
      %v8197 = vpop.f32.mrf.mxu0
      %v8198 = vadd.f32 0.0, %v8197
      %v8199 = vpop.f32.mrf.mxu0
      %8200 = vmatprep.mubr.f32.mxu0 0.0
      %8201 = vmatmul.mubr.f32.gmra.mxu0 %v8053
      %v8202 = vpop.f32.mrf.mxu0
      %v8203 = vadd.f32 0.0, %v8202
      %v8204 = vpop.f32.mrf.mxu0
      %8205 = vmatprep.mubr.f32.mxu0 0.0
      %8206 = vmatmul.mubr.f32.gmra.mxu0 %v8056
      %v8207 = vpop.f32.mrf.mxu0
      %v8208 = vadd.f32 0.0, %v8207
      %v8209 = vpop.f32.mrf.mxu0
      %8210 = vmatprep.mubr.f32.mxu0 0.0
      %8211 = vmatmul.mubr.f32.gmra.mxu0 %v8059
      %v8212 = vpop.f32.mrf.mxu0
      %v8213 = vadd.f32 0.0, %v8212
      %v8214 = vpop.f32.mrf.mxu0
      %8215 = vmatprep.mubr.f32.mxu0 0.0
      %8216 = vmatmul.mubr.f32.gmra.mxu0 %v8062
      %v8217 = vpop.f32.mrf.mxu0
      %v8218 = vadd.f32 0.0, %v8217
      %v8219 = vpop.f32.mrf.mxu0
      %8220 = vmatprep.mubr.f32.mxu0 0.0
      %8221 = vmatmul.mubr.f32.gmra.mxu0 %v8065
      %v8222 = vpop.f32.mrf.mxu0
      %v8223 = vadd.f32 0.0, %v8222
      %v8224 = vpop.f32.mrf.mxu0
      %8225 = vmatprep.mubr.f32.mxu0 0.0
      %8226 = vmatmul.mubr.f32.gmra.mxu0 %v8068
      %v8227 = vpop.f32.mrf.mxu0
      %v8228 = vadd.f32 0.0, %v8227
      %v8229 = vpop.f32.mrf.mxu0
      %8230 = vmatprep.mubr.f32.mxu0 0.0
      %8231 = vmatmul.mubr.f32.gmra.mxu0 %v8071
      %v8232 = vpop.f32.mrf.mxu0
      %v8233 = vadd.f32 0.0, %v8232
      %v8234 = vpop.f32.mrf.mxu0
      %8235 = vmatprep.mubr.f32.mxu0 0.0
      %8236 = vmatmul.mubr.f32.gmra.mxu0 %v8074
      %v8237 = vpop.f32.mrf.mxu0
      %v8238 = vadd.f32 0.0, %v8237
      %v8239 = vpop.f32.mrf.mxu0
      %8240 = vmatprep.mubr.f32.mxu0 0.0
      %8241 = vmatmul.mubr.f32.gmra.mxu0 %v8077
      %v8242 = vpop.f32.mrf.mxu0
      %v8243 = vadd.f32 0.0, %v8242
      %v8244 = vpop.f32.mrf.mxu0
      %8245 = vmatprep.mubr.f32.mxu0 0.0
      %8246 = vmatmul.mubr.f32.gmra.mxu0 %v8080
      %v8247 = vpop.f32.mrf.mxu0
      %v8248 = vadd.f32 0.0, %v8247
      %v8249 = vpop.f32.mrf.mxu0
      %8250 = vmatprep.mubr.f32.mxu0 0.0
      %8251 = vmatmul.mubr.f32.gmra.mxu0 %v8083
      %v8252 = vpop.f32.mrf.mxu0
      %v8253 = vadd.f32 0.0, %v8252
      %v8254 = vpop.f32.mrf.mxu0
      %8255 = vmatprep.mubr.f32.mxu0 0.0
      %8256 = vmatmul.mubr.f32.gmra.mxu0 %v8086
      %v8257 = vpop.f32.mrf.mxu0
      %v8258 = vadd.f32 0.0, %v8257
      %v8259 = vpop.f32.mrf.mxu0
      %8260 = vmatprep.mubr.f32.mxu0 0.0
      %8261 = vmatmul.mubr.f32.gmra.mxu0 %v8089
      %v8262 = vpop.f32.mrf.mxu0
      %v8263 = vadd.f32 0.0, %v8262
      %v8264 = vpop.f32.mrf.mxu0
      %8265 = vmatprep.mubr.f32.mxu0 0.0
      %8266 = vmatmul.mubr.f32.gmra.mxu0 %v8092
      %v8267 = vpop.f32.mrf.mxu0
      %v8268 = vadd.f32 0.0, %v8267
      %v8269 = vpop.f32.mrf.mxu0
      %8270 = vmatprep.mubr.f32.mxu0 0.0
      %8271 = vmatmul.mubr.f32.gmra.mxu0 %v8095
      %v8272 = vpop.f32.mrf.mxu0
      %v8273 = vadd.f32 0.0, %v8272
      %v8274 = vpop.f32.mrf.mxu0
      %8275 = vmatprep.mubr.f32.mxu0 0.0
      %8276 = vmatmul.mubr.f32.gmra.mxu0 %v8098
      %v8277 = vpop.f32.mrf.mxu0
      %v8278 = vadd.f32 0.0, %v8277
      %v8279 = vpop.f32.mrf.mxu0
      %8280 = vmatprep.mubr.f32.mxu0 0.0
      %8281 = vmatmul.mubr.f32.gmra.mxu0 %v8101
      %v8282 = vpop.f32.mrf.mxu0
      %v8283 = vadd.f32 0.0, %v8282
      %v8284 = vpop.f32.mrf.mxu0
      %8285 = vmatprep.mubr.f32.mxu0 0.0
      %8286 = vmatmul.mubr.f32.gmra.mxu0 %v8104
      %v8287 = vpop.f32.mrf.mxu0
      %v8288 = vadd.f32 0.0, %v8287
      %v8289 = vpop.f32.mrf.mxu0
      %8290 = vmatprep.mubr.f32.mxu0 0.0
      %8291 = vmatmul.mubr.f32.gmra.mxu0 %v8107
      %v8292 = vpop.f32.mrf.mxu0
      %v8293 = vadd.f32 0.0, %v8292
      %v8294 = vpop.f32.mrf.mxu0
      %8295 = vmatprep.mubr.f32.mxu0 0.0
      %8296 = vmatmul.mubr.f32.gmra.mxu0 %v8110
      %v8297 = vpop.f32.mrf.mxu0
      %v8298 = vadd.f32 0.0, %v8297
      %v8299 = vpop.f32.mrf.mxu0
      %8300 = vmatprep.mubr.f32.mxu0 0.0
      %8301 = vmatmul.mubr.f32.gmra.mxu0 %v8113
      %v8302 = vpop.f32.mrf.mxu0
      %v8303 = vadd.f32 0.0, %v8302
      %v8304 = vpop.f32.mrf.mxu0
      %8305 = vmatprep.mubr.f32.mxu0 0.0
      %8306 = vmatmul.mubr.f32.gmra.mxu0 %v8116
      %v8307 = vpop.f32.mrf.mxu0
      %v8308 = vadd.f32 0.0, %v8307
      %v8309 = vpop.f32.mrf.mxu0
      %8310 = vdwg.mxu0
      %v8312 = vsel %vm919, %v7990, 0
      %v8315 = vsel %vm919, %v7991, 0
      %v8318 = vsel %vm919, %v7992, 0
      %v8321 = vsel %vm919, %v7993, 0
      %v8324 = vsel %vm919, %v7994, 0
      %v8327 = vsel %vm919, %v7995, 0
      %v8330 = vsel %vm919, %v7996, 0
      %v8333 = vsel %vm919, %v7997, 0
      %v8336 = vsel %vm919, %v7998, 0
      %v8339 = vsel %vm919, %v7999, 0
      %v8342 = vsel %vm919, %v8000, 0
      %v8345 = vsel %vm919, %v8001, 0
      %v8348 = vsel %vm919, %v8002, 0
      %v8351 = vsel %vm919, %v8003, 0
      %v8354 = vsel %vm919, %v8004, 0
      %v8357 = vsel %vm919, %v8005, 0
      %v8360 = vsel %vm919, %v8006, 0
      %v8363 = vsel %vm919, %v8007, 0
      %v8366 = vsel %vm919, %v8008, 0
      %v8369 = vsel %vm919, %v8009, 0
      %v8372 = vsel %vm919, %v8010, 0
      %v8375 = vsel %vm919, %v8011, 0
      %v8378 = vsel %vm919, %v8012, 0
      %v8381 = vsel %vm919, %v8013, 0
      %v8384 = vsel %vm919, %v8014, 0
      %v8387 = vsel %vm968, %v8015, 0
      %8389 = vmatprep.subr.mxu0 0.0
      %8390 = vmatpush1.msra.mxu0 0.0
      %8391 = vmatprep.subr.mxu0 0.0
      %8392 = vmatpush1.msra.mxu0 0.0
      %8393 = vmatprep.subr.mxu0 0.0
      %8394 = vmatpush1.msra.mxu0 0.0
      %8395 = vmatprep.subr.mxu0 0.0
      %8396 = vmatpush1.msra.mxu0 0.0
      %8397 = vmatprep.subr.mxu0 0.0
      %8398 = vmatpush1.msra.mxu0 0.0
      %8399 = vmatprep.subr.mxu0 0.0
      %8400 = vmatpush1.msra.mxu0 0.0
      %8401 = vmatprep.subr.mxu0 0.0
      %8402 = vmatpush1.msra.mxu0 0.0
      %8403 = vmatprep.subr.mxu0 0.0
      %8404 = vmatpush1.msra.mxu0 0.0
      %8405 = vmatprep.subr.mxu0 0.0
      %8406 = vmatpush1.msra.mxu0 0.0
      %8407 = vmatprep.subr.mxu0 0.0
      %8408 = vmatpush1.msra.mxu0 0.0
      %8409 = vmatprep.subr.mxu0 0.0
      %8410 = vmatpush1.msra.mxu0 0.0
      %8411 = vmatprep.subr.mxu0 0.0
      %8412 = vmatpush1.msra.mxu0 0.0
      %8413 = vmatprep.subr.mxu0 0.0
      %8414 = vmatpush1.msra.mxu0 0.0
      %8415 = vmatprep.subr.mxu0 0.0
      %8416 = vmatpush1.msra.mxu0 0.0
      %8417 = vmatprep.subr.mxu0 0.0
      %8418 = vmatpush1.msra.mxu0 0.0
      %8419 = vmatprep.subr.mxu0 0.0
      %8420 = vmatpush1.msra.mxu0 %v8387
      %8421 = vmatprep.subr.mxu0 0.0
      %8422 = vmatpush2.msra.mxu0 0.0
      %8423 = vmatprep.subr.mxu0 0.0
      %8424 = vmatpush2.msra.mxu0 0.0
      %8425 = vmatprep.subr.mxu0 0.0
      %8426 = vmatpush2.msra.mxu0 0.0
      %8427 = vmatprep.subr.mxu0 0.0
      %8428 = vmatpush2.msra.mxu0 0.0
      %8429 = vmatprep.subr.mxu0 0.0
      %8430 = vmatpush2.msra.mxu0 0.0
      %8431 = vmatprep.subr.mxu0 0.0
      %8432 = vmatpush2.msra.mxu0 0.0
      %8433 = vmatprep.subr.mxu0 0.0
      %8434 = vmatpush2.msra.mxu0 0.0
      %8435 = vmatprep.subr.mxu0 0.0
      %8436 = vmatpush2.msra.mxu0 0.0
      %8437 = vmatprep.subr.mxu0 0.0
      %8438 = vmatpush2.msra.mxu0 0.0
      %8439 = vmatprep.subr.mxu0 0.0
      %8440 = vmatpush2.msra.mxu0 0.0
      %8441 = vmatprep.subr.mxu0 0.0
      %8442 = vmatpush2.msra.mxu0 0.0
      %8443 = vmatprep.subr.mxu0 0.0
      %8444 = vmatpush2.msra.mxu0 0.0
      %8445 = vmatprep.subr.mxu0 0.0
      %8446 = vmatpush2.msra.mxu0 0.0
      %8447 = vmatprep.subr.mxu0 0.0
      %8448 = vmatpush2.msra.mxu0 0.0
      %8449 = vmatprep.subr.mxu0 0.0
      %8450 = vmatpush2.msra.mxu0 0.0
      %8451 = vmatprep.subr.mxu0 0.0
      %8452 = vmatpush2.msra.mxu0 0.0
      %8453 = vmatprep.mubr.f32.mxu0 0.0
      %8454 = vmatmul.mubr.f32.gmra.mxu0 %v8312
      %v8455 = vpop.f32.mrf.mxu0
      %v8456 = vadd.f32 %v8188, %v8455
      %v8457 = vpop.f32.mrf.mxu0
      %8458 = vmatprep.mubr.f32.mxu0 0.0
      %8459 = vmatmul.mubr.f32.gmra.mxu0 %v8315
      %v8460 = vpop.f32.mrf.mxu0
      %v8461 = vadd.f32 %v8193, %v8460
      %v8462 = vpop.f32.mrf.mxu0
      %8463 = vmatprep.mubr.f32.mxu0 0.0
      %8464 = vmatmul.mubr.f32.gmra.mxu0 %v8318
      %v8465 = vpop.f32.mrf.mxu0
      %v8466 = vadd.f32 %v8198, %v8465
      %v8467 = vpop.f32.mrf.mxu0
      %8468 = vmatprep.mubr.f32.mxu0 0.0
      %8469 = vmatmul.mubr.f32.gmra.mxu0 %v8321
      %v8470 = vpop.f32.mrf.mxu0
      %v8471 = vadd.f32 %v8203, %v8470
      %v8472 = vpop.f32.mrf.mxu0
      %8473 = vmatprep.mubr.f32.mxu0 0.0
      %8474 = vmatmul.mubr.f32.gmra.mxu0 %v8324
      %v8475 = vpop.f32.mrf.mxu0
      %v8476 = vadd.f32 %v8208, %v8475
      %v8477 = vpop.f32.mrf.mxu0
      %8478 = vmatprep.mubr.f32.mxu0 0.0
      %8479 = vmatmul.mubr.f32.gmra.mxu0 %v8327
      %v8480 = vpop.f32.mrf.mxu0
      %v8481 = vadd.f32 %v8213, %v8480
      %v8482 = vpop.f32.mrf.mxu0
      %8483 = vmatprep.mubr.f32.mxu0 0.0
      %8484 = vmatmul.mubr.f32.gmra.mxu0 %v8330
      %v8485 = vpop.f32.mrf.mxu0
      %v8486 = vadd.f32 %v8218, %v8485
      %v8487 = vpop.f32.mrf.mxu0
      %8488 = vmatprep.mubr.f32.mxu0 0.0
      %8489 = vmatmul.mubr.f32.gmra.mxu0 %v8333
      %v8490 = vpop.f32.mrf.mxu0
      %v8491 = vadd.f32 %v8223, %v8490
      %v8492 = vpop.f32.mrf.mxu0
      %8493 = vmatprep.mubr.f32.mxu0 0.0
      %8494 = vmatmul.mubr.f32.gmra.mxu0 %v8336
      %v8495 = vpop.f32.mrf.mxu0
      %v8496 = vadd.f32 %v8228, %v8495
      %v8497 = vpop.f32.mrf.mxu0
      %8498 = vmatprep.mubr.f32.mxu0 0.0
      %8499 = vmatmul.mubr.f32.gmra.mxu0 %v8339
      %v8500 = vpop.f32.mrf.mxu0
      %v8501 = vadd.f32 %v8233, %v8500
      %v8502 = vpop.f32.mrf.mxu0
      %8503 = vmatprep.mubr.f32.mxu0 0.0
      %8504 = vmatmul.mubr.f32.gmra.mxu0 %v8342
      %v8505 = vpop.f32.mrf.mxu0
      %v8506 = vadd.f32 %v8238, %v8505
      %v8507 = vpop.f32.mrf.mxu0
      %8508 = vmatprep.mubr.f32.mxu0 0.0
      %8509 = vmatmul.mubr.f32.gmra.mxu0 %v8345
      %v8510 = vpop.f32.mrf.mxu0
      %v8511 = vadd.f32 %v8243, %v8510
      %v8512 = vpop.f32.mrf.mxu0
      %8513 = vmatprep.mubr.f32.mxu0 0.0
      %8514 = vmatmul.mubr.f32.gmra.mxu0 %v8348
      %v8515 = vpop.f32.mrf.mxu0
      %v8516 = vadd.f32 %v8248, %v8515
      %v8517 = vpop.f32.mrf.mxu0
      %8518 = vmatprep.mubr.f32.mxu0 0.0
      %8519 = vmatmul.mubr.f32.gmra.mxu0 %v8351
      %v8520 = vpop.f32.mrf.mxu0
      %v8521 = vadd.f32 %v8253, %v8520
      %v8522 = vpop.f32.mrf.mxu0
      %8523 = vmatprep.mubr.f32.mxu0 0.0
      %8524 = vmatmul.mubr.f32.gmra.mxu0 %v8354
      %v8525 = vpop.f32.mrf.mxu0
      %v8526 = vadd.f32 %v8258, %v8525
      %v8527 = vpop.f32.mrf.mxu0
      %8528 = vmatprep.mubr.f32.mxu0 0.0
      %8529 = vmatmul.mubr.f32.gmra.mxu0 %v8357
      %v8530 = vpop.f32.mrf.mxu0
      %v8531 = vadd.f32 %v8263, %v8530
      %v8532 = vpop.f32.mrf.mxu0
      %8533 = vmatprep.mubr.f32.mxu0 0.0
      %8534 = vmatmul.mubr.f32.gmra.mxu0 %v8360
      %v8535 = vpop.f32.mrf.mxu0
      %v8536 = vadd.f32 %v8268, %v8535
      %v8537 = vpop.f32.mrf.mxu0
      %8538 = vmatprep.mubr.f32.mxu0 0.0
      %8539 = vmatmul.mubr.f32.gmra.mxu0 %v8363
      %v8540 = vpop.f32.mrf.mxu0
      %v8541 = vadd.f32 %v8273, %v8540
      %v8542 = vpop.f32.mrf.mxu0
      %8543 = vmatprep.mubr.f32.mxu0 0.0
      %8544 = vmatmul.mubr.f32.gmra.mxu0 %v8366
      %v8545 = vpop.f32.mrf.mxu0
      %v8546 = vadd.f32 %v8278, %v8545
      %v8547 = vpop.f32.mrf.mxu0
      %8548 = vmatprep.mubr.f32.mxu0 0.0
      %8549 = vmatmul.mubr.f32.gmra.mxu0 %v8369
      %v8550 = vpop.f32.mrf.mxu0
      %v8551 = vadd.f32 %v8283, %v8550
      %v8552 = vpop.f32.mrf.mxu0
      %8553 = vmatprep.mubr.f32.mxu0 0.0
      %8554 = vmatmul.mubr.f32.gmra.mxu0 %v8372
      %v8555 = vpop.f32.mrf.mxu0
      %v8556 = vadd.f32 %v8288, %v8555
      %v8557 = vpop.f32.mrf.mxu0
      %8558 = vmatprep.mubr.f32.mxu0 0.0
      %8559 = vmatmul.mubr.f32.gmra.mxu0 %v8375
      %v8560 = vpop.f32.mrf.mxu0
      %v8561 = vadd.f32 %v8293, %v8560
      %v8562 = vpop.f32.mrf.mxu0
      %8563 = vmatprep.mubr.f32.mxu0 0.0
      %8564 = vmatmul.mubr.f32.gmra.mxu0 %v8378
      %v8565 = vpop.f32.mrf.mxu0
      %v8566 = vadd.f32 %v8298, %v8565
      %v8567 = vpop.f32.mrf.mxu0
      %8568 = vmatprep.mubr.f32.mxu0 0.0
      %8569 = vmatmul.mubr.f32.gmra.mxu0 %v8381
      %v8570 = vpop.f32.mrf.mxu0
      %v8571 = vadd.f32 %v8303, %v8570
      %v8572 = vpop.f32.mrf.mxu0
      %8573 = vmatprep.mubr.f32.mxu0 0.0
      %8574 = vmatmul.mubr.f32.gmra.mxu0 %v8384
      %v8575 = vpop.f32.mrf.mxu0
      %v8576 = vadd.f32 %v8308, %v8575
      %v8577 = vpop.f32.mrf.mxu0
      %8578 = vdwg.mxu0
      %v8579 = vld [vmem:[#allocation2 + $0x2] sm:$0xff]
      %v8580 = vld [vmem:[#allocation2 + $0xa] sm:$0xff]
      %v8581 = vld [vmem:[#allocation2 + $0x12] sm:$0xff]
      %v8582 = vld [vmem:[#allocation2 + $0x1a] sm:$0xff]
      %v8583 = vld [vmem:[#allocation2 + $0x22] sm:$0xff]
      %v8584 = vld [vmem:[#allocation2 + $0x2a] sm:$0xff]
      %v8585 = vld [vmem:[#allocation2 + $0x32] sm:$0xff]
      %v8586 = vld [vmem:[#allocation2 + $0x3a] sm:$0xff]
      %v8587 = vld [vmem:[#allocation2 + $0x42] sm:$0xff]
      %v8588 = vld [vmem:[#allocation2 + $0x4a] sm:$0xff]
      %v8589 = vld [vmem:[#allocation2 + $0x52] sm:$0xff]
      %v8590 = vld [vmem:[#allocation2 + $0x5a] sm:$0xff]
      %v8591 = vld [vmem:[#allocation2 + $0x62] sm:$0xff]
      %v8592 = vld [vmem:[#allocation2 + $0x6a] sm:$0xff]
      %v8593 = vld [vmem:[#allocation2 + $0x72] sm:$0xff]
      %v8594 = vld [vmem:[#allocation2 + $0x7a] sm:$0xff]
      %v8595 = vld [vmem:[#allocation2 + $0x82] sm:$0xff]
      %v8596 = vld [vmem:[#allocation2 + $0x8a] sm:$0xff]
      %v8597 = vld [vmem:[#allocation2 + $0x92] sm:$0xff]
      %v8598 = vld [vmem:[#allocation2 + $0x9a] sm:$0xff]
      %v8599 = vld [vmem:[#allocation2 + $0xa2] sm:$0xff]
      %v8600 = vld [vmem:[#allocation2 + $0xaa] sm:$0xff]
      %v8601 = vld [vmem:[#allocation2 + $0xb2] sm:$0xff]
      %v8602 = vld [vmem:[#allocation2 + $0xba] sm:$0xff]
      %v8603 = vld [vmem:[#allocation2 + $0xc2] sm:$0xff]
      %s8604 = scalar_lea.vmem %s23, 8
      %v8605 = vld [vmem:[%s8604] sm:$0xf]
      %v8607 = vsel %vm919, %v8579, 0
      %v8610 = vsel %vm919, %v8580, 0
      %v8613 = vsel %vm919, %v8581, 0
      %v8616 = vsel %vm919, %v8582, 0
      %v8619 = vsel %vm919, %v8583, 0
      %v8622 = vsel %vm919, %v8584, 0
      %v8625 = vsel %vm919, %v8585, 0
      %v8628 = vsel %vm919, %v8586, 0
      %v8631 = vsel %vm919, %v8587, 0
      %v8634 = vsel %vm919, %v8588, 0
      %v8637 = vsel %vm919, %v8589, 0
      %v8640 = vsel %vm919, %v8590, 0
      %v8643 = vsel %vm919, %v8591, 0
      %v8646 = vsel %vm919, %v8592, 0
      %v8649 = vsel %vm919, %v8593, 0
      %v8652 = vsel %vm919, %v8594, 0
      %v8655 = vsel %vm919, %v8595, 0
      %v8658 = vsel %vm919, %v8596, 0
      %v8661 = vsel %vm919, %v8597, 0
      %v8664 = vsel %vm919, %v8598, 0
      %v8667 = vsel %vm919, %v8599, 0
      %v8670 = vsel %vm919, %v8600, 0
      %v8673 = vsel %vm919, %v8601, 0
      %v8676 = vsel %vm919, %v8602, 0
      %v8679 = vsel %vm919, %v8603, 0
      %v8682 = vsel %vm968, %v8605, 0
      %8684 = vmatprep.subr.mxu0 0.0
      %8685 = vmatpush1.msra.mxu0 0.0
      %8686 = vmatprep.subr.mxu0 0.0
      %8687 = vmatpush1.msra.mxu0 0.0
      %8688 = vmatprep.subr.mxu0 0.0
      %8689 = vmatpush1.msra.mxu0 0.0
      %8690 = vmatprep.subr.mxu0 0.0
      %8691 = vmatpush1.msra.mxu0 0.0
      %8692 = vmatprep.subr.mxu0 0.0
      %8693 = vmatpush1.msra.mxu0 0.0
      %8694 = vmatprep.subr.mxu0 0.0
      %8695 = vmatpush1.msra.mxu0 0.0
      %8696 = vmatprep.subr.mxu0 0.0
      %8697 = vmatpush1.msra.mxu0 0.0
      %8698 = vmatprep.subr.mxu0 0.0
      %8699 = vmatpush1.msra.mxu0 0.0
      %8700 = vmatprep.subr.mxu0 0.0
      %8701 = vmatpush1.msra.mxu0 0.0
      %8702 = vmatprep.subr.mxu0 0.0
      %8703 = vmatpush1.msra.mxu0 0.0
      %8704 = vmatprep.subr.mxu0 0.0
      %8705 = vmatpush1.msra.mxu0 0.0
      %8706 = vmatprep.subr.mxu0 0.0
      %8707 = vmatpush1.msra.mxu0 0.0
      %8708 = vmatprep.subr.mxu0 0.0
      %8709 = vmatpush1.msra.mxu0 0.0
      %8710 = vmatprep.subr.mxu0 0.0
      %8711 = vmatpush1.msra.mxu0 0.0
      %8712 = vmatprep.subr.mxu0 0.0
      %8713 = vmatpush1.msra.mxu0 0.0
      %8714 = vmatprep.subr.mxu0 0.0
      %8715 = vmatpush1.msra.mxu0 %v8682
      %8716 = vmatprep.subr.mxu0 0.0
      %8717 = vmatpush2.msra.mxu0 0.0
      %8718 = vmatprep.subr.mxu0 0.0
      %8719 = vmatpush2.msra.mxu0 0.0
      %8720 = vmatprep.subr.mxu0 0.0
      %8721 = vmatpush2.msra.mxu0 0.0
      %8722 = vmatprep.subr.mxu0 0.0
      %8723 = vmatpush2.msra.mxu0 0.0
      %8724 = vmatprep.subr.mxu0 0.0
      %8725 = vmatpush2.msra.mxu0 0.0
      %8726 = vmatprep.subr.mxu0 0.0
      %8727 = vmatpush2.msra.mxu0 0.0
      %8728 = vmatprep.subr.mxu0 0.0
      %8729 = vmatpush2.msra.mxu0 0.0
      %8730 = vmatprep.subr.mxu0 0.0
      %8731 = vmatpush2.msra.mxu0 0.0
      %8732 = vmatprep.subr.mxu0 0.0
      %8733 = vmatpush2.msra.mxu0 0.0
      %8734 = vmatprep.subr.mxu0 0.0
      %8735 = vmatpush2.msra.mxu0 0.0
      %8736 = vmatprep.subr.mxu0 0.0
      %8737 = vmatpush2.msra.mxu0 0.0
      %8738 = vmatprep.subr.mxu0 0.0
      %8739 = vmatpush2.msra.mxu0 0.0
      %8740 = vmatprep.subr.mxu0 0.0
      %8741 = vmatpush2.msra.mxu0 0.0
      %8742 = vmatprep.subr.mxu0 0.0
      %8743 = vmatpush2.msra.mxu0 0.0
      %8744 = vmatprep.subr.mxu0 0.0
      %8745 = vmatpush2.msra.mxu0 0.0
      %8746 = vmatprep.subr.mxu0 0.0
      %8747 = vmatpush2.msra.mxu0 0.0
      %8748 = vmatprep.mubr.f32.mxu0 0.0
      %8749 = vmatmul.mubr.f32.gmra.mxu0 %v8607
      %v8750 = vpop.f32.mrf.mxu0
      %v8751 = vadd.f32 0.0, %v8750
      %v8752 = vpop.f32.mrf.mxu0
      %8753 = vmatprep.mubr.f32.mxu0 0.0
      %8754 = vmatmul.mubr.f32.gmra.mxu0 %v8610
      %v8755 = vpop.f32.mrf.mxu0
      %v8756 = vadd.f32 0.0, %v8755
      %v8757 = vpop.f32.mrf.mxu0
      %8758 = vmatprep.mubr.f32.mxu0 0.0
      %8759 = vmatmul.mubr.f32.gmra.mxu0 %v8613
      %v8760 = vpop.f32.mrf.mxu0
      %v8761 = vadd.f32 0.0, %v8760
      %v8762 = vpop.f32.mrf.mxu0
      %8763 = vmatprep.mubr.f32.mxu0 0.0
      %8764 = vmatmul.mubr.f32.gmra.mxu0 %v8616
      %v8765 = vpop.f32.mrf.mxu0
      %v8766 = vadd.f32 0.0, %v8765
      %v8767 = vpop.f32.mrf.mxu0
      %8768 = vmatprep.mubr.f32.mxu0 0.0
      %8769 = vmatmul.mubr.f32.gmra.mxu0 %v8619
      %v8770 = vpop.f32.mrf.mxu0
      %v8771 = vadd.f32 0.0, %v8770
      %v8772 = vpop.f32.mrf.mxu0
      %8773 = vmatprep.mubr.f32.mxu0 0.0
      %8774 = vmatmul.mubr.f32.gmra.mxu0 %v8622
      %v8775 = vpop.f32.mrf.mxu0
      %v8776 = vadd.f32 0.0, %v8775
      %v8777 = vpop.f32.mrf.mxu0
      %8778 = vmatprep.mubr.f32.mxu0 0.0
      %8779 = vmatmul.mubr.f32.gmra.mxu0 %v8625
      %v8780 = vpop.f32.mrf.mxu0
      %v8781 = vadd.f32 0.0, %v8780
      %v8782 = vpop.f32.mrf.mxu0
      %8783 = vmatprep.mubr.f32.mxu0 0.0
      %8784 = vmatmul.mubr.f32.gmra.mxu0 %v8628
      %v8785 = vpop.f32.mrf.mxu0
      %v8786 = vadd.f32 0.0, %v8785
      %v8787 = vpop.f32.mrf.mxu0
      %8788 = vmatprep.mubr.f32.mxu0 0.0
      %8789 = vmatmul.mubr.f32.gmra.mxu0 %v8631
      %v8790 = vpop.f32.mrf.mxu0
      %v8791 = vadd.f32 0.0, %v8790
      %v8792 = vpop.f32.mrf.mxu0
      %8793 = vmatprep.mubr.f32.mxu0 0.0
      %8794 = vmatmul.mubr.f32.gmra.mxu0 %v8634
      %v8795 = vpop.f32.mrf.mxu0
      %v8796 = vadd.f32 0.0, %v8795
      %v8797 = vpop.f32.mrf.mxu0
      %8798 = vmatprep.mubr.f32.mxu0 0.0
      %8799 = vmatmul.mubr.f32.gmra.mxu0 %v8637
      %v8800 = vpop.f32.mrf.mxu0
      %v8801 = vadd.f32 0.0, %v8800
      %v8802 = vpop.f32.mrf.mxu0
      %8803 = vmatprep.mubr.f32.mxu0 0.0
      %8804 = vmatmul.mubr.f32.gmra.mxu0 %v8640
      %v8805 = vpop.f32.mrf.mxu0
      %v8806 = vadd.f32 0.0, %v8805
      %v8807 = vpop.f32.mrf.mxu0
      %8808 = vmatprep.mubr.f32.mxu0 0.0
      %8809 = vmatmul.mubr.f32.gmra.mxu0 %v8643
      %v8810 = vpop.f32.mrf.mxu0
      %v8811 = vadd.f32 0.0, %v8810
      %v8812 = vpop.f32.mrf.mxu0
      %8813 = vmatprep.mubr.f32.mxu0 0.0
      %8814 = vmatmul.mubr.f32.gmra.mxu0 %v8646
      %v8815 = vpop.f32.mrf.mxu0
      %v8816 = vadd.f32 0.0, %v8815
      %v8817 = vpop.f32.mrf.mxu0
      %8818 = vmatprep.mubr.f32.mxu0 0.0
      %8819 = vmatmul.mubr.f32.gmra.mxu0 %v8649
      %v8820 = vpop.f32.mrf.mxu0
      %v8821 = vadd.f32 0.0, %v8820
      %v8822 = vpop.f32.mrf.mxu0
      %8823 = vmatprep.mubr.f32.mxu0 0.0
      %8824 = vmatmul.mubr.f32.gmra.mxu0 %v8652
      %v8825 = vpop.f32.mrf.mxu0
      %v8826 = vadd.f32 0.0, %v8825
      %v8827 = vpop.f32.mrf.mxu0
      %8828 = vmatprep.mubr.f32.mxu0 0.0
      %8829 = vmatmul.mubr.f32.gmra.mxu0 %v8655
      %v8830 = vpop.f32.mrf.mxu0
      %v8831 = vadd.f32 0.0, %v8830
      %v8832 = vpop.f32.mrf.mxu0
      %8833 = vmatprep.mubr.f32.mxu0 0.0
      %8834 = vmatmul.mubr.f32.gmra.mxu0 %v8658
      %v8835 = vpop.f32.mrf.mxu0
      %v8836 = vadd.f32 0.0, %v8835
      %v8837 = vpop.f32.mrf.mxu0
      %8838 = vmatprep.mubr.f32.mxu0 0.0
      %8839 = vmatmul.mubr.f32.gmra.mxu0 %v8661
      %v8840 = vpop.f32.mrf.mxu0
      %v8841 = vadd.f32 0.0, %v8840
      %v8842 = vpop.f32.mrf.mxu0
      %8843 = vmatprep.mubr.f32.mxu0 0.0
      %8844 = vmatmul.mubr.f32.gmra.mxu0 %v8664
      %v8845 = vpop.f32.mrf.mxu0
      %v8846 = vadd.f32 0.0, %v8845
      %v8847 = vpop.f32.mrf.mxu0
      %8848 = vmatprep.mubr.f32.mxu0 0.0
      %8849 = vmatmul.mubr.f32.gmra.mxu0 %v8667
      %v8850 = vpop.f32.mrf.mxu0
      %v8851 = vadd.f32 0.0, %v8850
      %v8852 = vpop.f32.mrf.mxu0
      %8853 = vmatprep.mubr.f32.mxu0 0.0
      %8854 = vmatmul.mubr.f32.gmra.mxu0 %v8670
      %v8855 = vpop.f32.mrf.mxu0
      %v8856 = vadd.f32 0.0, %v8855
      %v8857 = vpop.f32.mrf.mxu0
      %8858 = vmatprep.mubr.f32.mxu0 0.0
      %8859 = vmatmul.mubr.f32.gmra.mxu0 %v8673
      %v8860 = vpop.f32.mrf.mxu0
      %v8861 = vadd.f32 0.0, %v8860
      %v8862 = vpop.f32.mrf.mxu0
      %8863 = vmatprep.mubr.f32.mxu0 0.0
      %8864 = vmatmul.mubr.f32.gmra.mxu0 %v8676
      %v8865 = vpop.f32.mrf.mxu0
      %v8866 = vadd.f32 0.0, %v8865
      %v8867 = vpop.f32.mrf.mxu0
      %8868 = vmatprep.mubr.f32.mxu0 0.0
      %8869 = vmatmul.mubr.f32.gmra.mxu0 %v8679
      %v8870 = vpop.f32.mrf.mxu0
      %v8871 = vadd.f32 0.0, %v8870
      %v8872 = vpop.f32.mrf.mxu0
      %8873 = vdwg.mxu0
      %v8874 = vadd.f32 %v8456, %v8751
      %v8875 = vadd.f32 %v8461, %v8756
      %v8876 = vadd.f32 %v8466, %v8761
      %v8877 = vadd.f32 %v8471, %v8766
      %v8878 = vadd.f32 %v8476, %v8771
      %v8879 = vadd.f32 %v8481, %v8776
      %v8880 = vadd.f32 %v8486, %v8781
      %v8881 = vadd.f32 %v8491, %v8786
      %v8882 = vadd.f32 %v8496, %v8791
      %v8883 = vadd.f32 %v8501, %v8796
      %v8884 = vadd.f32 %v8506, %v8801
      %v8885 = vadd.f32 %v8511, %v8806
      %v8886 = vadd.f32 %v8516, %v8811
      %v8887 = vadd.f32 %v8521, %v8816
      %v8888 = vadd.f32 %v8526, %v8821
      %v8889 = vadd.f32 %v8531, %v8826
      %v8890 = vadd.f32 %v8536, %v8831
      %v8891 = vadd.f32 %v8541, %v8836
      %v8892 = vadd.f32 %v8546, %v8841
      %v8893 = vadd.f32 %v8551, %v8846
      %v8894 = vadd.f32 %v8556, %v8851
      %v8895 = vadd.f32 %v8561, %v8856
      %v8896 = vadd.f32 %v8566, %v8861
      %v8897 = vadd.f32 %v8571, %v8866
      %v8898 = vadd.f32 %v8576, %v8871
      %v8899 = vxor.u32 %v8874, 2147483648
      %v8900 = vxor.u32 %v8875, 2147483648
      %v8901 = vxor.u32 %v8876, 2147483648
      %v8902 = vxor.u32 %v8877, 2147483648
      %v8903 = vxor.u32 %v8878, 2147483648
      %v8904 = vxor.u32 %v8879, 2147483648
      %v8905 = vxor.u32 %v8880, 2147483648
      %v8906 = vxor.u32 %v8881, 2147483648
      %v8907 = vxor.u32 %v8882, 2147483648
      %v8908 = vxor.u32 %v8883, 2147483648
      %v8909 = vxor.u32 %v8884, 2147483648
      %v8910 = vxor.u32 %v8885, 2147483648
      %v8911 = vxor.u32 %v8886, 2147483648
      %v8912 = vxor.u32 %v8887, 2147483648
      %v8913 = vxor.u32 %v8888, 2147483648
      %v8914 = vxor.u32 %v8889, 2147483648
      %v8915 = vxor.u32 %v8890, 2147483648
      %v8916 = vxor.u32 %v8891, 2147483648
      %v8917 = vxor.u32 %v8892, 2147483648
      %v8918 = vxor.u32 %v8893, 2147483648
      %v8919 = vxor.u32 %v8894, 2147483648
      %v8920 = vxor.u32 %v8895, 2147483648
      %v8921 = vxor.u32 %v8896, 2147483648
      %v8922 = vxor.u32 %v8897, 2147483648
      %v8923 = vxor.u32 %v8898, 2147483648
      %v8924 = vmul.f32 %v8899, 1.442695
      %v8925 = vpow.pop %v8924
      %v8926 = vmul.f32 %v8900, 1.442695
      %v8927 = vpow.pop %v8926
      %v8928 = vmul.f32 %v8901, 1.442695
      %v8929 = vpow.pop %v8928
      %v8930 = vmul.f32 %v8902, 1.442695
      %v8931 = vpow.pop %v8930
      %v8932 = vmul.f32 %v8903, 1.442695
      %v8933 = vpow.pop %v8932
      %v8934 = vmul.f32 %v8904, 1.442695
      %v8935 = vpow.pop %v8934
      %v8936 = vmul.f32 %v8905, 1.442695
      %v8937 = vpow.pop %v8936
      %v8938 = vmul.f32 %v8906, 1.442695
      %v8939 = vpow.pop %v8938
      %v8940 = vmul.f32 %v8907, 1.442695
      %v8941 = vpow.pop %v8940
      %v8942 = vmul.f32 %v8908, 1.442695
      %v8943 = vpow.pop %v8942
      %v8944 = vmul.f32 %v8909, 1.442695
      %v8945 = vpow.pop %v8944
      %v8946 = vmul.f32 %v8910, 1.442695
      %v8947 = vpow.pop %v8946
      %v8948 = vmul.f32 %v8911, 1.442695
      %v8949 = vpow.pop %v8948
      %v8950 = vmul.f32 %v8912, 1.442695
      %v8951 = vpow.pop %v8950
      %v8952 = vmul.f32 %v8913, 1.442695
      %v8953 = vpow.pop %v8952
      %v8954 = vmul.f32 %v8914, 1.442695
      %v8955 = vpow.pop %v8954
      %v8956 = vmul.f32 %v8915, 1.442695
      %v8957 = vpow.pop %v8956
      %v8958 = vmul.f32 %v8916, 1.442695
      %v8959 = vpow.pop %v8958
      %v8960 = vmul.f32 %v8917, 1.442695
      %v8961 = vpow.pop %v8960
      %v8962 = vmul.f32 %v8918, 1.442695
      %v8963 = vpow.pop %v8962
      %v8964 = vmul.f32 %v8919, 1.442695
      %v8965 = vpow.pop %v8964
      %v8966 = vmul.f32 %v8920, 1.442695
      %v8967 = vpow.pop %v8966
      %v8968 = vmul.f32 %v8921, 1.442695
      %v8969 = vpow.pop %v8968
      %v8970 = vmul.f32 %v8922, 1.442695
      %v8971 = vpow.pop %v8970
      %v8972 = vmul.f32 %v8923, 1.442695
      %v8973 = vpow.pop %v8972
      %v8974 = vadd.f32 %v8925, 1.0
      %v8975 = vadd.f32 %v8927, 1.0
      %v8976 = vadd.f32 %v8929, 1.0
      %v8977 = vadd.f32 %v8931, 1.0
      %v8978 = vadd.f32 %v8933, 1.0
      %v8979 = vadd.f32 %v8935, 1.0
      %v8980 = vadd.f32 %v8937, 1.0
      %v8981 = vadd.f32 %v8939, 1.0
      %v8982 = vadd.f32 %v8941, 1.0
      %v8983 = vadd.f32 %v8943, 1.0
      %v8984 = vadd.f32 %v8945, 1.0
      %v8985 = vadd.f32 %v8947, 1.0
      %v8986 = vadd.f32 %v8949, 1.0
      %v8987 = vadd.f32 %v8951, 1.0
      %v8988 = vadd.f32 %v8953, 1.0
      %v8989 = vadd.f32 %v8955, 1.0
      %v8990 = vadd.f32 %v8957, 1.0
      %v8991 = vadd.f32 %v8959, 1.0
      %v8992 = vadd.f32 %v8961, 1.0
      %v8993 = vadd.f32 %v8963, 1.0
      %v8994 = vadd.f32 %v8965, 1.0
      %v8995 = vadd.f32 %v8967, 1.0
      %v8996 = vadd.f32 %v8969, 1.0
      %v8997 = vadd.f32 %v8971, 1.0
      %v8998 = vadd.f32 %v8973, 1.0
      %v8999 = vrcp.pop %v8974
      %v9000 = vmul.f32 1.0, %v8999
      %v9001 = vrcp.pop %v8975
      %v9002 = vmul.f32 1.0, %v9001
      %v9003 = vrcp.pop %v8976
      %v9004 = vmul.f32 1.0, %v9003
      %v9005 = vrcp.pop %v8977
      %v9006 = vmul.f32 1.0, %v9005
      %v9007 = vrcp.pop %v8978
      %v9008 = vmul.f32 1.0, %v9007
      %v9009 = vrcp.pop %v8979
      %v9010 = vmul.f32 1.0, %v9009
      %v9011 = vrcp.pop %v8980
      %v9012 = vmul.f32 1.0, %v9011
      %v9013 = vrcp.pop %v8981
      %v9014 = vmul.f32 1.0, %v9013
      %v9015 = vrcp.pop %v8982
      %v9016 = vmul.f32 1.0, %v9015
      %v9017 = vrcp.pop %v8983
      %v9018 = vmul.f32 1.0, %v9017
      %v9019 = vrcp.pop %v8984
      %v9020 = vmul.f32 1.0, %v9019
      %v9021 = vrcp.pop %v8985
      %v9022 = vmul.f32 1.0, %v9021
      %v9023 = vrcp.pop %v8986
      %v9024 = vmul.f32 1.0, %v9023
      %v9025 = vrcp.pop %v8987
      %v9026 = vmul.f32 1.0, %v9025
      %v9027 = vrcp.pop %v8988
      %v9028 = vmul.f32 1.0, %v9027
      %v9029 = vrcp.pop %v8989
      %v9030 = vmul.f32 1.0, %v9029
      %v9031 = vrcp.pop %v8990
      %v9032 = vmul.f32 1.0, %v9031
      %v9033 = vrcp.pop %v8991
      %v9034 = vmul.f32 1.0, %v9033
      %v9035 = vrcp.pop %v8992
      %v9036 = vmul.f32 1.0, %v9035
      %v9037 = vrcp.pop %v8993
      %v9038 = vmul.f32 1.0, %v9037
      %v9039 = vrcp.pop %v8994
      %v9040 = vmul.f32 1.0, %v9039
      %v9041 = vrcp.pop %v8995
      %v9042 = vmul.f32 1.0, %v9041
      %v9043 = vrcp.pop %v8996
      %v9044 = vmul.f32 1.0, %v9043
      %v9045 = vrcp.pop %v8997
      %v9046 = vmul.f32 1.0, %v9045
      %v9047 = vrcp.pop %v8998
      %v9048 = vmul.f32 1.0, %v9047
      %vm9049 = vcmask 7168
      %9050 = vst.msk [vmem:[%s818] sm:$0xff] %vm9049, %v9000
      %9051 = vst.msk [vmem:[%s818 + $0x8] sm:$0xff] %vm9049, %v9002
      %9052 = vst.msk [vmem:[%s818 + $0x10] sm:$0xff] %vm9049, %v9004
      %9053 = vst.msk [vmem:[%s818 + $0x18] sm:$0xff] %vm9049, %v9006
      %9054 = vst.msk [vmem:[%s818 + $0x20] sm:$0xff] %vm9049, %v9008
      %9055 = vst.msk [vmem:[%s818 + $0x28] sm:$0xff] %vm9049, %v9010
      %9056 = vst.msk [vmem:[%s818 + $0x30] sm:$0xff] %vm9049, %v9012
      %9057 = vst.msk [vmem:[%s818 + $0x38] sm:$0xff] %vm9049, %v9014
      %9058 = vst.msk [vmem:[%s818 + $0x40] sm:$0xff] %vm9049, %v9016
      %9059 = vst.msk [vmem:[%s818 + $0x48] sm:$0xff] %vm9049, %v9018
      %9060 = vst.msk [vmem:[%s818 + $0x50] sm:$0xff] %vm9049, %v9020
      %9061 = vst.msk [vmem:[%s818 + $0x58] sm:$0xff] %vm9049, %v9022
      %9062 = vst.msk [vmem:[%s818 + $0x60] sm:$0xff] %vm9049, %v9024
      %9063 = vst.msk [vmem:[%s818 + $0x68] sm:$0xff] %vm9049, %v9026
      %9064 = vst.msk [vmem:[%s818 + $0x70] sm:$0xff] %vm9049, %v9028
      %9065 = vst.msk [vmem:[%s818 + $0x78] sm:$0xff] %vm9049, %v9030
      %9066 = vst.msk [vmem:[%s818 + $0x80] sm:$0xff] %vm9049, %v9032
      %9067 = vst.msk [vmem:[%s818 + $0x88] sm:$0xff] %vm9049, %v9034
      %9068 = vst.msk [vmem:[%s818 + $0x90] sm:$0xff] %vm9049, %v9036
      %9069 = vst.msk [vmem:[%s818 + $0x98] sm:$0xff] %vm9049, %v9038
      %9070 = vst.msk [vmem:[%s818 + $0xa0] sm:$0xff] %vm9049, %v9040
      %9071 = vst.msk [vmem:[%s818 + $0xa8] sm:$0xff] %vm9049, %v9042
      %9072 = vst.msk [vmem:[%s818 + $0xb0] sm:$0xff] %vm9049, %v9044
      %9073 = vst.msk [vmem:[%s818 + $0xb8] sm:$0xff] %vm9049, %v9046
      %9074 = vst.msk [vmem:[%s818 + $0xc0] sm:$0xff] %vm9049, %v9048
      %p9075 = scmp.lt.s32.totalorder %s38, 1
      %s9076 = scalar_select %p9075, %s38, 1
      %s9077 = smul.addr %s9076, 25
      %s9078 = smul.addr %s9077, 8
      %s9079 = scalar_lea.vmem %s27, %s9078
      // Predicated region
      $region129: #{fcn_forward.1} parent=127 // pred_check
        %p9080 = pneg %p628
      $region130: #{fcn_forward.1} parent=127 // pred_check_branch
        %9082 = sbr.rel (%p9080) target = $region132
      $region131: #{fcn_forward.1} parent=127 // pred_region
        _
      $region132: #{fcn_forward.1} parent=127 // pred_fallthru
        _
    $region128: #{fcn_forward.1} parent=5 // pred_fallthru
      _
    %p9083 = scmp.le.s32.totalorder 2, %s33
    // Predicated region
    $region133: #{fcn_forward.1} parent=5 // pred_check
      %p9084 = pneg %p9083
    $region134: #{fcn_forward.1} parent=5 // pred_check_branch
      %9086 = sbr.rel (%p9084) target = $region136
    $region135: #{fcn_forward.1} parent=5 // pred_region
      %s9087 = ssub.s32 %s33, 2
      // Predicated region
      $region137: #{fcn_forward.1} parent=135 // pred_check
        %p9088 = pneg %p634
      $region138: #{fcn_forward.1} parent=135 // pred_check_branch
        %9090 = sbr.rel (%p9088) target = $region140
      $region139: #{fcn_forward.1} parent=135 // pred_region
        %p9091 = scmp.lt.s32.totalorder %s39, 1
        %s9092 = scalar_select %p9091, %s39, 1
        %s9093 = smul.addr %s9092, 25
        %s9094 = smul.addr %s9093, 8
        %s9095 = scalar_lea.vmem %s27, %s9094
      $region140: #{fcn_forward.1} parent=135 // pred_fallthru
        _
    $region136: #{fcn_forward.1} parent=5 // pred_fallthru
      _
  $region6: #{fcn_forward.1} parent=0 // loop_footer
    %s37 = sadd.s32 1, %s33
  $region7: #{fcn_forward.1} parent=0 // loop_footer_branch
    %32 = sbr.rel target = $region3
  $region8: #{fcn_forward.1} parent=0 // loop_exit
    _

</llo_original>
